<compile_context>
chip_gen: v7x
topology: tpu7x:2x2x1
jax: 0.10.0
libtpu: 0.0.40
codegen_flags: <defaults>
</compile_context>

<pallas_src>
import functools

import jax
import jax.numpy as jnp
from jax.experimental import pallas as pl
from jax.experimental.pallas import tpu as pltpu

# ----------------------------- configuration -------------------------------
N_NODES = 8        # graph nodes == image batch size
FT_DIM = 32        # param_dict['ft_dim']
H_DIM = 32         # param_dict['h_dim']
IMG_OUT_DIM = 16   # param_dict['img_output_dim']
LABEL_NUM = 10     # param_dict['label_num']
ADD_RES = True     # param_dict['add_res']
IMG_HW = 32        # fc1 = Linear(64*16*16, 500) forces 32x32 inputs (pool /2 -> 16)
POOL_HW = IMG_HW // 2
CONV_CH = 64
TAPS = 3 * 3 * 3   # im2col width for conv1 (3x3 kernel, 3 in-channels)
FC1_HID = 500
FC1_HID_PAD = 512  # padded to a lane-dense multiple of 128
FC1_K = CONV_CH * POOL_HW * POOL_HW   # 16384
FC1_TK = 4096                         # K tile for fc1 (4 grid steps)

_VMEM = pl.BlockSpec(memory_space=pltpu.MemorySpace.VMEM)


def _elu(x):
    # ELU(alpha=1); clamp the unused branch of where() to avoid exp overflow.
    return jnp.where(x > 0, x, jnp.exp(jnp.minimum(x, 0.0)) - 1.0)


# ------------------------------ Pallas kernels ------------------------------
def graph_kernel(x_ref, wcat_ref, bcat_ref, res_ref, adj_ref, node_ref):
    """Fused graph branch: linear1/linear2 (ELU), cosine adjacency, 2 GCN layers.

    wcat packs [w1; w2; wa; wg1; wg2] along rows, bcat packs the 5 biases.
    """
    x = x_ref[...]
    wcat = wcat_ref[...]
    bcat = bcat_ref[...]
    w1 = wcat[:FT_DIM]
    w2 = wcat[FT_DIM:FT_DIM + H_DIM]
    wa = wcat[FT_DIM + H_DIM:FT_DIM + 2 * H_DIM]
    wg1 = wcat[FT_DIM + 2 * H_DIM:FT_DIM + 3 * H_DIM]
    wg2 = wcat[FT_DIM + 3 * H_DIM:FT_DIM + 4 * H_DIM]
    b1, b2, ba, bg1, bg2 = (bcat[i:i + 1, :] for i in range(5))

    h = _elu(jnp.dot(x, w1, preferred_element_type=jnp.float32) + b1)
    # dropout -> identity (eval mode)
    h = _elu(jnp.dot(h, w2, preferred_element_type=jnp.float32) + b2)
    res = h

    t = jnp.tanh(jnp.dot(h, wa, preferred_element_type=jnp.float32) + ba)
    wn = jnp.sqrt(jnp.sum(t * t, axis=-1, keepdims=True))            # row L2 norms (N,1)
    adj = jnp.dot(t, t.T, preferred_element_type=jnp.float32) / (wn * wn.T)

    g1 = _elu(jnp.dot(adj, jnp.dot(h, wg1, preferred_element_type=jnp.float32),
                      preferred_element_type=jnp.float32) + bg1)
    res = res + g1
    g2 = _elu(jnp.dot(adj, jnp.dot(g1, wg2, preferred_element_type=jnp.float32),
                      preferred_element_type=jnp.float32) + bg2)
    res = res + g2

    res_ref[...] = res
    adj_ref[...] = adj
    node_ref[...] = g2


def conv_pool_kernel(p_ref, w_ref, b_ref, o_ref):
    """relu(conv1(x)) + MaxPool2d(2,2), one image per grid step.

    Patch rows are pre-ordered as q*256 + (yo*16+xo) with q = position inside the
    2x2 pool window, so the pool is four contiguous row-block maxima (no reshape).
    Output rows land in pooled-NHWC order (yo, xo) with channels on lanes; fc1's
    weight rows were permuted at param-prep time to match.
    """
    c = jnp.maximum(
        jnp.dot(p_ref[...], w_ref[...], preferred_element_type=jnp.float32) + b_ref[...],
        0.0)                                                  # (1024, 64)
    q = POOL_HW * POOL_HW                                     # 256
    o_ref[...] = jnp.maximum(jnp.maximum(c[0:q], c[q:2 * q]),
                             jnp.maximum(c[2 * q:3 * q], c[3 * q:4 * q]))


def fc1_kernel(x_ref, w_ref, b_ref, o_ref):
    """leaky_relu(x @ W + b); K tiled over the grid, bf16 weight stream,
    f32 accumulation directly in the resident output block."""
    @pl.when(pl.program_id(0) == 0)
    def _():
        o_ref[...] = jnp.zeros_like(o_ref)

    o_ref[...] += jnp.dot(x_ref[...].astype(jnp.bfloat16), w_ref[...],
                          preferred_element_type=jnp.float32)

    @pl.when(pl.program_id(0) == pl.num_programs(0) - 1)
    def _():
        z = o_ref[...] + b_ref[...]
        o_ref[...] = jnp.where(z > 0, z, 0.01 * z)   # F.leaky_relu default slope


def tail_kernel(res_ref, h_ref, w2_ref, b2_ref, pw_ref, pb_ref, emb_ref, pred_ref):
    """fc2 + [res | image] concat + linear_pred + log_softmax, fused."""
    res = res_ref[...]
    image = (jnp.dot(h_ref[...], w2_ref[...], preferred_element_type=jnp.float32)
             + b2_ref[...])
    emb_ref[:, :H_DIM] = res
    emb_ref[:, H_DIM:] = image

    pw = pw_ref[...]
    z = (jnp.dot(res, pw[:H_DIM], preferred_element_type=jnp.float32)
         + jnp.dot(image, pw[H_DIM:], preferred_element_type=jnp.float32)
         + pb_ref[...])
    m = jnp.max(z, axis=-1, keepdims=True)
    pred_ref[...] = z - (jnp.log(jnp.sum(jnp.exp(z - m), axis=-1, keepdims=True)) + m)


# ------------------------------- wrappers -----------------------------------
def _fc1_leaky(x, w_bf16, b, tk=FC1_TK):
    n, k = x.shape
    _, m = w_bf16.shape
    assert k % tk == 0
    return pl.pallas_call(
        fc1_kernel,
        out_shape=jax.ShapeDtypeStruct((n, m), jnp.float32),
        grid=(k // tk,),
        in_specs=[
            pl.BlockSpec((n, tk), lambda i: (0, i)),
            pl.BlockSpec((tk, m), lambda i: (i, 0)),
            pl.BlockSpec((1, m), lambda i: (0, 0)),
        ],
        out_specs=pl.BlockSpec((n, m), lambda i: (0, 0)),
        compiler_params=pltpu.CompilerParams(
            dimension_semantics=("arbitrary",),
            vmem_limit_bytes=32 * 1024 * 1024),
    )(x, w_bf16, b)


def _im2col_patches(img):
    """(N, 32, 32, 3) -> (N, 32, 32, 27); tap-major, channel-minor (matches conv_w)."""
    xp = jnp.pad(img, ((0, 0), (1, 1), (1, 1), (0, 0)))
    return jnp.concatenate(
        [xp[:, dy:dy + IMG_HW, dx:dx + IMG_HW, :] for dy in range(3) for dx in range(3)],
        axis=-1)


def _im2col_pool_order(img):
    """im2col rows re-ordered so each image's rows are q*256 + (yo*16 + xo),
    where q = py*2 + px is the position inside the 2x2 maxpool window."""
    n = img.shape[0]
    pt = _im2col_patches(img)                                   # (N, 32, 32, 27)
    pt = pt.reshape(n, POOL_HW, 2, POOL_HW, 2, TAPS)            # (n, yo, py, xo, px, 27)
    pt = jnp.transpose(pt, (0, 2, 4, 1, 3, 5))                  # (n, py, px, yo, xo, 27)
    return pt.reshape(n * IMG_HW * IMG_HW, TAPS)


@jax.jit
def model_forward(kparams, node_ft, img):
    n_nodes = node_ft.shape[0]
    n = img.shape[0]

    # -------- graph branch (single fused Pallas kernel, packed params) --------
    res, adj, _node_out = pl.pallas_call(
        graph_kernel,
        out_shape=(
            jax.ShapeDtypeStruct((n_nodes, H_DIM), jnp.float32),
            jax.ShapeDtypeStruct((n_nodes, n_nodes), jnp.float32),
            jax.ShapeDtypeStruct((n_nodes, H_DIM), jnp.float32),
        ),
        in_specs=[_VMEM, _VMEM, _VMEM],
        out_specs=(_VMEM, _VMEM, _VMEM),
    )(node_ft, kparams['node_wcat'], kparams['node_bcat'])

    # -------- CNN branch: conv1 + relu + maxpool + flatten, fused --------
    patches = _im2col_pool_order(img)                           # (n*1024, 27)
    pooled = pl.pallas_call(
        conv_pool_kernel,
        out_shape=jax.ShapeDtypeStruct((n * POOL_HW * POOL_HW, CONV_CH), jnp.float32),
        grid=(n,),
        in_specs=[
            pl.BlockSpec((IMG_HW * IMG_HW, TAPS), lambda i: (i, 0)),
            pl.BlockSpec((TAPS, CONV_CH), lambda i: (0, 0)),
            pl.BlockSpec((1, CONV_CH), lambda i: (0, 0)),
        ],
        out_specs=pl.BlockSpec((POOL_HW * POOL_HW, CONV_CH), lambda i: (i, 0)),
        compiler_params=pltpu.CompilerParams(dimension_semantics=("parallel",)),
    )(patches, kparams['conv_w'], kparams['conv_b'])
    # free collapse; rows are already in the order fc1's permuted weights expect
    flat = pooled.reshape(n, FC1_K)

    # dropout -> identity (eval mode)
    h = _fc1_leaky(flat, kparams['fc1_w'], kparams['fc1_b'])    # (n, 512), padded lanes = 0

    # -------- fc2 + concat + linear_pred + log_softmax (fused tail) --------
    emb, pred = pl.pallas_call(
        tail_kernel,
        out_shape=(
            jax.ShapeDtypeStruct((n, H_DIM + IMG_OUT_DIM), jnp.float32),
            jax.ShapeDtypeStruct((n, LABEL_NUM), jnp.float32),
        ),
        in_specs=[_VMEM] * 6,
        out_specs=(_VMEM, _VMEM),
    )(res, h, kparams['fc2_w'], kparams['fc2_b'], kparams['pred_w'], kparams['pred_b'])

    return pred, adj, emb


# --------------------------- pure-JAX reference ------------------------------
def reference_forward(params, node_ft, img):
    """PyTorch-faithful reference in f32 (NCHW flatten order, unpadded fc1)."""
    dot = functools.partial(jnp.dot, precision=jax.lax.Precision.HIGHEST)
    h = _elu(dot(node_ft, params['w1']) + params['b1'])
    h = _elu(dot(h, params['w2']) + params['b2'])
    res = h
    t = jnp.tanh(dot(h, params['wa']) + params['ba'])
    w = jnp.sqrt(jnp.sum(t * t, axis=-1, keepdims=True))
    adj = dot(t, t.T) / (w * w.T)
    g1 = _elu(dot(adj, dot(h, params['wg1'])) + params['bg1'])
    res = res + g1
    g2 = _elu(dot(adj, dot(g1, params['wg2'])) + params['bg2'])
    res = res + g2

    n = img.shape[0]
    conv = jnp.maximum(
        dot(_im2col_patches(img).reshape(n * IMG_HW * IMG_HW, TAPS), params['conv_w'])
        + params['conv_b'], 0.0)
    conv = conv.reshape(n, IMG_HW, IMG_HW, CONV_CH)
    pooled = jnp.max(conv.reshape(n, POOL_HW, 2, POOL_HW, 2, CONV_CH), axis=(2, 4))
    flat = jnp.transpose(pooled, (0, 3, 1, 2)).reshape(n, FC1_K)   # PyTorch NCHW flatten
    z = dot(flat, params['fc1_w']) + params['fc1_b']
    hfc = jnp.where(z > 0, z, 0.01 * z)
    image = dot(hfc, params['fc2_w']) + params['fc2_b']

    emb = jnp.concatenate([res, image], axis=1) if ADD_RES else g2
    pred = jax.nn.log_softmax(dot(emb, params['pred_w']) + params['pred_b'], axis=-1)
    return pred, adj, emb


# ------------------------------- param init ----------------------------------
def _init_linear(key, fan_in, fan_out):
    k1, k2 = jax.random.split(key)
    bound = 1.0 / (fan_in ** 0.5)
    w = jax.random.uniform(k1, (fan_in, fan_out), jnp.float32, -bound, bound)
    b = jax.random.uniform(k2, (1, fan_out), jnp.float32, -bound, bound)
    return w, b


def make_params(key):
    """PyTorch-faithful parameters (f32, NCHW fc1 row order, 500-wide fc1)."""
    keys = jax.random.split(key, 10)
    p = {}
    p['w1'], p['b1'] = _init_linear(keys[0], FT_DIM, H_DIM)
    p['w2'], p['b2'] = _init_linear(keys[1], H_DIM, H_DIM)
    p['wa'], p['ba'] = _init_linear(keys[2], H_DIM, H_DIM)
    p['wg1'], p['bg1'] = _init_linear(keys[3], H_DIM, H_DIM)
    p['wg2'], p['bg2'] = _init_linear(keys[4], H_DIM, H_DIM)
    # conv1: (kh, kw, cin, cout) flattened to (27, 64); tap-major, channel-minor.
    p['conv_w'], p['conv_b'] = _init_linear(keys[5], TAPS, CONV_CH)
    p['fc1_w'], p['fc1_b'] = _init_linear(keys[6], FC1_K, FC1_HID)
    p['fc2_w'], p['fc2_b'] = _init_linear(keys[7], FC1_HID, IMG_OUT_DIM)
    pred_in = H_DIM + IMG_OUT_DIM if ADD_RES else H_DIM
    p['pred_w'], p['pred_b'] = _init_linear(keys[8], pred_in, LABEL_NUM)
    return p


def prepare_kernel_params(p):
    """One-time layout prep for the Pallas path:
      * pack the 10 graph weights/biases into 2 arrays,
      * permute fc1_w rows from NCHW-flatten order to the fused kernel's
        pooled-NHWC row order, pad 500->512, cast to bf16,
      * pad fc1_b / fc2_w to the 512-wide padded hidden dim."""
    kp = {}
    kp['node_wcat'] = jnp.concatenate(
        [p['w1'], p['w2'], p['wa'], p['wg1'], p['wg2']], axis=0)       # (FT+4H, H)
    kp['node_bcat'] = jnp.concatenate(
        [p['b1'], p['b2'], p['ba'], p['bg1'], p['bg2']], axis=0)       # (5, H)
    kp['conv_w'] = p['conv_w']
    kp['conv_b'] = p['conv_b']

    pad = FC1_HID_PAD - FC1_HID
    # PyTorch row order is (c, h, w); kernel row order is (h, w, c).
    w1 = p['fc1_w'].reshape(CONV_CH, POOL_HW, POOL_HW, FC1_HID)
    w1 = jnp.transpose(w1, (1, 2, 0, 3)).reshape(FC1_K, FC1_HID)
    kp['fc1_w'] = jnp.pad(w1, ((0, 0), (0, pad))).astype(jnp.bfloat16)  # (16384, 512) bf16
    kp['fc1_b'] = jnp.pad(p['fc1_b'], ((0, 0), (0, pad)))               # (1, 512)
    kp['fc2_w'] = jnp.pad(p['fc2_w'], ((0, pad), (0, 0)))               # (512, 16)
    kp['fc2_b'] = p['fc2_b']
    kp['pred_w'] = p['pred_w']
    kp['pred_b'] = p['pred_b']
    return kp


# ---------------------------------- main --------------------------------------
if __name__ == "__main__":
    root = jax.random.PRNGKey(0)
    kkey, kx, ki = jax.random.split(root, 3)
    params = make_params(kkey)
    kparams = prepare_kernel_params(params)       # one-time layout/bf16 prep
    node_ft = jax.random.normal(kx, (N_NODES, FT_DIM), jnp.float32)
    img = jax.random.normal(ki, (N_NODES, IMG_HW, IMG_HW, 3), jnp.float32)

    pred, adj, emb = model_forward(kparams, node_ft, img)
    jax.block_until_ready((pred, adj, emb))

    r_pred, r_adj, r_emb = reference_forward(params, node_ft, img)
    assert pred.shape == (N_NODES, LABEL_NUM)
    assert adj.shape == (N_NODES, N_NODES)
    assert emb.shape == (N_NODES, H_DIM + IMG_OUT_DIM)
    assert jnp.all(jnp.isfinite(pred)) and jnp.all(jnp.isfinite(adj)) and jnp.all(jnp.isfinite(emb))
    # adj is an all-f32 path; emb/pred go through the bf16 fc1 weight stream.
    assert jnp.allclose(adj, r_adj, atol=1e-2, rtol=1e-2)
    assert jnp.allclose(emb, r_emb, atol=2e-2, rtol=2e-2)
    assert jnp.allclose(pred, r_pred, atol=2e-2, rtol=2e-2)

    print("KERNEL_OK")
</pallas_src>

<mosaic_0001>
module attributes {stable_mosaic.version = 11 : i64} {
  func.func @conv_pool_kernel(%arg0: i32, %arg1: memref<1024x27xf32, #tpu.memory_space<vmem>>, %arg2: memref<27x64xf32, #tpu.memory_space<vmem>>, %arg3: memref<1x64xf32, #tpu.memory_space<vmem>>, %arg4: memref<256x64xf32, #tpu.memory_space<vmem>>) attributes {dimension_semantics = [#tpu.dimension_semantics<parallel>], iteration_bounds = array<i64: 8>, scalar_prefetch = 0 : i64, scratch_operands = 0 : i64, tpu.core_type = #tpu.core_type<tc>, window_params = [{transform_indices = @transform_0, window_bounds = array<i64: 1024, 27>}, {pipeline_mode = #tpu.pipeline_mode<synchronous>, transform_indices = @transform_1, window_bounds = array<i64: 27, 64>}, {pipeline_mode = #tpu.pipeline_mode<synchronous>, transform_indices = @transform_2, window_bounds = array<i64: 1, 64>}, {transform_indices = @transform_3, window_bounds = array<i64: 256, 64>}]} {
    %c0 = arith.constant 0 : index
    %c0_0 = arith.constant 0 : index
    %0 = vector.load %arg1[%c0, %c0_0] : memref<1024x27xf32, #tpu.memory_space<vmem>>, vector<1024x27xf32>
    %c0_1 = arith.constant 0 : index
    %c0_2 = arith.constant 0 : index
    %1 = vector.load %arg2[%c0_1, %c0_2] : memref<27x64xf32, #tpu.memory_space<vmem>>, vector<27x64xf32>
    %cst = arith.constant dense<0.000000e+00> : vector<1024x64xf32>
    %2 = tpu.matmul %0, %1, %cst {dimension_numbers = #tpu.dot_dimension_numbers<[1], [0], [0], [1], [0, 0, 1, 1], [], []>} : vector<1024x27xf32>, vector<27x64xf32>, vector<1024x64xf32> -> vector<1024x64xf32>
    %c0_3 = arith.constant 0 : index
    %c0_4 = arith.constant 0 : index
    %3 = vector.load %arg3[%c0_3, %c0_4] : memref<1x64xf32, #tpu.memory_space<vmem>>, vector<1x64xf32>
    %4 = vector.broadcast %3 : vector<1x64xf32> to vector<1024x64xf32>
    %5 = arith.addf %2, %4 : vector<1024x64xf32>
    %cst_5 = arith.constant 0.000000e+00 : f32
    %6 = vector.broadcast %cst_5 : f32 to vector<1024x64xf32>
    %7 = arith.maximumf %5, %6 : vector<1024x64xf32>
    %8 = vector.extract_strided_slice %7 {offsets = [0, 0], sizes = [256, 64], strides = [1, 1]} : vector<1024x64xf32> to vector<256x64xf32>
    %9 = vector.extract_strided_slice %7 {offsets = [256, 0], sizes = [256, 64], strides = [1, 1]} : vector<1024x64xf32> to vector<256x64xf32>
    %10 = arith.maximumf %8, %9 : vector<256x64xf32>
    %11 = vector.extract_strided_slice %7 {offsets = [512, 0], sizes = [256, 64], strides = [1, 1]} : vector<1024x64xf32> to vector<256x64xf32>
    %12 = vector.extract_strided_slice %7 {offsets = [768, 0], sizes = [256, 64], strides = [1, 1]} : vector<1024x64xf32> to vector<256x64xf32>
    %13 = arith.maximumf %11, %12 : vector<256x64xf32>
    %14 = arith.maximumf %10, %13 : vector<256x64xf32>
    %c0_6 = arith.constant 0 : index
    %c0_7 = arith.constant 0 : index
    %15 = vector.load %arg4[%c0_6, %c0_7] : memref<256x64xf32, #tpu.memory_space<vmem>>, vector<256x64xf32>
    tpu.vector_store %arg4[%c0_6, %c0_7], %14 {strides = array<i32>} : memref<256x64xf32, #tpu.memory_space<vmem>>, vector<256x64xf32>,
    return
  }
  func.func @transform_0(%arg0: i32) -> (i32, i32) {
    %c0_i32 = arith.constant 0 : i32
    %c0_i32_0 = arith.constant 0 : i32
    return %arg0, %c0_i32 : i32, i32
  }
  func.func @transform_1(%arg0: i32) -> (i32, i32) {
    %c0_i32 = arith.constant 0 : i32
    %c0_i32_0 = arith.constant 0 : i32
    %c0_i32_1 = arith.constant 0 : i32
    return %c0_i32, %c0_i32_0 : i32, i32
  }
  func.func @transform_2(%arg0: i32) -> (i32, i32) {
    %c0_i32 = arith.constant 0 : i32
    %c0_i32_0 = arith.constant 0 : i32
    %c0_i32_1 = arith.constant 0 : i32
    return %c0_i32, %c0_i32_0 : i32, i32
  }
  func.func @transform_3(%arg0: i32) -> (i32, i32) {
    %c0_i32 = arith.constant 0 : i32
    %c0_i32_0 = arith.constant 0 : i32
    return %arg0, %c0_i32 : i32, i32
  }
}

module attributes {stable_mosaic.version = 11 : i64} {
  func.func @fc1_kernel(%arg0: i32, %arg1: memref<8x4096xf32, #tpu.memory_space<vmem>>, %arg2: memref<4096x512xbf16, #tpu.memory_space<vmem>>, %arg3: memref<1x512xf32, #tpu.memory_space<vmem>>, %arg4: memref<8x512xf32, #tpu.memory_space<vmem>>) attributes {dimension_semantics = [#tpu.dimension_semantics<arbitrary>], iteration_bounds = array<i64: 4>, scalar_prefetch = 0 : i64, scratch_operands = 0 : i64, tpu.core_type = #tpu.core_type<tc>, window_params = [{transform_indices = @transform_0, window_bounds = array<i64: 8, 4096>}, {transform_indices = @transform_1, window_bounds = array<i64: 4096, 512>}, {pipeline_mode = #tpu.pipeline_mode<synchronous>, transform_indices = @transform_2, window_bounds = array<i64: 1, 512>}, {pipeline_mode = #tpu.pipeline_mode<synchronous>, transform_indices = @transform_3, window_bounds = array<i64: 8, 512>}]} {
    %c0_i32 = arith.constant 0 : i32
    %0 = arith.cmpi eq, %arg0, %c0_i32 : i32
    %1 = arith.extui %0 : i1 to i32
    %c0_i32_0 = arith.constant 0 : i32
    %2 = arith.cmpi ne, %1, %c0_i32_0 : i32
    scf.if %2 {
      %cst_9 = arith.constant 0.000000e+00 : f32
      %13 = vector.broadcast %cst_9 : f32 to vector<8x512xf32>
      %c0_10 = arith.constant 0 : index
      %c0_11 = arith.constant 0 : index
      %14 = vector.load %arg4[%c0_10, %c0_11] : memref<8x512xf32, #tpu.memory_space<vmem>>, vector<8x512xf32>
      tpu.vector_store %arg4[%c0_10, %c0_11], %13 {strides = array<i32>} : memref<8x512xf32, #tpu.memory_space<vmem>>, vector<8x512xf32>,
    } else {
    }
    %c0 = arith.constant 0 : index
    %c0_1 = arith.constant 0 : index
    %3 = vector.load %arg4[%c0, %c0_1] : memref<8x512xf32, #tpu.memory_space<vmem>>, vector<8x512xf32>
    %c0_2 = arith.constant 0 : index
    %c0_3 = arith.constant 0 : index
    %4 = vector.load %arg1[%c0_2, %c0_3] : memref<8x4096xf32, #tpu.memory_space<vmem>>, vector<8x4096xf32>
    %5 = arith.truncf %4 : vector<8x4096xf32> to vector<8x4096xbf16>
    %c0_4 = arith.constant 0 : index
    %c0_5 = arith.constant 0 : index
    %6 = vector.load %arg2[%c0_4, %c0_5] : memref<4096x512xbf16, #tpu.memory_space<vmem>>, vector<4096x512xbf16>
    %cst = arith.constant dense<0.000000e+00> : vector<8x512xf32>
    %7 = tpu.matmul %5, %6, %cst {dimension_numbers = #tpu.dot_dimension_numbers<[1], [0], [0], [1], [0, 0, 1, 1], [], []>} : vector<8x4096xbf16>, vector<4096x512xbf16>, vector<8x512xf32> -> vector<8x512xf32>
    %8 = arith.addf %3, %7 : vector<8x512xf32>
    %c0_6 = arith.constant 0 : index
    %c0_7 = arith.constant 0 : index
    %9 = vector.load %arg4[%c0_6, %c0_7] : memref<8x512xf32, #tpu.memory_space<vmem>>, vector<8x512xf32>
    tpu.vector_store %arg4[%c0_6, %c0_7], %8 {strides = array<i32>} : memref<8x512xf32, #tpu.memory_space<vmem>>, vector<8x512xf32>,
    %c3_i32 = arith.constant 3 : i32
    %10 = arith.cmpi eq, %arg0, %c3_i32 : i32
    %11 = arith.extui %10 : i1 to i32
    %c0_i32_8 = arith.constant 0 : i32
    %12 = arith.cmpi ne, %11, %c0_i32_8 : i32
    scf.if %12 {
      %c0_9 = arith.constant 0 : index
      %c0_10 = arith.constant 0 : index
      %13 = vector.load %arg4[%c0_9, %c0_10] : memref<8x512xf32, #tpu.memory_space<vmem>>, vector<8x512xf32>
      %c0_11 = arith.constant 0 : index
      %c0_12 = arith.constant 0 : index
      %14 = vector.load %arg3[%c0_11, %c0_12] : memref<1x512xf32, #tpu.memory_space<vmem>>, vector<1x512xf32>
      %15 = vector.broadcast %14 : vector<1x512xf32> to vector<8x512xf32>
      %16 = arith.addf %13, %15 : vector<8x512xf32>
      %cst_13 = arith.constant 0.000000e+00 : f32
      %17 = vector.broadcast %cst_13 : f32 to vector<8x512xf32>
      %18 = arith.cmpf ogt, %16, %17 : vector<8x512xf32>
      %cst_14 = arith.constant 0.00999999977 : f32
      %19 = vector.broadcast %cst_14 : f32 to vector<8x512xf32>
      %20 = arith.mulf %19, %16 : vector<8x512xf32>
      %21 = arith.select %18, %16, %20 : vector<8x512xi1>, vector<8x512xf32>
      %c0_15 = arith.constant 0 : index
      %c0_16 = arith.constant 0 : index
      %22 = vector.load %arg4[%c0_15, %c0_16] : memref<8x512xf32, #tpu.memory_space<vmem>>, vector<8x512xf32>
      tpu.vector_store %arg4[%c0_15, %c0_16], %21 {strides = array<i32>} : memref<8x512xf32, #tpu.memory_space<vmem>>, vector<8x512xf32>,
    } else {
    }
    return
  }
  func.func @transform_0(%arg0: i32) -> (i32, i32) {
    %c0_i32 = arith.constant 0 : i32
    %c0_i32_0 = arith.constant 0 : i32
    return %c0_i32, %arg0 : i32, i32
  }
  func.func @transform_1(%arg0: i32) -> (i32, i32) {
    %c0_i32 = arith.constant 0 : i32
    %c0_i32_0 = arith.constant 0 : i32
    return %arg0, %c0_i32 : i32, i32
  }
  func.func @transform_2(%arg0: i32) -> (i32, i32) {
    %c0_i32 = arith.constant 0 : i32
    %c0_i32_0 = arith.constant 0 : i32
    %c0_i32_1 = arith.constant 0 : i32
    return %c0_i32, %c0_i32_0 : i32, i32
  }
  func.func @transform_3(%arg0: i32) -> (i32, i32) {
    %c0_i32 = arith.constant 0 : i32
    %c0_i32_0 = arith.constant 0 : i32
    %c0_i32_1 = arith.constant 0 : i32
    return %c0_i32, %c0_i32_0 : i32, i32
  }
}

module attributes {stable_mosaic.version = 11 : i64} {
  func.func @graph_kernel(%arg0: memref<8x32xf32, #tpu.memory_space<vmem>>, %arg1: memref<160x32xf32, #tpu.memory_space<vmem>>, %arg2: memref<5x32xf32, #tpu.memory_space<vmem>>, %arg3: memref<8x32xf32, #tpu.memory_space<vmem>>, %arg4: memref<8x8xf32, #tpu.memory_space<vmem>>, %arg5: memref<8x32xf32, #tpu.memory_space<vmem>>) attributes {dimension_semantics = [], scalar_prefetch = 0 : i64, scratch_operands = 0 : i64, tpu.core_type = #tpu.core_type<tc>} {
    %c0 = arith.constant 0 : index
    %c0_0 = arith.constant 0 : index
    %0 = vector.load %arg0[%c0, %c0_0] : memref<8x32xf32, #tpu.memory_space<vmem>>, vector<8x32xf32>
    %c0_1 = arith.constant 0 : index
    %c0_2 = arith.constant 0 : index
    %1 = vector.load %arg1[%c0_1, %c0_2] : memref<160x32xf32, #tpu.memory_space<vmem>>, vector<160x32xf32>
    %c0_3 = arith.constant 0 : index
    %c0_4 = arith.constant 0 : index
    %2 = vector.load %arg2[%c0_3, %c0_4] : memref<5x32xf32, #tpu.memory_space<vmem>>, vector<5x32xf32>
    %3 = vector.extract_strided_slice %1 {offsets = [0, 0], sizes = [32, 32], strides = [1, 1]} : vector<160x32xf32> to vector<32x32xf32>
    %4 = vector.extract_strided_slice %1 {offsets = [32, 0], sizes = [32, 32], strides = [1, 1]} : vector<160x32xf32> to vector<32x32xf32>
    %5 = vector.extract_strided_slice %1 {offsets = [64, 0], sizes = [32, 32], strides = [1, 1]} : vector<160x32xf32> to vector<32x32xf32>
    %6 = vector.extract_strided_slice %1 {offsets = [96, 0], sizes = [32, 32], strides = [1, 1]} : vector<160x32xf32> to vector<32x32xf32>
    %7 = vector.extract_strided_slice %1 {offsets = [128, 0], sizes = [32, 32], strides = [1, 1]} : vector<160x32xf32> to vector<32x32xf32>
    %8 = vector.extract_strided_slice %2 {offsets = [0, 0], sizes = [1, 32], strides = [1, 1]} : vector<5x32xf32> to vector<1x32xf32>
    %9 = vector.extract_strided_slice %2 {offsets = [1, 0], sizes = [1, 32], strides = [1, 1]} : vector<5x32xf32> to vector<1x32xf32>
    %10 = vector.extract_strided_slice %2 {offsets = [2, 0], sizes = [1, 32], strides = [1, 1]} : vector<5x32xf32> to vector<1x32xf32>
    %11 = vector.extract_strided_slice %2 {offsets = [3, 0], sizes = [1, 32], strides = [1, 1]} : vector<5x32xf32> to vector<1x32xf32>
    %12 = vector.extract_strided_slice %2 {offsets = [4, 0], sizes = [1, 32], strides = [1, 1]} : vector<5x32xf32> to vector<1x32xf32>
    %cst = arith.constant dense<0.000000e+00> : vector<8x32xf32>
    %13 = tpu.matmul %0, %3, %cst {dimension_numbers = #tpu.dot_dimension_numbers<[1], [0], [0], [1], [0, 0, 1, 1], [], []>} : vector<8x32xf32>, vector<32x32xf32>, vector<8x32xf32> -> vector<8x32xf32>
    %14 = vector.broadcast %8 : vector<1x32xf32> to vector<8x32xf32>
    %15 = arith.addf %13, %14 : vector<8x32xf32>
    %cst_5 = arith.constant 0.000000e+00 : f32
    %16 = vector.broadcast %cst_5 : f32 to vector<8x32xf32>
    %17 = arith.cmpf ogt, %15, %16 : vector<8x32xf32>
    %cst_6 = arith.constant 0.000000e+00 : f32
    %18 = vector.broadcast %cst_6 : f32 to vector<8x32xf32>
    %19 = arith.minimumf %15, %18 : vector<8x32xf32>
    %20 = math.exp %19 : vector<8x32xf32>
    %cst_7 = arith.constant 1.000000e+00 : f32
    %21 = vector.broadcast %cst_7 : f32 to vector<8x32xf32>
    %22 = arith.subf %20, %21 : vector<8x32xf32>
    %23 = arith.select %17, %15, %22 : vector<8x32xi1>, vector<8x32xf32>
    %cst_8 = arith.constant dense<0.000000e+00> : vector<8x32xf32>
    %24 = tpu.matmul %23, %4, %cst_8 {dimension_numbers = #tpu.dot_dimension_numbers<[1], [0], [0], [1], [0, 0, 1, 1], [], []>} : vector<8x32xf32>, vector<32x32xf32>, vector<8x32xf32> -> vector<8x32xf32>
    %25 = vector.broadcast %9 : vector<1x32xf32> to vector<8x32xf32>
    %26 = arith.addf %24, %25 : vector<8x32xf32>
    %cst_9 = arith.constant 0.000000e+00 : f32
    %27 = vector.broadcast %cst_9 : f32 to vector<8x32xf32>
    %28 = arith.cmpf ogt, %26, %27 : vector<8x32xf32>
    %cst_10 = arith.constant 0.000000e+00 : f32
    %29 = vector.broadcast %cst_10 : f32 to vector<8x32xf32>
    %30 = arith.minimumf %26, %29 : vector<8x32xf32>
    %31 = math.exp %30 : vector<8x32xf32>
    %cst_11 = arith.constant 1.000000e+00 : f32
    %32 = vector.broadcast %cst_11 : f32 to vector<8x32xf32>
    %33 = arith.subf %31, %32 : vector<8x32xf32>
    %34 = arith.select %28, %26, %33 : vector<8x32xi1>, vector<8x32xf32>
    %cst_12 = arith.constant dense<0.000000e+00> : vector<8x32xf32>
    %35 = tpu.matmul %34, %5, %cst_12 {dimension_numbers = #tpu.dot_dimension_numbers<[1], [0], [0], [1], [0, 0, 1, 1], [], []>} : vector<8x32xf32>, vector<32x32xf32>, vector<8x32xf32> -> vector<8x32xf32>
    %36 = vector.broadcast %10 : vector<1x32xf32> to vector<8x32xf32>
    %37 = arith.addf %35, %36 : vector<8x32xf32>
    %38 = math.tanh %37 : vector<8x32xf32>
    %39 = arith.mulf %38, %38 : vector<8x32xf32>
    %cst_13 = arith.constant dense<0.000000e+00> : vector<8xf32>
    %40 = vector.multi_reduction <add>, %39, %cst_13 [1] : vector<8x32xf32> to vector<8xf32>
    %41 = vector.shape_cast %40 : vector<8xf32> to vector<8x1xf32>
    %42 = math.sqrt %41 : vector<8x1xf32>
    %43 = tpu.transpose %38, [1, 0] : vector<8x32xf32> -> vector<32x8xf32>
    %cst_14 = arith.constant dense<0.000000e+00> : vector<8x8xf32>
    %44 = tpu.matmul %38, %43, %cst_14 {dimension_numbers = #tpu.dot_dimension_numbers<[1], [0], [0], [1], [0, 0, 1, 1], [], []>} : vector<8x32xf32>, vector<32x8xf32>, vector<8x8xf32> -> vector<8x8xf32>
    %45 = tpu.transpose %42, [1, 0] : vector<8x1xf32> -> vector<1x8xf32>
    %46 = vector.broadcast %42 : vector<8x1xf32> to vector<8x8xf32>
    %47 = vector.broadcast %45 : vector<1x8xf32> to vector<8x8xf32>
    %48 = arith.mulf %46, %47 : vector<8x8xf32>
    %49 = arith.divf %44, %48 : vector<8x8xf32>
    %cst_15 = arith.constant dense<0.000000e+00> : vector<8x32xf32>
    %50 = tpu.matmul %34, %6, %cst_15 {dimension_numbers = #tpu.dot_dimension_numbers<[1], [0], [0], [1], [0, 0, 1, 1], [], []>} : vector<8x32xf32>, vector<32x32xf32>, vector<8x32xf32> -> vector<8x32xf32>
    %cst_16 = arith.constant dense<0.000000e+00> : vector<8x32xf32>
    %51 = tpu.matmul %49, %50, %cst_16 {dimension_numbers = #tpu.dot_dimension_numbers<[1], [0], [0], [1], [0, 0, 1, 1], [], []>} : vector<8x8xf32>, vector<8x32xf32>, vector<8x32xf32> -> vector<8x32xf32>
    %52 = vector.broadcast %11 : vector<1x32xf32> to vector<8x32xf32>
    %53 = arith.addf %51, %52 : vector<8x32xf32>
    %cst_17 = arith.constant 0.000000e+00 : f32
    %54 = vector.broadcast %cst_17 : f32 to vector<8x32xf32>
    %55 = arith.cmpf ogt, %53, %54 : vector<8x32xf32>
    %cst_18 = arith.constant 0.000000e+00 : f32
    %56 = vector.broadcast %cst_18 : f32 to vector<8x32xf32>
    %57 = arith.minimumf %53, %56 : vector<8x32xf32>
    %58 = math.exp %57 : vector<8x32xf32>
    %cst_19 = arith.constant 1.000000e+00 : f32
    %59 = vector.broadcast %cst_19 : f32 to vector<8x32xf32>
    %60 = arith.subf %58, %59 : vector<8x32xf32>
    %61 = arith.select %55, %53, %60 : vector<8x32xi1>, vector<8x32xf32>
    %62 = arith.addf %34, %61 : vector<8x32xf32>
    %cst_20 = arith.constant dense<0.000000e+00> : vector<8x32xf32>
    %63 = tpu.matmul %61, %7, %cst_20 {dimension_numbers = #tpu.dot_dimension_numbers<[1], [0], [0], [1], [0, 0, 1, 1], [], []>} : vector<8x32xf32>, vector<32x32xf32>, vector<8x32xf32> -> vector<8x32xf32>
    %cst_21 = arith.constant dense<0.000000e+00> : vector<8x32xf32>
    %64 = tpu.matmul %49, %63, %cst_21 {dimension_numbers = #tpu.dot_dimension_numbers<[1], [0], [0], [1], [0, 0, 1, 1], [], []>} : vector<8x8xf32>, vector<8x32xf32>, vector<8x32xf32> -> vector<8x32xf32>
    %65 = vector.broadcast %12 : vector<1x32xf32> to vector<8x32xf32>
    %66 = arith.addf %64, %65 : vector<8x32xf32>
    %cst_22 = arith.constant 0.000000e+00 : f32
    %67 = vector.broadcast %cst_22 : f32 to vector<8x32xf32>
    %68 = arith.cmpf ogt, %66, %67 : vector<8x32xf32>
    %cst_23 = arith.constant 0.000000e+00 : f32
    %69 = vector.broadcast %cst_23 : f32 to vector<8x32xf32>
    %70 = arith.minimumf %66, %69 : vector<8x32xf32>
    %71 = math.exp %70 : vector<8x32xf32>
    %cst_24 = arith.constant 1.000000e+00 : f32
    %72 = vector.broadcast %cst_24 : f32 to vector<8x32xf32>
    %73 = arith.subf %71, %72 : vector<8x32xf32>
    %74 = arith.select %68, %66, %73 : vector<8x32xi1>, vector<8x32xf32>
    %75 = arith.addf %62, %74 : vector<8x32xf32>
    %c0_25 = arith.constant 0 : index
    %c0_26 = arith.constant 0 : index
    %76 = vector.load %arg3[%c0_25, %c0_26] : memref<8x32xf32, #tpu.memory_space<vmem>>, vector<8x32xf32>
    tpu.vector_store %arg3[%c0_25, %c0_26], %75 {strides = array<i32>} : memref<8x32xf32, #tpu.memory_space<vmem>>, vector<8x32xf32>,
    %c0_27 = arith.constant 0 : index
    %c0_28 = arith.constant 0 : index
    %77 = vector.load %arg4[%c0_27, %c0_28] : memref<8x8xf32, #tpu.memory_space<vmem>>, vector<8x8xf32>
    tpu.vector_store %arg4[%c0_27, %c0_28], %49 {strides = array<i32>} : memref<8x8xf32, #tpu.memory_space<vmem>>, vector<8x8xf32>,
    %c0_29 = arith.constant 0 : index
    %c0_30 = arith.constant 0 : index
    %78 = vector.load %arg5[%c0_29, %c0_30] : memref<8x32xf32, #tpu.memory_space<vmem>>, vector<8x32xf32>
    tpu.vector_store %arg5[%c0_29, %c0_30], %74 {strides = array<i32>} : memref<8x32xf32, #tpu.memory_space<vmem>>, vector<8x32xf32>,
    return
  }
}

module attributes {stable_mosaic.version = 11 : i64} {
  func.func @tail_kernel(%arg0: memref<8x32xf32, #tpu.memory_space<vmem>>, %arg1: memref<8x512xf32, #tpu.memory_space<vmem>>, %arg2: memref<512x16xf32, #tpu.memory_space<vmem>>, %arg3: memref<1x16xf32, #tpu.memory_space<vmem>>, %arg4: memref<48x10xf32, #tpu.memory_space<vmem>>, %arg5: memref<1x10xf32, #tpu.memory_space<vmem>>, %arg6: memref<8x48xf32, #tpu.memory_space<vmem>>, %arg7: memref<8x10xf32, #tpu.memory_space<vmem>>) attributes {dimension_semantics = [], scalar_prefetch = 0 : i64, scratch_operands = 0 : i64, tpu.core_type = #tpu.core_type<tc>} {
    %c0 = arith.constant 0 : index
    %c0_0 = arith.constant 0 : index
    %0 = vector.load %arg0[%c0, %c0_0] : memref<8x32xf32, #tpu.memory_space<vmem>>, vector<8x32xf32>
    %c0_1 = arith.constant 0 : index
    %c0_2 = arith.constant 0 : index
    %1 = vector.load %arg1[%c0_1, %c0_2] : memref<8x512xf32, #tpu.memory_space<vmem>>, vector<8x512xf32>
    %c0_3 = arith.constant 0 : index
    %c0_4 = arith.constant 0 : index
    %2 = vector.load %arg2[%c0_3, %c0_4] : memref<512x16xf32, #tpu.memory_space<vmem>>, vector<512x16xf32>
    %cst = arith.constant dense<0.000000e+00> : vector<8x16xf32>
    %3 = tpu.matmul %1, %2, %cst {dimension_numbers = #tpu.dot_dimension_numbers<[1], [0], [0], [1], [0, 0, 1, 1], [], []>} : vector<8x512xf32>, vector<512x16xf32>, vector<8x16xf32> -> vector<8x16xf32>
    %c0_5 = arith.constant 0 : index
    %c0_6 = arith.constant 0 : index
    %4 = vector.load %arg3[%c0_5, %c0_6] : memref<1x16xf32, #tpu.memory_space<vmem>>, vector<1x16xf32>
    %5 = vector.broadcast %4 : vector<1x16xf32> to vector<8x16xf32>
    %6 = arith.addf %3, %5 : vector<8x16xf32>
    %c0_7 = arith.constant 0 : index
    %c0_8 = arith.constant 0 : index
    %7 = vector.load %arg6[%c0_7, %c0_8] : memref<8x48xf32, #tpu.memory_space<vmem>>, vector<8x32xf32>
    tpu.vector_store %arg6[%c0_7, %c0_8], %0 {strides = array<i32>} : memref<8x48xf32, #tpu.memory_space<vmem>>, vector<8x32xf32>,
    %c0_9 = arith.constant 0 : index
    %c32 = arith.constant 32 : index
    %8 = vector.load %arg6[%c0_9, %c32] : memref<8x48xf32, #tpu.memory_space<vmem>>, vector<8x16xf32>
    tpu.vector_store %arg6[%c0_9, %c32], %6 {strides = array<i32>} : memref<8x48xf32, #tpu.memory_space<vmem>>, vector<8x16xf32>,
    %c0_10 = arith.constant 0 : index
    %c0_11 = arith.constant 0 : index
    %9 = vector.load %arg4[%c0_10, %c0_11] : memref<48x10xf32, #tpu.memory_space<vmem>>, vector<48x10xf32>
    %10 = vector.extract_strided_slice %9 {offsets = [0, 0], sizes = [32, 10], strides = [1, 1]} : vector<48x10xf32> to vector<32x10xf32>
    %cst_12 = arith.constant dense<0.000000e+00> : vector<8x10xf32>
    %11 = tpu.matmul %0, %10, %cst_12 {dimension_numbers = #tpu.dot_dimension_numbers<[1], [0], [0], [1], [0, 0, 1, 1], [], []>} : vector<8x32xf32>, vector<32x10xf32>, vector<8x10xf32> -> vector<8x10xf32>
    %12 = vector.extract_strided_slice %9 {offsets = [32, 0], sizes = [16, 10], strides = [1, 1]} : vector<48x10xf32> to vector<16x10xf32>
    %cst_13 = arith.constant dense<0.000000e+00> : vector<8x10xf32>
    %13 = tpu.matmul %6, %12, %cst_13 {dimension_numbers = #tpu.dot_dimension_numbers<[1], [0], [0], [1], [0, 0, 1, 1], [], []>} : vector<8x16xf32>, vector<16x10xf32>, vector<8x10xf32> -> vector<8x10xf32>
    %14 = arith.addf %11, %13 : vector<8x10xf32>
    %c0_14 = arith.constant 0 : index
    %c0_15 = arith.constant 0 : index
    %15 = vector.load %arg5[%c0_14, %c0_15] : memref<1x10xf32, #tpu.memory_space<vmem>>, vector<1x10xf32>
    %16 = vector.broadcast %15 : vector<1x10xf32> to vector<8x10xf32>
    %17 = arith.addf %14, %16 : vector<8x10xf32>
    %cst_16 = arith.constant dense<0xFF800000> : vector<8xf32>
    %18 = vector.multi_reduction <maximumf>, %17, %cst_16 [1] : vector<8x10xf32> to vector<8xf32>
    %19 = vector.shape_cast %18 : vector<8xf32> to vector<8x1xf32>
    %20 = vector.broadcast %19 : vector<8x1xf32> to vector<8x10xf32>
    %21 = arith.subf %17, %20 : vector<8x10xf32>
    %22 = math.exp %21 : vector<8x10xf32>
    %cst_17 = arith.constant dense<0.000000e+00> : vector<8xf32>
    %23 = vector.multi_reduction <add>, %22, %cst_17 [1] : vector<8x10xf32> to vector<8xf32>
    %24 = vector.shape_cast %23 : vector<8xf32> to vector<8x1xf32>
    %25 = math.log %24 : vector<8x1xf32>
    %26 = arith.addf %25, %19 : vector<8x1xf32>
    %27 = vector.broadcast %26 : vector<8x1xf32> to vector<8x10xf32>
    %28 = arith.subf %17, %27 : vector<8x10xf32>
    %c0_18 = arith.constant 0 : index
    %c0_19 = arith.constant 0 : index
    %29 = vector.load %arg7[%c0_18, %c0_19] : memref<8x10xf32, #tpu.memory_space<vmem>>, vector<8x10xf32>
    tpu.vector_store %arg7[%c0_18, %c0_19], %28 {strides = array<i32>} : memref<8x10xf32, #tpu.memory_space<vmem>>, vector<8x10xf32>,
    return
  }
}

</mosaic_0001>

<llo_original>
// kernel: model_forward.5
$region0: #{model_forward.5}
  #allocation0 [shape = 'u32[]', space=smem, size = 0x4, offset = 0x4, fixed_abs, tag = 'smem constant byte address 0x4 - core index']
  #allocation1 [shape = 'u32[144,128]{1,0:T(1,128)}', space=vmem, size = 0x12000, scoped, tag = 'internal scratch']
  %s0 = inlined_call_operand.vmem [shape: f32[8192,27], index: 0, kind: input, shape index: {}]
  %s1 = inlined_call_operand.vmem [shape: f32[27,64], index: 1, kind: input, shape index: {}]
  %s2 = inlined_call_operand.vmem [shape: f32[1,64], index: 2, kind: input, shape index: {}]
  %s3 = inlined_call_operand.vmem [shape: f32[2048,64], index: 3, kind: output, shape index: {}]
  %s4 = sld [smem:[#allocation0]]
  $region45: #{model_forward.5} parent=0
    _
  %s6 = ssub.s32 1, %s4
  %s7 = scalar_select 0, %s6, %s4
  loop: start=0, step=1, limit=10
  $region2: #{model_forward.5} parent=0 // loop_pre_header
    _
  $region3: #{model_forward.5} parent=0 // loop_header
    %s9 = sphi 0, %s13
    %p10 = scmp.ge.s32.totalorder %s9, 10
    %s19 = sphi 0, %s21
    %s22 = sphi 0, %s19
    %s23 = sphi 0, %s22
    %s39 = sphi 0, %s23
    %s43 = sphi 0, %s43
    %s45 = sphi 0, %s43
    %s46 = sphi 0, %s45
    %s60 = sphi 0, %s46
    %s64 = sphi 0, %s64
    %s66 = sphi 0, %s64
    %s67 = sphi 0, %s66
    %s81 = sphi 0, %s67
    %s87 = sphi 0, %s89
    %s90 = sphi 0, %s87
    %s91 = sphi 0, %s90
    %s107 = sphi 0, %s91
  $region4: #{model_forward.5} parent=0 // loop_header_branch
    %12 = sbr.rel (%p10) target = $region8
  $region5: #{model_forward.5} parent=0 // loop_body
    %s14 = ssub.s32 %s9, 1
    %s15 = ssub.s32 %s9, 2
    %s16 = sadd.s32 %s9, 1
    %s17 = ssub.s32 %s9, %s16
    %p18 = scmp.eq.s32.totalorder %s17, 0
    %s20 = sadd.s32 %s19, 1
    %s21 = scalar_select %p18, %s19, %s20
    %p24 = pneg %p18
    %p25 = scmp.eq.s32.totalorder %s9, 7
    %p26 = por %p24, %p25
    %p27 = scmp.ne.s32.totalorder %s19, %s22
    %p28 = scmp.eq.s32.totalorder %s9, 0
    %p29 = por %p27, %p28
    %p30 = scmp.ne.s32.totalorder %s19, %s22
    %p31 = scmp.eq.s32.totalorder %s14, 7
    %p32 = por %p30, %p31
    %p33 = scmp.ne.s32.totalorder %s22, %s23
    %p34 = scmp.eq.s32.totalorder %s14, 0
    %p35 = por %p33, %p34
    %p36 = scmp.ne.s32.totalorder %s22, %s23
    %p37 = scmp.eq.s32.totalorder %s15, 7
    %p38 = por %p36, %p37
    %p40 = scmp.ne.s32.totalorder %s23, %s39
    %p41 = scmp.eq.s32.totalorder %s15, 0
    %p42 = por %p40, %p41
    %s44 = sadd.s32 %s43, 1
    %p47 = scmp.eq.s32.totalorder %s9, 7
    %p48 = scmp.ne.s32.totalorder %s43, %s45
    %p49 = scmp.eq.s32.totalorder %s9, 0
    %p50 = por %p48, %p49
    %p51 = scmp.ne.s32.totalorder %s43, %s45
    %p52 = scmp.eq.s32.totalorder %s14, 7
    %p53 = por %p51, %p52
    %p54 = scmp.ne.s32.totalorder %s45, %s46
    %p55 = scmp.eq.s32.totalorder %s14, 0
    %p56 = por %p54, %p55
    %p57 = scmp.ne.s32.totalorder %s45, %s46
    %p58 = scmp.eq.s32.totalorder %s15, 7
    %p59 = por %p57, %p58
    %p61 = scmp.ne.s32.totalorder %s46, %s60
    %p62 = scmp.eq.s32.totalorder %s15, 0
    %p63 = por %p61, %p62
    %s65 = sadd.s32 %s64, 1
    %p68 = scmp.eq.s32.totalorder %s9, 7
    %p69 = scmp.ne.s32.totalorder %s64, %s66
    %p70 = scmp.eq.s32.totalorder %s9, 0
    %p71 = por %p69, %p70
    %p72 = scmp.ne.s32.totalorder %s64, %s66
    %p73 = scmp.eq.s32.totalorder %s14, 7
    %p74 = por %p72, %p73
    %p75 = scmp.ne.s32.totalorder %s66, %s67
    %p76 = scmp.eq.s32.totalorder %s14, 0
    %p77 = por %p75, %p76
    %p78 = scmp.ne.s32.totalorder %s66, %s67
    %p79 = scmp.eq.s32.totalorder %s15, 7
    %p80 = por %p78, %p79
    %p82 = scmp.ne.s32.totalorder %s67, %s81
    %p83 = scmp.eq.s32.totalorder %s15, 0
    %p84 = por %p82, %p83
    %s85 = ssub.s32 %s9, %s16
    %p86 = scmp.eq.s32.totalorder %s85, 0
    %s88 = sadd.s32 %s87, 1
    %s89 = scalar_select %p86, %s87, %s88
    %p92 = pneg %p86
    %p93 = scmp.eq.s32.totalorder %s9, 7
    %p94 = por %p92, %p93
    %p95 = scmp.ne.s32.totalorder %s87, %s90
    %p96 = scmp.eq.s32.totalorder %s9, 0
    %p97 = por %p95, %p96
    %p98 = scmp.ne.s32.totalorder %s87, %s90
    %p99 = scmp.eq.s32.totalorder %s14, 7
    %p100 = por %p98, %p99
    %p101 = scmp.ne.s32.totalorder %s90, %s91
    %p102 = scmp.eq.s32.totalorder %s14, 0
    %p103 = por %p101, %p102
    %p104 = scmp.ne.s32.totalorder %s90, %s91
    %p105 = scmp.eq.s32.totalorder %s15, 7
    %p106 = por %p104, %p105
    %p108 = scmp.ne.s32.totalorder %s91, %s107
    %p109 = scmp.eq.s32.totalorder %s15, 0
    %p110 = por %p108, %p109
    %p111 = scmp.le.s32.totalorder 1, %s9
    %p112 = scmp.lt.s32.totalorder %s9, 9
    %p113 = pnand %p111, %p112
    %p114 = pneg %p113
    // Predicated region
    $region9: #{model_forward.5} parent=5 // pred_check
      _
    $region10: #{model_forward.5} parent=5 // pred_check_branch
      %116 = sbr.rel (%p113) target = $region12
    $region11: #{model_forward.5} parent=5 // pred_region
      %s117 = ssub.s32 %s9, 1
      // Predicated region
      $region13: #{model_forward.5} parent=11 // pred_check
        %p118 = pneg %p56
      $region14: #{model_forward.5} parent=11 // pred_check_branch
        %120 = sbr.rel (%p118) target = $region16
      $region15: #{model_forward.5} parent=11 // pred_region
        _
      $region16: #{model_forward.5} parent=11 // pred_fallthru
        _
      // Predicated region
      $region17: #{model_forward.5} parent=11 // pred_check
        %p121 = pneg %p77
      $region18: #{model_forward.5} parent=11 // pred_check_branch
        %123 = sbr.rel (%p121) target = $region20
      $region19: #{model_forward.5} parent=11 // pred_region
        _
      $region20: #{model_forward.5} parent=11 // pred_fallthru
        _
    $region12: #{model_forward.5} parent=5 // pred_fallthru
      _
    %p124 = scmp.lt.s32.totalorder %s9, 8
    // Predicated region
    $region21: #{model_forward.5} parent=5 // pred_check
      %p125 = pneg %p124
    $region22: #{model_forward.5} parent=5 // pred_check_branch
      %127 = sbr.rel (%p125) target = $region24
    $region23: #{model_forward.5} parent=5 // pred_region
      // Predicated region
      $region25: #{model_forward.5} parent=23 // pred_check
        %p128 = pneg %p29
      $region26: #{model_forward.5} parent=23 // pred_check_branch
        %130 = sbr.rel (%p128) target = $region28
      $region27: #{model_forward.5} parent=23 // pred_region
        %s131 = smul.u32 128, %s9
        %p132 = scmp.lt.s32.totalorder %s131, 1023
        %s133 = scalar_select %p132, %s131, 1023
        %s134 = smul.addr %s133, 8
        %s135 = scalar_lea.vmem %s0, %s134
        %s136 = smul.u32 128, %s9
      $region28: #{model_forward.5} parent=23 // pred_fallthru
        _
    $region24: #{model_forward.5} parent=5 // pred_fallthru
      _
    %p137 = scmp.le.s32.totalorder 1, %s9
    %p138 = scmp.lt.s32.totalorder %s9, 9
    %p139 = pnand %p137, %p138
    %p140 = pneg %p139
    // Predicated region
    $region29: #{model_forward.5} parent=5 // pred_check
      _
    $region30: #{model_forward.5} parent=5 // pred_check_branch
      %142 = sbr.rel (%p139) target = $region32
    $region31: #{model_forward.5} parent=5 // pred_region
      %s143 = ssub.s32 %s9, 1
      %s144 = smul.u32 128, %s14
      %p145 = scmp.lt.s32.totalorder %s144, 1023
      %s146 = scalar_select %p145, %s144, 1023
      %s147 = smul.addr %s146, 8
      %s148 = scalar_lea.vmem %s0, %s147
      %p149 = pneg %p35
      %p150 = pneg %p32
      %p151 = pneg %p56
      %p152 = pneg %p53
      %p153 = pneg %p77
      %p154 = pneg %p74
      %p155 = pneg %p103
      %p156 = pneg %p100
      %s157 = smul.u32 32, %s14
      %p158 = scmp.lt.s32.totalorder %s157, 255
      %s159 = scalar_select %p158, %s157, 255
      %s160 = smul.addr %s159, 8
      %s161 = scalar_lea.vmem %s3, %s160
      %s162 = smul.u32 128, %s14
      %p163 = scmp.lt.s32.totalorder %s162, 1023
      %s164 = scalar_select %p163, %s162, 1023
      %s165 = smul.addr %s164, 8
      %s166 = scalar_lea.vmem %s0, %s165
      %s167 = smul.u32 128, %s14
      %s168 = smul.u32 32, %s14
      %p169 = scmp.lt.s32.totalorder %s168, 255
      %s170 = scalar_select %p169, %s168, 255
      %s171 = smul.addr %s170, 8
      %s172 = scalar_lea.vmem %s3, %s171
      %s173 = smul.u32 32, %s14
      %v174 = vld [vmem:[%s166] sm:$0xff]
      %v175 = vld [vmem:[%s166 + $0x8] sm:$0xff]
      %v176 = vld [vmem:[%s166 + $0x10] sm:$0xff]
      %v177 = vld [vmem:[%s166 + $0x18] sm:$0xff]
      %v178 = vld [vmem:[%s166 + $0x20] sm:$0xff]
      %v179 = vld [vmem:[%s166 + $0x28] sm:$0xff]
      %v180 = vld [vmem:[%s166 + $0x30] sm:$0xff]
      %v181 = vld [vmem:[%s166 + $0x38] sm:$0xff]
      %v182 = vld [vmem:[%s166 + $0x40] sm:$0xff]
      %v183 = vld [vmem:[%s166 + $0x48] sm:$0xff]
      %v184 = vld [vmem:[%s166 + $0x50] sm:$0xff]
      %v185 = vld [vmem:[%s166 + $0x58] sm:$0xff]
      %v186 = vld [vmem:[%s166 + $0x60] sm:$0xff]
      %v187 = vld [vmem:[%s166 + $0x68] sm:$0xff]
      %v188 = vld [vmem:[%s166 + $0x70] sm:$0xff]
      %v189 = vld [vmem:[%s166 + $0x78] sm:$0xff]
      %v190 = vld [vmem:[%s166 + $0x80] sm:$0xff]
      %v191 = vld [vmem:[%s166 + $0x88] sm:$0xff]
      %v192 = vld [vmem:[%s166 + $0x90] sm:$0xff]
      %v193 = vld [vmem:[%s166 + $0x98] sm:$0xff]
      %v194 = vld [vmem:[%s166 + $0xa0] sm:$0xff]
      %v195 = vld [vmem:[%s166 + $0xa8] sm:$0xff]
      %v196 = vld [vmem:[%s166 + $0xb0] sm:$0xff]
      %v197 = vld [vmem:[%s166 + $0xb8] sm:$0xff]
      %v198 = vld [vmem:[%s166 + $0xc0] sm:$0xff]
      %v199 = vld [vmem:[%s166 + $0xc8] sm:$0xff]
      %v200 = vld [vmem:[%s166 + $0xd0] sm:$0xff]
      %v201 = vld [vmem:[%s166 + $0xd8] sm:$0xff]
      %v202 = vld [vmem:[%s166 + $0xe0] sm:$0xff]
      %v203 = vld [vmem:[%s166 + $0xe8] sm:$0xff]
      %v204 = vld [vmem:[%s166 + $0xf0] sm:$0xff]
      %v205 = vld [vmem:[%s166 + $0xf8] sm:$0xff]
      %v206 = vld [vmem:[%s166 + $0x100] sm:$0xff]
      %v207 = vld [vmem:[%s166 + $0x108] sm:$0xff]
      %v208 = vld [vmem:[%s166 + $0x110] sm:$0xff]
      %v209 = vld [vmem:[%s166 + $0x118] sm:$0xff]
      %v210 = vld [vmem:[%s166 + $0x120] sm:$0xff]
      %v211 = vld [vmem:[%s166 + $0x128] sm:$0xff]
      %v212 = vld [vmem:[%s166 + $0x130] sm:$0xff]
      %v213 = vld [vmem:[%s166 + $0x138] sm:$0xff]
      %v214 = vld [vmem:[%s166 + $0x140] sm:$0xff]
      %v215 = vld [vmem:[%s166 + $0x148] sm:$0xff]
      %v216 = vld [vmem:[%s166 + $0x150] sm:$0xff]
      %v217 = vld [vmem:[%s166 + $0x158] sm:$0xff]
      %v218 = vld [vmem:[%s166 + $0x160] sm:$0xff]
      %v219 = vld [vmem:[%s166 + $0x168] sm:$0xff]
      %v220 = vld [vmem:[%s166 + $0x170] sm:$0xff]
      %v221 = vld [vmem:[%s166 + $0x178] sm:$0xff]
      %v222 = vld [vmem:[%s166 + $0x180] sm:$0xff]
      %v223 = vld [vmem:[%s166 + $0x188] sm:$0xff]
      %v224 = vld [vmem:[%s166 + $0x190] sm:$0xff]
      %v225 = vld [vmem:[%s166 + $0x198] sm:$0xff]
      %v226 = vld [vmem:[%s166 + $0x1a0] sm:$0xff]
      %v227 = vld [vmem:[%s166 + $0x1a8] sm:$0xff]
      %v228 = vld [vmem:[%s166 + $0x1b0] sm:$0xff]
      %v229 = vld [vmem:[%s166 + $0x1b8] sm:$0xff]
      %v230 = vld [vmem:[%s166 + $0x1c0] sm:$0xff]
      %v231 = vld [vmem:[%s166 + $0x1c8] sm:$0xff]
      %v232 = vld [vmem:[%s166 + $0x1d0] sm:$0xff]
      %v233 = vld [vmem:[%s166 + $0x1d8] sm:$0xff]
      %v234 = vld [vmem:[%s166 + $0x1e0] sm:$0xff]
      %v235 = vld [vmem:[%s166 + $0x1e8] sm:$0xff]
      %v236 = vld [vmem:[%s166 + $0x1f0] sm:$0xff]
      %v237 = vld [vmem:[%s166 + $0x1f8] sm:$0xff]
      %v238 = vld [vmem:[%s166 + $0x200] sm:$0xff]
      %v239 = vld [vmem:[%s166 + $0x208] sm:$0xff]
      %v240 = vld [vmem:[%s166 + $0x210] sm:$0xff]
      %v241 = vld [vmem:[%s166 + $0x218] sm:$0xff]
      %v242 = vld [vmem:[%s166 + $0x220] sm:$0xff]
      %v243 = vld [vmem:[%s166 + $0x228] sm:$0xff]
      %v244 = vld [vmem:[%s166 + $0x230] sm:$0xff]
      %v245 = vld [vmem:[%s166 + $0x238] sm:$0xff]
      %v246 = vld [vmem:[%s166 + $0x240] sm:$0xff]
      %v247 = vld [vmem:[%s166 + $0x248] sm:$0xff]
      %v248 = vld [vmem:[%s166 + $0x250] sm:$0xff]
      %v249 = vld [vmem:[%s166 + $0x258] sm:$0xff]
      %v250 = vld [vmem:[%s166 + $0x260] sm:$0xff]
      %v251 = vld [vmem:[%s166 + $0x268] sm:$0xff]
      %v252 = vld [vmem:[%s166 + $0x270] sm:$0xff]
      %v253 = vld [vmem:[%s166 + $0x278] sm:$0xff]
      %v254 = vld [vmem:[%s166 + $0x280] sm:$0xff]
      %v255 = vld [vmem:[%s166 + $0x288] sm:$0xff]
      %v256 = vld [vmem:[%s166 + $0x290] sm:$0xff]
      %v257 = vld [vmem:[%s166 + $0x298] sm:$0xff]
      %v258 = vld [vmem:[%s166 + $0x2a0] sm:$0xff]
      %v259 = vld [vmem:[%s166 + $0x2a8] sm:$0xff]
      %v260 = vld [vmem:[%s166 + $0x2b0] sm:$0xff]
      %v261 = vld [vmem:[%s166 + $0x2b8] sm:$0xff]
      %v262 = vld [vmem:[%s166 + $0x2c0] sm:$0xff]
      %v263 = vld [vmem:[%s166 + $0x2c8] sm:$0xff]
      %v264 = vld [vmem:[%s166 + $0x2d0] sm:$0xff]
      %v265 = vld [vmem:[%s166 + $0x2d8] sm:$0xff]
      %v266 = vld [vmem:[%s166 + $0x2e0] sm:$0xff]
      %v267 = vld [vmem:[%s166 + $0x2e8] sm:$0xff]
      %v268 = vld [vmem:[%s166 + $0x2f0] sm:$0xff]
      %v269 = vld [vmem:[%s166 + $0x2f8] sm:$0xff]
      %v270 = vld [vmem:[%s166 + $0x300] sm:$0xff]
      %v271 = vld [vmem:[%s166 + $0x308] sm:$0xff]
      %v272 = vld [vmem:[%s166 + $0x310] sm:$0xff]
      %v273 = vld [vmem:[%s166 + $0x318] sm:$0xff]
      %v274 = vld [vmem:[%s166 + $0x320] sm:$0xff]
      %v275 = vld [vmem:[%s166 + $0x328] sm:$0xff]
      %v276 = vld [vmem:[%s166 + $0x330] sm:$0xff]
      %v277 = vld [vmem:[%s166 + $0x338] sm:$0xff]
      %v278 = vld [vmem:[%s166 + $0x340] sm:$0xff]
      %v279 = vld [vmem:[%s166 + $0x348] sm:$0xff]
      %v280 = vld [vmem:[%s166 + $0x350] sm:$0xff]
      %v281 = vld [vmem:[%s166 + $0x358] sm:$0xff]
      %v282 = vld [vmem:[%s166 + $0x360] sm:$0xff]
      %v283 = vld [vmem:[%s166 + $0x368] sm:$0xff]
      %v284 = vld [vmem:[%s166 + $0x370] sm:$0xff]
      %v285 = vld [vmem:[%s166 + $0x378] sm:$0xff]
      %v286 = vld [vmem:[%s166 + $0x380] sm:$0xff]
      %v287 = vld [vmem:[%s166 + $0x388] sm:$0xff]
      %v288 = vld [vmem:[%s166 + $0x390] sm:$0xff]
      %v289 = vld [vmem:[%s166 + $0x398] sm:$0xff]
      %v290 = vld [vmem:[%s166 + $0x3a0] sm:$0xff]
      %v291 = vld [vmem:[%s166 + $0x3a8] sm:$0xff]
      %v292 = vld [vmem:[%s166 + $0x3b0] sm:$0xff]
      %v293 = vld [vmem:[%s166 + $0x3b8] sm:$0xff]
      %v294 = vld [vmem:[%s166 + $0x3c0] sm:$0xff]
      %v295 = vld [vmem:[%s166 + $0x3c8] sm:$0xff]
      %v296 = vld [vmem:[%s166 + $0x3d0] sm:$0xff]
      %v297 = vld [vmem:[%s166 + $0x3d8] sm:$0xff]
      %v298 = vld [vmem:[%s166 + $0x3e0] sm:$0xff]
      %v299 = vld [vmem:[%s166 + $0x3e8] sm:$0xff]
      %v300 = vld [vmem:[%s166 + $0x3f0] sm:$0xff]
      %v301 = vld [vmem:[%s166 + $0x3f8] sm:$0xff]
      %v302 = vld [vmem:[%s1] sm:$0xff]
      %v303 = vld [vmem:[%s1 + $0x8] sm:$0xff]
      %v304 = vld [vmem:[%s1 + $0x10] sm:$0xff]
      %v305 = vld [vmem:[%s1 + $0x18] sm:$0x7]
      %v306 = vld [vmem:[%s2] sm:$0x1]
      %v308 = vlaneseq
      %v309 = vshrl.u32 %v308, 7
      %v310 = vsub.s32 0, %v309
      %v311 = vrot.slane %v306, %v310
      %vm313 = vcmask 220160
      %v315 = vsel %vm313, %v174, 0
      %v318 = vsel %vm313, %v175, 0
      %v321 = vsel %vm313, %v176, 0
      %v324 = vsel %vm313, %v177, 0
      %v327 = vsel %vm313, %v178, 0
      %v330 = vsel %vm313, %v179, 0
      %v333 = vsel %vm313, %v180, 0
      %v336 = vsel %vm313, %v181, 0
      %v339 = vsel %vm313, %v182, 0
      %v342 = vsel %vm313, %v183, 0
      %v345 = vsel %vm313, %v184, 0
      %v348 = vsel %vm313, %v185, 0
      %v351 = vsel %vm313, %v186, 0
      %v354 = vsel %vm313, %v187, 0
      %v357 = vsel %vm313, %v188, 0
      %v360 = vsel %vm313, %v189, 0
      %v363 = vsel %vm313, %v190, 0
      %v366 = vsel %vm313, %v191, 0
      %v369 = vsel %vm313, %v192, 0
      %v372 = vsel %vm313, %v193, 0
      %v375 = vsel %vm313, %v194, 0
      %v378 = vsel %vm313, %v195, 0
      %v381 = vsel %vm313, %v196, 0
      %v384 = vsel %vm313, %v197, 0
      %v387 = vsel %vm313, %v198, 0
      %v390 = vsel %vm313, %v199, 0
      %v393 = vsel %vm313, %v200, 0
      %v396 = vsel %vm313, %v201, 0
      %v399 = vsel %vm313, %v202, 0
      %v402 = vsel %vm313, %v203, 0
      %v405 = vsel %vm313, %v204, 0
      %v408 = vsel %vm313, %v205, 0
      %v411 = vsel %vm313, %v206, 0
      %v414 = vsel %vm313, %v207, 0
      %v417 = vsel %vm313, %v208, 0
      %v420 = vsel %vm313, %v209, 0
      %v423 = vsel %vm313, %v210, 0
      %v426 = vsel %vm313, %v211, 0
      %v429 = vsel %vm313, %v212, 0
      %v432 = vsel %vm313, %v213, 0
      %v435 = vsel %vm313, %v214, 0
      %v438 = vsel %vm313, %v215, 0
      %v441 = vsel %vm313, %v216, 0
      %v444 = vsel %vm313, %v217, 0
      %v447 = vsel %vm313, %v218, 0
      %v450 = vsel %vm313, %v219, 0
      %v453 = vsel %vm313, %v220, 0
      %v456 = vsel %vm313, %v221, 0
      %v459 = vsel %vm313, %v222, 0
      %v462 = vsel %vm313, %v223, 0
      %v465 = vsel %vm313, %v224, 0
      %v468 = vsel %vm313, %v225, 0
      %v471 = vsel %vm313, %v226, 0
      %v474 = vsel %vm313, %v227, 0
      %v477 = vsel %vm313, %v228, 0
      %v480 = vsel %vm313, %v229, 0
      %v483 = vsel %vm313, %v230, 0
      %v486 = vsel %vm313, %v231, 0
      %v489 = vsel %vm313, %v232, 0
      %v492 = vsel %vm313, %v233, 0
      %v495 = vsel %vm313, %v234, 0
      %v498 = vsel %vm313, %v235, 0
      %v501 = vsel %vm313, %v236, 0
      %v504 = vsel %vm313, %v237, 0
      %v507 = vsel %vm313, %v238, 0
      %v510 = vsel %vm313, %v239, 0
      %v513 = vsel %vm313, %v240, 0
      %v516 = vsel %vm313, %v241, 0
      %v519 = vsel %vm313, %v242, 0
      %v522 = vsel %vm313, %v243, 0
      %v525 = vsel %vm313, %v244, 0
      %v528 = vsel %vm313, %v245, 0
      %v531 = vsel %vm313, %v246, 0
      %v534 = vsel %vm313, %v247, 0
      %v537 = vsel %vm313, %v248, 0
      %v540 = vsel %vm313, %v249, 0
      %v543 = vsel %vm313, %v250, 0
      %v546 = vsel %vm313, %v251, 0
      %v549 = vsel %vm313, %v252, 0
      %v552 = vsel %vm313, %v253, 0
      %v555 = vsel %vm313, %v254, 0
      %v558 = vsel %vm313, %v255, 0
      %v561 = vsel %vm313, %v256, 0
      %v564 = vsel %vm313, %v257, 0
      %v567 = vsel %vm313, %v258, 0
      %v570 = vsel %vm313, %v259, 0
      %v573 = vsel %vm313, %v260, 0
      %v576 = vsel %vm313, %v261, 0
      %v579 = vsel %vm313, %v262, 0
      %v582 = vsel %vm313, %v263, 0
      %v585 = vsel %vm313, %v264, 0
      %v588 = vsel %vm313, %v265, 0
      %v591 = vsel %vm313, %v266, 0
      %v594 = vsel %vm313, %v267, 0
      %v597 = vsel %vm313, %v268, 0
      %v600 = vsel %vm313, %v269, 0
      %v603 = vsel %vm313, %v270, 0
      %v606 = vsel %vm313, %v271, 0
      %v609 = vsel %vm313, %v272, 0
      %v612 = vsel %vm313, %v273, 0
      %v615 = vsel %vm313, %v274, 0
      %v618 = vsel %vm313, %v275, 0
      %v621 = vsel %vm313, %v276, 0
      %v624 = vsel %vm313, %v277, 0
      %v627 = vsel %vm313, %v278, 0
      %v630 = vsel %vm313, %v279, 0
      %v633 = vsel %vm313, %v280, 0
      %v636 = vsel %vm313, %v281, 0
      %v639 = vsel %vm313, %v282, 0
      %v642 = vsel %vm313, %v283, 0
      %v645 = vsel %vm313, %v284, 0
      %v648 = vsel %vm313, %v285, 0
      %v651 = vsel %vm313, %v286, 0
      %v654 = vsel %vm313, %v287, 0
      %v657 = vsel %vm313, %v288, 0
      %v660 = vsel %vm313, %v289, 0
      %v663 = vsel %vm313, %v290, 0
      %v666 = vsel %vm313, %v291, 0
      %v669 = vsel %vm313, %v292, 0
      %v672 = vsel %vm313, %v293, 0
      %v675 = vsel %vm313, %v294, 0
      %v678 = vsel %vm313, %v295, 0
      %v681 = vsel %vm313, %v296, 0
      %v684 = vsel %vm313, %v297, 0
      %v687 = vsel %vm313, %v298, 0
      %v690 = vsel %vm313, %v299, 0
      %v693 = vsel %vm313, %v300, 0
      %v696 = vsel %vm313, %v301, 0
      %vm698 = vcmask 1042432
      %v700 = vsel %vm698, %v305, 0
      %702 = vmatprep.subr.mxu0 0.0
      %703 = vmatpush1.msra.mxu0 %v302
      %704 = vmatprep.subr.mxu0 0.0
      %705 = vmatpush1.msra.mxu0 %v303
      %706 = vmatprep.subr.mxu0 0.0
      %707 = vmatpush1.msra.mxu0 %v304
      %708 = vmatprep.subr.mxu0 0.0
      %709 = vmatpush1.msra.mxu0 %v700
      %710 = vmatprep.subr.mxu0 0.0
      %711 = vmatpush1.msra.mxu0 0.0
      %712 = vmatprep.subr.mxu0 0.0
      %713 = vmatpush1.msra.mxu0 0.0
      %714 = vmatprep.subr.mxu0 0.0
      %715 = vmatpush1.msra.mxu0 0.0
      %716 = vmatprep.subr.mxu0 0.0
      %717 = vmatpush1.msra.mxu0 0.0
      %718 = vmatprep.subr.mxu0 0.0
      %719 = vmatpush1.msra.mxu0 0.0
      %720 = vmatprep.subr.mxu0 0.0
      %721 = vmatpush1.msra.mxu0 0.0
      %722 = vmatprep.subr.mxu0 0.0
      %723 = vmatpush1.msra.mxu0 0.0
      %724 = vmatprep.subr.mxu0 0.0
      %725 = vmatpush1.msra.mxu0 0.0
      %726 = vmatprep.subr.mxu0 0.0
      %727 = vmatpush1.msra.mxu0 0.0
      %728 = vmatprep.subr.mxu0 0.0
      %729 = vmatpush1.msra.mxu0 0.0
      %730 = vmatprep.subr.mxu0 0.0
      %731 = vmatpush1.msra.mxu0 0.0
      %732 = vmatprep.subr.mxu0 0.0
      %733 = vmatpush1.msra.mxu0 0.0
      %734 = vmatprep.subr.mxu0 0.0
      %735 = vmatpush1.msra.mxu0 0.0
      %736 = vmatprep.subr.mxu0 0.0
      %737 = vmatpush1.msra.mxu0 0.0
      %738 = vmatprep.subr.mxu0 0.0
      %739 = vmatpush1.msra.mxu0 0.0
      %740 = vmatprep.subr.mxu0 0.0
      %741 = vmatpush1.msra.mxu0 0.0
      %742 = vmatprep.subr.mxu0 0.0
      %743 = vmatpush1.msra.mxu0 0.0
      %744 = vmatprep.subr.mxu0 0.0
      %745 = vmatpush1.msra.mxu0 0.0
      %746 = vmatprep.subr.mxu0 0.0
      %747 = vmatpush1.msra.mxu0 0.0
      %748 = vmatprep.subr.mxu0 0.0
      %749 = vmatpush1.msra.mxu0 0.0
      %750 = vmatprep.subr.mxu0 0.0
      %751 = vmatpush1.msra.mxu0 0.0
      %752 = vmatprep.subr.mxu0 0.0
      %753 = vmatpush1.msra.mxu0 0.0
      %754 = vmatprep.subr.mxu0 0.0
      %755 = vmatpush1.msra.mxu0 0.0
      %756 = vmatprep.subr.mxu0 0.0
      %757 = vmatpush1.msra.mxu0 0.0
      %758 = vmatprep.subr.mxu0 0.0
      %759 = vmatpush1.msra.mxu0 0.0
      %760 = vmatprep.subr.mxu0 0.0
      %761 = vmatpush1.msra.mxu0 0.0
      %762 = vmatprep.subr.mxu0 0.0
      %763 = vmatpush1.msra.mxu0 0.0
      %764 = vmatprep.subr.mxu0 0.0
      %765 = vmatpush1.msra.mxu0 0.0
      %766 = vmatprep.mubr.f32.mxu0 0.0
      %767 = vmatmul.mubr.f32.gmra.mrb[0].mxu0 %v315
      %v768 = vpop.f32.mrb[0].mxu0
      %v769 = vadd.f32 %v311, %v768
      %v770 = vpop.f32.mrb[0].mxu0
      %771 = vmatprep.mubr.f32.mxu0 0.0
      %772 = vmatmul.mubr.f32.gmra.mrb[0].mxu0 %v318
      %v773 = vpop.f32.mrb[0].mxu0
      %v774 = vadd.f32 %v311, %v773
      %v775 = vpop.f32.mrb[0].mxu0
      %776 = vmatprep.mubr.f32.mxu0 0.0
      %777 = vmatmul.mubr.f32.gmra.mrb[0].mxu0 %v321
      %v778 = vpop.f32.mrb[0].mxu0
      %v779 = vadd.f32 %v311, %v778
      %v780 = vpop.f32.mrb[0].mxu0
      %781 = vmatprep.mubr.f32.mxu0 0.0
      %782 = vmatmul.mubr.f32.gmra.mrb[0].mxu0 %v324
      %v783 = vpop.f32.mrb[0].mxu0
      %v784 = vadd.f32 %v311, %v783
      %v785 = vpop.f32.mrb[0].mxu0
      %786 = vmatprep.mubr.f32.mxu0 0.0
      %787 = vmatmul.mubr.f32.gmra.mrb[0].mxu0 %v327
      %v788 = vpop.f32.mrb[0].mxu0
      %v789 = vadd.f32 %v311, %v788
      %v790 = vpop.f32.mrb[0].mxu0
      %791 = vmatprep.mubr.f32.mxu0 0.0
      %792 = vmatmul.mubr.f32.gmra.mrb[0].mxu0 %v330
      %v793 = vpop.f32.mrb[0].mxu0
      %v794 = vadd.f32 %v311, %v793
      %v795 = vpop.f32.mrb[0].mxu0
      %796 = vmatprep.mubr.f32.mxu0 0.0
      %797 = vmatmul.mubr.f32.gmra.mrb[0].mxu0 %v333
      %v798 = vpop.f32.mrb[0].mxu0
      %v799 = vadd.f32 %v311, %v798
      %v800 = vpop.f32.mrb[0].mxu0
      %801 = vmatprep.mubr.f32.mxu0 0.0
      %802 = vmatmul.mubr.f32.gmra.mrb[0].mxu0 %v336
      %v803 = vpop.f32.mrb[0].mxu0
      %v804 = vadd.f32 %v311, %v803
      %v805 = vpop.f32.mrb[0].mxu0
      %806 = vmatprep.mubr.f32.mxu0 0.0
      %807 = vmatmul.mubr.f32.gmra.mrb[0].mxu0 %v339
      %v808 = vpop.f32.mrb[0].mxu0
      %v809 = vadd.f32 %v311, %v808
      %v810 = vpop.f32.mrb[0].mxu0
      %811 = vmatprep.mubr.f32.mxu0 0.0
      %812 = vmatmul.mubr.f32.gmra.mrb[0].mxu0 %v342
      %v813 = vpop.f32.mrb[0].mxu0
      %v814 = vadd.f32 %v311, %v813
      %v815 = vpop.f32.mrb[0].mxu0
      %816 = vmatprep.mubr.f32.mxu0 0.0
      %817 = vmatmul.mubr.f32.gmra.mrb[0].mxu0 %v345
      %v818 = vpop.f32.mrb[0].mxu0
      %v819 = vadd.f32 %v311, %v818
      %v820 = vpop.f32.mrb[0].mxu0
      %821 = vmatprep.mubr.f32.mxu0 0.0
      %822 = vmatmul.mubr.f32.gmra.mrb[0].mxu0 %v348
      %v823 = vpop.f32.mrb[0].mxu0
      %v824 = vadd.f32 %v311, %v823
      %v825 = vpop.f32.mrb[0].mxu0
      %826 = vmatprep.mubr.f32.mxu0 0.0
      %827 = vmatmul.mubr.f32.gmra.mrb[0].mxu0 %v351
      %v828 = vpop.f32.mrb[0].mxu0
      %v829 = vadd.f32 %v311, %v828
      %v830 = vpop.f32.mrb[0].mxu0
      %831 = vmatprep.mubr.f32.mxu0 0.0
      %832 = vmatmul.mubr.f32.gmra.mrb[0].mxu0 %v354
      %v833 = vpop.f32.mrb[0].mxu0
      %v834 = vadd.f32 %v311, %v833
      %v835 = vpop.f32.mrb[0].mxu0
      %836 = vmatprep.mubr.f32.mxu0 0.0
      %837 = vmatmul.mubr.f32.gmra.mrb[0].mxu0 %v357
      %v838 = vpop.f32.mrb[0].mxu0
      %v839 = vadd.f32 %v311, %v838
      %v840 = vpop.f32.mrb[0].mxu0
      %841 = vmatprep.mubr.f32.mxu0 0.0
      %842 = vmatmul.mubr.f32.gmra.mrb[0].mxu0 %v360
      %v843 = vpop.f32.mrb[0].mxu0
      %v844 = vadd.f32 %v311, %v843
      %v845 = vpop.f32.mrb[0].mxu0
      %846 = vmatprep.mubr.f32.mxu0 0.0
      %847 = vmatmul.mubr.f32.gmra.mrb[0].mxu0 %v363
      %v848 = vpop.f32.mrb[0].mxu0
      %v849 = vadd.f32 %v311, %v848
      %v850 = vpop.f32.mrb[0].mxu0
      %851 = vmatprep.mubr.f32.mxu0 0.0
      %852 = vmatmul.mubr.f32.gmra.mrb[0].mxu0 %v366
      %v853 = vpop.f32.mrb[0].mxu0
      %v854 = vadd.f32 %v311, %v853
      %v855 = vpop.f32.mrb[0].mxu0
      %856 = vmatprep.mubr.f32.mxu0 0.0
      %857 = vmatmul.mubr.f32.gmra.mrb[0].mxu0 %v369
      %v858 = vpop.f32.mrb[0].mxu0
      %v859 = vadd.f32 %v311, %v858
      %v860 = vpop.f32.mrb[0].mxu0
      %861 = vmatprep.mubr.f32.mxu0 0.0
      %862 = vmatmul.mubr.f32.gmra.mrb[0].mxu0 %v372
      %v863 = vpop.f32.mrb[0].mxu0
      %v864 = vadd.f32 %v311, %v863
      %v865 = vpop.f32.mrb[0].mxu0
      %866 = vmatprep.mubr.f32.mxu0 0.0
      %867 = vmatmul.mubr.f32.gmra.mrb[0].mxu0 %v375
      %v868 = vpop.f32.mrb[0].mxu0
      %v869 = vadd.f32 %v311, %v868
      %v870 = vpop.f32.mrb[0].mxu0
      %871 = vmatprep.mubr.f32.mxu0 0.0
      %872 = vmatmul.mubr.f32.gmra.mrb[0].mxu0 %v378
      %v873 = vpop.f32.mrb[0].mxu0
      %v874 = vadd.f32 %v311, %v873
      %v875 = vpop.f32.mrb[0].mxu0
      %876 = vmatprep.mubr.f32.mxu0 0.0
      %877 = vmatmul.mubr.f32.gmra.mrb[0].mxu0 %v381
      %v878 = vpop.f32.mrb[0].mxu0
      %v879 = vadd.f32 %v311, %v878
      %v880 = vpop.f32.mrb[0].mxu0
      %881 = vmatprep.mubr.f32.mxu0 0.0
      %882 = vmatmul.mubr.f32.gmra.mrb[0].mxu0 %v384
      %v883 = vpop.f32.mrb[0].mxu0
      %v884 = vadd.f32 %v311, %v883
      %v885 = vpop.f32.mrb[0].mxu0
      %886 = vmatprep.mubr.f32.mxu0 0.0
      %887 = vmatmul.mubr.f32.gmra.mrb[0].mxu0 %v387
      %v888 = vpop.f32.mrb[0].mxu0
      %v889 = vadd.f32 %v311, %v888
      %v890 = vpop.f32.mrb[0].mxu0
      %891 = vmatprep.mubr.f32.mxu0 0.0
      %892 = vmatmul.mubr.f32.gmra.mrb[0].mxu0 %v390
      %v893 = vpop.f32.mrb[0].mxu0
      %v894 = vadd.f32 %v311, %v893
      %v895 = vpop.f32.mrb[0].mxu0
      %896 = vmatprep.mubr.f32.mxu0 0.0
      %897 = vmatmul.mubr.f32.gmra.mrb[0].mxu0 %v393
      %v898 = vpop.f32.mrb[0].mxu0
      %v899 = vadd.f32 %v311, %v898
      %v900 = vpop.f32.mrb[0].mxu0
      %901 = vmatprep.mubr.f32.mxu0 0.0
      %902 = vmatmul.mubr.f32.gmra.mrb[0].mxu0 %v396
      %v903 = vpop.f32.mrb[0].mxu0
      %v904 = vadd.f32 %v311, %v903
      %v905 = vpop.f32.mrb[0].mxu0
      %906 = vmatprep.mubr.f32.mxu0 0.0
      %907 = vmatmul.mubr.f32.gmra.mrb[0].mxu0 %v399
      %v908 = vpop.f32.mrb[0].mxu0
      %v909 = vadd.f32 %v311, %v908
      %v910 = vpop.f32.mrb[0].mxu0
      %911 = vmatprep.mubr.f32.mxu0 0.0
      %912 = vmatmul.mubr.f32.gmra.mrb[0].mxu0 %v402
      %v913 = vpop.f32.mrb[0].mxu0
      %v914 = vadd.f32 %v311, %v913
      %v915 = vpop.f32.mrb[0].mxu0
      %916 = vmatprep.mubr.f32.mxu0 0.0
      %917 = vmatmul.mubr.f32.gmra.mrb[0].mxu0 %v405
      %v918 = vpop.f32.mrb[0].mxu0
      %v919 = vadd.f32 %v311, %v918
      %v920 = vpop.f32.mrb[0].mxu0
      %921 = vmatprep.mubr.f32.mxu0 0.0
      %922 = vmatmul.mubr.f32.gmra.mrb[0].mxu0 %v408
      %v923 = vpop.f32.mrb[0].mxu0
      %v924 = vadd.f32 %v311, %v923
      %v925 = vpop.f32.mrb[0].mxu0
      %926 = vmatprep.mubr.f32.mxu0 0.0
      %927 = vmatmul.mubr.f32.gmra.mrb[0].mxu0 %v411
      %v928 = vpop.f32.mrb[0].mxu0
      %v929 = vadd.f32 %v311, %v928
      %v930 = vpop.f32.mrb[0].mxu0
      %931 = vmatprep.mubr.f32.mxu0 0.0
      %932 = vmatmul.mubr.f32.gmra.mrb[0].mxu0 %v414
      %v933 = vpop.f32.mrb[0].mxu0
      %v934 = vadd.f32 %v311, %v933
      %v935 = vpop.f32.mrb[0].mxu0
      %936 = vmatprep.mubr.f32.mxu0 0.0
      %937 = vmatmul.mubr.f32.gmra.mrb[0].mxu0 %v417
      %v938 = vpop.f32.mrb[0].mxu0
      %v939 = vadd.f32 %v311, %v938
      %v940 = vpop.f32.mrb[0].mxu0
      %941 = vmatprep.mubr.f32.mxu0 0.0
      %942 = vmatmul.mubr.f32.gmra.mrb[0].mxu0 %v420
      %v943 = vpop.f32.mrb[0].mxu0
      %v944 = vadd.f32 %v311, %v943
      %v945 = vpop.f32.mrb[0].mxu0
      %946 = vmatprep.mubr.f32.mxu0 0.0
      %947 = vmatmul.mubr.f32.gmra.mrb[0].mxu0 %v423
      %v948 = vpop.f32.mrb[0].mxu0
      %v949 = vadd.f32 %v311, %v948
      %v950 = vpop.f32.mrb[0].mxu0
      %951 = vmatprep.mubr.f32.mxu0 0.0
      %952 = vmatmul.mubr.f32.gmra.mrb[0].mxu0 %v426
      %v953 = vpop.f32.mrb[0].mxu0
      %v954 = vadd.f32 %v311, %v953
      %v955 = vpop.f32.mrb[0].mxu0
      %956 = vmatprep.mubr.f32.mxu0 0.0
      %957 = vmatmul.mubr.f32.gmra.mrb[0].mxu0 %v429
      %v958 = vpop.f32.mrb[0].mxu0
      %v959 = vadd.f32 %v311, %v958
      %v960 = vpop.f32.mrb[0].mxu0
      %961 = vmatprep.mubr.f32.mxu0 0.0
      %962 = vmatmul.mubr.f32.gmra.mrb[0].mxu0 %v432
      %v963 = vpop.f32.mrb[0].mxu0
      %v964 = vadd.f32 %v311, %v963
      %v965 = vpop.f32.mrb[0].mxu0
      %966 = vmatprep.mubr.f32.mxu0 0.0
      %967 = vmatmul.mubr.f32.gmra.mrb[0].mxu0 %v435
      %v968 = vpop.f32.mrb[0].mxu0
      %v969 = vadd.f32 %v311, %v968
      %v970 = vpop.f32.mrb[0].mxu0
      %971 = vmatprep.mubr.f32.mxu0 0.0
      %972 = vmatmul.mubr.f32.gmra.mrb[0].mxu0 %v438
      %v973 = vpop.f32.mrb[0].mxu0
      %v974 = vadd.f32 %v311, %v973
      %v975 = vpop.f32.mrb[0].mxu0
      %976 = vmatprep.mubr.f32.mxu0 0.0
      %977 = vmatmul.mubr.f32.gmra.mrb[0].mxu0 %v441
      %v978 = vpop.f32.mrb[0].mxu0
      %v979 = vadd.f32 %v311, %v978
      %v980 = vpop.f32.mrb[0].mxu0
      %981 = vmatprep.mubr.f32.mxu0 0.0
      %982 = vmatmul.mubr.f32.gmra.mrb[0].mxu0 %v444
      %v983 = vpop.f32.mrb[0].mxu0
      %v984 = vadd.f32 %v311, %v983
      %v985 = vpop.f32.mrb[0].mxu0
      %986 = vmatprep.mubr.f32.mxu0 0.0
      %987 = vmatmul.mubr.f32.gmra.mrb[0].mxu0 %v447
      %v988 = vpop.f32.mrb[0].mxu0
      %v989 = vadd.f32 %v311, %v988
      %v990 = vpop.f32.mrb[0].mxu0
      %991 = vmatprep.mubr.f32.mxu0 0.0
      %992 = vmatmul.mubr.f32.gmra.mrb[0].mxu0 %v450
      %v993 = vpop.f32.mrb[0].mxu0
      %v994 = vadd.f32 %v311, %v993
      %v995 = vpop.f32.mrb[0].mxu0
      %996 = vmatprep.mubr.f32.mxu0 0.0
      %997 = vmatmul.mubr.f32.gmra.mrb[0].mxu0 %v453
      %v998 = vpop.f32.mrb[0].mxu0
      %v999 = vadd.f32 %v311, %v998
      %v1000 = vpop.f32.mrb[0].mxu0
      %1001 = vmatprep.mubr.f32.mxu0 0.0
      %1002 = vmatmul.mubr.f32.gmra.mrb[0].mxu0 %v456
      %v1003 = vpop.f32.mrb[0].mxu0
      %v1004 = vadd.f32 %v311, %v1003
      %v1005 = vpop.f32.mrb[0].mxu0
      %1006 = vmatprep.mubr.f32.mxu0 0.0
      %1007 = vmatmul.mubr.f32.gmra.mrb[0].mxu0 %v459
      %v1008 = vpop.f32.mrb[0].mxu0
      %v1009 = vadd.f32 %v311, %v1008
      %v1010 = vpop.f32.mrb[0].mxu0
      %1011 = vmatprep.mubr.f32.mxu0 0.0
      %1012 = vmatmul.mubr.f32.gmra.mrb[0].mxu0 %v462
      %v1013 = vpop.f32.mrb[0].mxu0
      %v1014 = vadd.f32 %v311, %v1013
      %v1015 = vpop.f32.mrb[0].mxu0
      %1016 = vmatprep.mubr.f32.mxu0 0.0
      %1017 = vmatmul.mubr.f32.gmra.mrb[0].mxu0 %v465
      %v1018 = vpop.f32.mrb[0].mxu0
      %v1019 = vadd.f32 %v311, %v1018
      %v1020 = vpop.f32.mrb[0].mxu0
      %1021 = vmatprep.mubr.f32.mxu0 0.0
      %1022 = vmatmul.mubr.f32.gmra.mrb[0].mxu0 %v468
      %v1023 = vpop.f32.mrb[0].mxu0
      %v1024 = vadd.f32 %v311, %v1023
      %v1025 = vpop.f32.mrb[0].mxu0
      %1026 = vmatprep.mubr.f32.mxu0 0.0
      %1027 = vmatmul.mubr.f32.gmra.mrb[0].mxu0 %v471
      %v1028 = vpop.f32.mrb[0].mxu0
      %v1029 = vadd.f32 %v311, %v1028
      %v1030 = vpop.f32.mrb[0].mxu0
      %1031 = vmatprep.mubr.f32.mxu0 0.0
      %1032 = vmatmul.mubr.f32.gmra.mrb[0].mxu0 %v474
      %v1033 = vpop.f32.mrb[0].mxu0
      %v1034 = vadd.f32 %v311, %v1033
      %v1035 = vpop.f32.mrb[0].mxu0
      %1036 = vmatprep.mubr.f32.mxu0 0.0
      %1037 = vmatmul.mubr.f32.gmra.mrb[0].mxu0 %v477
      %v1038 = vpop.f32.mrb[0].mxu0
      %v1039 = vadd.f32 %v311, %v1038
      %v1040 = vpop.f32.mrb[0].mxu0
      %1041 = vmatprep.mubr.f32.mxu0 0.0
      %1042 = vmatmul.mubr.f32.gmra.mrb[0].mxu0 %v480
      %v1043 = vpop.f32.mrb[0].mxu0
      %v1044 = vadd.f32 %v311, %v1043
      %v1045 = vpop.f32.mrb[0].mxu0
      %1046 = vmatprep.mubr.f32.mxu0 0.0
      %1047 = vmatmul.mubr.f32.gmra.mrb[0].mxu0 %v483
      %v1048 = vpop.f32.mrb[0].mxu0
      %v1049 = vadd.f32 %v311, %v1048
      %v1050 = vpop.f32.mrb[0].mxu0
      %1051 = vmatprep.mubr.f32.mxu0 0.0
      %1052 = vmatmul.mubr.f32.gmra.mrb[0].mxu0 %v486
      %v1053 = vpop.f32.mrb[0].mxu0
      %v1054 = vadd.f32 %v311, %v1053
      %v1055 = vpop.f32.mrb[0].mxu0
      %1056 = vmatprep.mubr.f32.mxu0 0.0
      %1057 = vmatmul.mubr.f32.gmra.mrb[0].mxu0 %v489
      %v1058 = vpop.f32.mrb[0].mxu0
      %v1059 = vadd.f32 %v311, %v1058
      %v1060 = vpop.f32.mrb[0].mxu0
      %1061 = vmatprep.mubr.f32.mxu0 0.0
      %1062 = vmatmul.mubr.f32.gmra.mrb[0].mxu0 %v492
      %v1063 = vpop.f32.mrb[0].mxu0
      %v1064 = vadd.f32 %v311, %v1063
      %v1065 = vpop.f32.mrb[0].mxu0
      %1066 = vmatprep.mubr.f32.mxu0 0.0
      %1067 = vmatmul.mubr.f32.gmra.mrb[0].mxu0 %v495
      %v1068 = vpop.f32.mrb[0].mxu0
      %v1069 = vadd.f32 %v311, %v1068
      %v1070 = vpop.f32.mrb[0].mxu0
      %1071 = vmatprep.mubr.f32.mxu0 0.0
      %1072 = vmatmul.mubr.f32.gmra.mrb[0].mxu0 %v498
      %v1073 = vpop.f32.mrb[0].mxu0
      %v1074 = vadd.f32 %v311, %v1073
      %v1075 = vpop.f32.mrb[0].mxu0
      %1076 = vmatprep.mubr.f32.mxu0 0.0
      %1077 = vmatmul.mubr.f32.gmra.mrb[0].mxu0 %v501
      %v1078 = vpop.f32.mrb[0].mxu0
      %v1079 = vadd.f32 %v311, %v1078
      %v1080 = vpop.f32.mrb[0].mxu0
      %1081 = vmatprep.mubr.f32.mxu0 0.0
      %1082 = vmatmul.mubr.f32.gmra.mrb[0].mxu0 %v504
      %v1083 = vpop.f32.mrb[0].mxu0
      %v1084 = vadd.f32 %v311, %v1083
      %v1085 = vpop.f32.mrb[0].mxu0
      %1086 = vmatprep.mubr.f32.mxu0 0.0
      %1087 = vmatmul.mubr.f32.gmra.mrb[0].mxu0 %v507
      %v1088 = vpop.f32.mrb[0].mxu0
      %v1089 = vadd.f32 %v311, %v1088
      %v1090 = vpop.f32.mrb[0].mxu0
      %1091 = vmatprep.mubr.f32.mxu0 0.0
      %1092 = vmatmul.mubr.f32.gmra.mrb[0].mxu0 %v510
      %v1093 = vpop.f32.mrb[0].mxu0
      %v1094 = vadd.f32 %v311, %v1093
      %v1095 = vpop.f32.mrb[0].mxu0
      %1096 = vmatprep.mubr.f32.mxu0 0.0
      %1097 = vmatmul.mubr.f32.gmra.mrb[0].mxu0 %v513
      %v1098 = vpop.f32.mrb[0].mxu0
      %v1099 = vadd.f32 %v311, %v1098
      %v1100 = vpop.f32.mrb[0].mxu0
      %1101 = vmatprep.mubr.f32.mxu0 0.0
      %1102 = vmatmul.mubr.f32.gmra.mrb[0].mxu0 %v516
      %v1103 = vpop.f32.mrb[0].mxu0
      %v1104 = vadd.f32 %v311, %v1103
      %v1105 = vpop.f32.mrb[0].mxu0
      %1106 = vmatprep.mubr.f32.mxu0 0.0
      %1107 = vmatmul.mubr.f32.gmra.mrb[0].mxu0 %v519
      %v1108 = vpop.f32.mrb[0].mxu0
      %v1109 = vadd.f32 %v311, %v1108
      %v1110 = vpop.f32.mrb[0].mxu0
      %1111 = vmatprep.mubr.f32.mxu0 0.0
      %1112 = vmatmul.mubr.f32.gmra.mrb[0].mxu0 %v522
      %v1113 = vpop.f32.mrb[0].mxu0
      %v1114 = vadd.f32 %v311, %v1113
      %v1115 = vpop.f32.mrb[0].mxu0
      %1116 = vmatprep.mubr.f32.mxu0 0.0
      %1117 = vmatmul.mubr.f32.gmra.mrb[0].mxu0 %v525
      %v1118 = vpop.f32.mrb[0].mxu0
      %v1119 = vadd.f32 %v311, %v1118
      %v1120 = vpop.f32.mrb[0].mxu0
      %1121 = vmatprep.mubr.f32.mxu0 0.0
      %1122 = vmatmul.mubr.f32.gmra.mrb[0].mxu0 %v528
      %v1123 = vpop.f32.mrb[0].mxu0
      %v1124 = vadd.f32 %v311, %v1123
      %v1125 = vpop.f32.mrb[0].mxu0
      %1126 = vmatprep.mubr.f32.mxu0 0.0
      %1127 = vmatmul.mubr.f32.gmra.mrb[0].mxu0 %v531
      %v1128 = vpop.f32.mrb[0].mxu0
      %v1129 = vadd.f32 %v311, %v1128
      %v1130 = vpop.f32.mrb[0].mxu0
      %1131 = vmatprep.mubr.f32.mxu0 0.0
      %1132 = vmatmul.mubr.f32.gmra.mrb[0].mxu0 %v534
      %v1133 = vpop.f32.mrb[0].mxu0
      %v1134 = vadd.f32 %v311, %v1133
      %v1135 = vpop.f32.mrb[0].mxu0
      %1136 = vmatprep.mubr.f32.mxu0 0.0
      %1137 = vmatmul.mubr.f32.gmra.mrb[0].mxu0 %v537
      %v1138 = vpop.f32.mrb[0].mxu0
      %v1139 = vadd.f32 %v311, %v1138
      %v1140 = vpop.f32.mrb[0].mxu0
      %1141 = vmatprep.mubr.f32.mxu0 0.0
      %1142 = vmatmul.mubr.f32.gmra.mrb[0].mxu0 %v540
      %v1143 = vpop.f32.mrb[0].mxu0
      %v1144 = vadd.f32 %v311, %v1143
      %v1145 = vpop.f32.mrb[0].mxu0
      %1146 = vmatprep.mubr.f32.mxu0 0.0
      %1147 = vmatmul.mubr.f32.gmra.mrb[0].mxu0 %v543
      %v1148 = vpop.f32.mrb[0].mxu0
      %v1149 = vadd.f32 %v311, %v1148
      %v1150 = vpop.f32.mrb[0].mxu0
      %1151 = vmatprep.mubr.f32.mxu0 0.0
      %1152 = vmatmul.mubr.f32.gmra.mrb[0].mxu0 %v546
      %v1153 = vpop.f32.mrb[0].mxu0
      %v1154 = vadd.f32 %v311, %v1153
      %v1155 = vpop.f32.mrb[0].mxu0
      %1156 = vmatprep.mubr.f32.mxu0 0.0
      %1157 = vmatmul.mubr.f32.gmra.mrb[0].mxu0 %v549
      %v1158 = vpop.f32.mrb[0].mxu0
      %v1159 = vadd.f32 %v311, %v1158
      %v1160 = vpop.f32.mrb[0].mxu0
      %1161 = vmatprep.mubr.f32.mxu0 0.0
      %1162 = vmatmul.mubr.f32.gmra.mrb[0].mxu0 %v552
      %v1163 = vpop.f32.mrb[0].mxu0
      %v1164 = vadd.f32 %v311, %v1163
      %v1165 = vpop.f32.mrb[0].mxu0
      %1166 = vmatprep.mubr.f32.mxu0 0.0
      %1167 = vmatmul.mubr.f32.gmra.mrb[0].mxu0 %v555
      %v1168 = vpop.f32.mrb[0].mxu0
      %v1169 = vadd.f32 %v311, %v1168
      %v1170 = vpop.f32.mrb[0].mxu0
      %1171 = vmatprep.mubr.f32.mxu0 0.0
      %1172 = vmatmul.mubr.f32.gmra.mrb[0].mxu0 %v558
      %v1173 = vpop.f32.mrb[0].mxu0
      %v1174 = vadd.f32 %v311, %v1173
      %v1175 = vpop.f32.mrb[0].mxu0
      %1176 = vmatprep.mubr.f32.mxu0 0.0
      %1177 = vmatmul.mubr.f32.gmra.mrb[0].mxu0 %v561
      %v1178 = vpop.f32.mrb[0].mxu0
      %v1179 = vadd.f32 %v311, %v1178
      %v1180 = vpop.f32.mrb[0].mxu0
      %1181 = vmatprep.mubr.f32.mxu0 0.0
      %1182 = vmatmul.mubr.f32.gmra.mrb[0].mxu0 %v564
      %v1183 = vpop.f32.mrb[0].mxu0
      %v1184 = vadd.f32 %v311, %v1183
      %v1185 = vpop.f32.mrb[0].mxu0
      %1186 = vmatprep.mubr.f32.mxu0 0.0
      %1187 = vmatmul.mubr.f32.gmra.mrb[0].mxu0 %v567
      %v1188 = vpop.f32.mrb[0].mxu0
      %v1189 = vadd.f32 %v311, %v1188
      %v1190 = vpop.f32.mrb[0].mxu0
      %1191 = vmatprep.mubr.f32.mxu0 0.0
      %1192 = vmatmul.mubr.f32.gmra.mrb[0].mxu0 %v570
      %v1193 = vpop.f32.mrb[0].mxu0
      %v1194 = vadd.f32 %v311, %v1193
      %v1195 = vpop.f32.mrb[0].mxu0
      %1196 = vmatprep.mubr.f32.mxu0 0.0
      %1197 = vmatmul.mubr.f32.gmra.mrb[0].mxu0 %v573
      %v1198 = vpop.f32.mrb[0].mxu0
      %v1199 = vadd.f32 %v311, %v1198
      %v1200 = vpop.f32.mrb[0].mxu0
      %1201 = vmatprep.mubr.f32.mxu0 0.0
      %1202 = vmatmul.mubr.f32.gmra.mrb[0].mxu0 %v576
      %v1203 = vpop.f32.mrb[0].mxu0
      %v1204 = vadd.f32 %v311, %v1203
      %v1205 = vpop.f32.mrb[0].mxu0
      %1206 = vmatprep.mubr.f32.mxu0 0.0
      %1207 = vmatmul.mubr.f32.gmra.mrb[0].mxu0 %v579
      %v1208 = vpop.f32.mrb[0].mxu0
      %v1209 = vadd.f32 %v311, %v1208
      %v1210 = vpop.f32.mrb[0].mxu0
      %1211 = vmatprep.mubr.f32.mxu0 0.0
      %1212 = vmatmul.mubr.f32.gmra.mrb[0].mxu0 %v582
      %v1213 = vpop.f32.mrb[0].mxu0
      %v1214 = vadd.f32 %v311, %v1213
      %v1215 = vpop.f32.mrb[0].mxu0
      %1216 = vmatprep.mubr.f32.mxu0 0.0
      %1217 = vmatmul.mubr.f32.gmra.mrb[0].mxu0 %v585
      %v1218 = vpop.f32.mrb[0].mxu0
      %v1219 = vadd.f32 %v311, %v1218
      %v1220 = vpop.f32.mrb[0].mxu0
      %1221 = vmatprep.mubr.f32.mxu0 0.0
      %1222 = vmatmul.mubr.f32.gmra.mrb[0].mxu0 %v588
      %v1223 = vpop.f32.mrb[0].mxu0
      %v1224 = vadd.f32 %v311, %v1223
      %v1225 = vpop.f32.mrb[0].mxu0
      %1226 = vmatprep.mubr.f32.mxu0 0.0
      %1227 = vmatmul.mubr.f32.gmra.mrb[0].mxu0 %v591
      %v1228 = vpop.f32.mrb[0].mxu0
      %v1229 = vadd.f32 %v311, %v1228
      %v1230 = vpop.f32.mrb[0].mxu0
      %1231 = vmatprep.mubr.f32.mxu0 0.0
      %1232 = vmatmul.mubr.f32.gmra.mrb[0].mxu0 %v594
      %v1233 = vpop.f32.mrb[0].mxu0
      %v1234 = vadd.f32 %v311, %v1233
      %v1235 = vpop.f32.mrb[0].mxu0
      %1236 = vmatprep.mubr.f32.mxu0 0.0
      %1237 = vmatmul.mubr.f32.gmra.mrb[0].mxu0 %v597
      %v1238 = vpop.f32.mrb[0].mxu0
      %v1239 = vadd.f32 %v311, %v1238
      %v1240 = vpop.f32.mrb[0].mxu0
      %1241 = vmatprep.mubr.f32.mxu0 0.0
      %1242 = vmatmul.mubr.f32.gmra.mrb[0].mxu0 %v600
      %v1243 = vpop.f32.mrb[0].mxu0
      %v1244 = vadd.f32 %v311, %v1243
      %v1245 = vpop.f32.mrb[0].mxu0
      %1246 = vmatprep.mubr.f32.mxu0 0.0
      %1247 = vmatmul.mubr.f32.gmra.mrb[0].mxu0 %v603
      %v1248 = vpop.f32.mrb[0].mxu0
      %v1249 = vadd.f32 %v311, %v1248
      %v1250 = vpop.f32.mrb[0].mxu0
      %1251 = vmatprep.mubr.f32.mxu0 0.0
      %1252 = vmatmul.mubr.f32.gmra.mrb[0].mxu0 %v606
      %v1253 = vpop.f32.mrb[0].mxu0
      %v1254 = vadd.f32 %v311, %v1253
      %v1255 = vpop.f32.mrb[0].mxu0
      %1256 = vmatprep.mubr.f32.mxu0 0.0
      %1257 = vmatmul.mubr.f32.gmra.mrb[0].mxu0 %v609
      %v1258 = vpop.f32.mrb[0].mxu0
      %v1259 = vadd.f32 %v311, %v1258
      %v1260 = vpop.f32.mrb[0].mxu0
      %1261 = vmatprep.mubr.f32.mxu0 0.0
      %1262 = vmatmul.mubr.f32.gmra.mrb[0].mxu0 %v612
      %v1263 = vpop.f32.mrb[0].mxu0
      %v1264 = vadd.f32 %v311, %v1263
      %v1265 = vpop.f32.mrb[0].mxu0
      %1266 = vmatprep.mubr.f32.mxu0 0.0
      %1267 = vmatmul.mubr.f32.gmra.mrb[0].mxu0 %v615
      %v1268 = vpop.f32.mrb[0].mxu0
      %v1269 = vadd.f32 %v311, %v1268
      %v1270 = vpop.f32.mrb[0].mxu0
      %1271 = vmatprep.mubr.f32.mxu0 0.0
      %1272 = vmatmul.mubr.f32.gmra.mrb[0].mxu0 %v618
      %v1273 = vpop.f32.mrb[0].mxu0
      %v1274 = vadd.f32 %v311, %v1273
      %v1275 = vpop.f32.mrb[0].mxu0
      %1276 = vmatprep.mubr.f32.mxu0 0.0
      %1277 = vmatmul.mubr.f32.gmra.mrb[0].mxu0 %v621
      %v1278 = vpop.f32.mrb[0].mxu0
      %v1279 = vadd.f32 %v311, %v1278
      %v1280 = vpop.f32.mrb[0].mxu0
      %1281 = vmatprep.mubr.f32.mxu0 0.0
      %1282 = vmatmul.mubr.f32.gmra.mrb[0].mxu0 %v624
      %v1283 = vpop.f32.mrb[0].mxu0
      %v1284 = vadd.f32 %v311, %v1283
      %v1285 = vpop.f32.mrb[0].mxu0
      %1286 = vmatprep.mubr.f32.mxu0 0.0
      %1287 = vmatmul.mubr.f32.gmra.mrb[0].mxu0 %v627
      %v1288 = vpop.f32.mrb[0].mxu0
      %v1289 = vadd.f32 %v311, %v1288
      %v1290 = vpop.f32.mrb[0].mxu0
      %1291 = vmatprep.mubr.f32.mxu0 0.0
      %1292 = vmatmul.mubr.f32.gmra.mrb[0].mxu0 %v630
      %v1293 = vpop.f32.mrb[0].mxu0
      %v1294 = vadd.f32 %v311, %v1293
      %v1295 = vpop.f32.mrb[0].mxu0
      %1296 = vmatprep.mubr.f32.mxu0 0.0
      %1297 = vmatmul.mubr.f32.gmra.mrb[0].mxu0 %v633
      %v1298 = vpop.f32.mrb[0].mxu0
      %v1299 = vadd.f32 %v311, %v1298
      %v1300 = vpop.f32.mrb[0].mxu0
      %1301 = vmatprep.mubr.f32.mxu0 0.0
      %1302 = vmatmul.mubr.f32.gmra.mrb[0].mxu0 %v636
      %v1303 = vpop.f32.mrb[0].mxu0
      %v1304 = vadd.f32 %v311, %v1303
      %v1305 = vpop.f32.mrb[0].mxu0
      %1306 = vmatprep.mubr.f32.mxu0 0.0
      %1307 = vmatmul.mubr.f32.gmra.mrb[0].mxu0 %v639
      %v1308 = vpop.f32.mrb[0].mxu0
      %v1309 = vadd.f32 %v311, %v1308
      %v1310 = vpop.f32.mrb[0].mxu0
      %1311 = vmatprep.mubr.f32.mxu0 0.0
      %1312 = vmatmul.mubr.f32.gmra.mrb[0].mxu0 %v642
      %v1313 = vpop.f32.mrb[0].mxu0
      %v1314 = vadd.f32 %v311, %v1313
      %v1315 = vpop.f32.mrb[0].mxu0
      %1316 = vmatprep.mubr.f32.mxu0 0.0
      %1317 = vmatmul.mubr.f32.gmra.mrb[0].mxu0 %v645
      %v1318 = vpop.f32.mrb[0].mxu0
      %v1319 = vadd.f32 %v311, %v1318
      %v1320 = vpop.f32.mrb[0].mxu0
      %1321 = vmatprep.mubr.f32.mxu0 0.0
      %1322 = vmatmul.mubr.f32.gmra.mrb[0].mxu0 %v648
      %v1323 = vpop.f32.mrb[0].mxu0
      %v1324 = vadd.f32 %v311, %v1323
      %v1325 = vpop.f32.mrb[0].mxu0
      %1326 = vmatprep.mubr.f32.mxu0 0.0
      %1327 = vmatmul.mubr.f32.gmra.mrb[0].mxu0 %v651
      %v1328 = vpop.f32.mrb[0].mxu0
      %v1329 = vadd.f32 %v311, %v1328
      %v1330 = vpop.f32.mrb[0].mxu0
      %1331 = vmatprep.mubr.f32.mxu0 0.0
      %1332 = vmatmul.mubr.f32.gmra.mrb[0].mxu0 %v654
      %v1333 = vpop.f32.mrb[0].mxu0
      %v1334 = vadd.f32 %v311, %v1333
      %v1335 = vpop.f32.mrb[0].mxu0
      %1336 = vmatprep.mubr.f32.mxu0 0.0
      %1337 = vmatmul.mubr.f32.gmra.mrb[0].mxu0 %v657
      %v1338 = vpop.f32.mrb[0].mxu0
      %v1339 = vadd.f32 %v311, %v1338
      %v1340 = vpop.f32.mrb[0].mxu0
      %1341 = vmatprep.mubr.f32.mxu0 0.0
      %1342 = vmatmul.mubr.f32.gmra.mrb[0].mxu0 %v660
      %v1343 = vpop.f32.mrb[0].mxu0
      %v1344 = vadd.f32 %v311, %v1343
      %v1345 = vpop.f32.mrb[0].mxu0
      %1346 = vmatprep.mubr.f32.mxu0 0.0
      %1347 = vmatmul.mubr.f32.gmra.mrb[0].mxu0 %v663
      %v1348 = vpop.f32.mrb[0].mxu0
      %v1349 = vadd.f32 %v311, %v1348
      %v1350 = vpop.f32.mrb[0].mxu0
      %1351 = vmatprep.mubr.f32.mxu0 0.0
      %1352 = vmatmul.mubr.f32.gmra.mrb[0].mxu0 %v666
      %v1353 = vpop.f32.mrb[0].mxu0
      %v1354 = vadd.f32 %v311, %v1353
      %v1355 = vpop.f32.mrb[0].mxu0
      %1356 = vmatprep.mubr.f32.mxu0 0.0
      %1357 = vmatmul.mubr.f32.gmra.mrb[0].mxu0 %v669
      %v1358 = vpop.f32.mrb[0].mxu0
      %v1359 = vadd.f32 %v311, %v1358
      %v1360 = vpop.f32.mrb[0].mxu0
      %1361 = vmatprep.mubr.f32.mxu0 0.0
      %1362 = vmatmul.mubr.f32.gmra.mrb[0].mxu0 %v672
      %v1363 = vpop.f32.mrb[0].mxu0
      %v1364 = vadd.f32 %v311, %v1363
      %v1365 = vpop.f32.mrb[0].mxu0
      %1366 = vmatprep.mubr.f32.mxu0 0.0
      %1367 = vmatmul.mubr.f32.gmra.mrb[0].mxu0 %v675
      %v1368 = vpop.f32.mrb[0].mxu0
      %v1369 = vadd.f32 %v311, %v1368
      %v1370 = vpop.f32.mrb[0].mxu0
      %1371 = vmatprep.mubr.f32.mxu0 0.0
      %1372 = vmatmul.mubr.f32.gmra.mrb[0].mxu0 %v678
      %v1373 = vpop.f32.mrb[0].mxu0
      %v1374 = vadd.f32 %v311, %v1373
      %v1375 = vpop.f32.mrb[0].mxu0
      %1376 = vmatprep.mubr.f32.mxu0 0.0
      %1377 = vmatmul.mubr.f32.gmra.mrb[0].mxu0 %v681
      %v1378 = vpop.f32.mrb[0].mxu0
      %v1379 = vadd.f32 %v311, %v1378
      %v1380 = vpop.f32.mrb[0].mxu0
      %1381 = vmatprep.mubr.f32.mxu0 0.0
      %1382 = vmatmul.mubr.f32.gmra.mrb[0].mxu0 %v684
      %v1383 = vpop.f32.mrb[0].mxu0
      %v1384 = vadd.f32 %v311, %v1383
      %v1385 = vpop.f32.mrb[0].mxu0
      %1386 = vmatprep.mubr.f32.mxu0 0.0
      %1387 = vmatmul.mubr.f32.gmra.mrb[0].mxu0 %v687
      %v1388 = vpop.f32.mrb[0].mxu0
      %v1389 = vadd.f32 %v311, %v1388
      %v1390 = vpop.f32.mrb[0].mxu0
      %1391 = vmatprep.mubr.f32.mxu0 0.0
      %1392 = vmatmul.mubr.f32.gmra.mrb[0].mxu0 %v690
      %v1393 = vpop.f32.mrb[0].mxu0
      %v1394 = vadd.f32 %v311, %v1393
      %v1395 = vpop.f32.mrb[0].mxu0
      %1396 = vmatprep.mubr.f32.mxu0 0.0
      %1397 = vmatmul.mubr.f32.gmra.mrb[0].mxu0 %v693
      %v1398 = vpop.f32.mrb[0].mxu0
      %v1399 = vadd.f32 %v311, %v1398
      %v1400 = vpop.f32.mrb[0].mxu0
      %1401 = vmatprep.mubr.f32.mxu0 0.0
      %1402 = vmatmul.mubr.f32.gmra.mrb[0].mxu0 %v696
      %v1403 = vpop.f32.mrb[0].mxu0
      %v1404 = vadd.f32 %v311, %v1403
      %v1405 = vpop.f32.mrb[0].mxu0
      %1406 = vdwg.mxu0
      %v1407 = vmax.f32 %v769, 0.0
      %v1408 = vmax.f32 %v774, 0.0
      %v1409 = vmax.f32 %v779, 0.0
      %v1410 = vmax.f32 %v784, 0.0
      %v1411 = vmax.f32 %v789, 0.0
      %v1412 = vmax.f32 %v794, 0.0
      %v1413 = vmax.f32 %v799, 0.0
      %v1414 = vmax.f32 %v804, 0.0
      %v1415 = vmax.f32 %v809, 0.0
      %v1416 = vmax.f32 %v814, 0.0
      %v1417 = vmax.f32 %v819, 0.0
      %v1418 = vmax.f32 %v824, 0.0
      %v1419 = vmax.f32 %v829, 0.0
      %v1420 = vmax.f32 %v834, 0.0
      %v1421 = vmax.f32 %v839, 0.0
      %v1422 = vmax.f32 %v844, 0.0
      %v1423 = vmax.f32 %v849, 0.0
      %v1424 = vmax.f32 %v854, 0.0
      %v1425 = vmax.f32 %v859, 0.0
      %v1426 = vmax.f32 %v864, 0.0
      %v1427 = vmax.f32 %v869, 0.0
      %v1428 = vmax.f32 %v874, 0.0
      %v1429 = vmax.f32 %v879, 0.0
      %v1430 = vmax.f32 %v884, 0.0
      %v1431 = vmax.f32 %v889, 0.0
      %v1432 = vmax.f32 %v894, 0.0
      %v1433 = vmax.f32 %v899, 0.0
      %v1434 = vmax.f32 %v904, 0.0
      %v1435 = vmax.f32 %v909, 0.0
      %v1436 = vmax.f32 %v914, 0.0
      %v1437 = vmax.f32 %v919, 0.0
      %v1438 = vmax.f32 %v924, 0.0
      %v1439 = vmax.f32 %v929, 0.0
      %v1440 = vmax.f32 %v934, 0.0
      %v1441 = vmax.f32 %v939, 0.0
      %v1442 = vmax.f32 %v944, 0.0
      %v1443 = vmax.f32 %v949, 0.0
      %v1444 = vmax.f32 %v954, 0.0
      %v1445 = vmax.f32 %v959, 0.0
      %v1446 = vmax.f32 %v964, 0.0
      %v1447 = vmax.f32 %v969, 0.0
      %v1448 = vmax.f32 %v974, 0.0
      %v1449 = vmax.f32 %v979, 0.0
      %v1450 = vmax.f32 %v984, 0.0
      %v1451 = vmax.f32 %v989, 0.0
      %v1452 = vmax.f32 %v994, 0.0
      %v1453 = vmax.f32 %v999, 0.0
      %v1454 = vmax.f32 %v1004, 0.0
      %v1455 = vmax.f32 %v1009, 0.0
      %v1456 = vmax.f32 %v1014, 0.0
      %v1457 = vmax.f32 %v1019, 0.0
      %v1458 = vmax.f32 %v1024, 0.0
      %v1459 = vmax.f32 %v1029, 0.0
      %v1460 = vmax.f32 %v1034, 0.0
      %v1461 = vmax.f32 %v1039, 0.0
      %v1462 = vmax.f32 %v1044, 0.0
      %v1463 = vmax.f32 %v1049, 0.0
      %v1464 = vmax.f32 %v1054, 0.0
      %v1465 = vmax.f32 %v1059, 0.0
      %v1466 = vmax.f32 %v1064, 0.0
      %v1467 = vmax.f32 %v1069, 0.0
      %v1468 = vmax.f32 %v1074, 0.0
      %v1469 = vmax.f32 %v1079, 0.0
      %v1470 = vmax.f32 %v1084, 0.0
      %v1471 = vmax.f32 %v1089, 0.0
      %v1472 = vmax.f32 %v1094, 0.0
      %v1473 = vmax.f32 %v1099, 0.0
      %v1474 = vmax.f32 %v1104, 0.0
      %v1475 = vmax.f32 %v1109, 0.0
      %v1476 = vmax.f32 %v1114, 0.0
      %v1477 = vmax.f32 %v1119, 0.0
      %v1478 = vmax.f32 %v1124, 0.0
      %v1479 = vmax.f32 %v1129, 0.0
      %v1480 = vmax.f32 %v1134, 0.0
      %v1481 = vmax.f32 %v1139, 0.0
      %v1482 = vmax.f32 %v1144, 0.0
      %v1483 = vmax.f32 %v1149, 0.0
      %v1484 = vmax.f32 %v1154, 0.0
      %v1485 = vmax.f32 %v1159, 0.0
      %v1486 = vmax.f32 %v1164, 0.0
      %v1487 = vmax.f32 %v1169, 0.0
      %v1488 = vmax.f32 %v1174, 0.0
      %v1489 = vmax.f32 %v1179, 0.0
      %v1490 = vmax.f32 %v1184, 0.0
      %v1491 = vmax.f32 %v1189, 0.0
      %v1492 = vmax.f32 %v1194, 0.0
      %v1493 = vmax.f32 %v1199, 0.0
      %v1494 = vmax.f32 %v1204, 0.0
      %v1495 = vmax.f32 %v1209, 0.0
      %v1496 = vmax.f32 %v1214, 0.0
      %v1497 = vmax.f32 %v1219, 0.0
      %v1498 = vmax.f32 %v1224, 0.0
      %v1499 = vmax.f32 %v1229, 0.0
      %v1500 = vmax.f32 %v1234, 0.0
      %v1501 = vmax.f32 %v1239, 0.0
      %v1502 = vmax.f32 %v1244, 0.0
      %v1503 = vmax.f32 %v1249, 0.0
      %v1504 = vmax.f32 %v1254, 0.0
      %v1505 = vmax.f32 %v1259, 0.0
      %v1506 = vmax.f32 %v1264, 0.0
      %v1507 = vmax.f32 %v1269, 0.0
      %v1508 = vmax.f32 %v1274, 0.0
      %v1509 = vmax.f32 %v1279, 0.0
      %v1510 = vmax.f32 %v1284, 0.0
      %v1511 = vmax.f32 %v1289, 0.0
      %v1512 = vmax.f32 %v1294, 0.0
      %v1513 = vmax.f32 %v1299, 0.0
      %v1514 = vmax.f32 %v1304, 0.0
      %v1515 = vmax.f32 %v1309, 0.0
      %v1516 = vmax.f32 %v1314, 0.0
      %v1517 = vmax.f32 %v1319, 0.0
      %v1518 = vmax.f32 %v1324, 0.0
      %v1519 = vmax.f32 %v1329, 0.0
      %v1520 = vmax.f32 %v1334, 0.0
      %v1521 = vmax.f32 %v1339, 0.0
      %v1522 = vmax.f32 %v1344, 0.0
      %v1523 = vmax.f32 %v1349, 0.0
      %v1524 = vmax.f32 %v1354, 0.0
      %v1525 = vmax.f32 %v1359, 0.0
      %v1526 = vmax.f32 %v1364, 0.0
      %v1527 = vmax.f32 %v1369, 0.0
      %v1528 = vmax.f32 %v1374, 0.0
      %v1529 = vmax.f32 %v1379, 0.0
      %v1530 = vmax.f32 %v1384, 0.0
      %v1531 = vmax.f32 %v1389, 0.0
      %v1532 = vmax.f32 %v1394, 0.0
      %v1533 = vmax.f32 %v1399, 0.0
      %v1534 = vmax.f32 %v1404, 0.0
      %v1535 = vmax.f32 %v1407, %v1439
      %v1536 = vmax.f32 %v1408, %v1440
      %v1537 = vmax.f32 %v1409, %v1441
      %v1538 = vmax.f32 %v1410, %v1442
      %v1539 = vmax.f32 %v1411, %v1443
      %v1540 = vmax.f32 %v1412, %v1444
      %v1541 = vmax.f32 %v1413, %v1445
      %v1542 = vmax.f32 %v1414, %v1446
      %v1543 = vmax.f32 %v1415, %v1447
      %v1544 = vmax.f32 %v1416, %v1448
      %v1545 = vmax.f32 %v1417, %v1449
      %v1546 = vmax.f32 %v1418, %v1450
      %v1547 = vmax.f32 %v1419, %v1451
      %v1548 = vmax.f32 %v1420, %v1452
      %v1549 = vmax.f32 %v1421, %v1453
      %v1550 = vmax.f32 %v1422, %v1454
      %v1551 = vmax.f32 %v1423, %v1455
      %v1552 = vmax.f32 %v1424, %v1456
      %v1553 = vmax.f32 %v1425, %v1457
      %v1554 = vmax.f32 %v1426, %v1458
      %v1555 = vmax.f32 %v1427, %v1459
      %v1556 = vmax.f32 %v1428, %v1460
      %v1557 = vmax.f32 %v1429, %v1461
      %v1558 = vmax.f32 %v1430, %v1462
      %v1559 = vmax.f32 %v1431, %v1463
      %v1560 = vmax.f32 %v1432, %v1464
      %v1561 = vmax.f32 %v1433, %v1465
      %v1562 = vmax.f32 %v1434, %v1466
      %v1563 = vmax.f32 %v1435, %v1467
      %v1564 = vmax.f32 %v1436, %v1468
      %v1565 = vmax.f32 %v1437, %v1469
      %v1566 = vmax.f32 %v1438, %v1470
      %v1567 = vmax.f32 %v1471, %v1503
      %v1568 = vmax.f32 %v1472, %v1504
      %v1569 = vmax.f32 %v1473, %v1505
      %v1570 = vmax.f32 %v1474, %v1506
      %v1571 = vmax.f32 %v1475, %v1507
      %v1572 = vmax.f32 %v1476, %v1508
      %v1573 = vmax.f32 %v1477, %v1509
      %v1574 = vmax.f32 %v1478, %v1510
      %v1575 = vmax.f32 %v1479, %v1511
      %v1576 = vmax.f32 %v1480, %v1512
      %v1577 = vmax.f32 %v1481, %v1513
      %v1578 = vmax.f32 %v1482, %v1514
      %v1579 = vmax.f32 %v1483, %v1515
      %v1580 = vmax.f32 %v1484, %v1516
      %v1581 = vmax.f32 %v1485, %v1517
      %v1582 = vmax.f32 %v1486, %v1518
      %v1583 = vmax.f32 %v1487, %v1519
      %v1584 = vmax.f32 %v1488, %v1520
      %v1585 = vmax.f32 %v1489, %v1521
      %v1586 = vmax.f32 %v1490, %v1522
      %v1587 = vmax.f32 %v1491, %v1523
      %v1588 = vmax.f32 %v1492, %v1524
      %v1589 = vmax.f32 %v1493, %v1525
      %v1590 = vmax.f32 %v1494, %v1526
      %v1591 = vmax.f32 %v1495, %v1527
      %v1592 = vmax.f32 %v1496, %v1528
      %v1593 = vmax.f32 %v1497, %v1529
      %v1594 = vmax.f32 %v1498, %v1530
      %v1595 = vmax.f32 %v1499, %v1531
      %v1596 = vmax.f32 %v1500, %v1532
      %v1597 = vmax.f32 %v1501, %v1533
      %v1598 = vmax.f32 %v1502, %v1534
      %v1599 = vmax.f32 %v1535, %v1567
      %v1600 = vmax.f32 %v1536, %v1568
      %v1601 = vmax.f32 %v1537, %v1569
      %v1602 = vmax.f32 %v1538, %v1570
      %v1603 = vmax.f32 %v1539, %v1571
      %v1604 = vmax.f32 %v1540, %v1572
      %v1605 = vmax.f32 %v1541, %v1573
      %v1606 = vmax.f32 %v1542, %v1574
      %v1607 = vmax.f32 %v1543, %v1575
      %v1608 = vmax.f32 %v1544, %v1576
      %v1609 = vmax.f32 %v1545, %v1577
      %v1610 = vmax.f32 %v1546, %v1578
      %v1611 = vmax.f32 %v1547, %v1579
      %v1612 = vmax.f32 %v1548, %v1580
      %v1613 = vmax.f32 %v1549, %v1581
      %v1614 = vmax.f32 %v1550, %v1582
      %v1615 = vmax.f32 %v1551, %v1583
      %v1616 = vmax.f32 %v1552, %v1584
      %v1617 = vmax.f32 %v1553, %v1585
      %v1618 = vmax.f32 %v1554, %v1586
      %v1619 = vmax.f32 %v1555, %v1587
      %v1620 = vmax.f32 %v1556, %v1588
      %v1621 = vmax.f32 %v1557, %v1589
      %v1622 = vmax.f32 %v1558, %v1590
      %v1623 = vmax.f32 %v1559, %v1591
      %v1624 = vmax.f32 %v1560, %v1592
      %v1625 = vmax.f32 %v1561, %v1593
      %v1626 = vmax.f32 %v1562, %v1594
      %v1627 = vmax.f32 %v1563, %v1595
      %v1628 = vmax.f32 %v1564, %v1596
      %v1629 = vmax.f32 %v1565, %v1597
      %v1630 = vmax.f32 %v1566, %v1598
      %vm1631 = vcmask 523264
      %1632 = vst.msk [vmem:[%s172] sm:$0xff] %vm1631, %v1599
      %1633 = vst.msk [vmem:[%s172 + $0x8] sm:$0xff] %vm1631, %v1600
      %1634 = vst.msk [vmem:[%s172 + $0x10] sm:$0xff] %vm1631, %v1601
      %1635 = vst.msk [vmem:[%s172 + $0x18] sm:$0xff] %vm1631, %v1602
      %1636 = vst.msk [vmem:[%s172 + $0x20] sm:$0xff] %vm1631, %v1603
      %1637 = vst.msk [vmem:[%s172 + $0x28] sm:$0xff] %vm1631, %v1604
      %1638 = vst.msk [vmem:[%s172 + $0x30] sm:$0xff] %vm1631, %v1605
      %1639 = vst.msk [vmem:[%s172 + $0x38] sm:$0xff] %vm1631, %v1606
      %1640 = vst.msk [vmem:[%s172 + $0x40] sm:$0xff] %vm1631, %v1607
      %1641 = vst.msk [vmem:[%s172 + $0x48] sm:$0xff] %vm1631, %v1608
      %1642 = vst.msk [vmem:[%s172 + $0x50] sm:$0xff] %vm1631, %v1609
      %1643 = vst.msk [vmem:[%s172 + $0x58] sm:$0xff] %vm1631, %v1610
      %1644 = vst.msk [vmem:[%s172 + $0x60] sm:$0xff] %vm1631, %v1611
      %1645 = vst.msk [vmem:[%s172 + $0x68] sm:$0xff] %vm1631, %v1612
      %1646 = vst.msk [vmem:[%s172 + $0x70] sm:$0xff] %vm1631, %v1613
      %1647 = vst.msk [vmem:[%s172 + $0x78] sm:$0xff] %vm1631, %v1614
      %1648 = vst.msk [vmem:[%s172 + $0x80] sm:$0xff] %vm1631, %v1615
      %1649 = vst.msk [vmem:[%s172 + $0x88] sm:$0xff] %vm1631, %v1616
      %1650 = vst.msk [vmem:[%s172 + $0x90] sm:$0xff] %vm1631, %v1617
      %1651 = vst.msk [vmem:[%s172 + $0x98] sm:$0xff] %vm1631, %v1618
      %1652 = vst.msk [vmem:[%s172 + $0xa0] sm:$0xff] %vm1631, %v1619
      %1653 = vst.msk [vmem:[%s172 + $0xa8] sm:$0xff] %vm1631, %v1620
      %1654 = vst.msk [vmem:[%s172 + $0xb0] sm:$0xff] %vm1631, %v1621
      %1655 = vst.msk [vmem:[%s172 + $0xb8] sm:$0xff] %vm1631, %v1622
      %1656 = vst.msk [vmem:[%s172 + $0xc0] sm:$0xff] %vm1631, %v1623
      %1657 = vst.msk [vmem:[%s172 + $0xc8] sm:$0xff] %vm1631, %v1624
      %1658 = vst.msk [vmem:[%s172 + $0xd0] sm:$0xff] %vm1631, %v1625
      %1659 = vst.msk [vmem:[%s172 + $0xd8] sm:$0xff] %vm1631, %v1626
      %1660 = vst.msk [vmem:[%s172 + $0xe0] sm:$0xff] %vm1631, %v1627
      %1661 = vst.msk [vmem:[%s172 + $0xe8] sm:$0xff] %vm1631, %v1628
      %1662 = vst.msk [vmem:[%s172 + $0xf0] sm:$0xff] %vm1631, %v1629
      %1663 = vst.msk [vmem:[%s172 + $0xf8] sm:$0xff] %vm1631, %v1630
      %s1664 = smul.u32 32, %s14
      %p1665 = scmp.lt.s32.totalorder %s1664, 255
      %s1666 = scalar_select %p1665, %s1664, 255
      %s1667 = smul.addr %s1666, 8
      %s1668 = scalar_lea.vmem %s3, %s1667
      // Predicated region
      $region33: #{model_forward.5} parent=31 // pred_check
        %p1669 = pneg %p100
      $region34: #{model_forward.5} parent=31 // pred_check_branch
        %1671 = sbr.rel (%p1669) target = $region36
      $region35: #{model_forward.5} parent=31 // pred_region
        %s1672 = smul.u32 32, %s14
      $region36: #{model_forward.5} parent=31 // pred_fallthru
        _
    $region32: #{model_forward.5} parent=5 // pred_fallthru
      _
    %p1673 = scmp.le.s32.totalorder 2, %s9
    // Predicated region
    $region37: #{model_forward.5} parent=5 // pred_check
      %p1674 = pneg %p1673
    $region38: #{model_forward.5} parent=5 // pred_check_branch
      %1676 = sbr.rel (%p1674) target = $region40
    $region39: #{model_forward.5} parent=5 // pred_region
      %s1677 = ssub.s32 %s9, 2
      // Predicated region
      $region41: #{model_forward.5} parent=39 // pred_check
        %p1678 = pneg %p106
      $region42: #{model_forward.5} parent=39 // pred_check_branch
        %1680 = sbr.rel (%p1678) target = $region44
      $region43: #{model_forward.5} parent=39 // pred_region
        %s1681 = smul.u32 32, %s15
        %p1682 = scmp.lt.s32.totalorder %s1681, 255
        %s1683 = scalar_select %p1682, %s1681, 255
        %s1684 = smul.addr %s1683, 8
        %s1685 = scalar_lea.vmem %s3, %s1684
      $region44: #{model_forward.5} parent=39 // pred_fallthru
        _
    $region40: #{model_forward.5} parent=5 // pred_fallthru
      _
  $region6: #{model_forward.5} parent=0 // loop_footer
    %s13 = sadd.s32 1, %s9
  $region7: #{model_forward.5} parent=0 // loop_footer_branch
    %8 = sbr.rel target = $region3
  $region8: #{model_forward.5} parent=0 // loop_exit
    _

// kernel: model_forward.4
$region0: #{model_forward.4}
  #allocation0 [shape = 'u32[]', space=smem, size = 0x4, offset = 0x4, fixed_abs, tag = 'smem constant byte address 0x4 - core index']
  #allocation1 [shape = 'u32[144,128]{1,0:T(1,128)}', space=vmem, size = 0x12000, scoped, tag = 'internal scratch']
  %s0 = inlined_call_operand.vmem [shape: f32[8,32], index: 0, kind: input, shape index: {}]
  %s1 = inlined_call_operand.vmem [shape: f32[160,32], index: 1, kind: input, shape index: {}]
  %s2 = inlined_call_operand.vmem [shape: f32[5,32], index: 2, kind: input, shape index: {}]
  %s3 = inlined_call_operand.vmem [shape: f32[8,32], index: 3, kind: output, shape index: {0}]
  %s4 = inlined_call_operand.hbm [shape: f32[8,8], index: 4, kind: output, shape index: {1}]
  %s5 = inlined_call_operand.hbm [shape: f32[8,32], index: 5, kind: output, shape index: {2}]
  %6 = xla_tuple %s3, %s4, %s5
  %s7 = sld [smem:[#allocation0]]
  $region38: #{model_forward.4} parent=0
    _
  %s9 = ssub.s32 1, %s7
  %s10 = scalar_select 0, %s9, %s7
  $region1: #{model_forward.4} parent=0
    #allocation2 [shape = 'u8[4096]{0}', space=vmem, size = 0x1000, scoped, tag = 'output window, operand 1, single buffered']
    #allocation3 [shape = 's32[1]{0}', space=sflag, size = 0x4, scoped, tag = 'scoped memory for model_forward.4']
    #allocation4 [shape = 'u8[4096]{0}', space=vmem, size = 0x1000, scoped, tag = 'output window, operand 2, single buffered']
    #allocation5 [shape = 's32[1]{0}', space=sflag, size = 0x4, scoped, tag = 'scoped memory for model_forward.4']
    %11 = vsyncpa [#allocation3], 0
    %12 = vsyncpa [#allocation5], 0
    // Predicated region
    $region2: #{model_forward.4} parent=1 // pred_check
      _
    $region3: #{model_forward.4} parent=1 // pred_check_branch
      %14 = sbr.rel (0) target = $region5
    $region4: #{model_forward.4} parent=1 // pred_region
      _
    $region5: #{model_forward.4} parent=1 // pred_fallthru
      _
    // Predicated region
    $region6: #{model_forward.4} parent=1 // pred_check
      _
    $region7: #{model_forward.4} parent=1 // pred_check_branch
      %16 = sbr.rel (0) target = $region9
    $region8: #{model_forward.4} parent=1 // pred_region
      _
    $region9: #{model_forward.4} parent=1 // pred_fallthru
      _
    // Predicated region
    $region10: #{model_forward.4} parent=1 // pred_check
      _
    $region11: #{model_forward.4} parent=1 // pred_check_branch
      %18 = sbr.rel (0) target = $region13
    $region12: #{model_forward.4} parent=1 // pred_region
      _
    $region13: #{model_forward.4} parent=1 // pred_fallthru
      _
    %v19 = vld [vmem:[%s0] sm:$0xff]
    %v20 = vld [vmem:[%s1] sm:$0xff]
    %v21 = vld [vmem:[%s1 + $0x8] sm:$0xff]
    %v22 = vld [vmem:[%s1 + $0x10] sm:$0xff]
    %v23 = vld [vmem:[%s1 + $0x18] sm:$0xff]
    %v24 = vld [vmem:[%s1 + $0x20] sm:$0xff]
    %v25 = vld [vmem:[%s1 + $0x28] sm:$0xff]
    %v26 = vld [vmem:[%s1 + $0x30] sm:$0xff]
    %v27 = vld [vmem:[%s1 + $0x38] sm:$0xff]
    %v28 = vld [vmem:[%s1 + $0x40] sm:$0xff]
    %v29 = vld [vmem:[%s1 + $0x48] sm:$0xff]
    %v30 = vld [vmem:[%s1 + $0x50] sm:$0xff]
    %v31 = vld [vmem:[%s1 + $0x58] sm:$0xff]
    %v32 = vld [vmem:[%s1 + $0x60] sm:$0xff]
    %v33 = vld [vmem:[%s1 + $0x68] sm:$0xff]
    %v34 = vld [vmem:[%s1 + $0x70] sm:$0xff]
    %v35 = vld [vmem:[%s1 + $0x78] sm:$0xff]
    %v36 = vld [vmem:[%s1 + $0x80] sm:$0xff]
    %v37 = vld [vmem:[%s1 + $0x88] sm:$0xff]
    %v38 = vld [vmem:[%s1 + $0x90] sm:$0xff]
    %v39 = vld [vmem:[%s1 + $0x98] sm:$0xff]
    %v40 = vld [vmem:[%s2] sm:$0x1f]
    %v41 = vlaneseq
    %v42 = vshrl.u32 %v41, 7
    %v43 = vsub.s32 0, %v42
    %v44 = vrot.slane %v40, %v43
    %vm45 = vcmask 261120
    %v47 = vsel %vm45, %v19, 0
    %49 = vmatprep.subr.mxu0 0.0
    %50 = vmatpush1.msra.mxu0 %v20
    %51 = vmatprep.subr.mxu0 0.0
    %52 = vmatpush1.msra.mxu0 %v21
    %53 = vmatprep.subr.mxu0 0.0
    %54 = vmatpush1.msra.mxu0 %v22
    %55 = vmatprep.subr.mxu0 0.0
    %56 = vmatpush1.msra.mxu0 %v23
    %57 = vmatprep.subr.mxu0 0.0
    %58 = vmatpush1.msra.mxu0 0.0
    %59 = vmatprep.subr.mxu0 0.0
    %60 = vmatpush1.msra.mxu0 0.0
    %61 = vmatprep.subr.mxu0 0.0
    %62 = vmatpush1.msra.mxu0 0.0
    %63 = vmatprep.subr.mxu0 0.0
    %64 = vmatpush1.msra.mxu0 0.0
    %65 = vmatprep.subr.mxu0 0.0
    %66 = vmatpush1.msra.mxu0 0.0
    %67 = vmatprep.subr.mxu0 0.0
    %68 = vmatpush1.msra.mxu0 0.0
    %69 = vmatprep.subr.mxu0 0.0
    %70 = vmatpush1.msra.mxu0 0.0
    %71 = vmatprep.subr.mxu0 0.0
    %72 = vmatpush1.msra.mxu0 0.0
    %73 = vmatprep.subr.mxu0 0.0
    %74 = vmatpush1.msra.mxu0 0.0
    %75 = vmatprep.subr.mxu0 0.0
    %76 = vmatpush1.msra.mxu0 0.0
    %77 = vmatprep.subr.mxu0 0.0
    %78 = vmatpush1.msra.mxu0 0.0
    %79 = vmatprep.subr.mxu0 0.0
    %80 = vmatpush1.msra.mxu0 0.0
    %81 = vmatprep.subr.mxu0 0.0
    %82 = vmatpush1.msra.mxu0 0.0
    %83 = vmatprep.subr.mxu0 0.0
    %84 = vmatpush1.msra.mxu0 0.0
    %85 = vmatprep.subr.mxu0 0.0
    %86 = vmatpush1.msra.mxu0 0.0
    %87 = vmatprep.subr.mxu0 0.0
    %88 = vmatpush1.msra.mxu0 0.0
    %89 = vmatprep.subr.mxu0 0.0
    %90 = vmatpush1.msra.mxu0 0.0
    %91 = vmatprep.subr.mxu0 0.0
    %92 = vmatpush1.msra.mxu0 0.0
    %93 = vmatprep.subr.mxu0 0.0
    %94 = vmatpush1.msra.mxu0 0.0
    %95 = vmatprep.subr.mxu0 0.0
    %96 = vmatpush1.msra.mxu0 0.0
    %97 = vmatprep.subr.mxu0 0.0
    %98 = vmatpush1.msra.mxu0 0.0
    %99 = vmatprep.subr.mxu0 0.0
    %100 = vmatpush1.msra.mxu0 0.0
    %101 = vmatprep.subr.mxu0 0.0
    %102 = vmatpush1.msra.mxu0 0.0
    %103 = vmatprep.subr.mxu0 0.0
    %104 = vmatpush1.msra.mxu0 0.0
    %105 = vmatprep.subr.mxu0 0.0
    %106 = vmatpush1.msra.mxu0 0.0
    %107 = vmatprep.subr.mxu0 0.0
    %108 = vmatpush1.msra.mxu0 0.0
    %109 = vmatprep.subr.mxu0 0.0
    %110 = vmatpush1.msra.mxu0 0.0
    %111 = vmatprep.subr.mxu0 0.0
    %112 = vmatpush1.msra.mxu0 0.0
    %113 = vmatprep.mubr.f32.mxu0 0.0
    %114 = vmatmul.mubr.f32.gmra.mrb[0].mxu0 %v47
    %v115 = vpop.f32.mrb[0].mxu0
    %v116 = vadd.f32 %v44, %v115
    %v117 = vpop.f32.mrb[0].mxu0
    %118 = vdwg.mxu0
    %vm119 = vcmp.gt.f32.partialorder %v116, 0.0
    %v120 = vmin.f32 %v116, 0.0
    %v121 = vmul.f32 %v120, 1.442695
    %v122 = vpow.pop %v121
    %v123 = vsub.f32 %v122, 1.0
    %v124 = vsel %vm119, %v116, %v123
    %v125 = vlaneseq
    %v126 = vshrl.u32 %v125, 7
    %v127 = vsub.s32 1, %v126
    %v128 = vrot.slane %v40, %v127
    %v130 = vsel %vm45, %v124, 0
    %132 = vmatprep.subr.mxu0 0.0
    %133 = vmatpush1.msra.mxu0 %v24
    %134 = vmatprep.subr.mxu0 0.0
    %135 = vmatpush1.msra.mxu0 %v25
    %136 = vmatprep.subr.mxu0 0.0
    %137 = vmatpush1.msra.mxu0 %v26
    %138 = vmatprep.subr.mxu0 0.0
    %139 = vmatpush1.msra.mxu0 %v27
    %140 = vmatprep.subr.mxu0 0.0
    %141 = vmatpush1.msra.mxu0 0.0
    %142 = vmatprep.subr.mxu0 0.0
    %143 = vmatpush1.msra.mxu0 0.0
    %144 = vmatprep.subr.mxu0 0.0
    %145 = vmatpush1.msra.mxu0 0.0
    %146 = vmatprep.subr.mxu0 0.0
    %147 = vmatpush1.msra.mxu0 0.0
    %148 = vmatprep.subr.mxu0 0.0
    %149 = vmatpush1.msra.mxu0 0.0
    %150 = vmatprep.subr.mxu0 0.0
    %151 = vmatpush1.msra.mxu0 0.0
    %152 = vmatprep.subr.mxu0 0.0
    %153 = vmatpush1.msra.mxu0 0.0
    %154 = vmatprep.subr.mxu0 0.0
    %155 = vmatpush1.msra.mxu0 0.0
    %156 = vmatprep.subr.mxu0 0.0
    %157 = vmatpush1.msra.mxu0 0.0
    %158 = vmatprep.subr.mxu0 0.0
    %159 = vmatpush1.msra.mxu0 0.0
    %160 = vmatprep.subr.mxu0 0.0
    %161 = vmatpush1.msra.mxu0 0.0
    %162 = vmatprep.subr.mxu0 0.0
    %163 = vmatpush1.msra.mxu0 0.0
    %164 = vmatprep.subr.mxu0 0.0
    %165 = vmatpush1.msra.mxu0 0.0
    %166 = vmatprep.subr.mxu0 0.0
    %167 = vmatpush1.msra.mxu0 0.0
    %168 = vmatprep.subr.mxu0 0.0
    %169 = vmatpush1.msra.mxu0 0.0
    %170 = vmatprep.subr.mxu0 0.0
    %171 = vmatpush1.msra.mxu0 0.0
    %172 = vmatprep.subr.mxu0 0.0
    %173 = vmatpush1.msra.mxu0 0.0
    %174 = vmatprep.subr.mxu0 0.0
    %175 = vmatpush1.msra.mxu0 0.0
    %176 = vmatprep.subr.mxu0 0.0
    %177 = vmatpush1.msra.mxu0 0.0
    %178 = vmatprep.subr.mxu0 0.0
    %179 = vmatpush1.msra.mxu0 0.0
    %180 = vmatprep.subr.mxu0 0.0
    %181 = vmatpush1.msra.mxu0 0.0
    %182 = vmatprep.subr.mxu0 0.0
    %183 = vmatpush1.msra.mxu0 0.0
    %184 = vmatprep.subr.mxu0 0.0
    %185 = vmatpush1.msra.mxu0 0.0
    %186 = vmatprep.subr.mxu0 0.0
    %187 = vmatpush1.msra.mxu0 0.0
    %188 = vmatprep.subr.mxu0 0.0
    %189 = vmatpush1.msra.mxu0 0.0
    %190 = vmatprep.subr.mxu0 0.0
    %191 = vmatpush1.msra.mxu0 0.0
    %192 = vmatprep.subr.mxu0 0.0
    %193 = vmatpush1.msra.mxu0 0.0
    %194 = vmatprep.subr.mxu0 0.0
    %195 = vmatpush1.msra.mxu0 0.0
    %196 = vmatprep.mubr.f32.mxu0 0.0
    %197 = vmatmul.mubr.f32.gmra.mrb[0].mxu0 %v130
    %v198 = vpop.f32.mrb[0].mxu0
    %v199 = vadd.f32 %v128, %v198
    %v200 = vpop.f32.mrb[0].mxu0
    %201 = vdwg.mxu0
    %vm202 = vcmp.gt.f32.partialorder %v199, 0.0
    %v203 = vmin.f32 %v199, 0.0
    %v204 = vmul.f32 %v203, 1.442695
    %v205 = vpow.pop %v204
    %v206 = vsub.f32 %v205, 1.0
    %v207 = vsel %vm202, %v199, %v206
    %v208 = vlaneseq
    %v209 = vshrl.u32 %v208, 7
    %v210 = vsub.s32 2, %v209
    %v211 = vrot.slane %v40, %v210
    %v213 = vsel %vm45, %v207, 0
    %215 = vmatprep.subr.mxu0 0.0
    %216 = vmatpush1.msra.mxu0 %v28
    %217 = vmatprep.subr.mxu0 0.0
    %218 = vmatpush1.msra.mxu0 %v29
    %219 = vmatprep.subr.mxu0 0.0
    %220 = vmatpush1.msra.mxu0 %v30
    %221 = vmatprep.subr.mxu0 0.0
    %222 = vmatpush1.msra.mxu0 %v31
    %223 = vmatprep.subr.mxu0 0.0
    %224 = vmatpush1.msra.mxu0 0.0
    %225 = vmatprep.subr.mxu0 0.0
    %226 = vmatpush1.msra.mxu0 0.0
    %227 = vmatprep.subr.mxu0 0.0
    %228 = vmatpush1.msra.mxu0 0.0
    %229 = vmatprep.subr.mxu0 0.0
    %230 = vmatpush1.msra.mxu0 0.0
    %231 = vmatprep.subr.mxu0 0.0
    %232 = vmatpush1.msra.mxu0 0.0
    %233 = vmatprep.subr.mxu0 0.0
    %234 = vmatpush1.msra.mxu0 0.0
    %235 = vmatprep.subr.mxu0 0.0
    %236 = vmatpush1.msra.mxu0 0.0
    %237 = vmatprep.subr.mxu0 0.0
    %238 = vmatpush1.msra.mxu0 0.0
    %239 = vmatprep.subr.mxu0 0.0
    %240 = vmatpush1.msra.mxu0 0.0
    %241 = vmatprep.subr.mxu0 0.0
    %242 = vmatpush1.msra.mxu0 0.0
    %243 = vmatprep.subr.mxu0 0.0
    %244 = vmatpush1.msra.mxu0 0.0
    %245 = vmatprep.subr.mxu0 0.0
    %246 = vmatpush1.msra.mxu0 0.0
    %247 = vmatprep.subr.mxu0 0.0
    %248 = vmatpush1.msra.mxu0 0.0
    %249 = vmatprep.subr.mxu0 0.0
    %250 = vmatpush1.msra.mxu0 0.0
    %251 = vmatprep.subr.mxu0 0.0
    %252 = vmatpush1.msra.mxu0 0.0
    %253 = vmatprep.subr.mxu0 0.0
    %254 = vmatpush1.msra.mxu0 0.0
    %255 = vmatprep.subr.mxu0 0.0
    %256 = vmatpush1.msra.mxu0 0.0
    %257 = vmatprep.subr.mxu0 0.0
    %258 = vmatpush1.msra.mxu0 0.0
    %259 = vmatprep.subr.mxu0 0.0
    %260 = vmatpush1.msra.mxu0 0.0
    %261 = vmatprep.subr.mxu0 0.0
    %262 = vmatpush1.msra.mxu0 0.0
    %263 = vmatprep.subr.mxu0 0.0
    %264 = vmatpush1.msra.mxu0 0.0
    %265 = vmatprep.subr.mxu0 0.0
    %266 = vmatpush1.msra.mxu0 0.0
    %267 = vmatprep.subr.mxu0 0.0
    %268 = vmatpush1.msra.mxu0 0.0
    %269 = vmatprep.subr.mxu0 0.0
    %270 = vmatpush1.msra.mxu0 0.0
    %271 = vmatprep.subr.mxu0 0.0
    %272 = vmatpush1.msra.mxu0 0.0
    %273 = vmatprep.subr.mxu0 0.0
    %274 = vmatpush1.msra.mxu0 0.0
    %275 = vmatprep.subr.mxu0 0.0
    %276 = vmatpush1.msra.mxu0 0.0
    %277 = vmatprep.subr.mxu0 0.0
    %278 = vmatpush1.msra.mxu0 0.0
    %279 = vmatprep.mubr.f32.mxu0 0.0
    %280 = vmatmul.mubr.f32.gmra.mrb[0].mxu0 %v213
    %v281 = vpop.f32.mrb[0].mxu0
    %v282 = vadd.f32 %v211, %v281
    %v283 = vpop.f32.mrb[0].mxu0
    %284 = vdwg.mxu0
    %v285 = vtanh.pop %v282
    %v286 = vmul.f32 %v285, %v285
    %v287 = vsel %vm45, %v286, 0.0
    %288 = vadd.xlane.f32.xlu0 %v287
    %v289 = vpop.xlane.xlu0 %288
    %v290 = vrsqrt.pop %v289
    %v291 = vmul.f32 %v289, %v290
    %vm292 = vcmp.eq.f32.partialorder %v289, inf
    %v293 = vsel %vm292, %v289, %v291
    %vm294 = vcmp.eq.f32.partialorder %v289, 0.0
    %v295 = vand.u32 %v289, 2147483648
    %v296 = vsel %vm294, %v295, %v293
    %v298 = vsel %vm45, %v285, 0
    %300 = vmatprep.subr.mxu0 0.0
    %301 = vmatpush1.xpose.msra.mxu0 %v298
    %302 = vmatprep.subr.mxu0 0.0
    %303 = vmatpush1.xpose.msra.mxu0 0.0
    %304 = vmatprep.subr.mxu0 0.0
    %305 = vmatpush1.xpose.msra.mxu0 0.0
    %306 = vmatprep.subr.mxu0 0.0
    %307 = vmatpush1.xpose.msra.mxu0 0.0
    %308 = vmatprep.subr.mxu0 0.0
    %309 = vmatpush1.xpose.msra.mxu0 0.0
    %310 = vmatprep.subr.mxu0 0.0
    %311 = vmatpush1.xpose.msra.mxu0 0.0
    %312 = vmatprep.subr.mxu0 0.0
    %313 = vmatpush1.xpose.msra.mxu0 0.0
    %314 = vmatprep.subr.mxu0 0.0
    %315 = vmatpush1.xpose.msra.mxu0 0.0
    %316 = vmatprep.subr.mxu0 0.0
    %317 = vmatpush1.xpose.msra.mxu0 0.0
    %318 = vmatprep.subr.mxu0 0.0
    %319 = vmatpush1.xpose.msra.mxu0 0.0
    %320 = vmatprep.subr.mxu0 0.0
    %321 = vmatpush1.xpose.msra.mxu0 0.0
    %322 = vmatprep.subr.mxu0 0.0
    %323 = vmatpush1.xpose.msra.mxu0 0.0
    %324 = vmatprep.subr.mxu0 0.0
    %325 = vmatpush1.xpose.msra.mxu0 0.0
    %326 = vmatprep.subr.mxu0 0.0
    %327 = vmatpush1.xpose.msra.mxu0 0.0
    %328 = vmatprep.subr.mxu0 0.0
    %329 = vmatpush1.xpose.msra.mxu0 0.0
    %330 = vmatprep.subr.mxu0 0.0
    %331 = vmatpush1.xpose.msra.mxu0 0.0
    %332 = vmatprep.subr.mxu0 0.0
    %333 = vmatpush1.xpose.msra.mxu0 0.0
    %334 = vmatprep.subr.mxu0 0.0
    %335 = vmatpush1.xpose.msra.mxu0 0.0
    %336 = vmatprep.subr.mxu0 0.0
    %337 = vmatpush1.xpose.msra.mxu0 0.0
    %338 = vmatprep.subr.mxu0 0.0
    %339 = vmatpush1.xpose.msra.mxu0 0.0
    %340 = vmatprep.subr.mxu0 0.0
    %341 = vmatpush1.xpose.msra.mxu0 0.0
    %342 = vmatprep.subr.mxu0 0.0
    %343 = vmatpush1.xpose.msra.mxu0 0.0
    %344 = vmatprep.subr.mxu0 0.0
    %345 = vmatpush1.xpose.msra.mxu0 0.0
    %346 = vmatprep.subr.mxu0 0.0
    %347 = vmatpush1.xpose.msra.mxu0 0.0
    %348 = vmatprep.subr.mxu0 0.0
    %349 = vmatpush1.xpose.msra.mxu0 0.0
    %350 = vmatprep.subr.mxu0 0.0
    %351 = vmatpush1.xpose.msra.mxu0 0.0
    %352 = vmatprep.subr.mxu0 0.0
    %353 = vmatpush1.xpose.msra.mxu0 0.0
    %354 = vmatprep.subr.mxu0 0.0
    %355 = vmatpush1.xpose.msra.mxu0 0.0
    %356 = vmatprep.subr.mxu0 0.0
    %357 = vmatpush1.xpose.msra.mxu0 0.0
    %358 = vmatprep.subr.mxu0 0.0
    %359 = vmatpush1.xpose.msra.mxu0 0.0
    %360 = vmatprep.subr.mxu0 0.0
    %361 = vmatpush1.xpose.msra.mxu0 0.0
    %362 = vmatprep.subr.mxu0 0.0
    %363 = vmatpush1.xpose.msra.mxu0 0.0
    %364 = vmatprep.mubr.f32.mxu0 0.0
    %365 = vmatmul.mubr.f32.gmra.mrb[0].mxu0 %v298
    %v366 = vpop.f32.mrb[0].mxu0
    %v367 = vadd.f32 0.0, %v366
    %v368 = vpop.f32.mrb[0].mxu0
    %369 = vdwg.mxu0
    %370 = vxpose.xlu0.b32.start [1/16] %v296, 128
    %371 = vxpose.xlu0.b32.cont [2/16] 0.0, 128
    %372 = vxpose.xlu0.b32.cont [3/16] 0.0, 128
    %373 = vxpose.xlu0.b32.cont [4/16] 0.0, 128
    %374 = vxpose.xlu0.b32.cont [5/16] 0.0, 128
    %375 = vxpose.xlu0.b32.cont [6/16] 0.0, 128
    %376 = vxpose.xlu0.b32.cont [7/16] 0.0, 128
    %377 = vxpose.xlu0.b32.cont [8/16] 0.0, 128
    %378 = vxpose.xlu0.b32.cont [9/16] 0.0, 128
    %379 = vxpose.xlu0.b32.cont [10/16] 0.0, 128
    %380 = vxpose.xlu0.b32.cont [11/16] 0.0, 128
    %381 = vxpose.xlu0.b32.cont [12/16] 0.0, 128
    %382 = vxpose.xlu0.b32.cont [13/16] 0.0, 128
    %383 = vxpose.xlu0.b32.cont [14/16] 0.0, 128
    %384 = vxpose.xlu0.b32.cont [15/16] 0.0, 128
    %385 = vxpose.xlu0.b32.end [16/16] 0.0, 128
    %v386 = vpop.trf.xlu0
    %v387 = vpop.trf.xlu0
    %v388 = vpop.trf.xlu0
    %v389 = vpop.trf.xlu0
    %v390 = vpop.trf.xlu0
    %v391 = vpop.trf.xlu0
    %v392 = vpop.trf.xlu0
    %v393 = vpop.trf.xlu0
    %v394 = vpop.trf.xlu0
    %v395 = vpop.trf.xlu0
    %v396 = vpop.trf.xlu0
    %v397 = vpop.trf.xlu0
    %v398 = vpop.trf.xlu0
    %v399 = vpop.trf.xlu0
    %v400 = vpop.trf.xlu0
    %v401 = vpop.trf.xlu0
    %v402 = vlaneseq
    %v403 = vshrl.u32 %v402, 7
    %v404 = vsub.s32 0, %v403
    %v405 = vrot.slane %v386, %v404
    %v406 = vmul.f32 %v296, %v405
    %v407 = vrcp.pop %v406
    %v408 = vmul.f32 %v367, %v407
    %409 = vmatprep.subr.mxu0 0.0
    %410 = vmatpush1.msra.mxu0 %v32
    %411 = vmatprep.subr.mxu0 0.0
    %412 = vmatpush1.msra.mxu0 %v33
    %413 = vmatprep.subr.mxu0 0.0
    %414 = vmatpush1.msra.mxu0 %v34
    %415 = vmatprep.subr.mxu0 0.0
    %416 = vmatpush1.msra.mxu0 %v35
    %417 = vmatprep.subr.mxu0 0.0
    %418 = vmatpush1.msra.mxu0 0.0
    %419 = vmatprep.subr.mxu0 0.0
    %420 = vmatpush1.msra.mxu0 0.0
    %421 = vmatprep.subr.mxu0 0.0
    %422 = vmatpush1.msra.mxu0 0.0
    %423 = vmatprep.subr.mxu0 0.0
    %424 = vmatpush1.msra.mxu0 0.0
    %425 = vmatprep.subr.mxu0 0.0
    %426 = vmatpush1.msra.mxu0 0.0
    %427 = vmatprep.subr.mxu0 0.0
    %428 = vmatpush1.msra.mxu0 0.0
    %429 = vmatprep.subr.mxu0 0.0
    %430 = vmatpush1.msra.mxu0 0.0
    %431 = vmatprep.subr.mxu0 0.0
    %432 = vmatpush1.msra.mxu0 0.0
    %433 = vmatprep.subr.mxu0 0.0
    %434 = vmatpush1.msra.mxu0 0.0
    %435 = vmatprep.subr.mxu0 0.0
    %436 = vmatpush1.msra.mxu0 0.0
    %437 = vmatprep.subr.mxu0 0.0
    %438 = vmatpush1.msra.mxu0 0.0
    %439 = vmatprep.subr.mxu0 0.0
    %440 = vmatpush1.msra.mxu0 0.0
    %441 = vmatprep.subr.mxu0 0.0
    %442 = vmatpush1.msra.mxu0 0.0
    %443 = vmatprep.subr.mxu0 0.0
    %444 = vmatpush1.msra.mxu0 0.0
    %445 = vmatprep.subr.mxu0 0.0
    %446 = vmatpush1.msra.mxu0 0.0
    %447 = vmatprep.subr.mxu0 0.0
    %448 = vmatpush1.msra.mxu0 0.0
    %449 = vmatprep.subr.mxu0 0.0
    %450 = vmatpush1.msra.mxu0 0.0
    %451 = vmatprep.subr.mxu0 0.0
    %452 = vmatpush1.msra.mxu0 0.0
    %453 = vmatprep.subr.mxu0 0.0
    %454 = vmatpush1.msra.mxu0 0.0
    %455 = vmatprep.subr.mxu0 0.0
    %456 = vmatpush1.msra.mxu0 0.0
    %457 = vmatprep.subr.mxu0 0.0
    %458 = vmatpush1.msra.mxu0 0.0
    %459 = vmatprep.subr.mxu0 0.0
    %460 = vmatpush1.msra.mxu0 0.0
    %461 = vmatprep.subr.mxu0 0.0
    %462 = vmatpush1.msra.mxu0 0.0
    %463 = vmatprep.subr.mxu0 0.0
    %464 = vmatpush1.msra.mxu0 0.0
    %465 = vmatprep.subr.mxu0 0.0
    %466 = vmatpush1.msra.mxu0 0.0
    %467 = vmatprep.subr.mxu0 0.0
    %468 = vmatpush1.msra.mxu0 0.0
    %469 = vmatprep.subr.mxu0 0.0
    %470 = vmatpush1.msra.mxu0 0.0
    %471 = vmatprep.subr.mxu0 0.0
    %472 = vmatpush1.msra.mxu0 0.0
    %473 = vmatprep.mubr.f32.mxu0 0.0
    %474 = vmatmul.mubr.f32.gmra.mrb[0].mxu0 %v213
    %v475 = vpop.f32.mrb[0].mxu0
    %v476 = vadd.f32 0.0, %v475
    %v477 = vpop.f32.mrb[0].mxu0
    %478 = vdwg.mxu0
    %v479 = vlaneseq
    %v480 = vshrl.u32 %v479, 7
    %v481 = vsub.s32 3, %v480
    %v482 = vrot.slane %v40, %v481
    %vm483 = vcmask 64512
    %v485 = vsel %vm483, %v408, 0
    %487 = vmatprep.subr.mxu0 0.0
    %488 = vmatpush1.msra.mxu0 %v476
    %489 = vmatprep.subr.mxu0 0.0
    %490 = vmatpush1.msra.mxu0 0.0
    %491 = vmatprep.subr.mxu0 0.0
    %492 = vmatpush1.msra.mxu0 0.0
    %493 = vmatprep.subr.mxu0 0.0
    %494 = vmatpush1.msra.mxu0 0.0
    %495 = vmatprep.subr.mxu0 0.0
    %496 = vmatpush1.msra.mxu0 0.0
    %497 = vmatprep.subr.mxu0 0.0
    %498 = vmatpush1.msra.mxu0 0.0
    %499 = vmatprep.subr.mxu0 0.0
    %500 = vmatpush1.msra.mxu0 0.0
    %501 = vmatprep.subr.mxu0 0.0
    %502 = vmatpush1.msra.mxu0 0.0
    %503 = vmatprep.subr.mxu0 0.0
    %504 = vmatpush1.msra.mxu0 0.0
    %505 = vmatprep.subr.mxu0 0.0
    %506 = vmatpush1.msra.mxu0 0.0
    %507 = vmatprep.subr.mxu0 0.0
    %508 = vmatpush1.msra.mxu0 0.0
    %509 = vmatprep.subr.mxu0 0.0
    %510 = vmatpush1.msra.mxu0 0.0
    %511 = vmatprep.subr.mxu0 0.0
    %512 = vmatpush1.msra.mxu0 0.0
    %513 = vmatprep.subr.mxu0 0.0
    %514 = vmatpush1.msra.mxu0 0.0
    %515 = vmatprep.subr.mxu0 0.0
    %516 = vmatpush1.msra.mxu0 0.0
    %517 = vmatprep.subr.mxu0 0.0
    %518 = vmatpush1.msra.mxu0 0.0
    %519 = vmatprep.subr.mxu0 0.0
    %520 = vmatpush1.msra.mxu0 0.0
    %521 = vmatprep.subr.mxu0 0.0
    %522 = vmatpush1.msra.mxu0 0.0
    %523 = vmatprep.subr.mxu0 0.0
    %524 = vmatpush1.msra.mxu0 0.0
    %525 = vmatprep.subr.mxu0 0.0
    %526 = vmatpush1.msra.mxu0 0.0
    %527 = vmatprep.subr.mxu0 0.0
    %528 = vmatpush1.msra.mxu0 0.0
    %529 = vmatprep.subr.mxu0 0.0
    %530 = vmatpush1.msra.mxu0 0.0
    %531 = vmatprep.subr.mxu0 0.0
    %532 = vmatpush1.msra.mxu0 0.0
    %533 = vmatprep.subr.mxu0 0.0
    %534 = vmatpush1.msra.mxu0 0.0
    %535 = vmatprep.subr.mxu0 0.0
    %536 = vmatpush1.msra.mxu0 0.0
    %537 = vmatprep.subr.mxu0 0.0
    %538 = vmatpush1.msra.mxu0 0.0
    %539 = vmatprep.subr.mxu0 0.0
    %540 = vmatpush1.msra.mxu0 0.0
    %541 = vmatprep.subr.mxu0 0.0
    %542 = vmatpush1.msra.mxu0 0.0
    %543 = vmatprep.subr.mxu0 0.0
    %544 = vmatpush1.msra.mxu0 0.0
    %545 = vmatprep.subr.mxu0 0.0
    %546 = vmatpush1.msra.mxu0 0.0
    %547 = vmatprep.subr.mxu0 0.0
    %548 = vmatpush1.msra.mxu0 0.0
    %549 = vmatprep.subr.mxu0 0.0
    %550 = vmatpush1.msra.mxu0 0.0
    %551 = vmatprep.mubr.f32.mxu0 0.0
    %552 = vmatmul.mubr.f32.gmra.mrb[0].mxu0 %v485
    %v553 = vpop.f32.mrb[0].mxu0
    %v554 = vadd.f32 %v482, %v553
    %v555 = vpop.f32.mrb[0].mxu0
    %556 = vdwg.mxu0
    %vm557 = vcmp.gt.f32.partialorder %v554, 0.0
    %v558 = vmin.f32 %v554, 0.0
    %v559 = vmul.f32 %v558, 1.442695
    %v560 = vpow.pop %v559
    %v561 = vsub.f32 %v560, 1.0
    %v562 = vsel %vm557, %v554, %v561
    %v563 = vadd.f32 %v207, %v562
    %v565 = vsel %vm45, %v562, 0
    %567 = vmatprep.subr.mxu0 0.0
    %568 = vmatpush1.msra.mxu0 %v36
    %569 = vmatprep.subr.mxu0 0.0
    %570 = vmatpush1.msra.mxu0 %v37
    %571 = vmatprep.subr.mxu0 0.0
    %572 = vmatpush1.msra.mxu0 %v38
    %573 = vmatprep.subr.mxu0 0.0
    %574 = vmatpush1.msra.mxu0 %v39
    %575 = vmatprep.subr.mxu0 0.0
    %576 = vmatpush1.msra.mxu0 0.0
    %577 = vmatprep.subr.mxu0 0.0
    %578 = vmatpush1.msra.mxu0 0.0
    %579 = vmatprep.subr.mxu0 0.0
    %580 = vmatpush1.msra.mxu0 0.0
    %581 = vmatprep.subr.mxu0 0.0
    %582 = vmatpush1.msra.mxu0 0.0
    %583 = vmatprep.subr.mxu0 0.0
    %584 = vmatpush1.msra.mxu0 0.0
    %585 = vmatprep.subr.mxu0 0.0
    %586 = vmatpush1.msra.mxu0 0.0
    %587 = vmatprep.subr.mxu0 0.0
    %588 = vmatpush1.msra.mxu0 0.0
    %589 = vmatprep.subr.mxu0 0.0
    %590 = vmatpush1.msra.mxu0 0.0
    %591 = vmatprep.subr.mxu0 0.0
    %592 = vmatpush1.msra.mxu0 0.0
    %593 = vmatprep.subr.mxu0 0.0
    %594 = vmatpush1.msra.mxu0 0.0
    %595 = vmatprep.subr.mxu0 0.0
    %596 = vmatpush1.msra.mxu0 0.0
    %597 = vmatprep.subr.mxu0 0.0
    %598 = vmatpush1.msra.mxu0 0.0
    %599 = vmatprep.subr.mxu0 0.0
    %600 = vmatpush1.msra.mxu0 0.0
    %601 = vmatprep.subr.mxu0 0.0
    %602 = vmatpush1.msra.mxu0 0.0
    %603 = vmatprep.subr.mxu0 0.0
    %604 = vmatpush1.msra.mxu0 0.0
    %605 = vmatprep.subr.mxu0 0.0
    %606 = vmatpush1.msra.mxu0 0.0
    %607 = vmatprep.subr.mxu0 0.0
    %608 = vmatpush1.msra.mxu0 0.0
    %609 = vmatprep.subr.mxu0 0.0
    %610 = vmatpush1.msra.mxu0 0.0
    %611 = vmatprep.subr.mxu0 0.0
    %612 = vmatpush1.msra.mxu0 0.0
    %613 = vmatprep.subr.mxu0 0.0
    %614 = vmatpush1.msra.mxu0 0.0
    %615 = vmatprep.subr.mxu0 0.0
    %616 = vmatpush1.msra.mxu0 0.0
    %617 = vmatprep.subr.mxu0 0.0
    %618 = vmatpush1.msra.mxu0 0.0
    %619 = vmatprep.subr.mxu0 0.0
    %620 = vmatpush1.msra.mxu0 0.0
    %621 = vmatprep.subr.mxu0 0.0
    %622 = vmatpush1.msra.mxu0 0.0
    %623 = vmatprep.subr.mxu0 0.0
    %624 = vmatpush1.msra.mxu0 0.0
    %625 = vmatprep.subr.mxu0 0.0
    %626 = vmatpush1.msra.mxu0 0.0
    %627 = vmatprep.subr.mxu0 0.0
    %628 = vmatpush1.msra.mxu0 0.0
    %629 = vmatprep.subr.mxu0 0.0
    %630 = vmatpush1.msra.mxu0 0.0
    %631 = vmatprep.mubr.f32.mxu0 0.0
    %632 = vmatmul.mubr.f32.gmra.mrb[0].mxu0 %v565
    %v633 = vpop.f32.mrb[0].mxu0
    %v634 = vadd.f32 0.0, %v633
    %v635 = vpop.f32.mrb[0].mxu0
    %636 = vdwg.mxu0
    %v637 = vlaneseq
    %v638 = vshrl.u32 %v637, 7
    %v639 = vsub.s32 4, %v638
    %v640 = vrot.slane %v40, %v639
    %641 = vmatprep.subr.mxu0 0.0
    %642 = vmatpush1.msra.mxu0 %v634
    %643 = vmatprep.subr.mxu0 0.0
    %644 = vmatpush1.msra.mxu0 0.0
    %645 = vmatprep.subr.mxu0 0.0
    %646 = vmatpush1.msra.mxu0 0.0
    %647 = vmatprep.subr.mxu0 0.0
    %648 = vmatpush1.msra.mxu0 0.0
    %649 = vmatprep.subr.mxu0 0.0
    %650 = vmatpush1.msra.mxu0 0.0
    %651 = vmatprep.subr.mxu0 0.0
    %652 = vmatpush1.msra.mxu0 0.0
    %653 = vmatprep.subr.mxu0 0.0
    %654 = vmatpush1.msra.mxu0 0.0
    %655 = vmatprep.subr.mxu0 0.0
    %656 = vmatpush1.msra.mxu0 0.0
    %657 = vmatprep.subr.mxu0 0.0
    %658 = vmatpush1.msra.mxu0 0.0
    %659 = vmatprep.subr.mxu0 0.0
    %660 = vmatpush1.msra.mxu0 0.0
    %661 = vmatprep.subr.mxu0 0.0
    %662 = vmatpush1.msra.mxu0 0.0
    %663 = vmatprep.subr.mxu0 0.0
    %664 = vmatpush1.msra.mxu0 0.0
    %665 = vmatprep.subr.mxu0 0.0
    %666 = vmatpush1.msra.mxu0 0.0
    %667 = vmatprep.subr.mxu0 0.0
    %668 = vmatpush1.msra.mxu0 0.0
    %669 = vmatprep.subr.mxu0 0.0
    %670 = vmatpush1.msra.mxu0 0.0
    %671 = vmatprep.subr.mxu0 0.0
    %672 = vmatpush1.msra.mxu0 0.0
    %673 = vmatprep.subr.mxu0 0.0
    %674 = vmatpush1.msra.mxu0 0.0
    %675 = vmatprep.subr.mxu0 0.0
    %676 = vmatpush1.msra.mxu0 0.0
    %677 = vmatprep.subr.mxu0 0.0
    %678 = vmatpush1.msra.mxu0 0.0
    %679 = vmatprep.subr.mxu0 0.0
    %680 = vmatpush1.msra.mxu0 0.0
    %681 = vmatprep.subr.mxu0 0.0
    %682 = vmatpush1.msra.mxu0 0.0
    %683 = vmatprep.subr.mxu0 0.0
    %684 = vmatpush1.msra.mxu0 0.0
    %685 = vmatprep.subr.mxu0 0.0
    %686 = vmatpush1.msra.mxu0 0.0
    %687 = vmatprep.subr.mxu0 0.0
    %688 = vmatpush1.msra.mxu0 0.0
    %689 = vmatprep.subr.mxu0 0.0
    %690 = vmatpush1.msra.mxu0 0.0
    %691 = vmatprep.subr.mxu0 0.0
    %692 = vmatpush1.msra.mxu0 0.0
    %693 = vmatprep.subr.mxu0 0.0
    %694 = vmatpush1.msra.mxu0 0.0
    %695 = vmatprep.subr.mxu0 0.0
    %696 = vmatpush1.msra.mxu0 0.0
    %697 = vmatprep.subr.mxu0 0.0
    %698 = vmatpush1.msra.mxu0 0.0
    %699 = vmatprep.subr.mxu0 0.0
    %700 = vmatpush1.msra.mxu0 0.0
    %701 = vmatprep.subr.mxu0 0.0
    %702 = vmatpush1.msra.mxu0 0.0
    %703 = vmatprep.subr.mxu0 0.0
    %704 = vmatpush1.msra.mxu0 0.0
    %705 = vmatprep.mubr.f32.mxu0 0.0
    %706 = vmatmul.mubr.f32.gmra.mrb[0].mxu0 %v485
    %v707 = vpop.f32.mrb[0].mxu0
    %v708 = vadd.f32 %v640, %v707
    %v709 = vpop.f32.mrb[0].mxu0
    %710 = vdwg.mxu0
    %vm711 = vcmp.gt.f32.partialorder %v708, 0.0
    %v712 = vmin.f32 %v708, 0.0
    %v713 = vmul.f32 %v712, 1.442695
    %v714 = vpow.pop %v713
    %v715 = vsub.f32 %v714, 1.0
    %v716 = vsel %vm711, %v708, %v715
    %v717 = vadd.f32 %v563, %v716
    %718 = vst.msk [vmem:[%s3] sm:$0xff] %vm45, %v717
    %719 = vst.msk [vmem:[#allocation2] sm:$0xff] %vm483, %v408
    %720 = vst.msk [vmem:[#allocation4] sm:$0xff] %vm45, %v716
    // Predicated region
    $region14: #{model_forward.4} parent=1 // pred_check
      _
    $region15: #{model_forward.4} parent=1 // pred_check_branch
      %722 = sbr.rel (0) target = $region17
    $region16: #{model_forward.4} parent=1 // pred_region
      _
    $region17: #{model_forward.4} parent=1 // pred_fallthru
      _
    // Predicated region
    $region18: #{model_forward.4} parent=1 // pred_check
      _
    $region19: #{model_forward.4} parent=1 // pred_check_branch
      %724 = sbr.rel (0) target = $region21
    $region20: #{model_forward.4} parent=1 // pred_region
      %s726 = ssub.s32 128, 128
      %727 = vsyncadd [#allocation3], %s726
      %s729 = sshll.u32 [#allocation2], 4
      %s730 = int_to_ptr.vmem [resolvable:$true] %s729
      %732 = dma.vmem_to_hbm [thread:$0]  %s730, 128, %s4, [#allocation3]
    $region21: #{model_forward.4} parent=1 // pred_fallthru
      _
    // Predicated region
    $region22: #{model_forward.4} parent=1 // pred_check
      _
    $region23: #{model_forward.4} parent=1 // pred_check_branch
      %734 = sbr.rel (0) target = $region25
    $region24: #{model_forward.4} parent=1 // pred_region
      %s736 = ssub.s32 128, 128
      %737 = vsyncadd [#allocation5], %s736
      %s739 = sshll.u32 [#allocation4], 4
      %s740 = int_to_ptr.vmem [resolvable:$true] %s739
      %742 = dma.vmem_to_hbm [thread:$0]  %s740, 128, %s5, [#allocation5]
    $region25: #{model_forward.4} parent=1 // pred_fallthru
      _
    // Predicated region
    $region26: #{model_forward.4} parent=1 // pred_check
      _
    $region27: #{model_forward.4} parent=1 // pred_check_branch
      %744 = sbr.rel (0) target = $region29
    $region28: #{model_forward.4} parent=1 // pred_region
      _
    $region29: #{model_forward.4} parent=1 // pred_fallthru
      _
    // Predicated region
    $region30: #{model_forward.4} parent=1 // pred_check
      _
    $region31: #{model_forward.4} parent=1 // pred_check_branch
      %746 = sbr.rel (0) target = $region33
    $region32: #{model_forward.4} parent=1 // pred_region
      %747 = dma.done [#allocation3], 128
    $region33: #{model_forward.4} parent=1 // pred_fallthru
      _
    // Predicated region
    $region34: #{model_forward.4} parent=1 // pred_check
      _
    $region35: #{model_forward.4} parent=1 // pred_check_branch
      %749 = sbr.rel (0) target = $region37
    $region36: #{model_forward.4} parent=1 // pred_region
      %750 = dma.done [#allocation5], 128
    $region37: #{model_forward.4} parent=1 // pred_fallthru
      _
    %751 = vsyncpa [#allocation3], 1
    %752 = vsyncpa [#allocation5], 1

// kernel: model_forward.7
$region0: #{model_forward.7}
  #allocation0 [shape = 'u32[]', space=smem, size = 0x4, offset = 0x4, fixed_abs, tag = 'smem constant byte address 0x4 - core index']
  #allocation1 [shape = 'u32[144,128]{1,0:T(1,128)}', space=vmem, size = 0x12000, scoped, tag = 'internal scratch']
  %s0 = inlined_call_operand.vmem [shape: f32[8,32], index: 0, kind: input, shape index: {}]
  %s1 = inlined_call_operand.vmem [shape: f32[8,512], index: 1, kind: input, shape index: {}]
  %s2 = inlined_call_operand.vmem [shape: f32[512,16], index: 2, kind: input, shape index: {}]
  %s3 = inlined_call_operand.vmem [shape: f32[1,16], index: 3, kind: input, shape index: {}]
  %s4 = inlined_call_operand.vmem [shape: f32[48,10], index: 4, kind: input, shape index: {}]
  %s5 = inlined_call_operand.vmem [shape: f32[1,10], index: 5, kind: input, shape index: {}]
  %s6 = inlined_call_operand.hbm [shape: f32[8,48], index: 6, kind: output, shape index: {0}]
  %s7 = inlined_call_operand.hbm [shape: f32[8,10], index: 7, kind: output, shape index: {1}]
  %8 = xla_tuple %s6, %s7
  %s9 = sld [smem:[#allocation0]]
  $region42: #{model_forward.7} parent=0
    _
  %s11 = ssub.s32 1, %s9
  %s12 = scalar_select 0, %s11, %s9
  $region1: #{model_forward.7} parent=0
    #allocation2 [shape = 'u8[4096]{0}', space=vmem, size = 0x1000, scoped, tag = 'output window, operand 0, single buffered']
    #allocation3 [shape = 's32[1]{0}', space=sflag, size = 0x4, scoped, tag = 'scoped memory for model_forward.7']
    #allocation4 [shape = 'u8[4096]{0}', space=vmem, size = 0x1000, scoped, tag = 'output window, operand 1, single buffered']
    #allocation5 [shape = 's32[1]{0}', space=sflag, size = 0x4, scoped, tag = 'scoped memory for model_forward.7']
    %13 = vsyncpa [#allocation3], 0
    %14 = vsyncpa [#allocation5], 0
    // Predicated region
    $region2: #{model_forward.7} parent=1 // pred_check
      _
    $region3: #{model_forward.7} parent=1 // pred_check_branch
      %16 = sbr.rel (0) target = $region5
    $region4: #{model_forward.7} parent=1 // pred_region
      _
    $region5: #{model_forward.7} parent=1 // pred_fallthru
      _
    // Predicated region
    $region6: #{model_forward.7} parent=1 // pred_check
      _
    $region7: #{model_forward.7} parent=1 // pred_check_branch
      %18 = sbr.rel (0) target = $region9
    $region8: #{model_forward.7} parent=1 // pred_region
      _
    $region9: #{model_forward.7} parent=1 // pred_fallthru
      _
    // Predicated region
    $region10: #{model_forward.7} parent=1 // pred_check
      _
    $region11: #{model_forward.7} parent=1 // pred_check_branch
      %20 = sbr.rel (0) target = $region13
    $region12: #{model_forward.7} parent=1 // pred_region
      _
    $region13: #{model_forward.7} parent=1 // pred_fallthru
      _
    // Predicated region
    $region14: #{model_forward.7} parent=1 // pred_check
      _
    $region15: #{model_forward.7} parent=1 // pred_check_branch
      %22 = sbr.rel (0) target = $region17
    $region16: #{model_forward.7} parent=1 // pred_region
      _
    $region17: #{model_forward.7} parent=1 // pred_fallthru
      _
    // Predicated region
    $region18: #{model_forward.7} parent=1 // pred_check
      _
    $region19: #{model_forward.7} parent=1 // pred_check_branch
      %24 = sbr.rel (0) target = $region21
    $region20: #{model_forward.7} parent=1 // pred_region
      _
    $region21: #{model_forward.7} parent=1 // pred_fallthru
      _
    // Predicated region
    $region22: #{model_forward.7} parent=1 // pred_check
      _
    $region23: #{model_forward.7} parent=1 // pred_check_branch
      %26 = sbr.rel (0) target = $region25
    $region24: #{model_forward.7} parent=1 // pred_region
      _
    $region25: #{model_forward.7} parent=1 // pred_fallthru
      _
    %v27 = vld [vmem:[%s0] sm:$0xff]
    %v28 = vld [vmem:[%s1] sm:$0xff]
    %v29 = vld [vmem:[%s1 + $0x8] sm:$0xff]
    %v30 = vld [vmem:[%s1 + $0x10] sm:$0xff]
    %v31 = vld [vmem:[%s1 + $0x18] sm:$0xff]
    %v32 = vld [vmem:[%s2] sm:$0xff]
    %v33 = vld [vmem:[%s2 + $0x8] sm:$0xff]
    %v34 = vld [vmem:[%s2 + $0x10] sm:$0xff]
    %v35 = vld [vmem:[%s2 + $0x18] sm:$0xff]
    %v36 = vld [vmem:[%s2 + $0x20] sm:$0xff]
    %v37 = vld [vmem:[%s2 + $0x28] sm:$0xff]
    %v38 = vld [vmem:[%s2 + $0x30] sm:$0xff]
    %v39 = vld [vmem:[%s2 + $0x38] sm:$0xff]
    %v40 = vld [vmem:[%s2 + $0x40] sm:$0xff]
    %v41 = vld [vmem:[%s2 + $0x48] sm:$0xff]
    %v42 = vld [vmem:[%s2 + $0x50] sm:$0xff]
    %v43 = vld [vmem:[%s2 + $0x58] sm:$0xff]
    %v44 = vld [vmem:[%s2 + $0x60] sm:$0xff]
    %v45 = vld [vmem:[%s2 + $0x68] sm:$0xff]
    %v46 = vld [vmem:[%s2 + $0x70] sm:$0xff]
    %v47 = vld [vmem:[%s2 + $0x78] sm:$0xff]
    %v48 = vld [vmem:[%s2 + $0x80] sm:$0xff]
    %v49 = vld [vmem:[%s2 + $0x88] sm:$0xff]
    %v50 = vld [vmem:[%s2 + $0x90] sm:$0xff]
    %v51 = vld [vmem:[%s2 + $0x98] sm:$0xff]
    %v52 = vld [vmem:[%s2 + $0xa0] sm:$0xff]
    %v53 = vld [vmem:[%s2 + $0xa8] sm:$0xff]
    %v54 = vld [vmem:[%s2 + $0xb0] sm:$0xff]
    %v55 = vld [vmem:[%s2 + $0xb8] sm:$0xff]
    %v56 = vld [vmem:[%s2 + $0xc0] sm:$0xff]
    %v57 = vld [vmem:[%s2 + $0xc8] sm:$0xff]
    %v58 = vld [vmem:[%s2 + $0xd0] sm:$0xff]
    %v59 = vld [vmem:[%s2 + $0xd8] sm:$0xff]
    %v60 = vld [vmem:[%s2 + $0xe0] sm:$0xff]
    %v61 = vld [vmem:[%s2 + $0xe8] sm:$0xff]
    %v62 = vld [vmem:[%s2 + $0xf0] sm:$0xff]
    %v63 = vld [vmem:[%s2 + $0xf8] sm:$0xff]
    %v64 = vld [vmem:[%s2 + $0x100] sm:$0xff]
    %v65 = vld [vmem:[%s2 + $0x108] sm:$0xff]
    %v66 = vld [vmem:[%s2 + $0x110] sm:$0xff]
    %v67 = vld [vmem:[%s2 + $0x118] sm:$0xff]
    %v68 = vld [vmem:[%s2 + $0x120] sm:$0xff]
    %v69 = vld [vmem:[%s2 + $0x128] sm:$0xff]
    %v70 = vld [vmem:[%s2 + $0x130] sm:$0xff]
    %v71 = vld [vmem:[%s2 + $0x138] sm:$0xff]
    %v72 = vld [vmem:[%s2 + $0x140] sm:$0xff]
    %v73 = vld [vmem:[%s2 + $0x148] sm:$0xff]
    %v74 = vld [vmem:[%s2 + $0x150] sm:$0xff]
    %v75 = vld [vmem:[%s2 + $0x158] sm:$0xff]
    %v76 = vld [vmem:[%s2 + $0x160] sm:$0xff]
    %v77 = vld [vmem:[%s2 + $0x168] sm:$0xff]
    %v78 = vld [vmem:[%s2 + $0x170] sm:$0xff]
    %v79 = vld [vmem:[%s2 + $0x178] sm:$0xff]
    %v80 = vld [vmem:[%s2 + $0x180] sm:$0xff]
    %v81 = vld [vmem:[%s2 + $0x188] sm:$0xff]
    %v82 = vld [vmem:[%s2 + $0x190] sm:$0xff]
    %v83 = vld [vmem:[%s2 + $0x198] sm:$0xff]
    %v84 = vld [vmem:[%s2 + $0x1a0] sm:$0xff]
    %v85 = vld [vmem:[%s2 + $0x1a8] sm:$0xff]
    %v86 = vld [vmem:[%s2 + $0x1b0] sm:$0xff]
    %v87 = vld [vmem:[%s2 + $0x1b8] sm:$0xff]
    %v88 = vld [vmem:[%s2 + $0x1c0] sm:$0xff]
    %v89 = vld [vmem:[%s2 + $0x1c8] sm:$0xff]
    %v90 = vld [vmem:[%s2 + $0x1d0] sm:$0xff]
    %v91 = vld [vmem:[%s2 + $0x1d8] sm:$0xff]
    %v92 = vld [vmem:[%s2 + $0x1e0] sm:$0xff]
    %v93 = vld [vmem:[%s2 + $0x1e8] sm:$0xff]
    %v94 = vld [vmem:[%s2 + $0x1f0] sm:$0xff]
    %v95 = vld [vmem:[%s2 + $0x1f8] sm:$0xff]
    %v96 = vld [vmem:[%s3] sm:$0x1]
    %v98 = vlaneseq
    %v99 = vshrl.u32 %v98, 7
    %v100 = vsub.s32 0, %v99
    %v101 = vrot.slane %v96, %v100
    %103 = vmatprep.subr.mxu0 0.0
    %104 = vmatpush1.msra.mxu0 %v32
    %105 = vmatprep.subr.mxu0 0.0
    %106 = vmatpush1.msra.mxu0 %v33
    %107 = vmatprep.subr.mxu0 0.0
    %108 = vmatpush1.msra.mxu0 %v34
    %109 = vmatprep.subr.mxu0 0.0
    %110 = vmatpush1.msra.mxu0 %v35
    %111 = vmatprep.subr.mxu0 0.0
    %112 = vmatpush1.msra.mxu0 %v36
    %113 = vmatprep.subr.mxu0 0.0
    %114 = vmatpush1.msra.mxu0 %v37
    %115 = vmatprep.subr.mxu0 0.0
    %116 = vmatpush1.msra.mxu0 %v38
    %117 = vmatprep.subr.mxu0 0.0
    %118 = vmatpush1.msra.mxu0 %v39
    %119 = vmatprep.subr.mxu0 0.0
    %120 = vmatpush1.msra.mxu0 %v40
    %121 = vmatprep.subr.mxu0 0.0
    %122 = vmatpush1.msra.mxu0 %v41
    %123 = vmatprep.subr.mxu0 0.0
    %124 = vmatpush1.msra.mxu0 %v42
    %125 = vmatprep.subr.mxu0 0.0
    %126 = vmatpush1.msra.mxu0 %v43
    %127 = vmatprep.subr.mxu0 0.0
    %128 = vmatpush1.msra.mxu0 %v44
    %129 = vmatprep.subr.mxu0 0.0
    %130 = vmatpush1.msra.mxu0 %v45
    %131 = vmatprep.subr.mxu0 0.0
    %132 = vmatpush1.msra.mxu0 %v46
    %133 = vmatprep.subr.mxu0 0.0
    %134 = vmatpush1.msra.mxu0 %v47
    %135 = vmatprep.subr.mxu0 0.0
    %136 = vmatpush1.msra.mxu0 %v48
    %137 = vmatprep.subr.mxu0 0.0
    %138 = vmatpush1.msra.mxu0 %v49
    %139 = vmatprep.subr.mxu0 0.0
    %140 = vmatpush1.msra.mxu0 %v50
    %141 = vmatprep.subr.mxu0 0.0
    %142 = vmatpush1.msra.mxu0 %v51
    %143 = vmatprep.subr.mxu0 0.0
    %144 = vmatpush1.msra.mxu0 %v52
    %145 = vmatprep.subr.mxu0 0.0
    %146 = vmatpush1.msra.mxu0 %v53
    %147 = vmatprep.subr.mxu0 0.0
    %148 = vmatpush1.msra.mxu0 %v54
    %149 = vmatprep.subr.mxu0 0.0
    %150 = vmatpush1.msra.mxu0 %v55
    %151 = vmatprep.subr.mxu0 0.0
    %152 = vmatpush1.msra.mxu0 %v56
    %153 = vmatprep.subr.mxu0 0.0
    %154 = vmatpush1.msra.mxu0 %v57
    %155 = vmatprep.subr.mxu0 0.0
    %156 = vmatpush1.msra.mxu0 %v58
    %157 = vmatprep.subr.mxu0 0.0
    %158 = vmatpush1.msra.mxu0 %v59
    %159 = vmatprep.subr.mxu0 0.0
    %160 = vmatpush1.msra.mxu0 %v60
    %161 = vmatprep.subr.mxu0 0.0
    %162 = vmatpush1.msra.mxu0 %v61
    %163 = vmatprep.subr.mxu0 0.0
    %164 = vmatpush1.msra.mxu0 %v62
    %165 = vmatprep.subr.mxu0 0.0
    %166 = vmatpush1.msra.mxu0 %v63
    %167 = vmatprep.mubr.f32.mxu0 %v29
    %168 = vmatmul.mubr.f32.gmra.mrb[0].mxu0 %v28
    %v169 = vpop.f32.mrb[0].mxu0
    %v170 = vadd.f32 %v101, %v169
    %v171 = vpop.f32.mrb[0].mxu0
    %172 = vdwg.mxu0
    %173 = vmatprep.subr.mxu0 0.0
    %174 = vmatpush1.msra.mxu0 %v64
    %175 = vmatprep.subr.mxu0 0.0
    %176 = vmatpush1.msra.mxu0 %v65
    %177 = vmatprep.subr.mxu0 0.0
    %178 = vmatpush1.msra.mxu0 %v66
    %179 = vmatprep.subr.mxu0 0.0
    %180 = vmatpush1.msra.mxu0 %v67
    %181 = vmatprep.subr.mxu0 0.0
    %182 = vmatpush1.msra.mxu0 %v68
    %183 = vmatprep.subr.mxu0 0.0
    %184 = vmatpush1.msra.mxu0 %v69
    %185 = vmatprep.subr.mxu0 0.0
    %186 = vmatpush1.msra.mxu0 %v70
    %187 = vmatprep.subr.mxu0 0.0
    %188 = vmatpush1.msra.mxu0 %v71
    %189 = vmatprep.subr.mxu0 0.0
    %190 = vmatpush1.msra.mxu0 %v72
    %191 = vmatprep.subr.mxu0 0.0
    %192 = vmatpush1.msra.mxu0 %v73
    %193 = vmatprep.subr.mxu0 0.0
    %194 = vmatpush1.msra.mxu0 %v74
    %195 = vmatprep.subr.mxu0 0.0
    %196 = vmatpush1.msra.mxu0 %v75
    %197 = vmatprep.subr.mxu0 0.0
    %198 = vmatpush1.msra.mxu0 %v76
    %199 = vmatprep.subr.mxu0 0.0
    %200 = vmatpush1.msra.mxu0 %v77
    %201 = vmatprep.subr.mxu0 0.0
    %202 = vmatpush1.msra.mxu0 %v78
    %203 = vmatprep.subr.mxu0 0.0
    %204 = vmatpush1.msra.mxu0 %v79
    %205 = vmatprep.subr.mxu0 0.0
    %206 = vmatpush1.msra.mxu0 %v80
    %207 = vmatprep.subr.mxu0 0.0
    %208 = vmatpush1.msra.mxu0 %v81
    %209 = vmatprep.subr.mxu0 0.0
    %210 = vmatpush1.msra.mxu0 %v82
    %211 = vmatprep.subr.mxu0 0.0
    %212 = vmatpush1.msra.mxu0 %v83
    %213 = vmatprep.subr.mxu0 0.0
    %214 = vmatpush1.msra.mxu0 %v84
    %215 = vmatprep.subr.mxu0 0.0
    %216 = vmatpush1.msra.mxu0 %v85
    %217 = vmatprep.subr.mxu0 0.0
    %218 = vmatpush1.msra.mxu0 %v86
    %219 = vmatprep.subr.mxu0 0.0
    %220 = vmatpush1.msra.mxu0 %v87
    %221 = vmatprep.subr.mxu0 0.0
    %222 = vmatpush1.msra.mxu0 %v88
    %223 = vmatprep.subr.mxu0 0.0
    %224 = vmatpush1.msra.mxu0 %v89
    %225 = vmatprep.subr.mxu0 0.0
    %226 = vmatpush1.msra.mxu0 %v90
    %227 = vmatprep.subr.mxu0 0.0
    %228 = vmatpush1.msra.mxu0 %v91
    %229 = vmatprep.subr.mxu0 0.0
    %230 = vmatpush1.msra.mxu0 %v92
    %231 = vmatprep.subr.mxu0 0.0
    %232 = vmatpush1.msra.mxu0 %v93
    %233 = vmatprep.subr.mxu0 0.0
    %234 = vmatpush1.msra.mxu0 %v94
    %235 = vmatprep.subr.mxu0 0.0
    %236 = vmatpush1.msra.mxu0 %v95
    %237 = vmatprep.mubr.f32.mxu0 %v31
    %238 = vmatmul.mubr.f32.gmra.mrb[0].mxu0 %v30
    %v239 = vpop.f32.mrb[0].mxu0
    %v240 = vadd.f32 %v170, %v239
    %v241 = vpop.f32.mrb[0].mxu0
    %242 = vdwg.mxu0
    %vm243 = vcmask 261120
    %244 = vst.msk [vmem:[#allocation2] sm:$0xff] %vm243, %v27
    %246 = vrot.lane.b32.xlu0 %v240, 32
    %v247 = vpop.permute.xlu0 %246
    %vm249 = vcmask 392448
    %250 = vst.msk [vmem:[#allocation2] sm:$0xff] %vm249, %v247
    %v251 = vld [vmem:[%s4] sm:$0xff]
    %v252 = vld [vmem:[%s4 + $0x8] sm:$0xff]
    %v253 = vld [vmem:[%s4 + $0x10] sm:$0xff]
    %v254 = vld [vmem:[%s4 + $0x18] sm:$0xff]
    %v255 = vld [vmem:[%s4 + $0x20] sm:$0xff]
    %v256 = vld [vmem:[%s4 + $0x28] sm:$0xff]
    %vm257 = vcmask 130048
    %v258 = vsel %vm257, %v240, 0
    %260 = vmatprep.subr.mxu0 0.0
    %261 = vmatpush1.msra.mxu0 %v255
    %262 = vmatprep.subr.mxu0 0.0
    %263 = vmatpush1.msra.mxu0 %v256
    %264 = vmatprep.subr.mxu0 0.0
    %265 = vmatpush1.msra.mxu0 0.0
    %266 = vmatprep.subr.mxu0 0.0
    %267 = vmatpush1.msra.mxu0 0.0
    %268 = vmatprep.subr.mxu0 0.0
    %269 = vmatpush1.msra.mxu0 0.0
    %270 = vmatprep.subr.mxu0 0.0
    %271 = vmatpush1.msra.mxu0 0.0
    %272 = vmatprep.subr.mxu0 0.0
    %273 = vmatpush1.msra.mxu0 0.0
    %274 = vmatprep.subr.mxu0 0.0
    %275 = vmatpush1.msra.mxu0 0.0
    %276 = vmatprep.subr.mxu0 0.0
    %277 = vmatpush1.msra.mxu0 0.0
    %278 = vmatprep.subr.mxu0 0.0
    %279 = vmatpush1.msra.mxu0 0.0
    %280 = vmatprep.subr.mxu0 0.0
    %281 = vmatpush1.msra.mxu0 0.0
    %282 = vmatprep.subr.mxu0 0.0
    %283 = vmatpush1.msra.mxu0 0.0
    %284 = vmatprep.subr.mxu0 0.0
    %285 = vmatpush1.msra.mxu0 0.0
    %286 = vmatprep.subr.mxu0 0.0
    %287 = vmatpush1.msra.mxu0 0.0
    %288 = vmatprep.subr.mxu0 0.0
    %289 = vmatpush1.msra.mxu0 0.0
    %290 = vmatprep.subr.mxu0 0.0
    %291 = vmatpush1.msra.mxu0 0.0
    %292 = vmatprep.subr.mxu0 0.0
    %293 = vmatpush1.msra.mxu0 0.0
    %294 = vmatprep.subr.mxu0 0.0
    %295 = vmatpush1.msra.mxu0 0.0
    %296 = vmatprep.subr.mxu0 0.0
    %297 = vmatpush1.msra.mxu0 0.0
    %298 = vmatprep.subr.mxu0 0.0
    %299 = vmatpush1.msra.mxu0 0.0
    %300 = vmatprep.subr.mxu0 0.0
    %301 = vmatpush1.msra.mxu0 0.0
    %302 = vmatprep.subr.mxu0 0.0
    %303 = vmatpush1.msra.mxu0 0.0
    %304 = vmatprep.subr.mxu0 0.0
    %305 = vmatpush1.msra.mxu0 0.0
    %306 = vmatprep.subr.mxu0 0.0
    %307 = vmatpush1.msra.mxu0 0.0
    %308 = vmatprep.subr.mxu0 0.0
    %309 = vmatpush1.msra.mxu0 0.0
    %310 = vmatprep.subr.mxu0 0.0
    %311 = vmatpush1.msra.mxu0 0.0
    %312 = vmatprep.subr.mxu0 0.0
    %313 = vmatpush1.msra.mxu0 0.0
    %314 = vmatprep.subr.mxu0 0.0
    %315 = vmatpush1.msra.mxu0 0.0
    %316 = vmatprep.subr.mxu0 0.0
    %317 = vmatpush1.msra.mxu0 0.0
    %318 = vmatprep.subr.mxu0 0.0
    %319 = vmatpush1.msra.mxu0 0.0
    %320 = vmatprep.subr.mxu0 0.0
    %321 = vmatpush1.msra.mxu0 0.0
    %322 = vmatprep.subr.mxu0 0.0
    %323 = vmatpush1.msra.mxu0 0.0
    %324 = vmatprep.mubr.f32.mxu0 0.0
    %325 = vmatmul.mubr.f32.gmra.mrb[0].mxu0 %v258
    %v326 = vpop.f32.mrb[0].mxu0
    %v327 = vadd.f32 0.0, %v326
    %v328 = vpop.f32.mrb[0].mxu0
    %329 = vdwg.mxu0
    %v331 = vsel %vm243, %v27, 0
    %333 = vmatprep.subr.mxu0 0.0
    %334 = vmatpush1.msra.mxu0 %v251
    %335 = vmatprep.subr.mxu0 0.0
    %336 = vmatpush1.msra.mxu0 %v252
    %337 = vmatprep.subr.mxu0 0.0
    %338 = vmatpush1.msra.mxu0 %v253
    %339 = vmatprep.subr.mxu0 0.0
    %340 = vmatpush1.msra.mxu0 %v254
    %341 = vmatprep.subr.mxu0 0.0
    %342 = vmatpush1.msra.mxu0 0.0
    %343 = vmatprep.subr.mxu0 0.0
    %344 = vmatpush1.msra.mxu0 0.0
    %345 = vmatprep.subr.mxu0 0.0
    %346 = vmatpush1.msra.mxu0 0.0
    %347 = vmatprep.subr.mxu0 0.0
    %348 = vmatpush1.msra.mxu0 0.0
    %349 = vmatprep.subr.mxu0 0.0
    %350 = vmatpush1.msra.mxu0 0.0
    %351 = vmatprep.subr.mxu0 0.0
    %352 = vmatpush1.msra.mxu0 0.0
    %353 = vmatprep.subr.mxu0 0.0
    %354 = vmatpush1.msra.mxu0 0.0
    %355 = vmatprep.subr.mxu0 0.0
    %356 = vmatpush1.msra.mxu0 0.0
    %357 = vmatprep.subr.mxu0 0.0
    %358 = vmatpush1.msra.mxu0 0.0
    %359 = vmatprep.subr.mxu0 0.0
    %360 = vmatpush1.msra.mxu0 0.0
    %361 = vmatprep.subr.mxu0 0.0
    %362 = vmatpush1.msra.mxu0 0.0
    %363 = vmatprep.subr.mxu0 0.0
    %364 = vmatpush1.msra.mxu0 0.0
    %365 = vmatprep.subr.mxu0 0.0
    %366 = vmatpush1.msra.mxu0 0.0
    %367 = vmatprep.subr.mxu0 0.0
    %368 = vmatpush1.msra.mxu0 0.0
    %369 = vmatprep.subr.mxu0 0.0
    %370 = vmatpush1.msra.mxu0 0.0
    %371 = vmatprep.subr.mxu0 0.0
    %372 = vmatpush1.msra.mxu0 0.0
    %373 = vmatprep.subr.mxu0 0.0
    %374 = vmatpush1.msra.mxu0 0.0
    %375 = vmatprep.subr.mxu0 0.0
    %376 = vmatpush1.msra.mxu0 0.0
    %377 = vmatprep.subr.mxu0 0.0
    %378 = vmatpush1.msra.mxu0 0.0
    %379 = vmatprep.subr.mxu0 0.0
    %380 = vmatpush1.msra.mxu0 0.0
    %381 = vmatprep.subr.mxu0 0.0
    %382 = vmatpush1.msra.mxu0 0.0
    %383 = vmatprep.subr.mxu0 0.0
    %384 = vmatpush1.msra.mxu0 0.0
    %385 = vmatprep.subr.mxu0 0.0
    %386 = vmatpush1.msra.mxu0 0.0
    %387 = vmatprep.subr.mxu0 0.0
    %388 = vmatpush1.msra.mxu0 0.0
    %389 = vmatprep.subr.mxu0 0.0
    %390 = vmatpush1.msra.mxu0 0.0
    %391 = vmatprep.subr.mxu0 0.0
    %392 = vmatpush1.msra.mxu0 0.0
    %393 = vmatprep.subr.mxu0 0.0
    %394 = vmatpush1.msra.mxu0 0.0
    %395 = vmatprep.subr.mxu0 0.0
    %396 = vmatpush1.msra.mxu0 0.0
    %397 = vmatprep.mubr.f32.mxu0 0.0
    %398 = vmatmul.mubr.f32.gmra.mrb[0].mxu0 %v331
    %v399 = vpop.f32.mrb[0].mxu0
    %v400 = vadd.f32 %v327, %v399
    %v401 = vpop.f32.mrb[0].mxu0
    %402 = vdwg.mxu0
    %v403 = vld [vmem:[%s5] sm:$0x1]
    %v405 = vlaneseq
    %v406 = vshrl.u32 %v405, 7
    %v407 = vsub.s32 0, %v406
    %v408 = vrot.slane %v403, %v407
    %v410 = vadd.f32 %v400, %v408
    %vm411 = vcmask 80896
    %v412 = vsel %vm411, %v410, -inf
    %413 = vmax.xlane.f32.xlu0 %v412
    %v414 = vpop.xlane.xlu0 %413
    %v415 = vsub.f32 %v410, %v414
    %v416 = vmul.f32 %v415, 1.442695
    %v417 = vpow.pop %v416
    %v418 = vsel %vm411, %v417, 0.0
    %419 = vadd.xlane.f32.xlu0 %v418
    %v420 = vpop.xlane.xlu0 %419
    %v421 = vlog2.pop %v420
    %v422 = vmul.f32 %v421, 0.6931472
    %v423 = vadd.f32 %v422, %v414
    %v424 = vsub.f32 %v410, %v423
    %425 = vst.msk [vmem:[#allocation4] sm:$0xff] %vm411, %v424
    // Predicated region
    $region26: #{model_forward.7} parent=1 // pred_check
      _
    $region27: #{model_forward.7} parent=1 // pred_check_branch
      %427 = sbr.rel (0) target = $region29
    $region28: #{model_forward.7} parent=1 // pred_region
      %s429 = ssub.s32 128, 128
      %430 = vsyncadd [#allocation3], %s429
      %s432 = sshll.u32 [#allocation2], 4
      %s433 = int_to_ptr.vmem [resolvable:$true] %s432
      %435 = dma.vmem_to_hbm [thread:$0]  %s433, 128, %s6, [#allocation3]
    $region29: #{model_forward.7} parent=1 // pred_fallthru
      _
    // Predicated region
    $region30: #{model_forward.7} parent=1 // pred_check
      _
    $region31: #{model_forward.7} parent=1 // pred_check_branch
      %437 = sbr.rel (0) target = $region33
    $region32: #{model_forward.7} parent=1 // pred_region
      %s439 = ssub.s32 128, 128
      %440 = vsyncadd [#allocation5], %s439
      %s442 = sshll.u32 [#allocation4], 4
      %s443 = int_to_ptr.vmem [resolvable:$true] %s442
      %445 = dma.vmem_to_hbm [thread:$0]  %s443, 128, %s7, [#allocation5]
    $region33: #{model_forward.7} parent=1 // pred_fallthru
      _
    // Predicated region
    $region34: #{model_forward.7} parent=1 // pred_check
      _
    $region35: #{model_forward.7} parent=1 // pred_check_branch
      %447 = sbr.rel (0) target = $region37
    $region36: #{model_forward.7} parent=1 // pred_region
      %448 = dma.done [#allocation3], 128
    $region37: #{model_forward.7} parent=1 // pred_fallthru
      _
    // Predicated region
    $region38: #{model_forward.7} parent=1 // pred_check
      _
    $region39: #{model_forward.7} parent=1 // pred_check_branch
      %450 = sbr.rel (0) target = $region41
    $region40: #{model_forward.7} parent=1 // pred_region
      %451 = dma.done [#allocation5], 128
    $region41: #{model_forward.7} parent=1 // pred_fallthru
      _
    %452 = vsyncpa [#allocation3], 1
    %453 = vsyncpa [#allocation5], 1

// kernel: model_forward.6
$region0: #{model_forward.6}
  #allocation0 [shape = 'u32[]', space=smem, size = 0x4, offset = 0x4, fixed_abs, tag = 'smem constant byte address 0x4 - core index']
  #allocation1 [shape = 'u32[144,128]{1,0:T(1,128)}', space=vmem, size = 0x12000, scoped, tag = 'internal scratch']
  %s0 = inlined_call_operand.vmem [shape: f32[8,16384], index: 0, kind: input, shape index: {}]
  %s1 = inlined_call_operand.hbm [shape: bf16[16384,512], index: 1, kind: input, shape index: {}]
  %s2 = inlined_call_operand.vmem [shape: f32[1,512], index: 2, kind: input, shape index: {}]
  %s3 = inlined_call_operand.vmem [shape: f32[8,512], index: 3, kind: output, shape index: {}]
  %s4 = sld [smem:[#allocation0]]
  $region57: #{model_forward.6} parent=0
    _
  %s6 = ssub.s32 1, %s4
  %s7 = scalar_select 0, %s6, %s4
  $region1: #{model_forward.6} parent=0
    #allocation2 [shape = 'u8[8388608]{0}', space=vmem, size = 0x800000, scoped, tag = 'input window, operand 1']
    #allocation3 [shape = 's32[2]{0}', space=sflag, size = 0x8, scoped, tag = 'scoped memory for model_forward.6']
    %8 = vsyncpa [#allocation3], 0
    %s9 = scalar_lea.sflag [#allocation3], 1
    %10 = vsyncpa %s9, 0
    loop: start=0, step=1, limit=6
    $region2: #{model_forward.6} parent=1 // loop_pre_header
      _
    $region3: #{model_forward.6} parent=1 // loop_header
      %s12 = sphi 0, %s16
      %p13 = scmp.ge.s32.totalorder %s12, 6
      %s22 = sphi 0, %s24
      %s25 = sphi 0, %s22
      %s26 = sphi 0, %s25
      %s42 = sphi 0, %s26
      %s48 = sphi 0, %s50
      %s51 = sphi 0, %s48
      %s52 = sphi 0, %s51
      %s68 = sphi 0, %s52
      %s72 = sphi 0, %s72
      %s74 = sphi 0, %s72
      %s75 = sphi 0, %s74
      %s89 = sphi 0, %s75
      %s93 = sphi 0, %s93
      %s95 = sphi 0, %s93
      %s96 = sphi 0, %s95
      %s110 = sphi 0, %s96
    $region4: #{model_forward.6} parent=1 // loop_header_branch
      %15 = sbr.rel (%p13) target = $region8
    $region5: #{model_forward.6} parent=1 // loop_body
      %s17 = ssub.s32 %s12, 1
      %s18 = ssub.s32 %s12, 2
      %s19 = sadd.s32 %s12, 1
      %s20 = ssub.s32 %s12, %s19
      %p21 = scmp.eq.s32.totalorder %s20, 0
      %s23 = sadd.s32 %s22, 1
      %s24 = scalar_select %p21, %s22, %s23
      %p27 = pneg %p21
      %p28 = scmp.eq.s32.totalorder %s12, 3
      %p29 = por %p27, %p28
      %p30 = scmp.ne.s32.totalorder %s22, %s25
      %p31 = scmp.eq.s32.totalorder %s12, 0
      %p32 = por %p30, %p31
      %p33 = scmp.ne.s32.totalorder %s22, %s25
      %p34 = scmp.eq.s32.totalorder %s17, 3
      %p35 = por %p33, %p34
      %p36 = scmp.ne.s32.totalorder %s25, %s26
      %p37 = scmp.eq.s32.totalorder %s17, 0
      %p38 = por %p36, %p37
      %p39 = scmp.ne.s32.totalorder %s25, %s26
      %p40 = scmp.eq.s32.totalorder %s18, 3
      %p41 = por %p39, %p40
      %p43 = scmp.ne.s32.totalorder %s26, %s42
      %p44 = scmp.eq.s32.totalorder %s18, 0
      %p45 = por %p43, %p44
      %s46 = ssub.s32 %s12, %s19
      %p47 = scmp.eq.s32.totalorder %s46, 0
      %s49 = sadd.s32 %s48, 1
      %s50 = scalar_select %p47, %s48, %s49
      %p53 = pneg %p47
      %p54 = scmp.eq.s32.totalorder %s12, 3
      %p55 = por %p53, %p54
      %p56 = scmp.ne.s32.totalorder %s48, %s51
      %p57 = scmp.eq.s32.totalorder %s12, 0
      %p58 = por %p56, %p57
      %p59 = scmp.ne.s32.totalorder %s48, %s51
      %p60 = scmp.eq.s32.totalorder %s17, 3
      %p61 = por %p59, %p60
      %p62 = scmp.ne.s32.totalorder %s51, %s52
      %p63 = scmp.eq.s32.totalorder %s17, 0
      %p64 = por %p62, %p63
      %p65 = scmp.ne.s32.totalorder %s51, %s52
      %p66 = scmp.eq.s32.totalorder %s18, 3
      %p67 = por %p65, %p66
      %p69 = scmp.ne.s32.totalorder %s52, %s68
      %p70 = scmp.eq.s32.totalorder %s18, 0
      %p71 = por %p69, %p70
      %s73 = sadd.s32 %s72, 1
      %p76 = scmp.eq.s32.totalorder %s12, 3
      %p77 = scmp.ne.s32.totalorder %s72, %s74
      %p78 = scmp.eq.s32.totalorder %s12, 0
      %p79 = por %p77, %p78
      %p80 = scmp.ne.s32.totalorder %s72, %s74
      %p81 = scmp.eq.s32.totalorder %s17, 3
      %p82 = por %p80, %p81
      %p83 = scmp.ne.s32.totalorder %s74, %s75
      %p84 = scmp.eq.s32.totalorder %s17, 0
      %p85 = por %p83, %p84
      %p86 = scmp.ne.s32.totalorder %s74, %s75
      %p87 = scmp.eq.s32.totalorder %s18, 3
      %p88 = por %p86, %p87
      %p90 = scmp.ne.s32.totalorder %s75, %s89
      %p91 = scmp.eq.s32.totalorder %s18, 0
      %p92 = por %p90, %p91
      %s94 = sadd.s32 %s93, 1
      %p97 = scmp.eq.s32.totalorder %s12, 3
      %p98 = scmp.ne.s32.totalorder %s93, %s95
      %p99 = scmp.eq.s32.totalorder %s12, 0
      %p100 = por %p98, %p99
      %p101 = scmp.ne.s32.totalorder %s93, %s95
      %p102 = scmp.eq.s32.totalorder %s17, 3
      %p103 = por %p101, %p102
      %p104 = scmp.ne.s32.totalorder %s95, %s96
      %p105 = scmp.eq.s32.totalorder %s17, 0
      %p106 = por %p104, %p105
      %p107 = scmp.ne.s32.totalorder %s95, %s96
      %p108 = scmp.eq.s32.totalorder %s18, 3
      %p109 = por %p107, %p108
      %p111 = scmp.ne.s32.totalorder %s96, %s110
      %p112 = scmp.eq.s32.totalorder %s18, 0
      %p113 = por %p111, %p112
      %p114 = scmp.le.s32.totalorder 1, %s12
      %p115 = scmp.lt.s32.totalorder %s12, 5
      %p116 = pnand %p114, %p115
      %p117 = pneg %p116
      // Predicated region
      $region9: #{model_forward.6} parent=5 // pred_check
        _
      $region10: #{model_forward.6} parent=5 // pred_check_branch
        %119 = sbr.rel (%p116) target = $region12
      $region11: #{model_forward.6} parent=5 // pred_region
        %s120 = ssub.s32 %s12, 1
        // Predicated region
        $region13: #{model_forward.6} parent=11 // pred_check
          %p121 = pneg %p85
        $region14: #{model_forward.6} parent=11 // pred_check_branch
          %123 = sbr.rel (%p121) target = $region16
        $region15: #{model_forward.6} parent=11 // pred_region
          _
        $region16: #{model_forward.6} parent=11 // pred_fallthru
          _
      $region12: #{model_forward.6} parent=5 // pred_fallthru
        _
      %p124 = scmp.lt.s32.totalorder %s12, 4
      // Predicated region
      $region17: #{model_forward.6} parent=5 // pred_check
        %p125 = pneg %p124
      $region18: #{model_forward.6} parent=5 // pred_check_branch
        %127 = sbr.rel (%p125) target = $region20
      $region19: #{model_forward.6} parent=5 // pred_region
        // Predicated region
        $region21: #{model_forward.6} parent=19 // pred_check
          %p128 = pneg %p32
        $region22: #{model_forward.6} parent=19 // pred_check_branch
          %130 = sbr.rel (%p128) target = $region24
        $region23: #{model_forward.6} parent=19 // pred_region
          %s131 = smul.u32 32, %s12
          %p132 = scmp.lt.s32.totalorder %s131, 127
          %s133 = scalar_select %p132, %s131, 127
          %s134 = smul.addr %s133, 8
          %s135 = scalar_lea.vmem %s0, %s134
          %s136 = smul.u32 32, %s12
        $region24: #{model_forward.6} parent=19 // pred_fallthru
          _
        // Predicated region
        $region25: #{model_forward.6} parent=19 // pred_check
          %p137 = pneg %p58
        $region26: #{model_forward.6} parent=19 // pred_check_branch
          %139 = sbr.rel (%p137) target = $region28
        $region27: #{model_forward.6} parent=19 // pred_region
          %s140 = sand.u32 %s48, 1
          %s141 = scalar_lea.sflag [#allocation3], %s140
          %s142 = sand.u32 %s48, 1
          %s143 = smul.addr %s142, 8192
          %s144 = scalar_lea.vmem [#allocation2], %s143
          %s145 = smul.u32 512, %s12
          %s147 = ssub.s32 131072, 131072
          %148 = vsyncadd %s141, %s147
          %s149 = smul.addr %s145, 4
          %s150 = smul.addr %s149, 64
          %s151 = scalar_lea.hbm %s1, %s150
          %s152 = sshll.u32 %s144, 4
          %s153 = int_to_ptr.vmem [resolvable:$true] %s152
          %158 = dma.hbm_to_vmem [thread:$0]  %s151, 131072, %s153, %s141, 256, 256, 16
        $region28: #{model_forward.6} parent=19 // pred_fallthru
          _
      $region20: #{model_forward.6} parent=5 // pred_fallthru
        _
      %p159 = scmp.le.s32.totalorder 1, %s12
      %p160 = scmp.lt.s32.totalorder %s12, 5
      %p161 = pnand %p159, %p160
      %p162 = pneg %p161
      // Predicated region
      $region29: #{model_forward.6} parent=5 // pred_check
        _
      $region30: #{model_forward.6} parent=5 // pred_check_branch
        %164 = sbr.rel (%p161) target = $region32
      $region31: #{model_forward.6} parent=5 // pred_region
        %s165 = ssub.s32 %s12, 1
        %s166 = sand.u32 %s51, 1
        %s167 = scalar_lea.sflag [#allocation3], %s166
        %s168 = sand.u32 %s51, 1
        %s169 = smul.addr %s168, 8192
        %s170 = scalar_lea.vmem [#allocation2], %s169
        // Predicated region
        $region33: #{model_forward.6} parent=31 // pred_check
          %p171 = pneg %p64
        $region34: #{model_forward.6} parent=31 // pred_check_branch
          %173 = sbr.rel (%p171) target = $region36
        $region35: #{model_forward.6} parent=31 // pred_region
          %174 = dma.done %s167, 131072
        $region36: #{model_forward.6} parent=31 // pred_fallthru
          _
        %s175 = smul.u32 32, %s17
        %p176 = scmp.lt.s32.totalorder %s175, 127
        %s177 = scalar_select %p176, %s175, 127
        %s178 = smul.addr %s177, 8
        %s179 = scalar_lea.vmem %s0, %s178
        %p180 = pneg %p38
        %p181 = pneg %p35
        %s182 = sand.u32 %s51, 1
        %s183 = scalar_lea.sflag [#allocation3], %s182
        %s184 = sand.u32 %s51, 1
        %s185 = smul.addr %s184, 8192
        %s186 = scalar_lea.vmem [#allocation2], %s185
        %p187 = pneg %p64
        %p188 = pneg %p61
        %p189 = pneg %p85
        %p190 = pneg %p82
        %p191 = pneg %p106
        %p192 = pneg %p103
        %s193 = smul.u32 32, %s17
        %p194 = scmp.lt.s32.totalorder %s193, 127
        %s195 = scalar_select %p194, %s193, 127
        %s196 = smul.addr %s195, 8
        %s197 = scalar_lea.vmem %s0, %s196
        %s198 = smul.u32 32, %s17
        %s199 = smul.u32 512, %s17
        %p200 = scmp.eq.s32.totalorder %s17, 0
        // Predicated region
        $region37: #{model_forward.6} parent=31 // pred_check
          %p201 = pneg %p200
        $region38: #{model_forward.6} parent=31 // pred_check_branch
          %203 = sbr.rel (%p201) target = $region40
        $region39: #{model_forward.6} parent=31 // pred_region
          %204 = vst [vmem:[%s3] sm:$0xff] 0.0
          %205 = vst [vmem:[%s3 + $0x8] sm:$0xff] 0.0
          %206 = vst [vmem:[%s3 + $0x10] sm:$0xff] 0.0
          %207 = vst [vmem:[%s3 + $0x18] sm:$0xff] 0.0
        $region40: #{model_forward.6} parent=31 // pred_fallthru
          _
        %v208 = vld [vmem:[%s3] sm:$0xff]
        %v209 = vld [vmem:[%s3 + $0x8] sm:$0xff]
        %v210 = vld [vmem:[%s3 + $0x10] sm:$0xff]
        %v211 = vld [vmem:[%s3 + $0x18] sm:$0xff]
        %v212 = vld [vmem:[%s197] sm:$0xff]
        %v213 = vld [vmem:[%s197 + $0x8] sm:$0xff]
        %v214 = vld [vmem:[%s197 + $0x10] sm:$0xff]
        %v215 = vld [vmem:[%s197 + $0x18] sm:$0xff]
        %v216 = vld [vmem:[%s197 + $0x20] sm:$0xff]
        %v217 = vld [vmem:[%s197 + $0x28] sm:$0xff]
        %v218 = vld [vmem:[%s197 + $0x30] sm:$0xff]
        %v219 = vld [vmem:[%s197 + $0x38] sm:$0xff]
        %v220 = vld [vmem:[%s197 + $0x40] sm:$0xff]
        %v221 = vld [vmem:[%s197 + $0x48] sm:$0xff]
        %v222 = vld [vmem:[%s197 + $0x50] sm:$0xff]
        %v223 = vld [vmem:[%s197 + $0x58] sm:$0xff]
        %v224 = vld [vmem:[%s197 + $0x60] sm:$0xff]
        %v225 = vld [vmem:[%s197 + $0x68] sm:$0xff]
        %v226 = vld [vmem:[%s197 + $0x70] sm:$0xff]
        %v227 = vld [vmem:[%s197 + $0x78] sm:$0xff]
        %v228 = vld [vmem:[%s197 + $0x80] sm:$0xff]
        %v229 = vld [vmem:[%s197 + $0x88] sm:$0xff]
        %v230 = vld [vmem:[%s197 + $0x90] sm:$0xff]
        %v231 = vld [vmem:[%s197 + $0x98] sm:$0xff]
        %v232 = vld [vmem:[%s197 + $0xa0] sm:$0xff]
        %v233 = vld [vmem:[%s197 + $0xa8] sm:$0xff]
        %v234 = vld [vmem:[%s197 + $0xb0] sm:$0xff]
        %v235 = vld [vmem:[%s197 + $0xb8] sm:$0xff]
        %v236 = vld [vmem:[%s197 + $0xc0] sm:$0xff]
        %v237 = vld [vmem:[%s197 + $0xc8] sm:$0xff]
        %v238 = vld [vmem:[%s197 + $0xd0] sm:$0xff]
        %v239 = vld [vmem:[%s197 + $0xd8] sm:$0xff]
        %v240 = vld [vmem:[%s197 + $0xe0] sm:$0xff]
        %v241 = vld [vmem:[%s197 + $0xe8] sm:$0xff]
        %v242 = vld [vmem:[%s197 + $0xf0] sm:$0xff]
        %v243 = vld [vmem:[%s197 + $0xf8] sm:$0xff]
        %v244 = vpack.c.bf16 %v212, %v212
        %v245 = vpack.c.bf16 %v213, %v213
        %v246 = vpack.c.bf16 %v214, %v214
        %v247 = vpack.c.bf16 %v215, %v215
        %v248 = vpack.c.bf16 %v216, %v216
        %v249 = vpack.c.bf16 %v217, %v217
        %v250 = vpack.c.bf16 %v218, %v218
        %v251 = vpack.c.bf16 %v219, %v219
        %v252 = vpack.c.bf16 %v220, %v220
        %v253 = vpack.c.bf16 %v221, %v221
        %v254 = vpack.c.bf16 %v222, %v222
        %v255 = vpack.c.bf16 %v223, %v223
        %v256 = vpack.c.bf16 %v224, %v224
        %v257 = vpack.c.bf16 %v225, %v225
        %v258 = vpack.c.bf16 %v226, %v226
        %v259 = vpack.c.bf16 %v227, %v227
        %v260 = vpack.c.bf16 %v228, %v228
        %v261 = vpack.c.bf16 %v229, %v229
        %v262 = vpack.c.bf16 %v230, %v230
        %v263 = vpack.c.bf16 %v231, %v231
        %v264 = vpack.c.bf16 %v232, %v232
        %v265 = vpack.c.bf16 %v233, %v233
        %v266 = vpack.c.bf16 %v234, %v234
        %v267 = vpack.c.bf16 %v235, %v235
        %v268 = vpack.c.bf16 %v236, %v236
        %v269 = vpack.c.bf16 %v237, %v237
        %v270 = vpack.c.bf16 %v238, %v238
        %v271 = vpack.c.bf16 %v239, %v239
        %v272 = vpack.c.bf16 %v240, %v240
        %v273 = vpack.c.bf16 %v241, %v241
        %v274 = vpack.c.bf16 %v242, %v242
        %v275 = vpack.c.bf16 %v243, %v243
        %v276 = vld [vmem:[%s170] sm:$0xff]
        %v277 = vld [vmem:[%s170 + $0x8] sm:$0xff]
        %v278 = vld [vmem:[%s170 + $0x10] sm:$0xff]
        %v279 = vld [vmem:[%s170 + $0x18] sm:$0xff]
        %v280 = vld [vmem:[%s170 + $0x20] sm:$0xff]
        %v281 = vld [vmem:[%s170 + $0x28] sm:$0xff]
        %v282 = vld [vmem:[%s170 + $0x30] sm:$0xff]
        %v283 = vld [vmem:[%s170 + $0x38] sm:$0xff]
        %v284 = vld [vmem:[%s170 + $0x40] sm:$0xff]
        %v285 = vld [vmem:[%s170 + $0x48] sm:$0xff]
        %v286 = vld [vmem:[%s170 + $0x50] sm:$0xff]
        %v287 = vld [vmem:[%s170 + $0x58] sm:$0xff]
        %v288 = vld [vmem:[%s170 + $0x60] sm:$0xff]
        %v289 = vld [vmem:[%s170 + $0x68] sm:$0xff]
        %v290 = vld [vmem:[%s170 + $0x70] sm:$0xff]
        %v291 = vld [vmem:[%s170 + $0x78] sm:$0xff]
        %v292 = vld [vmem:[%s170 + $0x80] sm:$0xff]
        %v293 = vld [vmem:[%s170 + $0x88] sm:$0xff]
        %v294 = vld [vmem:[%s170 + $0x90] sm:$0xff]
        %v295 = vld [vmem:[%s170 + $0x98] sm:$0xff]
        %v296 = vld [vmem:[%s170 + $0xa0] sm:$0xff]
        %v297 = vld [vmem:[%s170 + $0xa8] sm:$0xff]
        %v298 = vld [vmem:[%s170 + $0xb0] sm:$0xff]
        %v299 = vld [vmem:[%s170 + $0xb8] sm:$0xff]
        %v300 = vld [vmem:[%s170 + $0xc0] sm:$0xff]
        %v301 = vld [vmem:[%s170 + $0xc8] sm:$0xff]
        %v302 = vld [vmem:[%s170 + $0xd0] sm:$0xff]
        %v303 = vld [vmem:[%s170 + $0xd8] sm:$0xff]
        %v304 = vld [vmem:[%s170 + $0xe0] sm:$0xff]
        %v305 = vld [vmem:[%s170 + $0xe8] sm:$0xff]
        %v306 = vld [vmem:[%s170 + $0xf0] sm:$0xff]
        %v307 = vld [vmem:[%s170 + $0xf8] sm:$0xff]
        %v308 = vld [vmem:[%s170 + $0x100] sm:$0xff]
        %v309 = vld [vmem:[%s170 + $0x108] sm:$0xff]
        %v310 = vld [vmem:[%s170 + $0x110] sm:$0xff]
        %v311 = vld [vmem:[%s170 + $0x118] sm:$0xff]
        %v312 = vld [vmem:[%s170 + $0x120] sm:$0xff]
        %v313 = vld [vmem:[%s170 + $0x128] sm:$0xff]
        %v314 = vld [vmem:[%s170 + $0x130] sm:$0xff]
        %v315 = vld [vmem:[%s170 + $0x138] sm:$0xff]
        %v316 = vld [vmem:[%s170 + $0x140] sm:$0xff]
        %v317 = vld [vmem:[%s170 + $0x148] sm:$0xff]
        %v318 = vld [vmem:[%s170 + $0x150] sm:$0xff]
        %v319 = vld [vmem:[%s170 + $0x158] sm:$0xff]
        %v320 = vld [vmem:[%s170 + $0x160] sm:$0xff]
        %v321 = vld [vmem:[%s170 + $0x168] sm:$0xff]
        %v322 = vld [vmem:[%s170 + $0x170] sm:$0xff]
        %v323 = vld [vmem:[%s170 + $0x178] sm:$0xff]
        %v324 = vld [vmem:[%s170 + $0x180] sm:$0xff]
        %v325 = vld [vmem:[%s170 + $0x188] sm:$0xff]
        %v326 = vld [vmem:[%s170 + $0x190] sm:$0xff]
        %v327 = vld [vmem:[%s170 + $0x198] sm:$0xff]
        %v328 = vld [vmem:[%s170 + $0x1a0] sm:$0xff]
        %v329 = vld [vmem:[%s170 + $0x1a8] sm:$0xff]
        %v330 = vld [vmem:[%s170 + $0x1b0] sm:$0xff]
        %v331 = vld [vmem:[%s170 + $0x1b8] sm:$0xff]
        %v332 = vld [vmem:[%s170 + $0x1c0] sm:$0xff]
        %v333 = vld [vmem:[%s170 + $0x1c8] sm:$0xff]
        %v334 = vld [vmem:[%s170 + $0x1d0] sm:$0xff]
        %v335 = vld [vmem:[%s170 + $0x1d8] sm:$0xff]
        %v336 = vld [vmem:[%s170 + $0x1e0] sm:$0xff]
        %v337 = vld [vmem:[%s170 + $0x1e8] sm:$0xff]
        %v338 = vld [vmem:[%s170 + $0x1f0] sm:$0xff]
        %v339 = vld [vmem:[%s170 + $0x1f8] sm:$0xff]
        %v340 = vld [vmem:[%s170 + $0x200] sm:$0xff]
        %v341 = vld [vmem:[%s170 + $0x208] sm:$0xff]
        %v342 = vld [vmem:[%s170 + $0x210] sm:$0xff]
        %v343 = vld [vmem:[%s170 + $0x218] sm:$0xff]
        %v344 = vld [vmem:[%s170 + $0x220] sm:$0xff]
        %v345 = vld [vmem:[%s170 + $0x228] sm:$0xff]
        %v346 = vld [vmem:[%s170 + $0x230] sm:$0xff]
        %v347 = vld [vmem:[%s170 + $0x238] sm:$0xff]
        %v348 = vld [vmem:[%s170 + $0x240] sm:$0xff]
        %v349 = vld [vmem:[%s170 + $0x248] sm:$0xff]
        %v350 = vld [vmem:[%s170 + $0x250] sm:$0xff]
        %v351 = vld [vmem:[%s170 + $0x258] sm:$0xff]
        %v352 = vld [vmem:[%s170 + $0x260] sm:$0xff]
        %v353 = vld [vmem:[%s170 + $0x268] sm:$0xff]
        %v354 = vld [vmem:[%s170 + $0x270] sm:$0xff]
        %v355 = vld [vmem:[%s170 + $0x278] sm:$0xff]
        %v356 = vld [vmem:[%s170 + $0x280] sm:$0xff]
        %v357 = vld [vmem:[%s170 + $0x288] sm:$0xff]
        %v358 = vld [vmem:[%s170 + $0x290] sm:$0xff]
        %v359 = vld [vmem:[%s170 + $0x298] sm:$0xff]
        %v360 = vld [vmem:[%s170 + $0x2a0] sm:$0xff]
        %v361 = vld [vmem:[%s170 + $0x2a8] sm:$0xff]
        %v362 = vld [vmem:[%s170 + $0x2b0] sm:$0xff]
        %v363 = vld [vmem:[%s170 + $0x2b8] sm:$0xff]
        %v364 = vld [vmem:[%s170 + $0x2c0] sm:$0xff]
        %v365 = vld [vmem:[%s170 + $0x2c8] sm:$0xff]
        %v366 = vld [vmem:[%s170 + $0x2d0] sm:$0xff]
        %v367 = vld [vmem:[%s170 + $0x2d8] sm:$0xff]
        %v368 = vld [vmem:[%s170 + $0x2e0] sm:$0xff]
        %v369 = vld [vmem:[%s170 + $0x2e8] sm:$0xff]
        %v370 = vld [vmem:[%s170 + $0x2f0] sm:$0xff]
        %v371 = vld [vmem:[%s170 + $0x2f8] sm:$0xff]
        %v372 = vld [vmem:[%s170 + $0x300] sm:$0xff]
        %v373 = vld [vmem:[%s170 + $0x308] sm:$0xff]
        %v374 = vld [vmem:[%s170 + $0x310] sm:$0xff]
        %v375 = vld [vmem:[%s170 + $0x318] sm:$0xff]
        %v376 = vld [vmem:[%s170 + $0x320] sm:$0xff]
        %v377 = vld [vmem:[%s170 + $0x328] sm:$0xff]
        %v378 = vld [vmem:[%s170 + $0x330] sm:$0xff]
        %v379 = vld [vmem:[%s170 + $0x338] sm:$0xff]
        %v380 = vld [vmem:[%s170 + $0x340] sm:$0xff]
        %v381 = vld [vmem:[%s170 + $0x348] sm:$0xff]
        %v382 = vld [vmem:[%s170 + $0x350] sm:$0xff]
        %v383 = vld [vmem:[%s170 + $0x358] sm:$0xff]
        %v384 = vld [vmem:[%s170 + $0x360] sm:$0xff]
        %v385 = vld [vmem:[%s170 + $0x368] sm:$0xff]
        %v386 = vld [vmem:[%s170 + $0x370] sm:$0xff]
        %v387 = vld [vmem:[%s170 + $0x378] sm:$0xff]
        %v388 = vld [vmem:[%s170 + $0x380] sm:$0xff]
        %v389 = vld [vmem:[%s170 + $0x388] sm:$0xff]
        %v390 = vld [vmem:[%s170 + $0x390] sm:$0xff]
        %v391 = vld [vmem:[%s170 + $0x398] sm:$0xff]
        %v392 = vld [vmem:[%s170 + $0x3a0] sm:$0xff]
        %v393 = vld [vmem:[%s170 + $0x3a8] sm:$0xff]
        %v394 = vld [vmem:[%s170 + $0x3b0] sm:$0xff]
        %v395 = vld [vmem:[%s170 + $0x3b8] sm:$0xff]
        %v396 = vld [vmem:[%s170 + $0x3c0] sm:$0xff]
        %v397 = vld [vmem:[%s170 + $0x3c8] sm:$0xff]
        %v398 = vld [vmem:[%s170 + $0x3d0] sm:$0xff]
        %v399 = vld [vmem:[%s170 + $0x3d8] sm:$0xff]
        %v400 = vld [vmem:[%s170 + $0x3e0] sm:$0xff]
        %v401 = vld [vmem:[%s170 + $0x3e8] sm:$0xff]
        %v402 = vld [vmem:[%s170 + $0x3f0] sm:$0xff]
        %v403 = vld [vmem:[%s170 + $0x3f8] sm:$0xff]
        %v404 = vld [vmem:[%s170 + $0x400] sm:$0xff]
        %v405 = vld [vmem:[%s170 + $0x408] sm:$0xff]
        %v406 = vld [vmem:[%s170 + $0x410] sm:$0xff]
        %v407 = vld [vmem:[%s170 + $0x418] sm:$0xff]
        %v408 = vld [vmem:[%s170 + $0x420] sm:$0xff]
        %v409 = vld [vmem:[%s170 + $0x428] sm:$0xff]
        %v410 = vld [vmem:[%s170 + $0x430] sm:$0xff]
        %v411 = vld [vmem:[%s170 + $0x438] sm:$0xff]
        %v412 = vld [vmem:[%s170 + $0x440] sm:$0xff]
        %v413 = vld [vmem:[%s170 + $0x448] sm:$0xff]
        %v414 = vld [vmem:[%s170 + $0x450] sm:$0xff]
        %v415 = vld [vmem:[%s170 + $0x458] sm:$0xff]
        %v416 = vld [vmem:[%s170 + $0x460] sm:$0xff]
        %v417 = vld [vmem:[%s170 + $0x468] sm:$0xff]
        %v418 = vld [vmem:[%s170 + $0x470] sm:$0xff]
        %v419 = vld [vmem:[%s170 + $0x478] sm:$0xff]
        %v420 = vld [vmem:[%s170 + $0x480] sm:$0xff]
        %v421 = vld [vmem:[%s170 + $0x488] sm:$0xff]
        %v422 = vld [vmem:[%s170 + $0x490] sm:$0xff]
        %v423 = vld [vmem:[%s170 + $0x498] sm:$0xff]
        %v424 = vld [vmem:[%s170 + $0x4a0] sm:$0xff]
        %v425 = vld [vmem:[%s170 + $0x4a8] sm:$0xff]
        %v426 = vld [vmem:[%s170 + $0x4b0] sm:$0xff]
        %v427 = vld [vmem:[%s170 + $0x4b8] sm:$0xff]
        %v428 = vld [vmem:[%s170 + $0x4c0] sm:$0xff]
        %v429 = vld [vmem:[%s170 + $0x4c8] sm:$0xff]
        %v430 = vld [vmem:[%s170 + $0x4d0] sm:$0xff]
        %v431 = vld [vmem:[%s170 + $0x4d8] sm:$0xff]
        %v432 = vld [vmem:[%s170 + $0x4e0] sm:$0xff]
        %v433 = vld [vmem:[%s170 + $0x4e8] sm:$0xff]
        %v434 = vld [vmem:[%s170 + $0x4f0] sm:$0xff]
        %v435 = vld [vmem:[%s170 + $0x4f8] sm:$0xff]
        %v436 = vld [vmem:[%s170 + $0x500] sm:$0xff]
        %v437 = vld [vmem:[%s170 + $0x508] sm:$0xff]
        %v438 = vld [vmem:[%s170 + $0x510] sm:$0xff]
        %v439 = vld [vmem:[%s170 + $0x518] sm:$0xff]
        %v440 = vld [vmem:[%s170 + $0x520] sm:$0xff]
        %v441 = vld [vmem:[%s170 + $0x528] sm:$0xff]
        %v442 = vld [vmem:[%s170 + $0x530] sm:$0xff]
        %v443 = vld [vmem:[%s170 + $0x538] sm:$0xff]
        %v444 = vld [vmem:[%s170 + $0x540] sm:$0xff]
        %v445 = vld [vmem:[%s170 + $0x548] sm:$0xff]
        %v446 = vld [vmem:[%s170 + $0x550] sm:$0xff]
        %v447 = vld [vmem:[%s170 + $0x558] sm:$0xff]
        %v448 = vld [vmem:[%s170 + $0x560] sm:$0xff]
        %v449 = vld [vmem:[%s170 + $0x568] sm:$0xff]
        %v450 = vld [vmem:[%s170 + $0x570] sm:$0xff]
        %v451 = vld [vmem:[%s170 + $0x578] sm:$0xff]
        %v452 = vld [vmem:[%s170 + $0x580] sm:$0xff]
        %v453 = vld [vmem:[%s170 + $0x588] sm:$0xff]
        %v454 = vld [vmem:[%s170 + $0x590] sm:$0xff]
        %v455 = vld [vmem:[%s170 + $0x598] sm:$0xff]
        %v456 = vld [vmem:[%s170 + $0x5a0] sm:$0xff]
        %v457 = vld [vmem:[%s170 + $0x5a8] sm:$0xff]
        %v458 = vld [vmem:[%s170 + $0x5b0] sm:$0xff]
        %v459 = vld [vmem:[%s170 + $0x5b8] sm:$0xff]
        %v460 = vld [vmem:[%s170 + $0x5c0] sm:$0xff]
        %v461 = vld [vmem:[%s170 + $0x5c8] sm:$0xff]
        %v462 = vld [vmem:[%s170 + $0x5d0] sm:$0xff]
        %v463 = vld [vmem:[%s170 + $0x5d8] sm:$0xff]
        %v464 = vld [vmem:[%s170 + $0x5e0] sm:$0xff]
        %v465 = vld [vmem:[%s170 + $0x5e8] sm:$0xff]
        %v466 = vld [vmem:[%s170 + $0x5f0] sm:$0xff]
        %v467 = vld [vmem:[%s170 + $0x5f8] sm:$0xff]
        %v468 = vld [vmem:[%s170 + $0x600] sm:$0xff]
        %v469 = vld [vmem:[%s170 + $0x608] sm:$0xff]
        %v470 = vld [vmem:[%s170 + $0x610] sm:$0xff]
        %v471 = vld [vmem:[%s170 + $0x618] sm:$0xff]
        %v472 = vld [vmem:[%s170 + $0x620] sm:$0xff]
        %v473 = vld [vmem:[%s170 + $0x628] sm:$0xff]
        %v474 = vld [vmem:[%s170 + $0x630] sm:$0xff]
        %v475 = vld [vmem:[%s170 + $0x638] sm:$0xff]
        %v476 = vld [vmem:[%s170 + $0x640] sm:$0xff]
        %v477 = vld [vmem:[%s170 + $0x648] sm:$0xff]
        %v478 = vld [vmem:[%s170 + $0x650] sm:$0xff]
        %v479 = vld [vmem:[%s170 + $0x658] sm:$0xff]
        %v480 = vld [vmem:[%s170 + $0x660] sm:$0xff]
        %v481 = vld [vmem:[%s170 + $0x668] sm:$0xff]
        %v482 = vld [vmem:[%s170 + $0x670] sm:$0xff]
        %v483 = vld [vmem:[%s170 + $0x678] sm:$0xff]
        %v484 = vld [vmem:[%s170 + $0x680] sm:$0xff]
        %v485 = vld [vmem:[%s170 + $0x688] sm:$0xff]
        %v486 = vld [vmem:[%s170 + $0x690] sm:$0xff]
        %v487 = vld [vmem:[%s170 + $0x698] sm:$0xff]
        %v488 = vld [vmem:[%s170 + $0x6a0] sm:$0xff]
        %v489 = vld [vmem:[%s170 + $0x6a8] sm:$0xff]
        %v490 = vld [vmem:[%s170 + $0x6b0] sm:$0xff]
        %v491 = vld [vmem:[%s170 + $0x6b8] sm:$0xff]
        %v492 = vld [vmem:[%s170 + $0x6c0] sm:$0xff]
        %v493 = vld [vmem:[%s170 + $0x6c8] sm:$0xff]
        %v494 = vld [vmem:[%s170 + $0x6d0] sm:$0xff]
        %v495 = vld [vmem:[%s170 + $0x6d8] sm:$0xff]
        %v496 = vld [vmem:[%s170 + $0x6e0] sm:$0xff]
        %v497 = vld [vmem:[%s170 + $0x6e8] sm:$0xff]
        %v498 = vld [vmem:[%s170 + $0x6f0] sm:$0xff]
        %v499 = vld [vmem:[%s170 + $0x6f8] sm:$0xff]
        %v500 = vld [vmem:[%s170 + $0x700] sm:$0xff]
        %v501 = vld [vmem:[%s170 + $0x708] sm:$0xff]
        %v502 = vld [vmem:[%s170 + $0x710] sm:$0xff]
        %v503 = vld [vmem:[%s170 + $0x718] sm:$0xff]
        %v504 = vld [vmem:[%s170 + $0x720] sm:$0xff]
        %v505 = vld [vmem:[%s170 + $0x728] sm:$0xff]
        %v506 = vld [vmem:[%s170 + $0x730] sm:$0xff]
        %v507 = vld [vmem:[%s170 + $0x738] sm:$0xff]
        %v508 = vld [vmem:[%s170 + $0x740] sm:$0xff]
        %v509 = vld [vmem:[%s170 + $0x748] sm:$0xff]
        %v510 = vld [vmem:[%s170 + $0x750] sm:$0xff]
        %v511 = vld [vmem:[%s170 + $0x758] sm:$0xff]
        %v512 = vld [vmem:[%s170 + $0x760] sm:$0xff]
        %v513 = vld [vmem:[%s170 + $0x768] sm:$0xff]
        %v514 = vld [vmem:[%s170 + $0x770] sm:$0xff]
        %v515 = vld [vmem:[%s170 + $0x778] sm:$0xff]
        %v516 = vld [vmem:[%s170 + $0x780] sm:$0xff]
        %v517 = vld [vmem:[%s170 + $0x788] sm:$0xff]
        %v518 = vld [vmem:[%s170 + $0x790] sm:$0xff]
        %v519 = vld [vmem:[%s170 + $0x798] sm:$0xff]
        %v520 = vld [vmem:[%s170 + $0x7a0] sm:$0xff]
        %v521 = vld [vmem:[%s170 + $0x7a8] sm:$0xff]
        %v522 = vld [vmem:[%s170 + $0x7b0] sm:$0xff]
        %v523 = vld [vmem:[%s170 + $0x7b8] sm:$0xff]
        %v524 = vld [vmem:[%s170 + $0x7c0] sm:$0xff]
        %v525 = vld [vmem:[%s170 + $0x7c8] sm:$0xff]
        %v526 = vld [vmem:[%s170 + $0x7d0] sm:$0xff]
        %v527 = vld [vmem:[%s170 + $0x7d8] sm:$0xff]
        %v528 = vld [vmem:[%s170 + $0x7e0] sm:$0xff]
        %v529 = vld [vmem:[%s170 + $0x7e8] sm:$0xff]
        %v530 = vld [vmem:[%s170 + $0x7f0] sm:$0xff]
        %v531 = vld [vmem:[%s170 + $0x7f8] sm:$0xff]
        %v532 = vld [vmem:[%s170 + $0x800] sm:$0xff]
        %v533 = vld [vmem:[%s170 + $0x808] sm:$0xff]
        %v534 = vld [vmem:[%s170 + $0x810] sm:$0xff]
        %v535 = vld [vmem:[%s170 + $0x818] sm:$0xff]
        %v536 = vld [vmem:[%s170 + $0x820] sm:$0xff]
        %v537 = vld [vmem:[%s170 + $0x828] sm:$0xff]
        %v538 = vld [vmem:[%s170 + $0x830] sm:$0xff]
        %v539 = vld [vmem:[%s170 + $0x838] sm:$0xff]
        %v540 = vld [vmem:[%s170 + $0x840] sm:$0xff]
        %v541 = vld [vmem:[%s170 + $0x848] sm:$0xff]
        %v542 = vld [vmem:[%s170 + $0x850] sm:$0xff]
        %v543 = vld [vmem:[%s170 + $0x858] sm:$0xff]
        %v544 = vld [vmem:[%s170 + $0x860] sm:$0xff]
        %v545 = vld [vmem:[%s170 + $0x868] sm:$0xff]
        %v546 = vld [vmem:[%s170 + $0x870] sm:$0xff]
        %v547 = vld [vmem:[%s170 + $0x878] sm:$0xff]
        %v548 = vld [vmem:[%s170 + $0x880] sm:$0xff]
        %v549 = vld [vmem:[%s170 + $0x888] sm:$0xff]
        %v550 = vld [vmem:[%s170 + $0x890] sm:$0xff]
        %v551 = vld [vmem:[%s170 + $0x898] sm:$0xff]
        %v552 = vld [vmem:[%s170 + $0x8a0] sm:$0xff]
        %v553 = vld [vmem:[%s170 + $0x8a8] sm:$0xff]
        %v554 = vld [vmem:[%s170 + $0x8b0] sm:$0xff]
        %v555 = vld [vmem:[%s170 + $0x8b8] sm:$0xff]
        %v556 = vld [vmem:[%s170 + $0x8c0] sm:$0xff]
        %v557 = vld [vmem:[%s170 + $0x8c8] sm:$0xff]
        %v558 = vld [vmem:[%s170 + $0x8d0] sm:$0xff]
        %v559 = vld [vmem:[%s170 + $0x8d8] sm:$0xff]
        %v560 = vld [vmem:[%s170 + $0x8e0] sm:$0xff]
        %v561 = vld [vmem:[%s170 + $0x8e8] sm:$0xff]
        %v562 = vld [vmem:[%s170 + $0x8f0] sm:$0xff]
        %v563 = vld [vmem:[%s170 + $0x8f8] sm:$0xff]
        %v564 = vld [vmem:[%s170 + $0x900] sm:$0xff]
        %v565 = vld [vmem:[%s170 + $0x908] sm:$0xff]
        %v566 = vld [vmem:[%s170 + $0x910] sm:$0xff]
        %v567 = vld [vmem:[%s170 + $0x918] sm:$0xff]
        %v568 = vld [vmem:[%s170 + $0x920] sm:$0xff]
        %v569 = vld [vmem:[%s170 + $0x928] sm:$0xff]
        %v570 = vld [vmem:[%s170 + $0x930] sm:$0xff]
        %v571 = vld [vmem:[%s170 + $0x938] sm:$0xff]
        %v572 = vld [vmem:[%s170 + $0x940] sm:$0xff]
        %v573 = vld [vmem:[%s170 + $0x948] sm:$0xff]
        %v574 = vld [vmem:[%s170 + $0x950] sm:$0xff]
        %v575 = vld [vmem:[%s170 + $0x958] sm:$0xff]
        %v576 = vld [vmem:[%s170 + $0x960] sm:$0xff]
        %v577 = vld [vmem:[%s170 + $0x968] sm:$0xff]
        %v578 = vld [vmem:[%s170 + $0x970] sm:$0xff]
        %v579 = vld [vmem:[%s170 + $0x978] sm:$0xff]
        %v580 = vld [vmem:[%s170 + $0x980] sm:$0xff]
        %v581 = vld [vmem:[%s170 + $0x988] sm:$0xff]
        %v582 = vld [vmem:[%s170 + $0x990] sm:$0xff]
        %v583 = vld [vmem:[%s170 + $0x998] sm:$0xff]
        %v584 = vld [vmem:[%s170 + $0x9a0] sm:$0xff]
        %v585 = vld [vmem:[%s170 + $0x9a8] sm:$0xff]
        %v586 = vld [vmem:[%s170 + $0x9b0] sm:$0xff]
        %v587 = vld [vmem:[%s170 + $0x9b8] sm:$0xff]
        %v588 = vld [vmem:[%s170 + $0x9c0] sm:$0xff]
        %v589 = vld [vmem:[%s170 + $0x9c8] sm:$0xff]
        %v590 = vld [vmem:[%s170 + $0x9d0] sm:$0xff]
        %v591 = vld [vmem:[%s170 + $0x9d8] sm:$0xff]
        %v592 = vld [vmem:[%s170 + $0x9e0] sm:$0xff]
        %v593 = vld [vmem:[%s170 + $0x9e8] sm:$0xff]
        %v594 = vld [vmem:[%s170 + $0x9f0] sm:$0xff]
        %v595 = vld [vmem:[%s170 + $0x9f8] sm:$0xff]
        %v596 = vld [vmem:[%s170 + $0xa00] sm:$0xff]
        %v597 = vld [vmem:[%s170 + $0xa08] sm:$0xff]
        %v598 = vld [vmem:[%s170 + $0xa10] sm:$0xff]
        %v599 = vld [vmem:[%s170 + $0xa18] sm:$0xff]
        %v600 = vld [vmem:[%s170 + $0xa20] sm:$0xff]
        %v601 = vld [vmem:[%s170 + $0xa28] sm:$0xff]
        %v602 = vld [vmem:[%s170 + $0xa30] sm:$0xff]
        %v603 = vld [vmem:[%s170 + $0xa38] sm:$0xff]
        %v604 = vld [vmem:[%s170 + $0xa40] sm:$0xff]
        %v605 = vld [vmem:[%s170 + $0xa48] sm:$0xff]
        %v606 = vld [vmem:[%s170 + $0xa50] sm:$0xff]
        %v607 = vld [vmem:[%s170 + $0xa58] sm:$0xff]
        %v608 = vld [vmem:[%s170 + $0xa60] sm:$0xff]
        %v609 = vld [vmem:[%s170 + $0xa68] sm:$0xff]
        %v610 = vld [vmem:[%s170 + $0xa70] sm:$0xff]
        %v611 = vld [vmem:[%s170 + $0xa78] sm:$0xff]
        %v612 = vld [vmem:[%s170 + $0xa80] sm:$0xff]
        %v613 = vld [vmem:[%s170 + $0xa88] sm:$0xff]
        %v614 = vld [vmem:[%s170 + $0xa90] sm:$0xff]
        %v615 = vld [vmem:[%s170 + $0xa98] sm:$0xff]
        %v616 = vld [vmem:[%s170 + $0xaa0] sm:$0xff]
        %v617 = vld [vmem:[%s170 + $0xaa8] sm:$0xff]
        %v618 = vld [vmem:[%s170 + $0xab0] sm:$0xff]
        %v619 = vld [vmem:[%s170 + $0xab8] sm:$0xff]
        %v620 = vld [vmem:[%s170 + $0xac0] sm:$0xff]
        %v621 = vld [vmem:[%s170 + $0xac8] sm:$0xff]
        %v622 = vld [vmem:[%s170 + $0xad0] sm:$0xff]
        %v623 = vld [vmem:[%s170 + $0xad8] sm:$0xff]
        %v624 = vld [vmem:[%s170 + $0xae0] sm:$0xff]
        %v625 = vld [vmem:[%s170 + $0xae8] sm:$0xff]
        %v626 = vld [vmem:[%s170 + $0xaf0] sm:$0xff]
        %v627 = vld [vmem:[%s170 + $0xaf8] sm:$0xff]
        %v628 = vld [vmem:[%s170 + $0xb00] sm:$0xff]
        %v629 = vld [vmem:[%s170 + $0xb08] sm:$0xff]
        %v630 = vld [vmem:[%s170 + $0xb10] sm:$0xff]
        %v631 = vld [vmem:[%s170 + $0xb18] sm:$0xff]
        %v632 = vld [vmem:[%s170 + $0xb20] sm:$0xff]
        %v633 = vld [vmem:[%s170 + $0xb28] sm:$0xff]
        %v634 = vld [vmem:[%s170 + $0xb30] sm:$0xff]
        %v635 = vld [vmem:[%s170 + $0xb38] sm:$0xff]
        %v636 = vld [vmem:[%s170 + $0xb40] sm:$0xff]
        %v637 = vld [vmem:[%s170 + $0xb48] sm:$0xff]
        %v638 = vld [vmem:[%s170 + $0xb50] sm:$0xff]
        %v639 = vld [vmem:[%s170 + $0xb58] sm:$0xff]
        %v640 = vld [vmem:[%s170 + $0xb60] sm:$0xff]
        %v641 = vld [vmem:[%s170 + $0xb68] sm:$0xff]
        %v642 = vld [vmem:[%s170 + $0xb70] sm:$0xff]
        %v643 = vld [vmem:[%s170 + $0xb78] sm:$0xff]
        %v644 = vld [vmem:[%s170 + $0xb80] sm:$0xff]
        %v645 = vld [vmem:[%s170 + $0xb88] sm:$0xff]
        %v646 = vld [vmem:[%s170 + $0xb90] sm:$0xff]
        %v647 = vld [vmem:[%s170 + $0xb98] sm:$0xff]
        %v648 = vld [vmem:[%s170 + $0xba0] sm:$0xff]
        %v649 = vld [vmem:[%s170 + $0xba8] sm:$0xff]
        %v650 = vld [vmem:[%s170 + $0xbb0] sm:$0xff]
        %v651 = vld [vmem:[%s170 + $0xbb8] sm:$0xff]
        %v652 = vld [vmem:[%s170 + $0xbc0] sm:$0xff]
        %v653 = vld [vmem:[%s170 + $0xbc8] sm:$0xff]
        %v654 = vld [vmem:[%s170 + $0xbd0] sm:$0xff]
        %v655 = vld [vmem:[%s170 + $0xbd8] sm:$0xff]
        %v656 = vld [vmem:[%s170 + $0xbe0] sm:$0xff]
        %v657 = vld [vmem:[%s170 + $0xbe8] sm:$0xff]
        %v658 = vld [vmem:[%s170 + $0xbf0] sm:$0xff]
        %v659 = vld [vmem:[%s170 + $0xbf8] sm:$0xff]
        %v660 = vld [vmem:[%s170 + $0xc00] sm:$0xff]
        %v661 = vld [vmem:[%s170 + $0xc08] sm:$0xff]
        %v662 = vld [vmem:[%s170 + $0xc10] sm:$0xff]
        %v663 = vld [vmem:[%s170 + $0xc18] sm:$0xff]
        %v664 = vld [vmem:[%s170 + $0xc20] sm:$0xff]
        %v665 = vld [vmem:[%s170 + $0xc28] sm:$0xff]
        %v666 = vld [vmem:[%s170 + $0xc30] sm:$0xff]
        %v667 = vld [vmem:[%s170 + $0xc38] sm:$0xff]
        %v668 = vld [vmem:[%s170 + $0xc40] sm:$0xff]
        %v669 = vld [vmem:[%s170 + $0xc48] sm:$0xff]
        %v670 = vld [vmem:[%s170 + $0xc50] sm:$0xff]
        %v671 = vld [vmem:[%s170 + $0xc58] sm:$0xff]
        %v672 = vld [vmem:[%s170 + $0xc60] sm:$0xff]
        %v673 = vld [vmem:[%s170 + $0xc68] sm:$0xff]
        %v674 = vld [vmem:[%s170 + $0xc70] sm:$0xff]
        %v675 = vld [vmem:[%s170 + $0xc78] sm:$0xff]
        %v676 = vld [vmem:[%s170 + $0xc80] sm:$0xff]
        %v677 = vld [vmem:[%s170 + $0xc88] sm:$0xff]
        %v678 = vld [vmem:[%s170 + $0xc90] sm:$0xff]
        %v679 = vld [vmem:[%s170 + $0xc98] sm:$0xff]
        %v680 = vld [vmem:[%s170 + $0xca0] sm:$0xff]
        %v681 = vld [vmem:[%s170 + $0xca8] sm:$0xff]
        %v682 = vld [vmem:[%s170 + $0xcb0] sm:$0xff]
        %v683 = vld [vmem:[%s170 + $0xcb8] sm:$0xff]
        %v684 = vld [vmem:[%s170 + $0xcc0] sm:$0xff]
        %v685 = vld [vmem:[%s170 + $0xcc8] sm:$0xff]
        %v686 = vld [vmem:[%s170 + $0xcd0] sm:$0xff]
        %v687 = vld [vmem:[%s170 + $0xcd8] sm:$0xff]
        %v688 = vld [vmem:[%s170 + $0xce0] sm:$0xff]
        %v689 = vld [vmem:[%s170 + $0xce8] sm:$0xff]
        %v690 = vld [vmem:[%s170 + $0xcf0] sm:$0xff]
        %v691 = vld [vmem:[%s170 + $0xcf8] sm:$0xff]
        %v692 = vld [vmem:[%s170 + $0xd00] sm:$0xff]
        %v693 = vld [vmem:[%s170 + $0xd08] sm:$0xff]
        %v694 = vld [vmem:[%s170 + $0xd10] sm:$0xff]
        %v695 = vld [vmem:[%s170 + $0xd18] sm:$0xff]
        %v696 = vld [vmem:[%s170 + $0xd20] sm:$0xff]
        %v697 = vld [vmem:[%s170 + $0xd28] sm:$0xff]
        %v698 = vld [vmem:[%s170 + $0xd30] sm:$0xff]
        %v699 = vld [vmem:[%s170 + $0xd38] sm:$0xff]
        %v700 = vld [vmem:[%s170 + $0xd40] sm:$0xff]
        %v701 = vld [vmem:[%s170 + $0xd48] sm:$0xff]
        %v702 = vld [vmem:[%s170 + $0xd50] sm:$0xff]
        %v703 = vld [vmem:[%s170 + $0xd58] sm:$0xff]
        %v704 = vld [vmem:[%s170 + $0xd60] sm:$0xff]
        %v705 = vld [vmem:[%s170 + $0xd68] sm:$0xff]
        %v706 = vld [vmem:[%s170 + $0xd70] sm:$0xff]
        %v707 = vld [vmem:[%s170 + $0xd78] sm:$0xff]
        %v708 = vld [vmem:[%s170 + $0xd80] sm:$0xff]
        %v709 = vld [vmem:[%s170 + $0xd88] sm:$0xff]
        %v710 = vld [vmem:[%s170 + $0xd90] sm:$0xff]
        %v711 = vld [vmem:[%s170 + $0xd98] sm:$0xff]
        %v712 = vld [vmem:[%s170 + $0xda0] sm:$0xff]
        %v713 = vld [vmem:[%s170 + $0xda8] sm:$0xff]
        %v714 = vld [vmem:[%s170 + $0xdb0] sm:$0xff]
        %v715 = vld [vmem:[%s170 + $0xdb8] sm:$0xff]
        %v716 = vld [vmem:[%s170 + $0xdc0] sm:$0xff]
        %v717 = vld [vmem:[%s170 + $0xdc8] sm:$0xff]
        %v718 = vld [vmem:[%s170 + $0xdd0] sm:$0xff]
        %v719 = vld [vmem:[%s170 + $0xdd8] sm:$0xff]
        %v720 = vld [vmem:[%s170 + $0xde0] sm:$0xff]
        %v721 = vld [vmem:[%s170 + $0xde8] sm:$0xff]
        %v722 = vld [vmem:[%s170 + $0xdf0] sm:$0xff]
        %v723 = vld [vmem:[%s170 + $0xdf8] sm:$0xff]
        %v724 = vld [vmem:[%s170 + $0xe00] sm:$0xff]
        %v725 = vld [vmem:[%s170 + $0xe08] sm:$0xff]
        %v726 = vld [vmem:[%s170 + $0xe10] sm:$0xff]
        %v727 = vld [vmem:[%s170 + $0xe18] sm:$0xff]
        %v728 = vld [vmem:[%s170 + $0xe20] sm:$0xff]
        %v729 = vld [vmem:[%s170 + $0xe28] sm:$0xff]
        %v730 = vld [vmem:[%s170 + $0xe30] sm:$0xff]
        %v731 = vld [vmem:[%s170 + $0xe38] sm:$0xff]
        %v732 = vld [vmem:[%s170 + $0xe40] sm:$0xff]
        %v733 = vld [vmem:[%s170 + $0xe48] sm:$0xff]
        %v734 = vld [vmem:[%s170 + $0xe50] sm:$0xff]
        %v735 = vld [vmem:[%s170 + $0xe58] sm:$0xff]
        %v736 = vld [vmem:[%s170 + $0xe60] sm:$0xff]
        %v737 = vld [vmem:[%s170 + $0xe68] sm:$0xff]
        %v738 = vld [vmem:[%s170 + $0xe70] sm:$0xff]
        %v739 = vld [vmem:[%s170 + $0xe78] sm:$0xff]
        %v740 = vld [vmem:[%s170 + $0xe80] sm:$0xff]
        %v741 = vld [vmem:[%s170 + $0xe88] sm:$0xff]
        %v742 = vld [vmem:[%s170 + $0xe90] sm:$0xff]
        %v743 = vld [vmem:[%s170 + $0xe98] sm:$0xff]
        %v744 = vld [vmem:[%s170 + $0xea0] sm:$0xff]
        %v745 = vld [vmem:[%s170 + $0xea8] sm:$0xff]
        %v746 = vld [vmem:[%s170 + $0xeb0] sm:$0xff]
        %v747 = vld [vmem:[%s170 + $0xeb8] sm:$0xff]
        %v748 = vld [vmem:[%s170 + $0xec0] sm:$0xff]
        %v749 = vld [vmem:[%s170 + $0xec8] sm:$0xff]
        %v750 = vld [vmem:[%s170 + $0xed0] sm:$0xff]
        %v751 = vld [vmem:[%s170 + $0xed8] sm:$0xff]
        %v752 = vld [vmem:[%s170 + $0xee0] sm:$0xff]
        %v753 = vld [vmem:[%s170 + $0xee8] sm:$0xff]
        %v754 = vld [vmem:[%s170 + $0xef0] sm:$0xff]
        %v755 = vld [vmem:[%s170 + $0xef8] sm:$0xff]
        %v756 = vld [vmem:[%s170 + $0xf00] sm:$0xff]
        %v757 = vld [vmem:[%s170 + $0xf08] sm:$0xff]
        %v758 = vld [vmem:[%s170 + $0xf10] sm:$0xff]
        %v759 = vld [vmem:[%s170 + $0xf18] sm:$0xff]
        %v760 = vld [vmem:[%s170 + $0xf20] sm:$0xff]
        %v761 = vld [vmem:[%s170 + $0xf28] sm:$0xff]
        %v762 = vld [vmem:[%s170 + $0xf30] sm:$0xff]
        %v763 = vld [vmem:[%s170 + $0xf38] sm:$0xff]
        %v764 = vld [vmem:[%s170 + $0xf40] sm:$0xff]
        %v765 = vld [vmem:[%s170 + $0xf48] sm:$0xff]
        %v766 = vld [vmem:[%s170 + $0xf50] sm:$0xff]
        %v767 = vld [vmem:[%s170 + $0xf58] sm:$0xff]
        %v768 = vld [vmem:[%s170 + $0xf60] sm:$0xff]
        %v769 = vld [vmem:[%s170 + $0xf68] sm:$0xff]
        %v770 = vld [vmem:[%s170 + $0xf70] sm:$0xff]
        %v771 = vld [vmem:[%s170 + $0xf78] sm:$0xff]
        %v772 = vld [vmem:[%s170 + $0xf80] sm:$0xff]
        %v773 = vld [vmem:[%s170 + $0xf88] sm:$0xff]
        %v774 = vld [vmem:[%s170 + $0xf90] sm:$0xff]
        %v775 = vld [vmem:[%s170 + $0xf98] sm:$0xff]
        %v776 = vld [vmem:[%s170 + $0xfa0] sm:$0xff]
        %v777 = vld [vmem:[%s170 + $0xfa8] sm:$0xff]
        %v778 = vld [vmem:[%s170 + $0xfb0] sm:$0xff]
        %v779 = vld [vmem:[%s170 + $0xfb8] sm:$0xff]
        %v780 = vld [vmem:[%s170 + $0xfc0] sm:$0xff]
        %v781 = vld [vmem:[%s170 + $0xfc8] sm:$0xff]
        %v782 = vld [vmem:[%s170 + $0xfd0] sm:$0xff]
        %v783 = vld [vmem:[%s170 + $0xfd8] sm:$0xff]
        %v784 = vld [vmem:[%s170 + $0xfe0] sm:$0xff]
        %v785 = vld [vmem:[%s170 + $0xfe8] sm:$0xff]
        %v786 = vld [vmem:[%s170 + $0xff0] sm:$0xff]
        %v787 = vld [vmem:[%s170 + $0xff8] sm:$0xff]
        %v788 = vld [vmem:[%s170 + $0x1000] sm:$0xff]
        %v789 = vld [vmem:[%s170 + $0x1008] sm:$0xff]
        %v790 = vld [vmem:[%s170 + $0x1010] sm:$0xff]
        %v791 = vld [vmem:[%s170 + $0x1018] sm:$0xff]
        %v792 = vld [vmem:[%s170 + $0x1020] sm:$0xff]
        %v793 = vld [vmem:[%s170 + $0x1028] sm:$0xff]
        %v794 = vld [vmem:[%s170 + $0x1030] sm:$0xff]
        %v795 = vld [vmem:[%s170 + $0x1038] sm:$0xff]
        %v796 = vld [vmem:[%s170 + $0x1040] sm:$0xff]
        %v797 = vld [vmem:[%s170 + $0x1048] sm:$0xff]
        %v798 = vld [vmem:[%s170 + $0x1050] sm:$0xff]
        %v799 = vld [vmem:[%s170 + $0x1058] sm:$0xff]
        %v800 = vld [vmem:[%s170 + $0x1060] sm:$0xff]
        %v801 = vld [vmem:[%s170 + $0x1068] sm:$0xff]
        %v802 = vld [vmem:[%s170 + $0x1070] sm:$0xff]
        %v803 = vld [vmem:[%s170 + $0x1078] sm:$0xff]
        %v804 = vld [vmem:[%s170 + $0x1080] sm:$0xff]
        %v805 = vld [vmem:[%s170 + $0x1088] sm:$0xff]
        %v806 = vld [vmem:[%s170 + $0x1090] sm:$0xff]
        %v807 = vld [vmem:[%s170 + $0x1098] sm:$0xff]
        %v808 = vld [vmem:[%s170 + $0x10a0] sm:$0xff]
        %v809 = vld [vmem:[%s170 + $0x10a8] sm:$0xff]
        %v810 = vld [vmem:[%s170 + $0x10b0] sm:$0xff]
        %v811 = vld [vmem:[%s170 + $0x10b8] sm:$0xff]
        %v812 = vld [vmem:[%s170 + $0x10c0] sm:$0xff]
        %v813 = vld [vmem:[%s170 + $0x10c8] sm:$0xff]
        %v814 = vld [vmem:[%s170 + $0x10d0] sm:$0xff]
        %v815 = vld [vmem:[%s170 + $0x10d8] sm:$0xff]
        %v816 = vld [vmem:[%s170 + $0x10e0] sm:$0xff]
        %v817 = vld [vmem:[%s170 + $0x10e8] sm:$0xff]
        %v818 = vld [vmem:[%s170 + $0x10f0] sm:$0xff]
        %v819 = vld [vmem:[%s170 + $0x10f8] sm:$0xff]
        %v820 = vld [vmem:[%s170 + $0x1100] sm:$0xff]
        %v821 = vld [vmem:[%s170 + $0x1108] sm:$0xff]
        %v822 = vld [vmem:[%s170 + $0x1110] sm:$0xff]
        %v823 = vld [vmem:[%s170 + $0x1118] sm:$0xff]
        %v824 = vld [vmem:[%s170 + $0x1120] sm:$0xff]
        %v825 = vld [vmem:[%s170 + $0x1128] sm:$0xff]
        %v826 = vld [vmem:[%s170 + $0x1130] sm:$0xff]
        %v827 = vld [vmem:[%s170 + $0x1138] sm:$0xff]
        %v828 = vld [vmem:[%s170 + $0x1140] sm:$0xff]
        %v829 = vld [vmem:[%s170 + $0x1148] sm:$0xff]
        %v830 = vld [vmem:[%s170 + $0x1150] sm:$0xff]
        %v831 = vld [vmem:[%s170 + $0x1158] sm:$0xff]
        %v832 = vld [vmem:[%s170 + $0x1160] sm:$0xff]
        %v833 = vld [vmem:[%s170 + $0x1168] sm:$0xff]
        %v834 = vld [vmem:[%s170 + $0x1170] sm:$0xff]
        %v835 = vld [vmem:[%s170 + $0x1178] sm:$0xff]
        %v836 = vld [vmem:[%s170 + $0x1180] sm:$0xff]
        %v837 = vld [vmem:[%s170 + $0x1188] sm:$0xff]
        %v838 = vld [vmem:[%s170 + $0x1190] sm:$0xff]
        %v839 = vld [vmem:[%s170 + $0x1198] sm:$0xff]
        %v840 = vld [vmem:[%s170 + $0x11a0] sm:$0xff]
        %v841 = vld [vmem:[%s170 + $0x11a8] sm:$0xff]
        %v842 = vld [vmem:[%s170 + $0x11b0] sm:$0xff]
        %v843 = vld [vmem:[%s170 + $0x11b8] sm:$0xff]
        %v844 = vld [vmem:[%s170 + $0x11c0] sm:$0xff]
        %v845 = vld [vmem:[%s170 + $0x11c8] sm:$0xff]
        %v846 = vld [vmem:[%s170 + $0x11d0] sm:$0xff]
        %v847 = vld [vmem:[%s170 + $0x11d8] sm:$0xff]
        %v848 = vld [vmem:[%s170 + $0x11e0] sm:$0xff]
        %v849 = vld [vmem:[%s170 + $0x11e8] sm:$0xff]
        %v850 = vld [vmem:[%s170 + $0x11f0] sm:$0xff]
        %v851 = vld [vmem:[%s170 + $0x11f8] sm:$0xff]
        %v852 = vld [vmem:[%s170 + $0x1200] sm:$0xff]
        %v853 = vld [vmem:[%s170 + $0x1208] sm:$0xff]
        %v854 = vld [vmem:[%s170 + $0x1210] sm:$0xff]
        %v855 = vld [vmem:[%s170 + $0x1218] sm:$0xff]
        %v856 = vld [vmem:[%s170 + $0x1220] sm:$0xff]
        %v857 = vld [vmem:[%s170 + $0x1228] sm:$0xff]
        %v858 = vld [vmem:[%s170 + $0x1230] sm:$0xff]
        %v859 = vld [vmem:[%s170 + $0x1238] sm:$0xff]
        %v860 = vld [vmem:[%s170 + $0x1240] sm:$0xff]
        %v861 = vld [vmem:[%s170 + $0x1248] sm:$0xff]
        %v862 = vld [vmem:[%s170 + $0x1250] sm:$0xff]
        %v863 = vld [vmem:[%s170 + $0x1258] sm:$0xff]
        %v864 = vld [vmem:[%s170 + $0x1260] sm:$0xff]
        %v865 = vld [vmem:[%s170 + $0x1268] sm:$0xff]
        %v866 = vld [vmem:[%s170 + $0x1270] sm:$0xff]
        %v867 = vld [vmem:[%s170 + $0x1278] sm:$0xff]
        %v868 = vld [vmem:[%s170 + $0x1280] sm:$0xff]
        %v869 = vld [vmem:[%s170 + $0x1288] sm:$0xff]
        %v870 = vld [vmem:[%s170 + $0x1290] sm:$0xff]
        %v871 = vld [vmem:[%s170 + $0x1298] sm:$0xff]
        %v872 = vld [vmem:[%s170 + $0x12a0] sm:$0xff]
        %v873 = vld [vmem:[%s170 + $0x12a8] sm:$0xff]
        %v874 = vld [vmem:[%s170 + $0x12b0] sm:$0xff]
        %v875 = vld [vmem:[%s170 + $0x12b8] sm:$0xff]
        %v876 = vld [vmem:[%s170 + $0x12c0] sm:$0xff]
        %v877 = vld [vmem:[%s170 + $0x12c8] sm:$0xff]
        %v878 = vld [vmem:[%s170 + $0x12d0] sm:$0xff]
        %v879 = vld [vmem:[%s170 + $0x12d8] sm:$0xff]
        %v880 = vld [vmem:[%s170 + $0x12e0] sm:$0xff]
        %v881 = vld [vmem:[%s170 + $0x12e8] sm:$0xff]
        %v882 = vld [vmem:[%s170 + $0x12f0] sm:$0xff]
        %v883 = vld [vmem:[%s170 + $0x12f8] sm:$0xff]
        %v884 = vld [vmem:[%s170 + $0x1300] sm:$0xff]
        %v885 = vld [vmem:[%s170 + $0x1308] sm:$0xff]
        %v886 = vld [vmem:[%s170 + $0x1310] sm:$0xff]
        %v887 = vld [vmem:[%s170 + $0x1318] sm:$0xff]
        %v888 = vld [vmem:[%s170 + $0x1320] sm:$0xff]
        %v889 = vld [vmem:[%s170 + $0x1328] sm:$0xff]
        %v890 = vld [vmem:[%s170 + $0x1330] sm:$0xff]
        %v891 = vld [vmem:[%s170 + $0x1338] sm:$0xff]
        %v892 = vld [vmem:[%s170 + $0x1340] sm:$0xff]
        %v893 = vld [vmem:[%s170 + $0x1348] sm:$0xff]
        %v894 = vld [vmem:[%s170 + $0x1350] sm:$0xff]
        %v895 = vld [vmem:[%s170 + $0x1358] sm:$0xff]
        %v896 = vld [vmem:[%s170 + $0x1360] sm:$0xff]
        %v897 = vld [vmem:[%s170 + $0x1368] sm:$0xff]
        %v898 = vld [vmem:[%s170 + $0x1370] sm:$0xff]
        %v899 = vld [vmem:[%s170 + $0x1378] sm:$0xff]
        %v900 = vld [vmem:[%s170 + $0x1380] sm:$0xff]
        %v901 = vld [vmem:[%s170 + $0x1388] sm:$0xff]
        %v902 = vld [vmem:[%s170 + $0x1390] sm:$0xff]
        %v903 = vld [vmem:[%s170 + $0x1398] sm:$0xff]
        %v904 = vld [vmem:[%s170 + $0x13a0] sm:$0xff]
        %v905 = vld [vmem:[%s170 + $0x13a8] sm:$0xff]
        %v906 = vld [vmem:[%s170 + $0x13b0] sm:$0xff]
        %v907 = vld [vmem:[%s170 + $0x13b8] sm:$0xff]
        %v908 = vld [vmem:[%s170 + $0x13c0] sm:$0xff]
        %v909 = vld [vmem:[%s170 + $0x13c8] sm:$0xff]
        %v910 = vld [vmem:[%s170 + $0x13d0] sm:$0xff]
        %v911 = vld [vmem:[%s170 + $0x13d8] sm:$0xff]
        %v912 = vld [vmem:[%s170 + $0x13e0] sm:$0xff]
        %v913 = vld [vmem:[%s170 + $0x13e8] sm:$0xff]
        %v914 = vld [vmem:[%s170 + $0x13f0] sm:$0xff]
        %v915 = vld [vmem:[%s170 + $0x13f8] sm:$0xff]
        %v916 = vld [vmem:[%s170 + $0x1400] sm:$0xff]
        %v917 = vld [vmem:[%s170 + $0x1408] sm:$0xff]
        %v918 = vld [vmem:[%s170 + $0x1410] sm:$0xff]
        %v919 = vld [vmem:[%s170 + $0x1418] sm:$0xff]
        %v920 = vld [vmem:[%s170 + $0x1420] sm:$0xff]
        %v921 = vld [vmem:[%s170 + $0x1428] sm:$0xff]
        %v922 = vld [vmem:[%s170 + $0x1430] sm:$0xff]
        %v923 = vld [vmem:[%s170 + $0x1438] sm:$0xff]
        %v924 = vld [vmem:[%s170 + $0x1440] sm:$0xff]
        %v925 = vld [vmem:[%s170 + $0x1448] sm:$0xff]
        %v926 = vld [vmem:[%s170 + $0x1450] sm:$0xff]
        %v927 = vld [vmem:[%s170 + $0x1458] sm:$0xff]
        %v928 = vld [vmem:[%s170 + $0x1460] sm:$0xff]
        %v929 = vld [vmem:[%s170 + $0x1468] sm:$0xff]
        %v930 = vld [vmem:[%s170 + $0x1470] sm:$0xff]
        %v931 = vld [vmem:[%s170 + $0x1478] sm:$0xff]
        %v932 = vld [vmem:[%s170 + $0x1480] sm:$0xff]
        %v933 = vld [vmem:[%s170 + $0x1488] sm:$0xff]
        %v934 = vld [vmem:[%s170 + $0x1490] sm:$0xff]
        %v935 = vld [vmem:[%s170 + $0x1498] sm:$0xff]
        %v936 = vld [vmem:[%s170 + $0x14a0] sm:$0xff]
        %v937 = vld [vmem:[%s170 + $0x14a8] sm:$0xff]
        %v938 = vld [vmem:[%s170 + $0x14b0] sm:$0xff]
        %v939 = vld [vmem:[%s170 + $0x14b8] sm:$0xff]
        %v940 = vld [vmem:[%s170 + $0x14c0] sm:$0xff]
        %v941 = vld [vmem:[%s170 + $0x14c8] sm:$0xff]
        %v942 = vld [vmem:[%s170 + $0x14d0] sm:$0xff]
        %v943 = vld [vmem:[%s170 + $0x14d8] sm:$0xff]
        %v944 = vld [vmem:[%s170 + $0x14e0] sm:$0xff]
        %v945 = vld [vmem:[%s170 + $0x14e8] sm:$0xff]
        %v946 = vld [vmem:[%s170 + $0x14f0] sm:$0xff]
        %v947 = vld [vmem:[%s170 + $0x14f8] sm:$0xff]
        %v948 = vld [vmem:[%s170 + $0x1500] sm:$0xff]
        %v949 = vld [vmem:[%s170 + $0x1508] sm:$0xff]
        %v950 = vld [vmem:[%s170 + $0x1510] sm:$0xff]
        %v951 = vld [vmem:[%s170 + $0x1518] sm:$0xff]
        %v952 = vld [vmem:[%s170 + $0x1520] sm:$0xff]
        %v953 = vld [vmem:[%s170 + $0x1528] sm:$0xff]
        %v954 = vld [vmem:[%s170 + $0x1530] sm:$0xff]
        %v955 = vld [vmem:[%s170 + $0x1538] sm:$0xff]
        %v956 = vld [vmem:[%s170 + $0x1540] sm:$0xff]
        %v957 = vld [vmem:[%s170 + $0x1548] sm:$0xff]
        %v958 = vld [vmem:[%s170 + $0x1550] sm:$0xff]
        %v959 = vld [vmem:[%s170 + $0x1558] sm:$0xff]
        %v960 = vld [vmem:[%s170 + $0x1560] sm:$0xff]
        %v961 = vld [vmem:[%s170 + $0x1568] sm:$0xff]
        %v962 = vld [vmem:[%s170 + $0x1570] sm:$0xff]
        %v963 = vld [vmem:[%s170 + $0x1578] sm:$0xff]
        %v964 = vld [vmem:[%s170 + $0x1580] sm:$0xff]
        %v965 = vld [vmem:[%s170 + $0x1588] sm:$0xff]
        %v966 = vld [vmem:[%s170 + $0x1590] sm:$0xff]
        %v967 = vld [vmem:[%s170 + $0x1598] sm:$0xff]
        %v968 = vld [vmem:[%s170 + $0x15a0] sm:$0xff]
        %v969 = vld [vmem:[%s170 + $0x15a8] sm:$0xff]
        %v970 = vld [vmem:[%s170 + $0x15b0] sm:$0xff]
        %v971 = vld [vmem:[%s170 + $0x15b8] sm:$0xff]
        %v972 = vld [vmem:[%s170 + $0x15c0] sm:$0xff]
        %v973 = vld [vmem:[%s170 + $0x15c8] sm:$0xff]
        %v974 = vld [vmem:[%s170 + $0x15d0] sm:$0xff]
        %v975 = vld [vmem:[%s170 + $0x15d8] sm:$0xff]
        %v976 = vld [vmem:[%s170 + $0x15e0] sm:$0xff]
        %v977 = vld [vmem:[%s170 + $0x15e8] sm:$0xff]
        %v978 = vld [vmem:[%s170 + $0x15f0] sm:$0xff]
        %v979 = vld [vmem:[%s170 + $0x15f8] sm:$0xff]
        %v980 = vld [vmem:[%s170 + $0x1600] sm:$0xff]
        %v981 = vld [vmem:[%s170 + $0x1608] sm:$0xff]
        %v982 = vld [vmem:[%s170 + $0x1610] sm:$0xff]
        %v983 = vld [vmem:[%s170 + $0x1618] sm:$0xff]
        %v984 = vld [vmem:[%s170 + $0x1620] sm:$0xff]
        %v985 = vld [vmem:[%s170 + $0x1628] sm:$0xff]
        %v986 = vld [vmem:[%s170 + $0x1630] sm:$0xff]
        %v987 = vld [vmem:[%s170 + $0x1638] sm:$0xff]
        %v988 = vld [vmem:[%s170 + $0x1640] sm:$0xff]
        %v989 = vld [vmem:[%s170 + $0x1648] sm:$0xff]
        %v990 = vld [vmem:[%s170 + $0x1650] sm:$0xff]
        %v991 = vld [vmem:[%s170 + $0x1658] sm:$0xff]
        %v992 = vld [vmem:[%s170 + $0x1660] sm:$0xff]
        %v993 = vld [vmem:[%s170 + $0x1668] sm:$0xff]
        %v994 = vld [vmem:[%s170 + $0x1670] sm:$0xff]
        %v995 = vld [vmem:[%s170 + $0x1678] sm:$0xff]
        %v996 = vld [vmem:[%s170 + $0x1680] sm:$0xff]
        %v997 = vld [vmem:[%s170 + $0x1688] sm:$0xff]
        %v998 = vld [vmem:[%s170 + $0x1690] sm:$0xff]
        %v999 = vld [vmem:[%s170 + $0x1698] sm:$0xff]
        %v1000 = vld [vmem:[%s170 + $0x16a0] sm:$0xff]
        %v1001 = vld [vmem:[%s170 + $0x16a8] sm:$0xff]
        %v1002 = vld [vmem:[%s170 + $0x16b0] sm:$0xff]
        %v1003 = vld [vmem:[%s170 + $0x16b8] sm:$0xff]
        %v1004 = vld [vmem:[%s170 + $0x16c0] sm:$0xff]
        %v1005 = vld [vmem:[%s170 + $0x16c8] sm:$0xff]
        %v1006 = vld [vmem:[%s170 + $0x16d0] sm:$0xff]
        %v1007 = vld [vmem:[%s170 + $0x16d8] sm:$0xff]
        %v1008 = vld [vmem:[%s170 + $0x16e0] sm:$0xff]
        %v1009 = vld [vmem:[%s170 + $0x16e8] sm:$0xff]
        %v1010 = vld [vmem:[%s170 + $0x16f0] sm:$0xff]
        %v1011 = vld [vmem:[%s170 + $0x16f8] sm:$0xff]
        %v1012 = vld [vmem:[%s170 + $0x1700] sm:$0xff]
        %v1013 = vld [vmem:[%s170 + $0x1708] sm:$0xff]
        %v1014 = vld [vmem:[%s170 + $0x1710] sm:$0xff]
        %v1015 = vld [vmem:[%s170 + $0x1718] sm:$0xff]
        %v1016 = vld [vmem:[%s170 + $0x1720] sm:$0xff]
        %v1017 = vld [vmem:[%s170 + $0x1728] sm:$0xff]
        %v1018 = vld [vmem:[%s170 + $0x1730] sm:$0xff]
        %v1019 = vld [vmem:[%s170 + $0x1738] sm:$0xff]
        %v1020 = vld [vmem:[%s170 + $0x1740] sm:$0xff]
        %v1021 = vld [vmem:[%s170 + $0x1748] sm:$0xff]
        %v1022 = vld [vmem:[%s170 + $0x1750] sm:$0xff]
        %v1023 = vld [vmem:[%s170 + $0x1758] sm:$0xff]
        %v1024 = vld [vmem:[%s170 + $0x1760] sm:$0xff]
        %v1025 = vld [vmem:[%s170 + $0x1768] sm:$0xff]
        %v1026 = vld [vmem:[%s170 + $0x1770] sm:$0xff]
        %v1027 = vld [vmem:[%s170 + $0x1778] sm:$0xff]
        %v1028 = vld [vmem:[%s170 + $0x1780] sm:$0xff]
        %v1029 = vld [vmem:[%s170 + $0x1788] sm:$0xff]
        %v1030 = vld [vmem:[%s170 + $0x1790] sm:$0xff]
        %v1031 = vld [vmem:[%s170 + $0x1798] sm:$0xff]
        %v1032 = vld [vmem:[%s170 + $0x17a0] sm:$0xff]
        %v1033 = vld [vmem:[%s170 + $0x17a8] sm:$0xff]
        %v1034 = vld [vmem:[%s170 + $0x17b0] sm:$0xff]
        %v1035 = vld [vmem:[%s170 + $0x17b8] sm:$0xff]
        %v1036 = vld [vmem:[%s170 + $0x17c0] sm:$0xff]
        %v1037 = vld [vmem:[%s170 + $0x17c8] sm:$0xff]
        %v1038 = vld [vmem:[%s170 + $0x17d0] sm:$0xff]
        %v1039 = vld [vmem:[%s170 + $0x17d8] sm:$0xff]
        %v1040 = vld [vmem:[%s170 + $0x17e0] sm:$0xff]
        %v1041 = vld [vmem:[%s170 + $0x17e8] sm:$0xff]
        %v1042 = vld [vmem:[%s170 + $0x17f0] sm:$0xff]
        %v1043 = vld [vmem:[%s170 + $0x17f8] sm:$0xff]
        %v1044 = vld [vmem:[%s170 + $0x1800] sm:$0xff]
        %v1045 = vld [vmem:[%s170 + $0x1808] sm:$0xff]
        %v1046 = vld [vmem:[%s170 + $0x1810] sm:$0xff]
        %v1047 = vld [vmem:[%s170 + $0x1818] sm:$0xff]
        %v1048 = vld [vmem:[%s170 + $0x1820] sm:$0xff]
        %v1049 = vld [vmem:[%s170 + $0x1828] sm:$0xff]
        %v1050 = vld [vmem:[%s170 + $0x1830] sm:$0xff]
        %v1051 = vld [vmem:[%s170 + $0x1838] sm:$0xff]
        %v1052 = vld [vmem:[%s170 + $0x1840] sm:$0xff]
        %v1053 = vld [vmem:[%s170 + $0x1848] sm:$0xff]
        %v1054 = vld [vmem:[%s170 + $0x1850] sm:$0xff]
        %v1055 = vld [vmem:[%s170 + $0x1858] sm:$0xff]
        %v1056 = vld [vmem:[%s170 + $0x1860] sm:$0xff]
        %v1057 = vld [vmem:[%s170 + $0x1868] sm:$0xff]
        %v1058 = vld [vmem:[%s170 + $0x1870] sm:$0xff]
        %v1059 = vld [vmem:[%s170 + $0x1878] sm:$0xff]
        %v1060 = vld [vmem:[%s170 + $0x1880] sm:$0xff]
        %v1061 = vld [vmem:[%s170 + $0x1888] sm:$0xff]
        %v1062 = vld [vmem:[%s170 + $0x1890] sm:$0xff]
        %v1063 = vld [vmem:[%s170 + $0x1898] sm:$0xff]
        %v1064 = vld [vmem:[%s170 + $0x18a0] sm:$0xff]
        %v1065 = vld [vmem:[%s170 + $0x18a8] sm:$0xff]
        %v1066 = vld [vmem:[%s170 + $0x18b0] sm:$0xff]
        %v1067 = vld [vmem:[%s170 + $0x18b8] sm:$0xff]
        %v1068 = vld [vmem:[%s170 + $0x18c0] sm:$0xff]
        %v1069 = vld [vmem:[%s170 + $0x18c8] sm:$0xff]
        %v1070 = vld [vmem:[%s170 + $0x18d0] sm:$0xff]
        %v1071 = vld [vmem:[%s170 + $0x18d8] sm:$0xff]
        %v1072 = vld [vmem:[%s170 + $0x18e0] sm:$0xff]
        %v1073 = vld [vmem:[%s170 + $0x18e8] sm:$0xff]
        %v1074 = vld [vmem:[%s170 + $0x18f0] sm:$0xff]
        %v1075 = vld [vmem:[%s170 + $0x18f8] sm:$0xff]
        %v1076 = vld [vmem:[%s170 + $0x1900] sm:$0xff]
        %v1077 = vld [vmem:[%s170 + $0x1908] sm:$0xff]
        %v1078 = vld [vmem:[%s170 + $0x1910] sm:$0xff]
        %v1079 = vld [vmem:[%s170 + $0x1918] sm:$0xff]
        %v1080 = vld [vmem:[%s170 + $0x1920] sm:$0xff]
        %v1081 = vld [vmem:[%s170 + $0x1928] sm:$0xff]
        %v1082 = vld [vmem:[%s170 + $0x1930] sm:$0xff]
        %v1083 = vld [vmem:[%s170 + $0x1938] sm:$0xff]
        %v1084 = vld [vmem:[%s170 + $0x1940] sm:$0xff]
        %v1085 = vld [vmem:[%s170 + $0x1948] sm:$0xff]
        %v1086 = vld [vmem:[%s170 + $0x1950] sm:$0xff]
        %v1087 = vld [vmem:[%s170 + $0x1958] sm:$0xff]
        %v1088 = vld [vmem:[%s170 + $0x1960] sm:$0xff]
        %v1089 = vld [vmem:[%s170 + $0x1968] sm:$0xff]
        %v1090 = vld [vmem:[%s170 + $0x1970] sm:$0xff]
        %v1091 = vld [vmem:[%s170 + $0x1978] sm:$0xff]
        %v1092 = vld [vmem:[%s170 + $0x1980] sm:$0xff]
        %v1093 = vld [vmem:[%s170 + $0x1988] sm:$0xff]
        %v1094 = vld [vmem:[%s170 + $0x1990] sm:$0xff]
        %v1095 = vld [vmem:[%s170 + $0x1998] sm:$0xff]
        %v1096 = vld [vmem:[%s170 + $0x19a0] sm:$0xff]
        %v1097 = vld [vmem:[%s170 + $0x19a8] sm:$0xff]
        %v1098 = vld [vmem:[%s170 + $0x19b0] sm:$0xff]
        %v1099 = vld [vmem:[%s170 + $0x19b8] sm:$0xff]
        %v1100 = vld [vmem:[%s170 + $0x19c0] sm:$0xff]
        %v1101 = vld [vmem:[%s170 + $0x19c8] sm:$0xff]
        %v1102 = vld [vmem:[%s170 + $0x19d0] sm:$0xff]
        %v1103 = vld [vmem:[%s170 + $0x19d8] sm:$0xff]
        %v1104 = vld [vmem:[%s170 + $0x19e0] sm:$0xff]
        %v1105 = vld [vmem:[%s170 + $0x19e8] sm:$0xff]
        %v1106 = vld [vmem:[%s170 + $0x19f0] sm:$0xff]
        %v1107 = vld [vmem:[%s170 + $0x19f8] sm:$0xff]
        %v1108 = vld [vmem:[%s170 + $0x1a00] sm:$0xff]
        %v1109 = vld [vmem:[%s170 + $0x1a08] sm:$0xff]
        %v1110 = vld [vmem:[%s170 + $0x1a10] sm:$0xff]
        %v1111 = vld [vmem:[%s170 + $0x1a18] sm:$0xff]
        %v1112 = vld [vmem:[%s170 + $0x1a20] sm:$0xff]
        %v1113 = vld [vmem:[%s170 + $0x1a28] sm:$0xff]
        %v1114 = vld [vmem:[%s170 + $0x1a30] sm:$0xff]
        %v1115 = vld [vmem:[%s170 + $0x1a38] sm:$0xff]
        %v1116 = vld [vmem:[%s170 + $0x1a40] sm:$0xff]
        %v1117 = vld [vmem:[%s170 + $0x1a48] sm:$0xff]
        %v1118 = vld [vmem:[%s170 + $0x1a50] sm:$0xff]
        %v1119 = vld [vmem:[%s170 + $0x1a58] sm:$0xff]
        %v1120 = vld [vmem:[%s170 + $0x1a60] sm:$0xff]
        %v1121 = vld [vmem:[%s170 + $0x1a68] sm:$0xff]
        %v1122 = vld [vmem:[%s170 + $0x1a70] sm:$0xff]
        %v1123 = vld [vmem:[%s170 + $0x1a78] sm:$0xff]
        %v1124 = vld [vmem:[%s170 + $0x1a80] sm:$0xff]
        %v1125 = vld [vmem:[%s170 + $0x1a88] sm:$0xff]
        %v1126 = vld [vmem:[%s170 + $0x1a90] sm:$0xff]
        %v1127 = vld [vmem:[%s170 + $0x1a98] sm:$0xff]
        %v1128 = vld [vmem:[%s170 + $0x1aa0] sm:$0xff]
        %v1129 = vld [vmem:[%s170 + $0x1aa8] sm:$0xff]
        %v1130 = vld [vmem:[%s170 + $0x1ab0] sm:$0xff]
        %v1131 = vld [vmem:[%s170 + $0x1ab8] sm:$0xff]
        %v1132 = vld [vmem:[%s170 + $0x1ac0] sm:$0xff]
        %v1133 = vld [vmem:[%s170 + $0x1ac8] sm:$0xff]
        %v1134 = vld [vmem:[%s170 + $0x1ad0] sm:$0xff]
        %v1135 = vld [vmem:[%s170 + $0x1ad8] sm:$0xff]
        %v1136 = vld [vmem:[%s170 + $0x1ae0] sm:$0xff]
        %v1137 = vld [vmem:[%s170 + $0x1ae8] sm:$0xff]
        %v1138 = vld [vmem:[%s170 + $0x1af0] sm:$0xff]
        %v1139 = vld [vmem:[%s170 + $0x1af8] sm:$0xff]
        %v1140 = vld [vmem:[%s170 + $0x1b00] sm:$0xff]
        %v1141 = vld [vmem:[%s170 + $0x1b08] sm:$0xff]
        %v1142 = vld [vmem:[%s170 + $0x1b10] sm:$0xff]
        %v1143 = vld [vmem:[%s170 + $0x1b18] sm:$0xff]
        %v1144 = vld [vmem:[%s170 + $0x1b20] sm:$0xff]
        %v1145 = vld [vmem:[%s170 + $0x1b28] sm:$0xff]
        %v1146 = vld [vmem:[%s170 + $0x1b30] sm:$0xff]
        %v1147 = vld [vmem:[%s170 + $0x1b38] sm:$0xff]
        %v1148 = vld [vmem:[%s170 + $0x1b40] sm:$0xff]
        %v1149 = vld [vmem:[%s170 + $0x1b48] sm:$0xff]
        %v1150 = vld [vmem:[%s170 + $0x1b50] sm:$0xff]
        %v1151 = vld [vmem:[%s170 + $0x1b58] sm:$0xff]
        %v1152 = vld [vmem:[%s170 + $0x1b60] sm:$0xff]
        %v1153 = vld [vmem:[%s170 + $0x1b68] sm:$0xff]
        %v1154 = vld [vmem:[%s170 + $0x1b70] sm:$0xff]
        %v1155 = vld [vmem:[%s170 + $0x1b78] sm:$0xff]
        %v1156 = vld [vmem:[%s170 + $0x1b80] sm:$0xff]
        %v1157 = vld [vmem:[%s170 + $0x1b88] sm:$0xff]
        %v1158 = vld [vmem:[%s170 + $0x1b90] sm:$0xff]
        %v1159 = vld [vmem:[%s170 + $0x1b98] sm:$0xff]
        %v1160 = vld [vmem:[%s170 + $0x1ba0] sm:$0xff]
        %v1161 = vld [vmem:[%s170 + $0x1ba8] sm:$0xff]
        %v1162 = vld [vmem:[%s170 + $0x1bb0] sm:$0xff]
        %v1163 = vld [vmem:[%s170 + $0x1bb8] sm:$0xff]
        %v1164 = vld [vmem:[%s170 + $0x1bc0] sm:$0xff]
        %v1165 = vld [vmem:[%s170 + $0x1bc8] sm:$0xff]
        %v1166 = vld [vmem:[%s170 + $0x1bd0] sm:$0xff]
        %v1167 = vld [vmem:[%s170 + $0x1bd8] sm:$0xff]
        %v1168 = vld [vmem:[%s170 + $0x1be0] sm:$0xff]
        %v1169 = vld [vmem:[%s170 + $0x1be8] sm:$0xff]
        %v1170 = vld [vmem:[%s170 + $0x1bf0] sm:$0xff]
        %v1171 = vld [vmem:[%s170 + $0x1bf8] sm:$0xff]
        %v1172 = vld [vmem:[%s170 + $0x1c00] sm:$0xff]
        %v1173 = vld [vmem:[%s170 + $0x1c08] sm:$0xff]
        %v1174 = vld [vmem:[%s170 + $0x1c10] sm:$0xff]
        %v1175 = vld [vmem:[%s170 + $0x1c18] sm:$0xff]
        %v1176 = vld [vmem:[%s170 + $0x1c20] sm:$0xff]
        %v1177 = vld [vmem:[%s170 + $0x1c28] sm:$0xff]
        %v1178 = vld [vmem:[%s170 + $0x1c30] sm:$0xff]
        %v1179 = vld [vmem:[%s170 + $0x1c38] sm:$0xff]
        %v1180 = vld [vmem:[%s170 + $0x1c40] sm:$0xff]
        %v1181 = vld [vmem:[%s170 + $0x1c48] sm:$0xff]
        %v1182 = vld [vmem:[%s170 + $0x1c50] sm:$0xff]
        %v1183 = vld [vmem:[%s170 + $0x1c58] sm:$0xff]
        %v1184 = vld [vmem:[%s170 + $0x1c60] sm:$0xff]
        %v1185 = vld [vmem:[%s170 + $0x1c68] sm:$0xff]
        %v1186 = vld [vmem:[%s170 + $0x1c70] sm:$0xff]
        %v1187 = vld [vmem:[%s170 + $0x1c78] sm:$0xff]
        %v1188 = vld [vmem:[%s170 + $0x1c80] sm:$0xff]
        %v1189 = vld [vmem:[%s170 + $0x1c88] sm:$0xff]
        %v1190 = vld [vmem:[%s170 + $0x1c90] sm:$0xff]
        %v1191 = vld [vmem:[%s170 + $0x1c98] sm:$0xff]
        %v1192 = vld [vmem:[%s170 + $0x1ca0] sm:$0xff]
        %v1193 = vld [vmem:[%s170 + $0x1ca8] sm:$0xff]
        %v1194 = vld [vmem:[%s170 + $0x1cb0] sm:$0xff]
        %v1195 = vld [vmem:[%s170 + $0x1cb8] sm:$0xff]
        %v1196 = vld [vmem:[%s170 + $0x1cc0] sm:$0xff]
        %v1197 = vld [vmem:[%s170 + $0x1cc8] sm:$0xff]
        %v1198 = vld [vmem:[%s170 + $0x1cd0] sm:$0xff]
        %v1199 = vld [vmem:[%s170 + $0x1cd8] sm:$0xff]
        %v1200 = vld [vmem:[%s170 + $0x1ce0] sm:$0xff]
        %v1201 = vld [vmem:[%s170 + $0x1ce8] sm:$0xff]
        %v1202 = vld [vmem:[%s170 + $0x1cf0] sm:$0xff]
        %v1203 = vld [vmem:[%s170 + $0x1cf8] sm:$0xff]
        %v1204 = vld [vmem:[%s170 + $0x1d00] sm:$0xff]
        %v1205 = vld [vmem:[%s170 + $0x1d08] sm:$0xff]
        %v1206 = vld [vmem:[%s170 + $0x1d10] sm:$0xff]
        %v1207 = vld [vmem:[%s170 + $0x1d18] sm:$0xff]
        %v1208 = vld [vmem:[%s170 + $0x1d20] sm:$0xff]
        %v1209 = vld [vmem:[%s170 + $0x1d28] sm:$0xff]
        %v1210 = vld [vmem:[%s170 + $0x1d30] sm:$0xff]
        %v1211 = vld [vmem:[%s170 + $0x1d38] sm:$0xff]
        %v1212 = vld [vmem:[%s170 + $0x1d40] sm:$0xff]
        %v1213 = vld [vmem:[%s170 + $0x1d48] sm:$0xff]
        %v1214 = vld [vmem:[%s170 + $0x1d50] sm:$0xff]
        %v1215 = vld [vmem:[%s170 + $0x1d58] sm:$0xff]
        %v1216 = vld [vmem:[%s170 + $0x1d60] sm:$0xff]
        %v1217 = vld [vmem:[%s170 + $0x1d68] sm:$0xff]
        %v1218 = vld [vmem:[%s170 + $0x1d70] sm:$0xff]
        %v1219 = vld [vmem:[%s170 + $0x1d78] sm:$0xff]
        %v1220 = vld [vmem:[%s170 + $0x1d80] sm:$0xff]
        %v1221 = vld [vmem:[%s170 + $0x1d88] sm:$0xff]
        %v1222 = vld [vmem:[%s170 + $0x1d90] sm:$0xff]
        %v1223 = vld [vmem:[%s170 + $0x1d98] sm:$0xff]
        %v1224 = vld [vmem:[%s170 + $0x1da0] sm:$0xff]
        %v1225 = vld [vmem:[%s170 + $0x1da8] sm:$0xff]
        %v1226 = vld [vmem:[%s170 + $0x1db0] sm:$0xff]
        %v1227 = vld [vmem:[%s170 + $0x1db8] sm:$0xff]
        %v1228 = vld [vmem:[%s170 + $0x1dc0] sm:$0xff]
        %v1229 = vld [vmem:[%s170 + $0x1dc8] sm:$0xff]
        %v1230 = vld [vmem:[%s170 + $0x1dd0] sm:$0xff]
        %v1231 = vld [vmem:[%s170 + $0x1dd8] sm:$0xff]
        %v1232 = vld [vmem:[%s170 + $0x1de0] sm:$0xff]
        %v1233 = vld [vmem:[%s170 + $0x1de8] sm:$0xff]
        %v1234 = vld [vmem:[%s170 + $0x1df0] sm:$0xff]
        %v1235 = vld [vmem:[%s170 + $0x1df8] sm:$0xff]
        %v1236 = vld [vmem:[%s170 + $0x1e00] sm:$0xff]
        %v1237 = vld [vmem:[%s170 + $0x1e08] sm:$0xff]
        %v1238 = vld [vmem:[%s170 + $0x1e10] sm:$0xff]
        %v1239 = vld [vmem:[%s170 + $0x1e18] sm:$0xff]
        %v1240 = vld [vmem:[%s170 + $0x1e20] sm:$0xff]
        %v1241 = vld [vmem:[%s170 + $0x1e28] sm:$0xff]
        %v1242 = vld [vmem:[%s170 + $0x1e30] sm:$0xff]
        %v1243 = vld [vmem:[%s170 + $0x1e38] sm:$0xff]
        %v1244 = vld [vmem:[%s170 + $0x1e40] sm:$0xff]
        %v1245 = vld [vmem:[%s170 + $0x1e48] sm:$0xff]
        %v1246 = vld [vmem:[%s170 + $0x1e50] sm:$0xff]
        %v1247 = vld [vmem:[%s170 + $0x1e58] sm:$0xff]
        %v1248 = vld [vmem:[%s170 + $0x1e60] sm:$0xff]
        %v1249 = vld [vmem:[%s170 + $0x1e68] sm:$0xff]
        %v1250 = vld [vmem:[%s170 + $0x1e70] sm:$0xff]
        %v1251 = vld [vmem:[%s170 + $0x1e78] sm:$0xff]
        %v1252 = vld [vmem:[%s170 + $0x1e80] sm:$0xff]
        %v1253 = vld [vmem:[%s170 + $0x1e88] sm:$0xff]
        %v1254 = vld [vmem:[%s170 + $0x1e90] sm:$0xff]
        %v1255 = vld [vmem:[%s170 + $0x1e98] sm:$0xff]
        %v1256 = vld [vmem:[%s170 + $0x1ea0] sm:$0xff]
        %v1257 = vld [vmem:[%s170 + $0x1ea8] sm:$0xff]
        %v1258 = vld [vmem:[%s170 + $0x1eb0] sm:$0xff]
        %v1259 = vld [vmem:[%s170 + $0x1eb8] sm:$0xff]
        %v1260 = vld [vmem:[%s170 + $0x1ec0] sm:$0xff]
        %v1261 = vld [vmem:[%s170 + $0x1ec8] sm:$0xff]
        %v1262 = vld [vmem:[%s170 + $0x1ed0] sm:$0xff]
        %v1263 = vld [vmem:[%s170 + $0x1ed8] sm:$0xff]
        %v1264 = vld [vmem:[%s170 + $0x1ee0] sm:$0xff]
        %v1265 = vld [vmem:[%s170 + $0x1ee8] sm:$0xff]
        %v1266 = vld [vmem:[%s170 + $0x1ef0] sm:$0xff]
        %v1267 = vld [vmem:[%s170 + $0x1ef8] sm:$0xff]
        %v1268 = vld [vmem:[%s170 + $0x1f00] sm:$0xff]
        %v1269 = vld [vmem:[%s170 + $0x1f08] sm:$0xff]
        %v1270 = vld [vmem:[%s170 + $0x1f10] sm:$0xff]
        %v1271 = vld [vmem:[%s170 + $0x1f18] sm:$0xff]
        %v1272 = vld [vmem:[%s170 + $0x1f20] sm:$0xff]
        %v1273 = vld [vmem:[%s170 + $0x1f28] sm:$0xff]
        %v1274 = vld [vmem:[%s170 + $0x1f30] sm:$0xff]
        %v1275 = vld [vmem:[%s170 + $0x1f38] sm:$0xff]
        %v1276 = vld [vmem:[%s170 + $0x1f40] sm:$0xff]
        %v1277 = vld [vmem:[%s170 + $0x1f48] sm:$0xff]
        %v1278 = vld [vmem:[%s170 + $0x1f50] sm:$0xff]
        %v1279 = vld [vmem:[%s170 + $0x1f58] sm:$0xff]
        %v1280 = vld [vmem:[%s170 + $0x1f60] sm:$0xff]
        %v1281 = vld [vmem:[%s170 + $0x1f68] sm:$0xff]
        %v1282 = vld [vmem:[%s170 + $0x1f70] sm:$0xff]
        %v1283 = vld [vmem:[%s170 + $0x1f78] sm:$0xff]
        %v1284 = vld [vmem:[%s170 + $0x1f80] sm:$0xff]
        %v1285 = vld [vmem:[%s170 + $0x1f88] sm:$0xff]
        %v1286 = vld [vmem:[%s170 + $0x1f90] sm:$0xff]
        %v1287 = vld [vmem:[%s170 + $0x1f98] sm:$0xff]
        %v1288 = vld [vmem:[%s170 + $0x1fa0] sm:$0xff]
        %v1289 = vld [vmem:[%s170 + $0x1fa8] sm:$0xff]
        %v1290 = vld [vmem:[%s170 + $0x1fb0] sm:$0xff]
        %v1291 = vld [vmem:[%s170 + $0x1fb8] sm:$0xff]
        %v1292 = vld [vmem:[%s170 + $0x1fc0] sm:$0xff]
        %v1293 = vld [vmem:[%s170 + $0x1fc8] sm:$0xff]
        %v1294 = vld [vmem:[%s170 + $0x1fd0] sm:$0xff]
        %v1295 = vld [vmem:[%s170 + $0x1fd8] sm:$0xff]
        %v1296 = vld [vmem:[%s170 + $0x1fe0] sm:$0xff]
        %v1297 = vld [vmem:[%s170 + $0x1fe8] sm:$0xff]
        %v1298 = vld [vmem:[%s170 + $0x1ff0] sm:$0xff]
        %v1299 = vld [vmem:[%s170 + $0x1ff8] sm:$0xff]
        %v2324 = vunpack.c.l.b16 %v276
        %v2325 = vunpack.c.h.b16 %v276
        %v2326 = vunpack.c.l.b16 %v277
        %v2327 = vunpack.c.h.b16 %v277
        %v2328 = vunpack.c.l.b16 %v278
        %v2329 = vunpack.c.h.b16 %v278
        %v2330 = vunpack.c.l.b16 %v279
        %v2331 = vunpack.c.h.b16 %v279
        %v2332 = vunpack.c.l.b16 %v280
        %v2333 = vunpack.c.h.b16 %v280
        %v2334 = vunpack.c.l.b16 %v281
        %v2335 = vunpack.c.h.b16 %v281
        %v2336 = vunpack.c.l.b16 %v282
        %v2337 = vunpack.c.h.b16 %v282
        %v2338 = vunpack.c.l.b16 %v283
        %v2339 = vunpack.c.h.b16 %v283
        %v2340 = vunpack.c.l.b16 %v284
        %v2341 = vunpack.c.h.b16 %v284
        %v2342 = vunpack.c.l.b16 %v285
        %v2343 = vunpack.c.h.b16 %v285
        %v2344 = vunpack.c.l.b16 %v286
        %v2345 = vunpack.c.h.b16 %v286
        %v2346 = vunpack.c.l.b16 %v287
        %v2347 = vunpack.c.h.b16 %v287
        %v2348 = vunpack.c.l.b16 %v288
        %v2349 = vunpack.c.h.b16 %v288
        %v2350 = vunpack.c.l.b16 %v289
        %v2351 = vunpack.c.h.b16 %v289
        %v2352 = vunpack.c.l.b16 %v290
        %v2353 = vunpack.c.h.b16 %v290
        %v2354 = vunpack.c.l.b16 %v291
        %v2355 = vunpack.c.h.b16 %v291
        %v2356 = vunpack.c.l.b16 %v292
        %v2357 = vunpack.c.h.b16 %v292
        %v2358 = vunpack.c.l.b16 %v293
        %v2359 = vunpack.c.h.b16 %v293
        %v2360 = vunpack.c.l.b16 %v294
        %v2361 = vunpack.c.h.b16 %v294
        %v2362 = vunpack.c.l.b16 %v295
        %v2363 = vunpack.c.h.b16 %v295
        %v2364 = vunpack.c.l.b16 %v296
        %v2365 = vunpack.c.h.b16 %v296
        %v2366 = vunpack.c.l.b16 %v297
        %v2367 = vunpack.c.h.b16 %v297
        %v2368 = vunpack.c.l.b16 %v298
        %v2369 = vunpack.c.h.b16 %v298
        %v2370 = vunpack.c.l.b16 %v299
        %v2371 = vunpack.c.h.b16 %v299
        %v2372 = vunpack.c.l.b16 %v300
        %v2373 = vunpack.c.h.b16 %v300
        %v2374 = vunpack.c.l.b16 %v301
        %v2375 = vunpack.c.h.b16 %v301
        %v2376 = vunpack.c.l.b16 %v302
        %v2377 = vunpack.c.h.b16 %v302
        %v2378 = vunpack.c.l.b16 %v303
        %v2379 = vunpack.c.h.b16 %v303
        %v2380 = vunpack.c.l.b16 %v304
        %v2381 = vunpack.c.h.b16 %v304
        %v2382 = vunpack.c.l.b16 %v305
        %v2383 = vunpack.c.h.b16 %v305
        %v2384 = vunpack.c.l.b16 %v306
        %v2385 = vunpack.c.h.b16 %v306
        %v2386 = vunpack.c.l.b16 %v307
        %v2387 = vunpack.c.h.b16 %v307
        %v2388 = vunpack.c.l.b16 %v308
        %v2389 = vunpack.c.h.b16 %v308
        %v2390 = vunpack.c.l.b16 %v309
        %v2391 = vunpack.c.h.b16 %v309
        %v2392 = vunpack.c.l.b16 %v310
        %v2393 = vunpack.c.h.b16 %v310
        %v2394 = vunpack.c.l.b16 %v311
        %v2395 = vunpack.c.h.b16 %v311
        %v2396 = vunpack.c.l.b16 %v312
        %v2397 = vunpack.c.h.b16 %v312
        %v2398 = vunpack.c.l.b16 %v313
        %v2399 = vunpack.c.h.b16 %v313
        %v2400 = vunpack.c.l.b16 %v314
        %v2401 = vunpack.c.h.b16 %v314
        %v2402 = vunpack.c.l.b16 %v315
        %v2403 = vunpack.c.h.b16 %v315
        %v2404 = vunpack.c.l.b16 %v316
        %v2405 = vunpack.c.h.b16 %v316
        %v2406 = vunpack.c.l.b16 %v317
        %v2407 = vunpack.c.h.b16 %v317
        %v2408 = vunpack.c.l.b16 %v318
        %v2409 = vunpack.c.h.b16 %v318
        %v2410 = vunpack.c.l.b16 %v319
        %v2411 = vunpack.c.h.b16 %v319
        %v2412 = vunpack.c.l.b16 %v320
        %v2413 = vunpack.c.h.b16 %v320
        %v2414 = vunpack.c.l.b16 %v321
        %v2415 = vunpack.c.h.b16 %v321
        %v2416 = vunpack.c.l.b16 %v322
        %v2417 = vunpack.c.h.b16 %v322
        %v2418 = vunpack.c.l.b16 %v323
        %v2419 = vunpack.c.h.b16 %v323
        %v2420 = vunpack.c.l.b16 %v324
        %v2421 = vunpack.c.h.b16 %v324
        %v2422 = vunpack.c.l.b16 %v325
        %v2423 = vunpack.c.h.b16 %v325
        %v2424 = vunpack.c.l.b16 %v326
        %v2425 = vunpack.c.h.b16 %v326
        %v2426 = vunpack.c.l.b16 %v327
        %v2427 = vunpack.c.h.b16 %v327
        %v2428 = vunpack.c.l.b16 %v328
        %v2429 = vunpack.c.h.b16 %v328
        %v2430 = vunpack.c.l.b16 %v329
        %v2431 = vunpack.c.h.b16 %v329
        %v2432 = vunpack.c.l.b16 %v330
        %v2433 = vunpack.c.h.b16 %v330
        %v2434 = vunpack.c.l.b16 %v331
        %v2435 = vunpack.c.h.b16 %v331
        %v2436 = vunpack.c.l.b16 %v332
        %v2437 = vunpack.c.h.b16 %v332
        %v2438 = vunpack.c.l.b16 %v333
        %v2439 = vunpack.c.h.b16 %v333
        %v2440 = vunpack.c.l.b16 %v334
        %v2441 = vunpack.c.h.b16 %v334
        %v2442 = vunpack.c.l.b16 %v335
        %v2443 = vunpack.c.h.b16 %v335
        %v2444 = vunpack.c.l.b16 %v336
        %v2445 = vunpack.c.h.b16 %v336
        %v2446 = vunpack.c.l.b16 %v337
        %v2447 = vunpack.c.h.b16 %v337
        %v2448 = vunpack.c.l.b16 %v338
        %v2449 = vunpack.c.h.b16 %v338
        %v2450 = vunpack.c.l.b16 %v339
        %v2451 = vunpack.c.h.b16 %v339
        %v2452 = vunpack.c.l.b16 %v340
        %v2453 = vunpack.c.h.b16 %v340
        %v2454 = vunpack.c.l.b16 %v341
        %v2455 = vunpack.c.h.b16 %v341
        %v2456 = vunpack.c.l.b16 %v342
        %v2457 = vunpack.c.h.b16 %v342
        %v2458 = vunpack.c.l.b16 %v343
        %v2459 = vunpack.c.h.b16 %v343
        %v2460 = vunpack.c.l.b16 %v344
        %v2461 = vunpack.c.h.b16 %v344
        %v2462 = vunpack.c.l.b16 %v345
        %v2463 = vunpack.c.h.b16 %v345
        %v2464 = vunpack.c.l.b16 %v346
        %v2465 = vunpack.c.h.b16 %v346
        %v2466 = vunpack.c.l.b16 %v347
        %v2467 = vunpack.c.h.b16 %v347
        %v2468 = vunpack.c.l.b16 %v348
        %v2469 = vunpack.c.h.b16 %v348
        %v2470 = vunpack.c.l.b16 %v349
        %v2471 = vunpack.c.h.b16 %v349
        %v2472 = vunpack.c.l.b16 %v350
        %v2473 = vunpack.c.h.b16 %v350
        %v2474 = vunpack.c.l.b16 %v351
        %v2475 = vunpack.c.h.b16 %v351
        %v2476 = vunpack.c.l.b16 %v352
        %v2477 = vunpack.c.h.b16 %v352
        %v2478 = vunpack.c.l.b16 %v353
        %v2479 = vunpack.c.h.b16 %v353
        %v2480 = vunpack.c.l.b16 %v354
        %v2481 = vunpack.c.h.b16 %v354
        %v2482 = vunpack.c.l.b16 %v355
        %v2483 = vunpack.c.h.b16 %v355
        %v2484 = vunpack.c.l.b16 %v356
        %v2485 = vunpack.c.h.b16 %v356
        %v2486 = vunpack.c.l.b16 %v357
        %v2487 = vunpack.c.h.b16 %v357
        %v2488 = vunpack.c.l.b16 %v358
        %v2489 = vunpack.c.h.b16 %v358
        %v2490 = vunpack.c.l.b16 %v359
        %v2491 = vunpack.c.h.b16 %v359
        %v2492 = vunpack.c.l.b16 %v360
        %v2493 = vunpack.c.h.b16 %v360
        %v2494 = vunpack.c.l.b16 %v361
        %v2495 = vunpack.c.h.b16 %v361
        %v2496 = vunpack.c.l.b16 %v362
        %v2497 = vunpack.c.h.b16 %v362
        %v2498 = vunpack.c.l.b16 %v363
        %v2499 = vunpack.c.h.b16 %v363
        %v2500 = vunpack.c.l.b16 %v364
        %v2501 = vunpack.c.h.b16 %v364
        %v2502 = vunpack.c.l.b16 %v365
        %v2503 = vunpack.c.h.b16 %v365
        %v2504 = vunpack.c.l.b16 %v366
        %v2505 = vunpack.c.h.b16 %v366
        %v2506 = vunpack.c.l.b16 %v367
        %v2507 = vunpack.c.h.b16 %v367
        %v2508 = vunpack.c.l.b16 %v368
        %v2509 = vunpack.c.h.b16 %v368
        %v2510 = vunpack.c.l.b16 %v369
        %v2511 = vunpack.c.h.b16 %v369
        %v2512 = vunpack.c.l.b16 %v370
        %v2513 = vunpack.c.h.b16 %v370
        %v2514 = vunpack.c.l.b16 %v371
        %v2515 = vunpack.c.h.b16 %v371
        %v2516 = vunpack.c.l.b16 %v372
        %v2517 = vunpack.c.h.b16 %v372
        %v2518 = vunpack.c.l.b16 %v373
        %v2519 = vunpack.c.h.b16 %v373
        %v2520 = vunpack.c.l.b16 %v374
        %v2521 = vunpack.c.h.b16 %v374
        %v2522 = vunpack.c.l.b16 %v375
        %v2523 = vunpack.c.h.b16 %v375
        %v2524 = vunpack.c.l.b16 %v376
        %v2525 = vunpack.c.h.b16 %v376
        %v2526 = vunpack.c.l.b16 %v377
        %v2527 = vunpack.c.h.b16 %v377
        %v2528 = vunpack.c.l.b16 %v378
        %v2529 = vunpack.c.h.b16 %v378
        %v2530 = vunpack.c.l.b16 %v379
        %v2531 = vunpack.c.h.b16 %v379
        %v2532 = vunpack.c.l.b16 %v380
        %v2533 = vunpack.c.h.b16 %v380
        %v2534 = vunpack.c.l.b16 %v381
        %v2535 = vunpack.c.h.b16 %v381
        %v2536 = vunpack.c.l.b16 %v382
        %v2537 = vunpack.c.h.b16 %v382
        %v2538 = vunpack.c.l.b16 %v383
        %v2539 = vunpack.c.h.b16 %v383
        %v2540 = vunpack.c.l.b16 %v384
        %v2541 = vunpack.c.h.b16 %v384
        %v2542 = vunpack.c.l.b16 %v385
        %v2543 = vunpack.c.h.b16 %v385
        %v2544 = vunpack.c.l.b16 %v386
        %v2545 = vunpack.c.h.b16 %v386
        %v2546 = vunpack.c.l.b16 %v387
        %v2547 = vunpack.c.h.b16 %v387
        %v2548 = vunpack.c.l.b16 %v388
        %v2549 = vunpack.c.h.b16 %v388
        %v2550 = vunpack.c.l.b16 %v389
        %v2551 = vunpack.c.h.b16 %v389
        %v2552 = vunpack.c.l.b16 %v390
        %v2553 = vunpack.c.h.b16 %v390
        %v2554 = vunpack.c.l.b16 %v391
        %v2555 = vunpack.c.h.b16 %v391
        %v2556 = vunpack.c.l.b16 %v392
        %v2557 = vunpack.c.h.b16 %v392
        %v2558 = vunpack.c.l.b16 %v393
        %v2559 = vunpack.c.h.b16 %v393
        %v2560 = vunpack.c.l.b16 %v394
        %v2561 = vunpack.c.h.b16 %v394
        %v2562 = vunpack.c.l.b16 %v395
        %v2563 = vunpack.c.h.b16 %v395
        %v2564 = vunpack.c.l.b16 %v396
        %v2565 = vunpack.c.h.b16 %v396
        %v2566 = vunpack.c.l.b16 %v397
        %v2567 = vunpack.c.h.b16 %v397
        %v2568 = vunpack.c.l.b16 %v398
        %v2569 = vunpack.c.h.b16 %v398
        %v2570 = vunpack.c.l.b16 %v399
        %v2571 = vunpack.c.h.b16 %v399
        %v2572 = vunpack.c.l.b16 %v400
        %v2573 = vunpack.c.h.b16 %v400
        %v2574 = vunpack.c.l.b16 %v401
        %v2575 = vunpack.c.h.b16 %v401
        %v2576 = vunpack.c.l.b16 %v402
        %v2577 = vunpack.c.h.b16 %v402
        %v2578 = vunpack.c.l.b16 %v403
        %v2579 = vunpack.c.h.b16 %v403
        %v2580 = vunpack.c.l.b16 %v404
        %v2581 = vunpack.c.h.b16 %v404
        %v2582 = vunpack.c.l.b16 %v405
        %v2583 = vunpack.c.h.b16 %v405
        %v2584 = vunpack.c.l.b16 %v406
        %v2585 = vunpack.c.h.b16 %v406
        %v2586 = vunpack.c.l.b16 %v407
        %v2587 = vunpack.c.h.b16 %v407
        %v2588 = vunpack.c.l.b16 %v408
        %v2589 = vunpack.c.h.b16 %v408
        %v2590 = vunpack.c.l.b16 %v409
        %v2591 = vunpack.c.h.b16 %v409
        %v2592 = vunpack.c.l.b16 %v410
        %v2593 = vunpack.c.h.b16 %v410
        %v2594 = vunpack.c.l.b16 %v411
        %v2595 = vunpack.c.h.b16 %v411
        %v2596 = vunpack.c.l.b16 %v412
        %v2597 = vunpack.c.h.b16 %v412
        %v2598 = vunpack.c.l.b16 %v413
        %v2599 = vunpack.c.h.b16 %v413
        %v2600 = vunpack.c.l.b16 %v414
        %v2601 = vunpack.c.h.b16 %v414
        %v2602 = vunpack.c.l.b16 %v415
        %v2603 = vunpack.c.h.b16 %v415
        %v2604 = vunpack.c.l.b16 %v416
        %v2605 = vunpack.c.h.b16 %v416
        %v2606 = vunpack.c.l.b16 %v417
        %v2607 = vunpack.c.h.b16 %v417
        %v2608 = vunpack.c.l.b16 %v418
        %v2609 = vunpack.c.h.b16 %v418
        %v2610 = vunpack.c.l.b16 %v419
        %v2611 = vunpack.c.h.b16 %v419
        %v2612 = vunpack.c.l.b16 %v420
        %v2613 = vunpack.c.h.b16 %v420
        %v2614 = vunpack.c.l.b16 %v421
        %v2615 = vunpack.c.h.b16 %v421
        %v2616 = vunpack.c.l.b16 %v422
        %v2617 = vunpack.c.h.b16 %v422
        %v2618 = vunpack.c.l.b16 %v423
        %v2619 = vunpack.c.h.b16 %v423
        %v2620 = vunpack.c.l.b16 %v424
        %v2621 = vunpack.c.h.b16 %v424
        %v2622 = vunpack.c.l.b16 %v425
        %v2623 = vunpack.c.h.b16 %v425
        %v2624 = vunpack.c.l.b16 %v426
        %v2625 = vunpack.c.h.b16 %v426
        %v2626 = vunpack.c.l.b16 %v427
        %v2627 = vunpack.c.h.b16 %v427
        %v2628 = vunpack.c.l.b16 %v428
        %v2629 = vunpack.c.h.b16 %v428
        %v2630 = vunpack.c.l.b16 %v429
        %v2631 = vunpack.c.h.b16 %v429
        %v2632 = vunpack.c.l.b16 %v430
        %v2633 = vunpack.c.h.b16 %v430
        %v2634 = vunpack.c.l.b16 %v431
        %v2635 = vunpack.c.h.b16 %v431
        %v2636 = vunpack.c.l.b16 %v432
        %v2637 = vunpack.c.h.b16 %v432
        %v2638 = vunpack.c.l.b16 %v433
        %v2639 = vunpack.c.h.b16 %v433
        %v2640 = vunpack.c.l.b16 %v434
        %v2641 = vunpack.c.h.b16 %v434
        %v2642 = vunpack.c.l.b16 %v435
        %v2643 = vunpack.c.h.b16 %v435
        %v2644 = vunpack.c.l.b16 %v436
        %v2645 = vunpack.c.h.b16 %v436
        %v2646 = vunpack.c.l.b16 %v437
        %v2647 = vunpack.c.h.b16 %v437
        %v2648 = vunpack.c.l.b16 %v438
        %v2649 = vunpack.c.h.b16 %v438
        %v2650 = vunpack.c.l.b16 %v439
        %v2651 = vunpack.c.h.b16 %v439
        %v2652 = vunpack.c.l.b16 %v440
        %v2653 = vunpack.c.h.b16 %v440
        %v2654 = vunpack.c.l.b16 %v441
        %v2655 = vunpack.c.h.b16 %v441
        %v2656 = vunpack.c.l.b16 %v442
        %v2657 = vunpack.c.h.b16 %v442
        %v2658 = vunpack.c.l.b16 %v443
        %v2659 = vunpack.c.h.b16 %v443
        %v2660 = vunpack.c.l.b16 %v444
        %v2661 = vunpack.c.h.b16 %v444
        %v2662 = vunpack.c.l.b16 %v445
        %v2663 = vunpack.c.h.b16 %v445
        %v2664 = vunpack.c.l.b16 %v446
        %v2665 = vunpack.c.h.b16 %v446
        %v2666 = vunpack.c.l.b16 %v447
        %v2667 = vunpack.c.h.b16 %v447
        %v2668 = vunpack.c.l.b16 %v448
        %v2669 = vunpack.c.h.b16 %v448
        %v2670 = vunpack.c.l.b16 %v449
        %v2671 = vunpack.c.h.b16 %v449
        %v2672 = vunpack.c.l.b16 %v450
        %v2673 = vunpack.c.h.b16 %v450
        %v2674 = vunpack.c.l.b16 %v451
        %v2675 = vunpack.c.h.b16 %v451
        %v2676 = vunpack.c.l.b16 %v452
        %v2677 = vunpack.c.h.b16 %v452
        %v2678 = vunpack.c.l.b16 %v453
        %v2679 = vunpack.c.h.b16 %v453
        %v2680 = vunpack.c.l.b16 %v454
        %v2681 = vunpack.c.h.b16 %v454
        %v2682 = vunpack.c.l.b16 %v455
        %v2683 = vunpack.c.h.b16 %v455
        %v2684 = vunpack.c.l.b16 %v456
        %v2685 = vunpack.c.h.b16 %v456
        %v2686 = vunpack.c.l.b16 %v457
        %v2687 = vunpack.c.h.b16 %v457
        %v2688 = vunpack.c.l.b16 %v458
        %v2689 = vunpack.c.h.b16 %v458
        %v2690 = vunpack.c.l.b16 %v459
        %v2691 = vunpack.c.h.b16 %v459
        %v2692 = vunpack.c.l.b16 %v460
        %v2693 = vunpack.c.h.b16 %v460
        %v2694 = vunpack.c.l.b16 %v461
        %v2695 = vunpack.c.h.b16 %v461
        %v2696 = vunpack.c.l.b16 %v462
        %v2697 = vunpack.c.h.b16 %v462
        %v2698 = vunpack.c.l.b16 %v463
        %v2699 = vunpack.c.h.b16 %v463
        %v2700 = vunpack.c.l.b16 %v464
        %v2701 = vunpack.c.h.b16 %v464
        %v2702 = vunpack.c.l.b16 %v465
        %v2703 = vunpack.c.h.b16 %v465
        %v2704 = vunpack.c.l.b16 %v466
        %v2705 = vunpack.c.h.b16 %v466
        %v2706 = vunpack.c.l.b16 %v467
        %v2707 = vunpack.c.h.b16 %v467
        %v2708 = vunpack.c.l.b16 %v468
        %v2709 = vunpack.c.h.b16 %v468
        %v2710 = vunpack.c.l.b16 %v469
        %v2711 = vunpack.c.h.b16 %v469
        %v2712 = vunpack.c.l.b16 %v470
        %v2713 = vunpack.c.h.b16 %v470
        %v2714 = vunpack.c.l.b16 %v471
        %v2715 = vunpack.c.h.b16 %v471
        %v2716 = vunpack.c.l.b16 %v472
        %v2717 = vunpack.c.h.b16 %v472
        %v2718 = vunpack.c.l.b16 %v473
        %v2719 = vunpack.c.h.b16 %v473
        %v2720 = vunpack.c.l.b16 %v474
        %v2721 = vunpack.c.h.b16 %v474
        %v2722 = vunpack.c.l.b16 %v475
        %v2723 = vunpack.c.h.b16 %v475
        %v2724 = vunpack.c.l.b16 %v476
        %v2725 = vunpack.c.h.b16 %v476
        %v2726 = vunpack.c.l.b16 %v477
        %v2727 = vunpack.c.h.b16 %v477
        %v2728 = vunpack.c.l.b16 %v478
        %v2729 = vunpack.c.h.b16 %v478
        %v2730 = vunpack.c.l.b16 %v479
        %v2731 = vunpack.c.h.b16 %v479
        %v2732 = vunpack.c.l.b16 %v480
        %v2733 = vunpack.c.h.b16 %v480
        %v2734 = vunpack.c.l.b16 %v481
        %v2735 = vunpack.c.h.b16 %v481
        %v2736 = vunpack.c.l.b16 %v482
        %v2737 = vunpack.c.h.b16 %v482
        %v2738 = vunpack.c.l.b16 %v483
        %v2739 = vunpack.c.h.b16 %v483
        %v2740 = vunpack.c.l.b16 %v484
        %v2741 = vunpack.c.h.b16 %v484
        %v2742 = vunpack.c.l.b16 %v485
        %v2743 = vunpack.c.h.b16 %v485
        %v2744 = vunpack.c.l.b16 %v486
        %v2745 = vunpack.c.h.b16 %v486
        %v2746 = vunpack.c.l.b16 %v487
        %v2747 = vunpack.c.h.b16 %v487
        %v2748 = vunpack.c.l.b16 %v488
        %v2749 = vunpack.c.h.b16 %v488
        %v2750 = vunpack.c.l.b16 %v489
        %v2751 = vunpack.c.h.b16 %v489
        %v2752 = vunpack.c.l.b16 %v490
        %v2753 = vunpack.c.h.b16 %v490
        %v2754 = vunpack.c.l.b16 %v491
        %v2755 = vunpack.c.h.b16 %v491
        %v2756 = vunpack.c.l.b16 %v492
        %v2757 = vunpack.c.h.b16 %v492
        %v2758 = vunpack.c.l.b16 %v493
        %v2759 = vunpack.c.h.b16 %v493
        %v2760 = vunpack.c.l.b16 %v494
        %v2761 = vunpack.c.h.b16 %v494
        %v2762 = vunpack.c.l.b16 %v495
        %v2763 = vunpack.c.h.b16 %v495
        %v2764 = vunpack.c.l.b16 %v496
        %v2765 = vunpack.c.h.b16 %v496
        %v2766 = vunpack.c.l.b16 %v497
        %v2767 = vunpack.c.h.b16 %v497
        %v2768 = vunpack.c.l.b16 %v498
        %v2769 = vunpack.c.h.b16 %v498
        %v2770 = vunpack.c.l.b16 %v499
        %v2771 = vunpack.c.h.b16 %v499
        %v2772 = vunpack.c.l.b16 %v500
        %v2773 = vunpack.c.h.b16 %v500
        %v2774 = vunpack.c.l.b16 %v501
        %v2775 = vunpack.c.h.b16 %v501
        %v2776 = vunpack.c.l.b16 %v502
        %v2777 = vunpack.c.h.b16 %v502
        %v2778 = vunpack.c.l.b16 %v503
        %v2779 = vunpack.c.h.b16 %v503
        %v2780 = vunpack.c.l.b16 %v504
        %v2781 = vunpack.c.h.b16 %v504
        %v2782 = vunpack.c.l.b16 %v505
        %v2783 = vunpack.c.h.b16 %v505
        %v2784 = vunpack.c.l.b16 %v506
        %v2785 = vunpack.c.h.b16 %v506
        %v2786 = vunpack.c.l.b16 %v507
        %v2787 = vunpack.c.h.b16 %v507
        %v2788 = vunpack.c.l.b16 %v508
        %v2789 = vunpack.c.h.b16 %v508
        %v2790 = vunpack.c.l.b16 %v509
        %v2791 = vunpack.c.h.b16 %v509
        %v2792 = vunpack.c.l.b16 %v510
        %v2793 = vunpack.c.h.b16 %v510
        %v2794 = vunpack.c.l.b16 %v511
        %v2795 = vunpack.c.h.b16 %v511
        %v2796 = vunpack.c.l.b16 %v512
        %v2797 = vunpack.c.h.b16 %v512
        %v2798 = vunpack.c.l.b16 %v513
        %v2799 = vunpack.c.h.b16 %v513
        %v2800 = vunpack.c.l.b16 %v514
        %v2801 = vunpack.c.h.b16 %v514
        %v2802 = vunpack.c.l.b16 %v515
        %v2803 = vunpack.c.h.b16 %v515
        %v2804 = vunpack.c.l.b16 %v516
        %v2805 = vunpack.c.h.b16 %v516
        %v2806 = vunpack.c.l.b16 %v517
        %v2807 = vunpack.c.h.b16 %v517
        %v2808 = vunpack.c.l.b16 %v518
        %v2809 = vunpack.c.h.b16 %v518
        %v2810 = vunpack.c.l.b16 %v519
        %v2811 = vunpack.c.h.b16 %v519
        %v2812 = vunpack.c.l.b16 %v520
        %v2813 = vunpack.c.h.b16 %v520
        %v2814 = vunpack.c.l.b16 %v521
        %v2815 = vunpack.c.h.b16 %v521
        %v2816 = vunpack.c.l.b16 %v522
        %v2817 = vunpack.c.h.b16 %v522
        %v2818 = vunpack.c.l.b16 %v523
        %v2819 = vunpack.c.h.b16 %v523
        %v2820 = vunpack.c.l.b16 %v524
        %v2821 = vunpack.c.h.b16 %v524
        %v2822 = vunpack.c.l.b16 %v525
        %v2823 = vunpack.c.h.b16 %v525
        %v2824 = vunpack.c.l.b16 %v526
        %v2825 = vunpack.c.h.b16 %v526
        %v2826 = vunpack.c.l.b16 %v527
        %v2827 = vunpack.c.h.b16 %v527
        %v2828 = vunpack.c.l.b16 %v528
        %v2829 = vunpack.c.h.b16 %v528
        %v2830 = vunpack.c.l.b16 %v529
        %v2831 = vunpack.c.h.b16 %v529
        %v2832 = vunpack.c.l.b16 %v530
        %v2833 = vunpack.c.h.b16 %v530
        %v2834 = vunpack.c.l.b16 %v531
        %v2835 = vunpack.c.h.b16 %v531
        %v2836 = vunpack.c.l.b16 %v532
        %v2837 = vunpack.c.h.b16 %v532
        %v2838 = vunpack.c.l.b16 %v533
        %v2839 = vunpack.c.h.b16 %v533
        %v2840 = vunpack.c.l.b16 %v534
        %v2841 = vunpack.c.h.b16 %v534
        %v2842 = vunpack.c.l.b16 %v535
        %v2843 = vunpack.c.h.b16 %v535
        %v2844 = vunpack.c.l.b16 %v536
        %v2845 = vunpack.c.h.b16 %v536
        %v2846 = vunpack.c.l.b16 %v537
        %v2847 = vunpack.c.h.b16 %v537
        %v2848 = vunpack.c.l.b16 %v538
        %v2849 = vunpack.c.h.b16 %v538
        %v2850 = vunpack.c.l.b16 %v539
        %v2851 = vunpack.c.h.b16 %v539
        %v2852 = vunpack.c.l.b16 %v540
        %v2853 = vunpack.c.h.b16 %v540
        %v2854 = vunpack.c.l.b16 %v541
        %v2855 = vunpack.c.h.b16 %v541
        %v2856 = vunpack.c.l.b16 %v542
        %v2857 = vunpack.c.h.b16 %v542
        %v2858 = vunpack.c.l.b16 %v543
        %v2859 = vunpack.c.h.b16 %v543
        %v2860 = vunpack.c.l.b16 %v544
        %v2861 = vunpack.c.h.b16 %v544
        %v2862 = vunpack.c.l.b16 %v545
        %v2863 = vunpack.c.h.b16 %v545
        %v2864 = vunpack.c.l.b16 %v546
        %v2865 = vunpack.c.h.b16 %v546
        %v2866 = vunpack.c.l.b16 %v547
        %v2867 = vunpack.c.h.b16 %v547
        %v2868 = vunpack.c.l.b16 %v548
        %v2869 = vunpack.c.h.b16 %v548
        %v2870 = vunpack.c.l.b16 %v549
        %v2871 = vunpack.c.h.b16 %v549
        %v2872 = vunpack.c.l.b16 %v550
        %v2873 = vunpack.c.h.b16 %v550
        %v2874 = vunpack.c.l.b16 %v551
        %v2875 = vunpack.c.h.b16 %v551
        %v2876 = vunpack.c.l.b16 %v552
        %v2877 = vunpack.c.h.b16 %v552
        %v2878 = vunpack.c.l.b16 %v553
        %v2879 = vunpack.c.h.b16 %v553
        %v2880 = vunpack.c.l.b16 %v554
        %v2881 = vunpack.c.h.b16 %v554
        %v2882 = vunpack.c.l.b16 %v555
        %v2883 = vunpack.c.h.b16 %v555
        %v2884 = vunpack.c.l.b16 %v556
        %v2885 = vunpack.c.h.b16 %v556
        %v2886 = vunpack.c.l.b16 %v557
        %v2887 = vunpack.c.h.b16 %v557
        %v2888 = vunpack.c.l.b16 %v558
        %v2889 = vunpack.c.h.b16 %v558
        %v2890 = vunpack.c.l.b16 %v559
        %v2891 = vunpack.c.h.b16 %v559
        %v2892 = vunpack.c.l.b16 %v560
        %v2893 = vunpack.c.h.b16 %v560
        %v2894 = vunpack.c.l.b16 %v561
        %v2895 = vunpack.c.h.b16 %v561
        %v2896 = vunpack.c.l.b16 %v562
        %v2897 = vunpack.c.h.b16 %v562
        %v2898 = vunpack.c.l.b16 %v563
        %v2899 = vunpack.c.h.b16 %v563
        %v2900 = vunpack.c.l.b16 %v564
        %v2901 = vunpack.c.h.b16 %v564
        %v2902 = vunpack.c.l.b16 %v565
        %v2903 = vunpack.c.h.b16 %v565
        %v2904 = vunpack.c.l.b16 %v566
        %v2905 = vunpack.c.h.b16 %v566
        %v2906 = vunpack.c.l.b16 %v567
        %v2907 = vunpack.c.h.b16 %v567
        %v2908 = vunpack.c.l.b16 %v568
        %v2909 = vunpack.c.h.b16 %v568
        %v2910 = vunpack.c.l.b16 %v569
        %v2911 = vunpack.c.h.b16 %v569
        %v2912 = vunpack.c.l.b16 %v570
        %v2913 = vunpack.c.h.b16 %v570
        %v2914 = vunpack.c.l.b16 %v571
        %v2915 = vunpack.c.h.b16 %v571
        %v2916 = vunpack.c.l.b16 %v572
        %v2917 = vunpack.c.h.b16 %v572
        %v2918 = vunpack.c.l.b16 %v573
        %v2919 = vunpack.c.h.b16 %v573
        %v2920 = vunpack.c.l.b16 %v574
        %v2921 = vunpack.c.h.b16 %v574
        %v2922 = vunpack.c.l.b16 %v575
        %v2923 = vunpack.c.h.b16 %v575
        %v2924 = vunpack.c.l.b16 %v576
        %v2925 = vunpack.c.h.b16 %v576
        %v2926 = vunpack.c.l.b16 %v577
        %v2927 = vunpack.c.h.b16 %v577
        %v2928 = vunpack.c.l.b16 %v578
        %v2929 = vunpack.c.h.b16 %v578
        %v2930 = vunpack.c.l.b16 %v579
        %v2931 = vunpack.c.h.b16 %v579
        %v2932 = vunpack.c.l.b16 %v580
        %v2933 = vunpack.c.h.b16 %v580
        %v2934 = vunpack.c.l.b16 %v581
        %v2935 = vunpack.c.h.b16 %v581
        %v2936 = vunpack.c.l.b16 %v582
        %v2937 = vunpack.c.h.b16 %v582
        %v2938 = vunpack.c.l.b16 %v583
        %v2939 = vunpack.c.h.b16 %v583
        %v2940 = vunpack.c.l.b16 %v584
        %v2941 = vunpack.c.h.b16 %v584
        %v2942 = vunpack.c.l.b16 %v585
        %v2943 = vunpack.c.h.b16 %v585
        %v2944 = vunpack.c.l.b16 %v586
        %v2945 = vunpack.c.h.b16 %v586
        %v2946 = vunpack.c.l.b16 %v587
        %v2947 = vunpack.c.h.b16 %v587
        %v2948 = vunpack.c.l.b16 %v588
        %v2949 = vunpack.c.h.b16 %v588
        %v2950 = vunpack.c.l.b16 %v589
        %v2951 = vunpack.c.h.b16 %v589
        %v2952 = vunpack.c.l.b16 %v590
        %v2953 = vunpack.c.h.b16 %v590
        %v2954 = vunpack.c.l.b16 %v591
        %v2955 = vunpack.c.h.b16 %v591
        %v2956 = vunpack.c.l.b16 %v592
        %v2957 = vunpack.c.h.b16 %v592
        %v2958 = vunpack.c.l.b16 %v593
        %v2959 = vunpack.c.h.b16 %v593
        %v2960 = vunpack.c.l.b16 %v594
        %v2961 = vunpack.c.h.b16 %v594
        %v2962 = vunpack.c.l.b16 %v595
        %v2963 = vunpack.c.h.b16 %v595
        %v2964 = vunpack.c.l.b16 %v596
        %v2965 = vunpack.c.h.b16 %v596
        %v2966 = vunpack.c.l.b16 %v597
        %v2967 = vunpack.c.h.b16 %v597
        %v2968 = vunpack.c.l.b16 %v598
        %v2969 = vunpack.c.h.b16 %v598
        %v2970 = vunpack.c.l.b16 %v599
        %v2971 = vunpack.c.h.b16 %v599
        %v2972 = vunpack.c.l.b16 %v600
        %v2973 = vunpack.c.h.b16 %v600
        %v2974 = vunpack.c.l.b16 %v601
        %v2975 = vunpack.c.h.b16 %v601
        %v2976 = vunpack.c.l.b16 %v602
        %v2977 = vunpack.c.h.b16 %v602
        %v2978 = vunpack.c.l.b16 %v603
        %v2979 = vunpack.c.h.b16 %v603
        %v2980 = vunpack.c.l.b16 %v604
        %v2981 = vunpack.c.h.b16 %v604
        %v2982 = vunpack.c.l.b16 %v605
        %v2983 = vunpack.c.h.b16 %v605
        %v2984 = vunpack.c.l.b16 %v606
        %v2985 = vunpack.c.h.b16 %v606
        %v2986 = vunpack.c.l.b16 %v607
        %v2987 = vunpack.c.h.b16 %v607
        %v2988 = vunpack.c.l.b16 %v608
        %v2989 = vunpack.c.h.b16 %v608
        %v2990 = vunpack.c.l.b16 %v609
        %v2991 = vunpack.c.h.b16 %v609
        %v2992 = vunpack.c.l.b16 %v610
        %v2993 = vunpack.c.h.b16 %v610
        %v2994 = vunpack.c.l.b16 %v611
        %v2995 = vunpack.c.h.b16 %v611
        %v2996 = vunpack.c.l.b16 %v612
        %v2997 = vunpack.c.h.b16 %v612
        %v2998 = vunpack.c.l.b16 %v613
        %v2999 = vunpack.c.h.b16 %v613
        %v3000 = vunpack.c.l.b16 %v614
        %v3001 = vunpack.c.h.b16 %v614
        %v3002 = vunpack.c.l.b16 %v615
        %v3003 = vunpack.c.h.b16 %v615
        %v3004 = vunpack.c.l.b16 %v616
        %v3005 = vunpack.c.h.b16 %v616
        %v3006 = vunpack.c.l.b16 %v617
        %v3007 = vunpack.c.h.b16 %v617
        %v3008 = vunpack.c.l.b16 %v618
        %v3009 = vunpack.c.h.b16 %v618
        %v3010 = vunpack.c.l.b16 %v619
        %v3011 = vunpack.c.h.b16 %v619
        %v3012 = vunpack.c.l.b16 %v620
        %v3013 = vunpack.c.h.b16 %v620
        %v3014 = vunpack.c.l.b16 %v621
        %v3015 = vunpack.c.h.b16 %v621
        %v3016 = vunpack.c.l.b16 %v622
        %v3017 = vunpack.c.h.b16 %v622
        %v3018 = vunpack.c.l.b16 %v623
        %v3019 = vunpack.c.h.b16 %v623
        %v3020 = vunpack.c.l.b16 %v624
        %v3021 = vunpack.c.h.b16 %v624
        %v3022 = vunpack.c.l.b16 %v625
        %v3023 = vunpack.c.h.b16 %v625
        %v3024 = vunpack.c.l.b16 %v626
        %v3025 = vunpack.c.h.b16 %v626
        %v3026 = vunpack.c.l.b16 %v627
        %v3027 = vunpack.c.h.b16 %v627
        %v3028 = vunpack.c.l.b16 %v628
        %v3029 = vunpack.c.h.b16 %v628
        %v3030 = vunpack.c.l.b16 %v629
        %v3031 = vunpack.c.h.b16 %v629
        %v3032 = vunpack.c.l.b16 %v630
        %v3033 = vunpack.c.h.b16 %v630
        %v3034 = vunpack.c.l.b16 %v631
        %v3035 = vunpack.c.h.b16 %v631
        %v3036 = vunpack.c.l.b16 %v632
        %v3037 = vunpack.c.h.b16 %v632
        %v3038 = vunpack.c.l.b16 %v633
        %v3039 = vunpack.c.h.b16 %v633
        %v3040 = vunpack.c.l.b16 %v634
        %v3041 = vunpack.c.h.b16 %v634
        %v3042 = vunpack.c.l.b16 %v635
        %v3043 = vunpack.c.h.b16 %v635
        %v3044 = vunpack.c.l.b16 %v636
        %v3045 = vunpack.c.h.b16 %v636
        %v3046 = vunpack.c.l.b16 %v637
        %v3047 = vunpack.c.h.b16 %v637
        %v3048 = vunpack.c.l.b16 %v638
        %v3049 = vunpack.c.h.b16 %v638
        %v3050 = vunpack.c.l.b16 %v639
        %v3051 = vunpack.c.h.b16 %v639
        %v3052 = vunpack.c.l.b16 %v640
        %v3053 = vunpack.c.h.b16 %v640
        %v3054 = vunpack.c.l.b16 %v641
        %v3055 = vunpack.c.h.b16 %v641
        %v3056 = vunpack.c.l.b16 %v642
        %v3057 = vunpack.c.h.b16 %v642
        %v3058 = vunpack.c.l.b16 %v643
        %v3059 = vunpack.c.h.b16 %v643
        %v3060 = vunpack.c.l.b16 %v644
        %v3061 = vunpack.c.h.b16 %v644
        %v3062 = vunpack.c.l.b16 %v645
        %v3063 = vunpack.c.h.b16 %v645
        %v3064 = vunpack.c.l.b16 %v646
        %v3065 = vunpack.c.h.b16 %v646
        %v3066 = vunpack.c.l.b16 %v647
        %v3067 = vunpack.c.h.b16 %v647
        %v3068 = vunpack.c.l.b16 %v648
        %v3069 = vunpack.c.h.b16 %v648
        %v3070 = vunpack.c.l.b16 %v649
        %v3071 = vunpack.c.h.b16 %v649
        %v3072 = vunpack.c.l.b16 %v650
        %v3073 = vunpack.c.h.b16 %v650
        %v3074 = vunpack.c.l.b16 %v651
        %v3075 = vunpack.c.h.b16 %v651
        %v3076 = vunpack.c.l.b16 %v652
        %v3077 = vunpack.c.h.b16 %v652
        %v3078 = vunpack.c.l.b16 %v653
        %v3079 = vunpack.c.h.b16 %v653
        %v3080 = vunpack.c.l.b16 %v654
        %v3081 = vunpack.c.h.b16 %v654
        %v3082 = vunpack.c.l.b16 %v655
        %v3083 = vunpack.c.h.b16 %v655
        %v3084 = vunpack.c.l.b16 %v656
        %v3085 = vunpack.c.h.b16 %v656
        %v3086 = vunpack.c.l.b16 %v657
        %v3087 = vunpack.c.h.b16 %v657
        %v3088 = vunpack.c.l.b16 %v658
        %v3089 = vunpack.c.h.b16 %v658
        %v3090 = vunpack.c.l.b16 %v659
        %v3091 = vunpack.c.h.b16 %v659
        %v3092 = vunpack.c.l.b16 %v660
        %v3093 = vunpack.c.h.b16 %v660
        %v3094 = vunpack.c.l.b16 %v661
        %v3095 = vunpack.c.h.b16 %v661
        %v3096 = vunpack.c.l.b16 %v662
        %v3097 = vunpack.c.h.b16 %v662
        %v3098 = vunpack.c.l.b16 %v663
        %v3099 = vunpack.c.h.b16 %v663
        %v3100 = vunpack.c.l.b16 %v664
        %v3101 = vunpack.c.h.b16 %v664
        %v3102 = vunpack.c.l.b16 %v665
        %v3103 = vunpack.c.h.b16 %v665
        %v3104 = vunpack.c.l.b16 %v666
        %v3105 = vunpack.c.h.b16 %v666
        %v3106 = vunpack.c.l.b16 %v667
        %v3107 = vunpack.c.h.b16 %v667
        %v3108 = vunpack.c.l.b16 %v668
        %v3109 = vunpack.c.h.b16 %v668
        %v3110 = vunpack.c.l.b16 %v669
        %v3111 = vunpack.c.h.b16 %v669
        %v3112 = vunpack.c.l.b16 %v670
        %v3113 = vunpack.c.h.b16 %v670
        %v3114 = vunpack.c.l.b16 %v671
        %v3115 = vunpack.c.h.b16 %v671
        %v3116 = vunpack.c.l.b16 %v672
        %v3117 = vunpack.c.h.b16 %v672
        %v3118 = vunpack.c.l.b16 %v673
        %v3119 = vunpack.c.h.b16 %v673
        %v3120 = vunpack.c.l.b16 %v674
        %v3121 = vunpack.c.h.b16 %v674
        %v3122 = vunpack.c.l.b16 %v675
        %v3123 = vunpack.c.h.b16 %v675
        %v3124 = vunpack.c.l.b16 %v676
        %v3125 = vunpack.c.h.b16 %v676
        %v3126 = vunpack.c.l.b16 %v677
        %v3127 = vunpack.c.h.b16 %v677
        %v3128 = vunpack.c.l.b16 %v678
        %v3129 = vunpack.c.h.b16 %v678
        %v3130 = vunpack.c.l.b16 %v679
        %v3131 = vunpack.c.h.b16 %v679
        %v3132 = vunpack.c.l.b16 %v680
        %v3133 = vunpack.c.h.b16 %v680
        %v3134 = vunpack.c.l.b16 %v681
        %v3135 = vunpack.c.h.b16 %v681
        %v3136 = vunpack.c.l.b16 %v682
        %v3137 = vunpack.c.h.b16 %v682
        %v3138 = vunpack.c.l.b16 %v683
        %v3139 = vunpack.c.h.b16 %v683
        %v3140 = vunpack.c.l.b16 %v684
        %v3141 = vunpack.c.h.b16 %v684
        %v3142 = vunpack.c.l.b16 %v685
        %v3143 = vunpack.c.h.b16 %v685
        %v3144 = vunpack.c.l.b16 %v686
        %v3145 = vunpack.c.h.b16 %v686
        %v3146 = vunpack.c.l.b16 %v687
        %v3147 = vunpack.c.h.b16 %v687
        %v3148 = vunpack.c.l.b16 %v688
        %v3149 = vunpack.c.h.b16 %v688
        %v3150 = vunpack.c.l.b16 %v689
        %v3151 = vunpack.c.h.b16 %v689
        %v3152 = vunpack.c.l.b16 %v690
        %v3153 = vunpack.c.h.b16 %v690
        %v3154 = vunpack.c.l.b16 %v691
        %v3155 = vunpack.c.h.b16 %v691
        %v3156 = vunpack.c.l.b16 %v692
        %v3157 = vunpack.c.h.b16 %v692
        %v3158 = vunpack.c.l.b16 %v693
        %v3159 = vunpack.c.h.b16 %v693
        %v3160 = vunpack.c.l.b16 %v694
        %v3161 = vunpack.c.h.b16 %v694
        %v3162 = vunpack.c.l.b16 %v695
        %v3163 = vunpack.c.h.b16 %v695
        %v3164 = vunpack.c.l.b16 %v696
        %v3165 = vunpack.c.h.b16 %v696
        %v3166 = vunpack.c.l.b16 %v697
        %v3167 = vunpack.c.h.b16 %v697
        %v3168 = vunpack.c.l.b16 %v698
        %v3169 = vunpack.c.h.b16 %v698
        %v3170 = vunpack.c.l.b16 %v699
        %v3171 = vunpack.c.h.b16 %v699
        %v3172 = vunpack.c.l.b16 %v700
        %v3173 = vunpack.c.h.b16 %v700
        %v3174 = vunpack.c.l.b16 %v701
        %v3175 = vunpack.c.h.b16 %v701
        %v3176 = vunpack.c.l.b16 %v702
        %v3177 = vunpack.c.h.b16 %v702
        %v3178 = vunpack.c.l.b16 %v703
        %v3179 = vunpack.c.h.b16 %v703
        %v3180 = vunpack.c.l.b16 %v704
        %v3181 = vunpack.c.h.b16 %v704
        %v3182 = vunpack.c.l.b16 %v705
        %v3183 = vunpack.c.h.b16 %v705
        %v3184 = vunpack.c.l.b16 %v706
        %v3185 = vunpack.c.h.b16 %v706
        %v3186 = vunpack.c.l.b16 %v707
        %v3187 = vunpack.c.h.b16 %v707
        %v3188 = vunpack.c.l.b16 %v708
        %v3189 = vunpack.c.h.b16 %v708
        %v3190 = vunpack.c.l.b16 %v709
        %v3191 = vunpack.c.h.b16 %v709
        %v3192 = vunpack.c.l.b16 %v710
        %v3193 = vunpack.c.h.b16 %v710
        %v3194 = vunpack.c.l.b16 %v711
        %v3195 = vunpack.c.h.b16 %v711
        %v3196 = vunpack.c.l.b16 %v712
        %v3197 = vunpack.c.h.b16 %v712
        %v3198 = vunpack.c.l.b16 %v713
        %v3199 = vunpack.c.h.b16 %v713
        %v3200 = vunpack.c.l.b16 %v714
        %v3201 = vunpack.c.h.b16 %v714
        %v3202 = vunpack.c.l.b16 %v715
        %v3203 = vunpack.c.h.b16 %v715
        %v3204 = vunpack.c.l.b16 %v716
        %v3205 = vunpack.c.h.b16 %v716
        %v3206 = vunpack.c.l.b16 %v717
        %v3207 = vunpack.c.h.b16 %v717
        %v3208 = vunpack.c.l.b16 %v718
        %v3209 = vunpack.c.h.b16 %v718
        %v3210 = vunpack.c.l.b16 %v719
        %v3211 = vunpack.c.h.b16 %v719
        %v3212 = vunpack.c.l.b16 %v720
        %v3213 = vunpack.c.h.b16 %v720
        %v3214 = vunpack.c.l.b16 %v721
        %v3215 = vunpack.c.h.b16 %v721
        %v3216 = vunpack.c.l.b16 %v722
        %v3217 = vunpack.c.h.b16 %v722
        %v3218 = vunpack.c.l.b16 %v723
        %v3219 = vunpack.c.h.b16 %v723
        %v3220 = vunpack.c.l.b16 %v724
        %v3221 = vunpack.c.h.b16 %v724
        %v3222 = vunpack.c.l.b16 %v725
        %v3223 = vunpack.c.h.b16 %v725
        %v3224 = vunpack.c.l.b16 %v726
        %v3225 = vunpack.c.h.b16 %v726
        %v3226 = vunpack.c.l.b16 %v727
        %v3227 = vunpack.c.h.b16 %v727
        %v3228 = vunpack.c.l.b16 %v728
        %v3229 = vunpack.c.h.b16 %v728
        %v3230 = vunpack.c.l.b16 %v729
        %v3231 = vunpack.c.h.b16 %v729
        %v3232 = vunpack.c.l.b16 %v730
        %v3233 = vunpack.c.h.b16 %v730
        %v3234 = vunpack.c.l.b16 %v731
        %v3235 = vunpack.c.h.b16 %v731
        %v3236 = vunpack.c.l.b16 %v732
        %v3237 = vunpack.c.h.b16 %v732
        %v3238 = vunpack.c.l.b16 %v733
        %v3239 = vunpack.c.h.b16 %v733
        %v3240 = vunpack.c.l.b16 %v734
        %v3241 = vunpack.c.h.b16 %v734
        %v3242 = vunpack.c.l.b16 %v735
        %v3243 = vunpack.c.h.b16 %v735
        %v3244 = vunpack.c.l.b16 %v736
        %v3245 = vunpack.c.h.b16 %v736
        %v3246 = vunpack.c.l.b16 %v737
        %v3247 = vunpack.c.h.b16 %v737
        %v3248 = vunpack.c.l.b16 %v738
        %v3249 = vunpack.c.h.b16 %v738
        %v3250 = vunpack.c.l.b16 %v739
        %v3251 = vunpack.c.h.b16 %v739
        %v3252 = vunpack.c.l.b16 %v740
        %v3253 = vunpack.c.h.b16 %v740
        %v3254 = vunpack.c.l.b16 %v741
        %v3255 = vunpack.c.h.b16 %v741
        %v3256 = vunpack.c.l.b16 %v742
        %v3257 = vunpack.c.h.b16 %v742
        %v3258 = vunpack.c.l.b16 %v743
        %v3259 = vunpack.c.h.b16 %v743
        %v3260 = vunpack.c.l.b16 %v744
        %v3261 = vunpack.c.h.b16 %v744
        %v3262 = vunpack.c.l.b16 %v745
        %v3263 = vunpack.c.h.b16 %v745
        %v3264 = vunpack.c.l.b16 %v746
        %v3265 = vunpack.c.h.b16 %v746
        %v3266 = vunpack.c.l.b16 %v747
        %v3267 = vunpack.c.h.b16 %v747
        %v3268 = vunpack.c.l.b16 %v748
        %v3269 = vunpack.c.h.b16 %v748
        %v3270 = vunpack.c.l.b16 %v749
        %v3271 = vunpack.c.h.b16 %v749
        %v3272 = vunpack.c.l.b16 %v750
        %v3273 = vunpack.c.h.b16 %v750
        %v3274 = vunpack.c.l.b16 %v751
        %v3275 = vunpack.c.h.b16 %v751
        %v3276 = vunpack.c.l.b16 %v752
        %v3277 = vunpack.c.h.b16 %v752
        %v3278 = vunpack.c.l.b16 %v753
        %v3279 = vunpack.c.h.b16 %v753
        %v3280 = vunpack.c.l.b16 %v754
        %v3281 = vunpack.c.h.b16 %v754
        %v3282 = vunpack.c.l.b16 %v755
        %v3283 = vunpack.c.h.b16 %v755
        %v3284 = vunpack.c.l.b16 %v756
        %v3285 = vunpack.c.h.b16 %v756
        %v3286 = vunpack.c.l.b16 %v757
        %v3287 = vunpack.c.h.b16 %v757
        %v3288 = vunpack.c.l.b16 %v758
        %v3289 = vunpack.c.h.b16 %v758
        %v3290 = vunpack.c.l.b16 %v759
        %v3291 = vunpack.c.h.b16 %v759
        %v3292 = vunpack.c.l.b16 %v760
        %v3293 = vunpack.c.h.b16 %v760
        %v3294 = vunpack.c.l.b16 %v761
        %v3295 = vunpack.c.h.b16 %v761
        %v3296 = vunpack.c.l.b16 %v762
        %v3297 = vunpack.c.h.b16 %v762
        %v3298 = vunpack.c.l.b16 %v763
        %v3299 = vunpack.c.h.b16 %v763
        %v3300 = vunpack.c.l.b16 %v764
        %v3301 = vunpack.c.h.b16 %v764
        %v3302 = vunpack.c.l.b16 %v765
        %v3303 = vunpack.c.h.b16 %v765
        %v3304 = vunpack.c.l.b16 %v766
        %v3305 = vunpack.c.h.b16 %v766
        %v3306 = vunpack.c.l.b16 %v767
        %v3307 = vunpack.c.h.b16 %v767
        %v3308 = vunpack.c.l.b16 %v768
        %v3309 = vunpack.c.h.b16 %v768
        %v3310 = vunpack.c.l.b16 %v769
        %v3311 = vunpack.c.h.b16 %v769
        %v3312 = vunpack.c.l.b16 %v770
        %v3313 = vunpack.c.h.b16 %v770
        %v3314 = vunpack.c.l.b16 %v771
        %v3315 = vunpack.c.h.b16 %v771
        %v3316 = vunpack.c.l.b16 %v772
        %v3317 = vunpack.c.h.b16 %v772
        %v3318 = vunpack.c.l.b16 %v773
        %v3319 = vunpack.c.h.b16 %v773
        %v3320 = vunpack.c.l.b16 %v774
        %v3321 = vunpack.c.h.b16 %v774
        %v3322 = vunpack.c.l.b16 %v775
        %v3323 = vunpack.c.h.b16 %v775
        %v3324 = vunpack.c.l.b16 %v776
        %v3325 = vunpack.c.h.b16 %v776
        %v3326 = vunpack.c.l.b16 %v777
        %v3327 = vunpack.c.h.b16 %v777
        %v3328 = vunpack.c.l.b16 %v778
        %v3329 = vunpack.c.h.b16 %v778
        %v3330 = vunpack.c.l.b16 %v779
        %v3331 = vunpack.c.h.b16 %v779
        %v3332 = vunpack.c.l.b16 %v780
        %v3333 = vunpack.c.h.b16 %v780
        %v3334 = vunpack.c.l.b16 %v781
        %v3335 = vunpack.c.h.b16 %v781
        %v3336 = vunpack.c.l.b16 %v782
        %v3337 = vunpack.c.h.b16 %v782
        %v3338 = vunpack.c.l.b16 %v783
        %v3339 = vunpack.c.h.b16 %v783
        %v3340 = vunpack.c.l.b16 %v784
        %v3341 = vunpack.c.h.b16 %v784
        %v3342 = vunpack.c.l.b16 %v785
        %v3343 = vunpack.c.h.b16 %v785
        %v3344 = vunpack.c.l.b16 %v786
        %v3345 = vunpack.c.h.b16 %v786
        %v3346 = vunpack.c.l.b16 %v787
        %v3347 = vunpack.c.h.b16 %v787
        %v3348 = vunpack.c.l.b16 %v788
        %v3349 = vunpack.c.h.b16 %v788
        %v3350 = vunpack.c.l.b16 %v789
        %v3351 = vunpack.c.h.b16 %v789
        %v3352 = vunpack.c.l.b16 %v790
        %v3353 = vunpack.c.h.b16 %v790
        %v3354 = vunpack.c.l.b16 %v791
        %v3355 = vunpack.c.h.b16 %v791
        %v3356 = vunpack.c.l.b16 %v792
        %v3357 = vunpack.c.h.b16 %v792
        %v3358 = vunpack.c.l.b16 %v793
        %v3359 = vunpack.c.h.b16 %v793
        %v3360 = vunpack.c.l.b16 %v794
        %v3361 = vunpack.c.h.b16 %v794
        %v3362 = vunpack.c.l.b16 %v795
        %v3363 = vunpack.c.h.b16 %v795
        %v3364 = vunpack.c.l.b16 %v796
        %v3365 = vunpack.c.h.b16 %v796
        %v3366 = vunpack.c.l.b16 %v797
        %v3367 = vunpack.c.h.b16 %v797
        %v3368 = vunpack.c.l.b16 %v798
        %v3369 = vunpack.c.h.b16 %v798
        %v3370 = vunpack.c.l.b16 %v799
        %v3371 = vunpack.c.h.b16 %v799
        %v3372 = vunpack.c.l.b16 %v800
        %v3373 = vunpack.c.h.b16 %v800
        %v3374 = vunpack.c.l.b16 %v801
        %v3375 = vunpack.c.h.b16 %v801
        %v3376 = vunpack.c.l.b16 %v802
        %v3377 = vunpack.c.h.b16 %v802
        %v3378 = vunpack.c.l.b16 %v803
        %v3379 = vunpack.c.h.b16 %v803
        %v3380 = vunpack.c.l.b16 %v804
        %v3381 = vunpack.c.h.b16 %v804
        %v3382 = vunpack.c.l.b16 %v805
        %v3383 = vunpack.c.h.b16 %v805
        %v3384 = vunpack.c.l.b16 %v806
        %v3385 = vunpack.c.h.b16 %v806
        %v3386 = vunpack.c.l.b16 %v807
        %v3387 = vunpack.c.h.b16 %v807
        %v3388 = vunpack.c.l.b16 %v808
        %v3389 = vunpack.c.h.b16 %v808
        %v3390 = vunpack.c.l.b16 %v809
        %v3391 = vunpack.c.h.b16 %v809
        %v3392 = vunpack.c.l.b16 %v810
        %v3393 = vunpack.c.h.b16 %v810
        %v3394 = vunpack.c.l.b16 %v811
        %v3395 = vunpack.c.h.b16 %v811
        %v3396 = vunpack.c.l.b16 %v812
        %v3397 = vunpack.c.h.b16 %v812
        %v3398 = vunpack.c.l.b16 %v813
        %v3399 = vunpack.c.h.b16 %v813
        %v3400 = vunpack.c.l.b16 %v814
        %v3401 = vunpack.c.h.b16 %v814
        %v3402 = vunpack.c.l.b16 %v815
        %v3403 = vunpack.c.h.b16 %v815
        %v3404 = vunpack.c.l.b16 %v816
        %v3405 = vunpack.c.h.b16 %v816
        %v3406 = vunpack.c.l.b16 %v817
        %v3407 = vunpack.c.h.b16 %v817
        %v3408 = vunpack.c.l.b16 %v818
        %v3409 = vunpack.c.h.b16 %v818
        %v3410 = vunpack.c.l.b16 %v819
        %v3411 = vunpack.c.h.b16 %v819
        %v3412 = vunpack.c.l.b16 %v820
        %v3413 = vunpack.c.h.b16 %v820
        %v3414 = vunpack.c.l.b16 %v821
        %v3415 = vunpack.c.h.b16 %v821
        %v3416 = vunpack.c.l.b16 %v822
        %v3417 = vunpack.c.h.b16 %v822
        %v3418 = vunpack.c.l.b16 %v823
        %v3419 = vunpack.c.h.b16 %v823
        %v3420 = vunpack.c.l.b16 %v824
        %v3421 = vunpack.c.h.b16 %v824
        %v3422 = vunpack.c.l.b16 %v825
        %v3423 = vunpack.c.h.b16 %v825
        %v3424 = vunpack.c.l.b16 %v826
        %v3425 = vunpack.c.h.b16 %v826
        %v3426 = vunpack.c.l.b16 %v827
        %v3427 = vunpack.c.h.b16 %v827
        %v3428 = vunpack.c.l.b16 %v828
        %v3429 = vunpack.c.h.b16 %v828
        %v3430 = vunpack.c.l.b16 %v829
        %v3431 = vunpack.c.h.b16 %v829
        %v3432 = vunpack.c.l.b16 %v830
        %v3433 = vunpack.c.h.b16 %v830
        %v3434 = vunpack.c.l.b16 %v831
        %v3435 = vunpack.c.h.b16 %v831
        %v3436 = vunpack.c.l.b16 %v832
        %v3437 = vunpack.c.h.b16 %v832
        %v3438 = vunpack.c.l.b16 %v833
        %v3439 = vunpack.c.h.b16 %v833
        %v3440 = vunpack.c.l.b16 %v834
        %v3441 = vunpack.c.h.b16 %v834
        %v3442 = vunpack.c.l.b16 %v835
        %v3443 = vunpack.c.h.b16 %v835
        %v3444 = vunpack.c.l.b16 %v836
        %v3445 = vunpack.c.h.b16 %v836
        %v3446 = vunpack.c.l.b16 %v837
        %v3447 = vunpack.c.h.b16 %v837
        %v3448 = vunpack.c.l.b16 %v838
        %v3449 = vunpack.c.h.b16 %v838
        %v3450 = vunpack.c.l.b16 %v839
        %v3451 = vunpack.c.h.b16 %v839
        %v3452 = vunpack.c.l.b16 %v840
        %v3453 = vunpack.c.h.b16 %v840
        %v3454 = vunpack.c.l.b16 %v841
        %v3455 = vunpack.c.h.b16 %v841
        %v3456 = vunpack.c.l.b16 %v842
        %v3457 = vunpack.c.h.b16 %v842
        %v3458 = vunpack.c.l.b16 %v843
        %v3459 = vunpack.c.h.b16 %v843
        %v3460 = vunpack.c.l.b16 %v844
        %v3461 = vunpack.c.h.b16 %v844
        %v3462 = vunpack.c.l.b16 %v845
        %v3463 = vunpack.c.h.b16 %v845
        %v3464 = vunpack.c.l.b16 %v846
        %v3465 = vunpack.c.h.b16 %v846
        %v3466 = vunpack.c.l.b16 %v847
        %v3467 = vunpack.c.h.b16 %v847
        %v3468 = vunpack.c.l.b16 %v848
        %v3469 = vunpack.c.h.b16 %v848
        %v3470 = vunpack.c.l.b16 %v849
        %v3471 = vunpack.c.h.b16 %v849
        %v3472 = vunpack.c.l.b16 %v850
        %v3473 = vunpack.c.h.b16 %v850
        %v3474 = vunpack.c.l.b16 %v851
        %v3475 = vunpack.c.h.b16 %v851
        %v3476 = vunpack.c.l.b16 %v852
        %v3477 = vunpack.c.h.b16 %v852
        %v3478 = vunpack.c.l.b16 %v853
        %v3479 = vunpack.c.h.b16 %v853
        %v3480 = vunpack.c.l.b16 %v854
        %v3481 = vunpack.c.h.b16 %v854
        %v3482 = vunpack.c.l.b16 %v855
        %v3483 = vunpack.c.h.b16 %v855
        %v3484 = vunpack.c.l.b16 %v856
        %v3485 = vunpack.c.h.b16 %v856
        %v3486 = vunpack.c.l.b16 %v857
        %v3487 = vunpack.c.h.b16 %v857
        %v3488 = vunpack.c.l.b16 %v858
        %v3489 = vunpack.c.h.b16 %v858
        %v3490 = vunpack.c.l.b16 %v859
        %v3491 = vunpack.c.h.b16 %v859
        %v3492 = vunpack.c.l.b16 %v860
        %v3493 = vunpack.c.h.b16 %v860
        %v3494 = vunpack.c.l.b16 %v861
        %v3495 = vunpack.c.h.b16 %v861
        %v3496 = vunpack.c.l.b16 %v862
        %v3497 = vunpack.c.h.b16 %v862
        %v3498 = vunpack.c.l.b16 %v863
        %v3499 = vunpack.c.h.b16 %v863
        %v3500 = vunpack.c.l.b16 %v864
        %v3501 = vunpack.c.h.b16 %v864
        %v3502 = vunpack.c.l.b16 %v865
        %v3503 = vunpack.c.h.b16 %v865
        %v3504 = vunpack.c.l.b16 %v866
        %v3505 = vunpack.c.h.b16 %v866
        %v3506 = vunpack.c.l.b16 %v867
        %v3507 = vunpack.c.h.b16 %v867
        %v3508 = vunpack.c.l.b16 %v868
        %v3509 = vunpack.c.h.b16 %v868
        %v3510 = vunpack.c.l.b16 %v869
        %v3511 = vunpack.c.h.b16 %v869
        %v3512 = vunpack.c.l.b16 %v870
        %v3513 = vunpack.c.h.b16 %v870
        %v3514 = vunpack.c.l.b16 %v871
        %v3515 = vunpack.c.h.b16 %v871
        %v3516 = vunpack.c.l.b16 %v872
        %v3517 = vunpack.c.h.b16 %v872
        %v3518 = vunpack.c.l.b16 %v873
        %v3519 = vunpack.c.h.b16 %v873
        %v3520 = vunpack.c.l.b16 %v874
        %v3521 = vunpack.c.h.b16 %v874
        %v3522 = vunpack.c.l.b16 %v875
        %v3523 = vunpack.c.h.b16 %v875
        %v3524 = vunpack.c.l.b16 %v876
        %v3525 = vunpack.c.h.b16 %v876
        %v3526 = vunpack.c.l.b16 %v877
        %v3527 = vunpack.c.h.b16 %v877
        %v3528 = vunpack.c.l.b16 %v878
        %v3529 = vunpack.c.h.b16 %v878
        %v3530 = vunpack.c.l.b16 %v879
        %v3531 = vunpack.c.h.b16 %v879
        %v3532 = vunpack.c.l.b16 %v880
        %v3533 = vunpack.c.h.b16 %v880
        %v3534 = vunpack.c.l.b16 %v881
        %v3535 = vunpack.c.h.b16 %v881
        %v3536 = vunpack.c.l.b16 %v882
        %v3537 = vunpack.c.h.b16 %v882
        %v3538 = vunpack.c.l.b16 %v883
        %v3539 = vunpack.c.h.b16 %v883
        %v3540 = vunpack.c.l.b16 %v884
        %v3541 = vunpack.c.h.b16 %v884
        %v3542 = vunpack.c.l.b16 %v885
        %v3543 = vunpack.c.h.b16 %v885
        %v3544 = vunpack.c.l.b16 %v886
        %v3545 = vunpack.c.h.b16 %v886
        %v3546 = vunpack.c.l.b16 %v887
        %v3547 = vunpack.c.h.b16 %v887
        %v3548 = vunpack.c.l.b16 %v888
        %v3549 = vunpack.c.h.b16 %v888
        %v3550 = vunpack.c.l.b16 %v889
        %v3551 = vunpack.c.h.b16 %v889
        %v3552 = vunpack.c.l.b16 %v890
        %v3553 = vunpack.c.h.b16 %v890
        %v3554 = vunpack.c.l.b16 %v891
        %v3555 = vunpack.c.h.b16 %v891
        %v3556 = vunpack.c.l.b16 %v892
        %v3557 = vunpack.c.h.b16 %v892
        %v3558 = vunpack.c.l.b16 %v893
        %v3559 = vunpack.c.h.b16 %v893
        %v3560 = vunpack.c.l.b16 %v894
        %v3561 = vunpack.c.h.b16 %v894
        %v3562 = vunpack.c.l.b16 %v895
        %v3563 = vunpack.c.h.b16 %v895
        %v3564 = vunpack.c.l.b16 %v896
        %v3565 = vunpack.c.h.b16 %v896
        %v3566 = vunpack.c.l.b16 %v897
        %v3567 = vunpack.c.h.b16 %v897
        %v3568 = vunpack.c.l.b16 %v898
        %v3569 = vunpack.c.h.b16 %v898
        %v3570 = vunpack.c.l.b16 %v899
        %v3571 = vunpack.c.h.b16 %v899
        %v3572 = vunpack.c.l.b16 %v900
        %v3573 = vunpack.c.h.b16 %v900
        %v3574 = vunpack.c.l.b16 %v901
        %v3575 = vunpack.c.h.b16 %v901
        %v3576 = vunpack.c.l.b16 %v902
        %v3577 = vunpack.c.h.b16 %v902
        %v3578 = vunpack.c.l.b16 %v903
        %v3579 = vunpack.c.h.b16 %v903
        %v3580 = vunpack.c.l.b16 %v904
        %v3581 = vunpack.c.h.b16 %v904
        %v3582 = vunpack.c.l.b16 %v905
        %v3583 = vunpack.c.h.b16 %v905
        %v3584 = vunpack.c.l.b16 %v906
        %v3585 = vunpack.c.h.b16 %v906
        %v3586 = vunpack.c.l.b16 %v907
        %v3587 = vunpack.c.h.b16 %v907
        %v3588 = vunpack.c.l.b16 %v908
        %v3589 = vunpack.c.h.b16 %v908
        %v3590 = vunpack.c.l.b16 %v909
        %v3591 = vunpack.c.h.b16 %v909
        %v3592 = vunpack.c.l.b16 %v910
        %v3593 = vunpack.c.h.b16 %v910
        %v3594 = vunpack.c.l.b16 %v911
        %v3595 = vunpack.c.h.b16 %v911
        %v3596 = vunpack.c.l.b16 %v912
        %v3597 = vunpack.c.h.b16 %v912
        %v3598 = vunpack.c.l.b16 %v913
        %v3599 = vunpack.c.h.b16 %v913
        %v3600 = vunpack.c.l.b16 %v914
        %v3601 = vunpack.c.h.b16 %v914
        %v3602 = vunpack.c.l.b16 %v915
        %v3603 = vunpack.c.h.b16 %v915
        %v3604 = vunpack.c.l.b16 %v916
        %v3605 = vunpack.c.h.b16 %v916
        %v3606 = vunpack.c.l.b16 %v917
        %v3607 = vunpack.c.h.b16 %v917
        %v3608 = vunpack.c.l.b16 %v918
        %v3609 = vunpack.c.h.b16 %v918
        %v3610 = vunpack.c.l.b16 %v919
        %v3611 = vunpack.c.h.b16 %v919
        %v3612 = vunpack.c.l.b16 %v920
        %v3613 = vunpack.c.h.b16 %v920
        %v3614 = vunpack.c.l.b16 %v921
        %v3615 = vunpack.c.h.b16 %v921
        %v3616 = vunpack.c.l.b16 %v922
        %v3617 = vunpack.c.h.b16 %v922
        %v3618 = vunpack.c.l.b16 %v923
        %v3619 = vunpack.c.h.b16 %v923
        %v3620 = vunpack.c.l.b16 %v924
        %v3621 = vunpack.c.h.b16 %v924
        %v3622 = vunpack.c.l.b16 %v925
        %v3623 = vunpack.c.h.b16 %v925
        %v3624 = vunpack.c.l.b16 %v926
        %v3625 = vunpack.c.h.b16 %v926
        %v3626 = vunpack.c.l.b16 %v927
        %v3627 = vunpack.c.h.b16 %v927
        %v3628 = vunpack.c.l.b16 %v928
        %v3629 = vunpack.c.h.b16 %v928
        %v3630 = vunpack.c.l.b16 %v929
        %v3631 = vunpack.c.h.b16 %v929
        %v3632 = vunpack.c.l.b16 %v930
        %v3633 = vunpack.c.h.b16 %v930
        %v3634 = vunpack.c.l.b16 %v931
        %v3635 = vunpack.c.h.b16 %v931
        %v3636 = vunpack.c.l.b16 %v932
        %v3637 = vunpack.c.h.b16 %v932
        %v3638 = vunpack.c.l.b16 %v933
        %v3639 = vunpack.c.h.b16 %v933
        %v3640 = vunpack.c.l.b16 %v934
        %v3641 = vunpack.c.h.b16 %v934
        %v3642 = vunpack.c.l.b16 %v935
        %v3643 = vunpack.c.h.b16 %v935
        %v3644 = vunpack.c.l.b16 %v936
        %v3645 = vunpack.c.h.b16 %v936
        %v3646 = vunpack.c.l.b16 %v937
        %v3647 = vunpack.c.h.b16 %v937
        %v3648 = vunpack.c.l.b16 %v938
        %v3649 = vunpack.c.h.b16 %v938
        %v3650 = vunpack.c.l.b16 %v939
        %v3651 = vunpack.c.h.b16 %v939
        %v3652 = vunpack.c.l.b16 %v940
        %v3653 = vunpack.c.h.b16 %v940
        %v3654 = vunpack.c.l.b16 %v941
        %v3655 = vunpack.c.h.b16 %v941
        %v3656 = vunpack.c.l.b16 %v942
        %v3657 = vunpack.c.h.b16 %v942
        %v3658 = vunpack.c.l.b16 %v943
        %v3659 = vunpack.c.h.b16 %v943
        %v3660 = vunpack.c.l.b16 %v944
        %v3661 = vunpack.c.h.b16 %v944
        %v3662 = vunpack.c.l.b16 %v945
        %v3663 = vunpack.c.h.b16 %v945
        %v3664 = vunpack.c.l.b16 %v946
        %v3665 = vunpack.c.h.b16 %v946
        %v3666 = vunpack.c.l.b16 %v947
        %v3667 = vunpack.c.h.b16 %v947
        %v3668 = vunpack.c.l.b16 %v948
        %v3669 = vunpack.c.h.b16 %v948
        %v3670 = vunpack.c.l.b16 %v949
        %v3671 = vunpack.c.h.b16 %v949
        %v3672 = vunpack.c.l.b16 %v950
        %v3673 = vunpack.c.h.b16 %v950
        %v3674 = vunpack.c.l.b16 %v951
        %v3675 = vunpack.c.h.b16 %v951
        %v3676 = vunpack.c.l.b16 %v952
        %v3677 = vunpack.c.h.b16 %v952
        %v3678 = vunpack.c.l.b16 %v953
        %v3679 = vunpack.c.h.b16 %v953
        %v3680 = vunpack.c.l.b16 %v954
        %v3681 = vunpack.c.h.b16 %v954
        %v3682 = vunpack.c.l.b16 %v955
        %v3683 = vunpack.c.h.b16 %v955
        %v3684 = vunpack.c.l.b16 %v956
        %v3685 = vunpack.c.h.b16 %v956
        %v3686 = vunpack.c.l.b16 %v957
        %v3687 = vunpack.c.h.b16 %v957
        %v3688 = vunpack.c.l.b16 %v958
        %v3689 = vunpack.c.h.b16 %v958
        %v3690 = vunpack.c.l.b16 %v959
        %v3691 = vunpack.c.h.b16 %v959
        %v3692 = vunpack.c.l.b16 %v960
        %v3693 = vunpack.c.h.b16 %v960
        %v3694 = vunpack.c.l.b16 %v961
        %v3695 = vunpack.c.h.b16 %v961
        %v3696 = vunpack.c.l.b16 %v962
        %v3697 = vunpack.c.h.b16 %v962
        %v3698 = vunpack.c.l.b16 %v963
        %v3699 = vunpack.c.h.b16 %v963
        %v3700 = vunpack.c.l.b16 %v964
        %v3701 = vunpack.c.h.b16 %v964
        %v3702 = vunpack.c.l.b16 %v965
        %v3703 = vunpack.c.h.b16 %v965
        %v3704 = vunpack.c.l.b16 %v966
        %v3705 = vunpack.c.h.b16 %v966
        %v3706 = vunpack.c.l.b16 %v967
        %v3707 = vunpack.c.h.b16 %v967
        %v3708 = vunpack.c.l.b16 %v968
        %v3709 = vunpack.c.h.b16 %v968
        %v3710 = vunpack.c.l.b16 %v969
        %v3711 = vunpack.c.h.b16 %v969
        %v3712 = vunpack.c.l.b16 %v970
        %v3713 = vunpack.c.h.b16 %v970
        %v3714 = vunpack.c.l.b16 %v971
        %v3715 = vunpack.c.h.b16 %v971
        %v3716 = vunpack.c.l.b16 %v972
        %v3717 = vunpack.c.h.b16 %v972
        %v3718 = vunpack.c.l.b16 %v973
        %v3719 = vunpack.c.h.b16 %v973
        %v3720 = vunpack.c.l.b16 %v974
        %v3721 = vunpack.c.h.b16 %v974
        %v3722 = vunpack.c.l.b16 %v975
        %v3723 = vunpack.c.h.b16 %v975
        %v3724 = vunpack.c.l.b16 %v976
        %v3725 = vunpack.c.h.b16 %v976
        %v3726 = vunpack.c.l.b16 %v977
        %v3727 = vunpack.c.h.b16 %v977
        %v3728 = vunpack.c.l.b16 %v978
        %v3729 = vunpack.c.h.b16 %v978
        %v3730 = vunpack.c.l.b16 %v979
        %v3731 = vunpack.c.h.b16 %v979
        %v3732 = vunpack.c.l.b16 %v980
        %v3733 = vunpack.c.h.b16 %v980
        %v3734 = vunpack.c.l.b16 %v981
        %v3735 = vunpack.c.h.b16 %v981
        %v3736 = vunpack.c.l.b16 %v982
        %v3737 = vunpack.c.h.b16 %v982
        %v3738 = vunpack.c.l.b16 %v983
        %v3739 = vunpack.c.h.b16 %v983
        %v3740 = vunpack.c.l.b16 %v984
        %v3741 = vunpack.c.h.b16 %v984
        %v3742 = vunpack.c.l.b16 %v985
        %v3743 = vunpack.c.h.b16 %v985
        %v3744 = vunpack.c.l.b16 %v986
        %v3745 = vunpack.c.h.b16 %v986
        %v3746 = vunpack.c.l.b16 %v987
        %v3747 = vunpack.c.h.b16 %v987
        %v3748 = vunpack.c.l.b16 %v988
        %v3749 = vunpack.c.h.b16 %v988
        %v3750 = vunpack.c.l.b16 %v989
        %v3751 = vunpack.c.h.b16 %v989
        %v3752 = vunpack.c.l.b16 %v990
        %v3753 = vunpack.c.h.b16 %v990
        %v3754 = vunpack.c.l.b16 %v991
        %v3755 = vunpack.c.h.b16 %v991
        %v3756 = vunpack.c.l.b16 %v992
        %v3757 = vunpack.c.h.b16 %v992
        %v3758 = vunpack.c.l.b16 %v993
        %v3759 = vunpack.c.h.b16 %v993
        %v3760 = vunpack.c.l.b16 %v994
        %v3761 = vunpack.c.h.b16 %v994
        %v3762 = vunpack.c.l.b16 %v995
        %v3763 = vunpack.c.h.b16 %v995
        %v3764 = vunpack.c.l.b16 %v996
        %v3765 = vunpack.c.h.b16 %v996
        %v3766 = vunpack.c.l.b16 %v997
        %v3767 = vunpack.c.h.b16 %v997
        %v3768 = vunpack.c.l.b16 %v998
        %v3769 = vunpack.c.h.b16 %v998
        %v3770 = vunpack.c.l.b16 %v999
        %v3771 = vunpack.c.h.b16 %v999
        %v3772 = vunpack.c.l.b16 %v1000
        %v3773 = vunpack.c.h.b16 %v1000
        %v3774 = vunpack.c.l.b16 %v1001
        %v3775 = vunpack.c.h.b16 %v1001
        %v3776 = vunpack.c.l.b16 %v1002
        %v3777 = vunpack.c.h.b16 %v1002
        %v3778 = vunpack.c.l.b16 %v1003
        %v3779 = vunpack.c.h.b16 %v1003
        %v3780 = vunpack.c.l.b16 %v1004
        %v3781 = vunpack.c.h.b16 %v1004
        %v3782 = vunpack.c.l.b16 %v1005
        %v3783 = vunpack.c.h.b16 %v1005
        %v3784 = vunpack.c.l.b16 %v1006
        %v3785 = vunpack.c.h.b16 %v1006
        %v3786 = vunpack.c.l.b16 %v1007
        %v3787 = vunpack.c.h.b16 %v1007
        %v3788 = vunpack.c.l.b16 %v1008
        %v3789 = vunpack.c.h.b16 %v1008
        %v3790 = vunpack.c.l.b16 %v1009
        %v3791 = vunpack.c.h.b16 %v1009
        %v3792 = vunpack.c.l.b16 %v1010
        %v3793 = vunpack.c.h.b16 %v1010
        %v3794 = vunpack.c.l.b16 %v1011
        %v3795 = vunpack.c.h.b16 %v1011
        %v3796 = vunpack.c.l.b16 %v1012
        %v3797 = vunpack.c.h.b16 %v1012
        %v3798 = vunpack.c.l.b16 %v1013
        %v3799 = vunpack.c.h.b16 %v1013
        %v3800 = vunpack.c.l.b16 %v1014
        %v3801 = vunpack.c.h.b16 %v1014
        %v3802 = vunpack.c.l.b16 %v1015
        %v3803 = vunpack.c.h.b16 %v1015
        %v3804 = vunpack.c.l.b16 %v1016
        %v3805 = vunpack.c.h.b16 %v1016
        %v3806 = vunpack.c.l.b16 %v1017
        %v3807 = vunpack.c.h.b16 %v1017
        %v3808 = vunpack.c.l.b16 %v1018
        %v3809 = vunpack.c.h.b16 %v1018
        %v3810 = vunpack.c.l.b16 %v1019
        %v3811 = vunpack.c.h.b16 %v1019
        %v3812 = vunpack.c.l.b16 %v1020
        %v3813 = vunpack.c.h.b16 %v1020
        %v3814 = vunpack.c.l.b16 %v1021
        %v3815 = vunpack.c.h.b16 %v1021
        %v3816 = vunpack.c.l.b16 %v1022
        %v3817 = vunpack.c.h.b16 %v1022
        %v3818 = vunpack.c.l.b16 %v1023
        %v3819 = vunpack.c.h.b16 %v1023
        %v3820 = vunpack.c.l.b16 %v1024
        %v3821 = vunpack.c.h.b16 %v1024
        %v3822 = vunpack.c.l.b16 %v1025
        %v3823 = vunpack.c.h.b16 %v1025
        %v3824 = vunpack.c.l.b16 %v1026
        %v3825 = vunpack.c.h.b16 %v1026
        %v3826 = vunpack.c.l.b16 %v1027
        %v3827 = vunpack.c.h.b16 %v1027
        %v3828 = vunpack.c.l.b16 %v1028
        %v3829 = vunpack.c.h.b16 %v1028
        %v3830 = vunpack.c.l.b16 %v1029
        %v3831 = vunpack.c.h.b16 %v1029
        %v3832 = vunpack.c.l.b16 %v1030
        %v3833 = vunpack.c.h.b16 %v1030
        %v3834 = vunpack.c.l.b16 %v1031
        %v3835 = vunpack.c.h.b16 %v1031
        %v3836 = vunpack.c.l.b16 %v1032
        %v3837 = vunpack.c.h.b16 %v1032
        %v3838 = vunpack.c.l.b16 %v1033
        %v3839 = vunpack.c.h.b16 %v1033
        %v3840 = vunpack.c.l.b16 %v1034
        %v3841 = vunpack.c.h.b16 %v1034
        %v3842 = vunpack.c.l.b16 %v1035
        %v3843 = vunpack.c.h.b16 %v1035
        %v3844 = vunpack.c.l.b16 %v1036
        %v3845 = vunpack.c.h.b16 %v1036
        %v3846 = vunpack.c.l.b16 %v1037
        %v3847 = vunpack.c.h.b16 %v1037
        %v3848 = vunpack.c.l.b16 %v1038
        %v3849 = vunpack.c.h.b16 %v1038
        %v3850 = vunpack.c.l.b16 %v1039
        %v3851 = vunpack.c.h.b16 %v1039
        %v3852 = vunpack.c.l.b16 %v1040
        %v3853 = vunpack.c.h.b16 %v1040
        %v3854 = vunpack.c.l.b16 %v1041
        %v3855 = vunpack.c.h.b16 %v1041
        %v3856 = vunpack.c.l.b16 %v1042
        %v3857 = vunpack.c.h.b16 %v1042
        %v3858 = vunpack.c.l.b16 %v1043
        %v3859 = vunpack.c.h.b16 %v1043
        %v3860 = vunpack.c.l.b16 %v1044
        %v3861 = vunpack.c.h.b16 %v1044
        %v3862 = vunpack.c.l.b16 %v1045
        %v3863 = vunpack.c.h.b16 %v1045
        %v3864 = vunpack.c.l.b16 %v1046
        %v3865 = vunpack.c.h.b16 %v1046
        %v3866 = vunpack.c.l.b16 %v1047
        %v3867 = vunpack.c.h.b16 %v1047
        %v3868 = vunpack.c.l.b16 %v1048
        %v3869 = vunpack.c.h.b16 %v1048
        %v3870 = vunpack.c.l.b16 %v1049
        %v3871 = vunpack.c.h.b16 %v1049
        %v3872 = vunpack.c.l.b16 %v1050
        %v3873 = vunpack.c.h.b16 %v1050
        %v3874 = vunpack.c.l.b16 %v1051
        %v3875 = vunpack.c.h.b16 %v1051
        %v3876 = vunpack.c.l.b16 %v1052
        %v3877 = vunpack.c.h.b16 %v1052
        %v3878 = vunpack.c.l.b16 %v1053
        %v3879 = vunpack.c.h.b16 %v1053
        %v3880 = vunpack.c.l.b16 %v1054
        %v3881 = vunpack.c.h.b16 %v1054
        %v3882 = vunpack.c.l.b16 %v1055
        %v3883 = vunpack.c.h.b16 %v1055
        %v3884 = vunpack.c.l.b16 %v1056
        %v3885 = vunpack.c.h.b16 %v1056
        %v3886 = vunpack.c.l.b16 %v1057
        %v3887 = vunpack.c.h.b16 %v1057
        %v3888 = vunpack.c.l.b16 %v1058
        %v3889 = vunpack.c.h.b16 %v1058
        %v3890 = vunpack.c.l.b16 %v1059
        %v3891 = vunpack.c.h.b16 %v1059
        %v3892 = vunpack.c.l.b16 %v1060
        %v3893 = vunpack.c.h.b16 %v1060
        %v3894 = vunpack.c.l.b16 %v1061
        %v3895 = vunpack.c.h.b16 %v1061
        %v3896 = vunpack.c.l.b16 %v1062
        %v3897 = vunpack.c.h.b16 %v1062
        %v3898 = vunpack.c.l.b16 %v1063
        %v3899 = vunpack.c.h.b16 %v1063
        %v3900 = vunpack.c.l.b16 %v1064
        %v3901 = vunpack.c.h.b16 %v1064
        %v3902 = vunpack.c.l.b16 %v1065
        %v3903 = vunpack.c.h.b16 %v1065
        %v3904 = vunpack.c.l.b16 %v1066
        %v3905 = vunpack.c.h.b16 %v1066
        %v3906 = vunpack.c.l.b16 %v1067
        %v3907 = vunpack.c.h.b16 %v1067
        %v3908 = vunpack.c.l.b16 %v1068
        %v3909 = vunpack.c.h.b16 %v1068
        %v3910 = vunpack.c.l.b16 %v1069
        %v3911 = vunpack.c.h.b16 %v1069
        %v3912 = vunpack.c.l.b16 %v1070
        %v3913 = vunpack.c.h.b16 %v1070
        %v3914 = vunpack.c.l.b16 %v1071
        %v3915 = vunpack.c.h.b16 %v1071
        %v3916 = vunpack.c.l.b16 %v1072
        %v3917 = vunpack.c.h.b16 %v1072
        %v3918 = vunpack.c.l.b16 %v1073
        %v3919 = vunpack.c.h.b16 %v1073
        %v3920 = vunpack.c.l.b16 %v1074
        %v3921 = vunpack.c.h.b16 %v1074
        %v3922 = vunpack.c.l.b16 %v1075
        %v3923 = vunpack.c.h.b16 %v1075
        %v3924 = vunpack.c.l.b16 %v1076
        %v3925 = vunpack.c.h.b16 %v1076
        %v3926 = vunpack.c.l.b16 %v1077
        %v3927 = vunpack.c.h.b16 %v1077
        %v3928 = vunpack.c.l.b16 %v1078
        %v3929 = vunpack.c.h.b16 %v1078
        %v3930 = vunpack.c.l.b16 %v1079
        %v3931 = vunpack.c.h.b16 %v1079
        %v3932 = vunpack.c.l.b16 %v1080
        %v3933 = vunpack.c.h.b16 %v1080
        %v3934 = vunpack.c.l.b16 %v1081
        %v3935 = vunpack.c.h.b16 %v1081
        %v3936 = vunpack.c.l.b16 %v1082
        %v3937 = vunpack.c.h.b16 %v1082
        %v3938 = vunpack.c.l.b16 %v1083
        %v3939 = vunpack.c.h.b16 %v1083
        %v3940 = vunpack.c.l.b16 %v1084
        %v3941 = vunpack.c.h.b16 %v1084
        %v3942 = vunpack.c.l.b16 %v1085
        %v3943 = vunpack.c.h.b16 %v1085
        %v3944 = vunpack.c.l.b16 %v1086
        %v3945 = vunpack.c.h.b16 %v1086
        %v3946 = vunpack.c.l.b16 %v1087
        %v3947 = vunpack.c.h.b16 %v1087
        %v3948 = vunpack.c.l.b16 %v1088
        %v3949 = vunpack.c.h.b16 %v1088
        %v3950 = vunpack.c.l.b16 %v1089
        %v3951 = vunpack.c.h.b16 %v1089
        %v3952 = vunpack.c.l.b16 %v1090
        %v3953 = vunpack.c.h.b16 %v1090
        %v3954 = vunpack.c.l.b16 %v1091
        %v3955 = vunpack.c.h.b16 %v1091
        %v3956 = vunpack.c.l.b16 %v1092
        %v3957 = vunpack.c.h.b16 %v1092
        %v3958 = vunpack.c.l.b16 %v1093
        %v3959 = vunpack.c.h.b16 %v1093
        %v3960 = vunpack.c.l.b16 %v1094
        %v3961 = vunpack.c.h.b16 %v1094
        %v3962 = vunpack.c.l.b16 %v1095
        %v3963 = vunpack.c.h.b16 %v1095
        %v3964 = vunpack.c.l.b16 %v1096
        %v3965 = vunpack.c.h.b16 %v1096
        %v3966 = vunpack.c.l.b16 %v1097
        %v3967 = vunpack.c.h.b16 %v1097
        %v3968 = vunpack.c.l.b16 %v1098
        %v3969 = vunpack.c.h.b16 %v1098
        %v3970 = vunpack.c.l.b16 %v1099
        %v3971 = vunpack.c.h.b16 %v1099
        %v3972 = vunpack.c.l.b16 %v1100
        %v3973 = vunpack.c.h.b16 %v1100
        %v3974 = vunpack.c.l.b16 %v1101
        %v3975 = vunpack.c.h.b16 %v1101
        %v3976 = vunpack.c.l.b16 %v1102
        %v3977 = vunpack.c.h.b16 %v1102
        %v3978 = vunpack.c.l.b16 %v1103
        %v3979 = vunpack.c.h.b16 %v1103
        %v3980 = vunpack.c.l.b16 %v1104
        %v3981 = vunpack.c.h.b16 %v1104
        %v3982 = vunpack.c.l.b16 %v1105
        %v3983 = vunpack.c.h.b16 %v1105
        %v3984 = vunpack.c.l.b16 %v1106
        %v3985 = vunpack.c.h.b16 %v1106
        %v3986 = vunpack.c.l.b16 %v1107
        %v3987 = vunpack.c.h.b16 %v1107
        %v3988 = vunpack.c.l.b16 %v1108
        %v3989 = vunpack.c.h.b16 %v1108
        %v3990 = vunpack.c.l.b16 %v1109
        %v3991 = vunpack.c.h.b16 %v1109
        %v3992 = vunpack.c.l.b16 %v1110
        %v3993 = vunpack.c.h.b16 %v1110
        %v3994 = vunpack.c.l.b16 %v1111
        %v3995 = vunpack.c.h.b16 %v1111
        %v3996 = vunpack.c.l.b16 %v1112
        %v3997 = vunpack.c.h.b16 %v1112
        %v3998 = vunpack.c.l.b16 %v1113
        %v3999 = vunpack.c.h.b16 %v1113
        %v4000 = vunpack.c.l.b16 %v1114
        %v4001 = vunpack.c.h.b16 %v1114
        %v4002 = vunpack.c.l.b16 %v1115
        %v4003 = vunpack.c.h.b16 %v1115
        %v4004 = vunpack.c.l.b16 %v1116
        %v4005 = vunpack.c.h.b16 %v1116
        %v4006 = vunpack.c.l.b16 %v1117
        %v4007 = vunpack.c.h.b16 %v1117
        %v4008 = vunpack.c.l.b16 %v1118
        %v4009 = vunpack.c.h.b16 %v1118
        %v4010 = vunpack.c.l.b16 %v1119
        %v4011 = vunpack.c.h.b16 %v1119
        %v4012 = vunpack.c.l.b16 %v1120
        %v4013 = vunpack.c.h.b16 %v1120
        %v4014 = vunpack.c.l.b16 %v1121
        %v4015 = vunpack.c.h.b16 %v1121
        %v4016 = vunpack.c.l.b16 %v1122
        %v4017 = vunpack.c.h.b16 %v1122
        %v4018 = vunpack.c.l.b16 %v1123
        %v4019 = vunpack.c.h.b16 %v1123
        %v4020 = vunpack.c.l.b16 %v1124
        %v4021 = vunpack.c.h.b16 %v1124
        %v4022 = vunpack.c.l.b16 %v1125
        %v4023 = vunpack.c.h.b16 %v1125
        %v4024 = vunpack.c.l.b16 %v1126
        %v4025 = vunpack.c.h.b16 %v1126
        %v4026 = vunpack.c.l.b16 %v1127
        %v4027 = vunpack.c.h.b16 %v1127
        %v4028 = vunpack.c.l.b16 %v1128
        %v4029 = vunpack.c.h.b16 %v1128
        %v4030 = vunpack.c.l.b16 %v1129
        %v4031 = vunpack.c.h.b16 %v1129
        %v4032 = vunpack.c.l.b16 %v1130
        %v4033 = vunpack.c.h.b16 %v1130
        %v4034 = vunpack.c.l.b16 %v1131
        %v4035 = vunpack.c.h.b16 %v1131
        %v4036 = vunpack.c.l.b16 %v1132
        %v4037 = vunpack.c.h.b16 %v1132
        %v4038 = vunpack.c.l.b16 %v1133
        %v4039 = vunpack.c.h.b16 %v1133
        %v4040 = vunpack.c.l.b16 %v1134
        %v4041 = vunpack.c.h.b16 %v1134
        %v4042 = vunpack.c.l.b16 %v1135
        %v4043 = vunpack.c.h.b16 %v1135
        %v4044 = vunpack.c.l.b16 %v1136
        %v4045 = vunpack.c.h.b16 %v1136
        %v4046 = vunpack.c.l.b16 %v1137
        %v4047 = vunpack.c.h.b16 %v1137
        %v4048 = vunpack.c.l.b16 %v1138
        %v4049 = vunpack.c.h.b16 %v1138
        %v4050 = vunpack.c.l.b16 %v1139
        %v4051 = vunpack.c.h.b16 %v1139
        %v4052 = vunpack.c.l.b16 %v1140
        %v4053 = vunpack.c.h.b16 %v1140
        %v4054 = vunpack.c.l.b16 %v1141
        %v4055 = vunpack.c.h.b16 %v1141
        %v4056 = vunpack.c.l.b16 %v1142
        %v4057 = vunpack.c.h.b16 %v1142
        %v4058 = vunpack.c.l.b16 %v1143
        %v4059 = vunpack.c.h.b16 %v1143
        %v4060 = vunpack.c.l.b16 %v1144
        %v4061 = vunpack.c.h.b16 %v1144
        %v4062 = vunpack.c.l.b16 %v1145
        %v4063 = vunpack.c.h.b16 %v1145
        %v4064 = vunpack.c.l.b16 %v1146
        %v4065 = vunpack.c.h.b16 %v1146
        %v4066 = vunpack.c.l.b16 %v1147
        %v4067 = vunpack.c.h.b16 %v1147
        %v4068 = vunpack.c.l.b16 %v1148
        %v4069 = vunpack.c.h.b16 %v1148
        %v4070 = vunpack.c.l.b16 %v1149
        %v4071 = vunpack.c.h.b16 %v1149
        %v4072 = vunpack.c.l.b16 %v1150
        %v4073 = vunpack.c.h.b16 %v1150
        %v4074 = vunpack.c.l.b16 %v1151
        %v4075 = vunpack.c.h.b16 %v1151
        %v4076 = vunpack.c.l.b16 %v1152
        %v4077 = vunpack.c.h.b16 %v1152
        %v4078 = vunpack.c.l.b16 %v1153
        %v4079 = vunpack.c.h.b16 %v1153
        %v4080 = vunpack.c.l.b16 %v1154
        %v4081 = vunpack.c.h.b16 %v1154
        %v4082 = vunpack.c.l.b16 %v1155
        %v4083 = vunpack.c.h.b16 %v1155
        %v4084 = vunpack.c.l.b16 %v1156
        %v4085 = vunpack.c.h.b16 %v1156
        %v4086 = vunpack.c.l.b16 %v1157
        %v4087 = vunpack.c.h.b16 %v1157
        %v4088 = vunpack.c.l.b16 %v1158
        %v4089 = vunpack.c.h.b16 %v1158
        %v4090 = vunpack.c.l.b16 %v1159
        %v4091 = vunpack.c.h.b16 %v1159
        %v4092 = vunpack.c.l.b16 %v1160
        %v4093 = vunpack.c.h.b16 %v1160
        %v4094 = vunpack.c.l.b16 %v1161
        %v4095 = vunpack.c.h.b16 %v1161
        %v4096 = vunpack.c.l.b16 %v1162
        %v4097 = vunpack.c.h.b16 %v1162
        %v4098 = vunpack.c.l.b16 %v1163
        %v4099 = vunpack.c.h.b16 %v1163
        %v4100 = vunpack.c.l.b16 %v1164
        %v4101 = vunpack.c.h.b16 %v1164
        %v4102 = vunpack.c.l.b16 %v1165
        %v4103 = vunpack.c.h.b16 %v1165
        %v4104 = vunpack.c.l.b16 %v1166
        %v4105 = vunpack.c.h.b16 %v1166
        %v4106 = vunpack.c.l.b16 %v1167
        %v4107 = vunpack.c.h.b16 %v1167
        %v4108 = vunpack.c.l.b16 %v1168
        %v4109 = vunpack.c.h.b16 %v1168
        %v4110 = vunpack.c.l.b16 %v1169
        %v4111 = vunpack.c.h.b16 %v1169
        %v4112 = vunpack.c.l.b16 %v1170
        %v4113 = vunpack.c.h.b16 %v1170
        %v4114 = vunpack.c.l.b16 %v1171
        %v4115 = vunpack.c.h.b16 %v1171
        %v4116 = vunpack.c.l.b16 %v1172
        %v4117 = vunpack.c.h.b16 %v1172
        %v4118 = vunpack.c.l.b16 %v1173
        %v4119 = vunpack.c.h.b16 %v1173
        %v4120 = vunpack.c.l.b16 %v1174
        %v4121 = vunpack.c.h.b16 %v1174
        %v4122 = vunpack.c.l.b16 %v1175
        %v4123 = vunpack.c.h.b16 %v1175
        %v4124 = vunpack.c.l.b16 %v1176
        %v4125 = vunpack.c.h.b16 %v1176
        %v4126 = vunpack.c.l.b16 %v1177
        %v4127 = vunpack.c.h.b16 %v1177
        %v4128 = vunpack.c.l.b16 %v1178
        %v4129 = vunpack.c.h.b16 %v1178
        %v4130 = vunpack.c.l.b16 %v1179
        %v4131 = vunpack.c.h.b16 %v1179
        %v4132 = vunpack.c.l.b16 %v1180
        %v4133 = vunpack.c.h.b16 %v1180
        %v4134 = vunpack.c.l.b16 %v1181
        %v4135 = vunpack.c.h.b16 %v1181
        %v4136 = vunpack.c.l.b16 %v1182
        %v4137 = vunpack.c.h.b16 %v1182
        %v4138 = vunpack.c.l.b16 %v1183
        %v4139 = vunpack.c.h.b16 %v1183
        %v4140 = vunpack.c.l.b16 %v1184
        %v4141 = vunpack.c.h.b16 %v1184
        %v4142 = vunpack.c.l.b16 %v1185
        %v4143 = vunpack.c.h.b16 %v1185
        %v4144 = vunpack.c.l.b16 %v1186
        %v4145 = vunpack.c.h.b16 %v1186
        %v4146 = vunpack.c.l.b16 %v1187
        %v4147 = vunpack.c.h.b16 %v1187
        %v4148 = vunpack.c.l.b16 %v1188
        %v4149 = vunpack.c.h.b16 %v1188
        %v4150 = vunpack.c.l.b16 %v1189
        %v4151 = vunpack.c.h.b16 %v1189
        %v4152 = vunpack.c.l.b16 %v1190
        %v4153 = vunpack.c.h.b16 %v1190
        %v4154 = vunpack.c.l.b16 %v1191
        %v4155 = vunpack.c.h.b16 %v1191
        %v4156 = vunpack.c.l.b16 %v1192
        %v4157 = vunpack.c.h.b16 %v1192
        %v4158 = vunpack.c.l.b16 %v1193
        %v4159 = vunpack.c.h.b16 %v1193
        %v4160 = vunpack.c.l.b16 %v1194
        %v4161 = vunpack.c.h.b16 %v1194
        %v4162 = vunpack.c.l.b16 %v1195
        %v4163 = vunpack.c.h.b16 %v1195
        %v4164 = vunpack.c.l.b16 %v1196
        %v4165 = vunpack.c.h.b16 %v1196
        %v4166 = vunpack.c.l.b16 %v1197
        %v4167 = vunpack.c.h.b16 %v1197
        %v4168 = vunpack.c.l.b16 %v1198
        %v4169 = vunpack.c.h.b16 %v1198
        %v4170 = vunpack.c.l.b16 %v1199
        %v4171 = vunpack.c.h.b16 %v1199
        %v4172 = vunpack.c.l.b16 %v1200
        %v4173 = vunpack.c.h.b16 %v1200
        %v4174 = vunpack.c.l.b16 %v1201
        %v4175 = vunpack.c.h.b16 %v1201
        %v4176 = vunpack.c.l.b16 %v1202
        %v4177 = vunpack.c.h.b16 %v1202
        %v4178 = vunpack.c.l.b16 %v1203
        %v4179 = vunpack.c.h.b16 %v1203
        %v4180 = vunpack.c.l.b16 %v1204
        %v4181 = vunpack.c.h.b16 %v1204
        %v4182 = vunpack.c.l.b16 %v1205
        %v4183 = vunpack.c.h.b16 %v1205
        %v4184 = vunpack.c.l.b16 %v1206
        %v4185 = vunpack.c.h.b16 %v1206
        %v4186 = vunpack.c.l.b16 %v1207
        %v4187 = vunpack.c.h.b16 %v1207
        %v4188 = vunpack.c.l.b16 %v1208
        %v4189 = vunpack.c.h.b16 %v1208
        %v4190 = vunpack.c.l.b16 %v1209
        %v4191 = vunpack.c.h.b16 %v1209
        %v4192 = vunpack.c.l.b16 %v1210
        %v4193 = vunpack.c.h.b16 %v1210
        %v4194 = vunpack.c.l.b16 %v1211
        %v4195 = vunpack.c.h.b16 %v1211
        %v4196 = vunpack.c.l.b16 %v1212
        %v4197 = vunpack.c.h.b16 %v1212
        %v4198 = vunpack.c.l.b16 %v1213
        %v4199 = vunpack.c.h.b16 %v1213
        %v4200 = vunpack.c.l.b16 %v1214
        %v4201 = vunpack.c.h.b16 %v1214
        %v4202 = vunpack.c.l.b16 %v1215
        %v4203 = vunpack.c.h.b16 %v1215
        %v4204 = vunpack.c.l.b16 %v1216
        %v4205 = vunpack.c.h.b16 %v1216
        %v4206 = vunpack.c.l.b16 %v1217
        %v4207 = vunpack.c.h.b16 %v1217
        %v4208 = vunpack.c.l.b16 %v1218
        %v4209 = vunpack.c.h.b16 %v1218
        %v4210 = vunpack.c.l.b16 %v1219
        %v4211 = vunpack.c.h.b16 %v1219
        %v4212 = vunpack.c.l.b16 %v1220
        %v4213 = vunpack.c.h.b16 %v1220
        %v4214 = vunpack.c.l.b16 %v1221
        %v4215 = vunpack.c.h.b16 %v1221
        %v4216 = vunpack.c.l.b16 %v1222
        %v4217 = vunpack.c.h.b16 %v1222
        %v4218 = vunpack.c.l.b16 %v1223
        %v4219 = vunpack.c.h.b16 %v1223
        %v4220 = vunpack.c.l.b16 %v1224
        %v4221 = vunpack.c.h.b16 %v1224
        %v4222 = vunpack.c.l.b16 %v1225
        %v4223 = vunpack.c.h.b16 %v1225
        %v4224 = vunpack.c.l.b16 %v1226
        %v4225 = vunpack.c.h.b16 %v1226
        %v4226 = vunpack.c.l.b16 %v1227
        %v4227 = vunpack.c.h.b16 %v1227
        %v4228 = vunpack.c.l.b16 %v1228
        %v4229 = vunpack.c.h.b16 %v1228
        %v4230 = vunpack.c.l.b16 %v1229
        %v4231 = vunpack.c.h.b16 %v1229
        %v4232 = vunpack.c.l.b16 %v1230
        %v4233 = vunpack.c.h.b16 %v1230
        %v4234 = vunpack.c.l.b16 %v1231
        %v4235 = vunpack.c.h.b16 %v1231
        %v4236 = vunpack.c.l.b16 %v1232
        %v4237 = vunpack.c.h.b16 %v1232
        %v4238 = vunpack.c.l.b16 %v1233
        %v4239 = vunpack.c.h.b16 %v1233
        %v4240 = vunpack.c.l.b16 %v1234
        %v4241 = vunpack.c.h.b16 %v1234
        %v4242 = vunpack.c.l.b16 %v1235
        %v4243 = vunpack.c.h.b16 %v1235
        %v4244 = vunpack.c.l.b16 %v1236
        %v4245 = vunpack.c.h.b16 %v1236
        %v4246 = vunpack.c.l.b16 %v1237
        %v4247 = vunpack.c.h.b16 %v1237
        %v4248 = vunpack.c.l.b16 %v1238
        %v4249 = vunpack.c.h.b16 %v1238
        %v4250 = vunpack.c.l.b16 %v1239
        %v4251 = vunpack.c.h.b16 %v1239
        %v4252 = vunpack.c.l.b16 %v1240
        %v4253 = vunpack.c.h.b16 %v1240
        %v4254 = vunpack.c.l.b16 %v1241
        %v4255 = vunpack.c.h.b16 %v1241
        %v4256 = vunpack.c.l.b16 %v1242
        %v4257 = vunpack.c.h.b16 %v1242
        %v4258 = vunpack.c.l.b16 %v1243
        %v4259 = vunpack.c.h.b16 %v1243
        %v4260 = vunpack.c.l.b16 %v1244
        %v4261 = vunpack.c.h.b16 %v1244
        %v4262 = vunpack.c.l.b16 %v1245
        %v4263 = vunpack.c.h.b16 %v1245
        %v4264 = vunpack.c.l.b16 %v1246
        %v4265 = vunpack.c.h.b16 %v1246
        %v4266 = vunpack.c.l.b16 %v1247
        %v4267 = vunpack.c.h.b16 %v1247
        %v4268 = vunpack.c.l.b16 %v1248
        %v4269 = vunpack.c.h.b16 %v1248
        %v4270 = vunpack.c.l.b16 %v1249
        %v4271 = vunpack.c.h.b16 %v1249
        %v4272 = vunpack.c.l.b16 %v1250
        %v4273 = vunpack.c.h.b16 %v1250
        %v4274 = vunpack.c.l.b16 %v1251
        %v4275 = vunpack.c.h.b16 %v1251
        %v4276 = vunpack.c.l.b16 %v1252
        %v4277 = vunpack.c.h.b16 %v1252
        %v4278 = vunpack.c.l.b16 %v1253
        %v4279 = vunpack.c.h.b16 %v1253
        %v4280 = vunpack.c.l.b16 %v1254
        %v4281 = vunpack.c.h.b16 %v1254
        %v4282 = vunpack.c.l.b16 %v1255
        %v4283 = vunpack.c.h.b16 %v1255
        %v4284 = vunpack.c.l.b16 %v1256
        %v4285 = vunpack.c.h.b16 %v1256
        %v4286 = vunpack.c.l.b16 %v1257
        %v4287 = vunpack.c.h.b16 %v1257
        %v4288 = vunpack.c.l.b16 %v1258
        %v4289 = vunpack.c.h.b16 %v1258
        %v4290 = vunpack.c.l.b16 %v1259
        %v4291 = vunpack.c.h.b16 %v1259
        %v4292 = vunpack.c.l.b16 %v1260
        %v4293 = vunpack.c.h.b16 %v1260
        %v4294 = vunpack.c.l.b16 %v1261
        %v4295 = vunpack.c.h.b16 %v1261
        %v4296 = vunpack.c.l.b16 %v1262
        %v4297 = vunpack.c.h.b16 %v1262
        %v4298 = vunpack.c.l.b16 %v1263
        %v4299 = vunpack.c.h.b16 %v1263
        %v4300 = vunpack.c.l.b16 %v1264
        %v4301 = vunpack.c.h.b16 %v1264
        %v4302 = vunpack.c.l.b16 %v1265
        %v4303 = vunpack.c.h.b16 %v1265
        %v4304 = vunpack.c.l.b16 %v1266
        %v4305 = vunpack.c.h.b16 %v1266
        %v4306 = vunpack.c.l.b16 %v1267
        %v4307 = vunpack.c.h.b16 %v1267
        %v4308 = vunpack.c.l.b16 %v1268
        %v4309 = vunpack.c.h.b16 %v1268
        %v4310 = vunpack.c.l.b16 %v1269
        %v4311 = vunpack.c.h.b16 %v1269
        %v4312 = vunpack.c.l.b16 %v1270
        %v4313 = vunpack.c.h.b16 %v1270
        %v4314 = vunpack.c.l.b16 %v1271
        %v4315 = vunpack.c.h.b16 %v1271
        %v4316 = vunpack.c.l.b16 %v1272
        %v4317 = vunpack.c.h.b16 %v1272
        %v4318 = vunpack.c.l.b16 %v1273
        %v4319 = vunpack.c.h.b16 %v1273
        %v4320 = vunpack.c.l.b16 %v1274
        %v4321 = vunpack.c.h.b16 %v1274
        %v4322 = vunpack.c.l.b16 %v1275
        %v4323 = vunpack.c.h.b16 %v1275
        %v4324 = vunpack.c.l.b16 %v1276
        %v4325 = vunpack.c.h.b16 %v1276
        %v4326 = vunpack.c.l.b16 %v1277
        %v4327 = vunpack.c.h.b16 %v1277
        %v4328 = vunpack.c.l.b16 %v1278
        %v4329 = vunpack.c.h.b16 %v1278
        %v4330 = vunpack.c.l.b16 %v1279
        %v4331 = vunpack.c.h.b16 %v1279
        %v4332 = vunpack.c.l.b16 %v1280
        %v4333 = vunpack.c.h.b16 %v1280
        %v4334 = vunpack.c.l.b16 %v1281
        %v4335 = vunpack.c.h.b16 %v1281
        %v4336 = vunpack.c.l.b16 %v1282
        %v4337 = vunpack.c.h.b16 %v1282
        %v4338 = vunpack.c.l.b16 %v1283
        %v4339 = vunpack.c.h.b16 %v1283
        %v4340 = vunpack.c.l.b16 %v1284
        %v4341 = vunpack.c.h.b16 %v1284
        %v4342 = vunpack.c.l.b16 %v1285
        %v4343 = vunpack.c.h.b16 %v1285
        %v4344 = vunpack.c.l.b16 %v1286
        %v4345 = vunpack.c.h.b16 %v1286
        %v4346 = vunpack.c.l.b16 %v1287
        %v4347 = vunpack.c.h.b16 %v1287
        %v4348 = vunpack.c.l.b16 %v1288
        %v4349 = vunpack.c.h.b16 %v1288
        %v4350 = vunpack.c.l.b16 %v1289
        %v4351 = vunpack.c.h.b16 %v1289
        %v4352 = vunpack.c.l.b16 %v1290
        %v4353 = vunpack.c.h.b16 %v1290
        %v4354 = vunpack.c.l.b16 %v1291
        %v4355 = vunpack.c.h.b16 %v1291
        %v4356 = vunpack.c.l.b16 %v1292
        %v4357 = vunpack.c.h.b16 %v1292
        %v4358 = vunpack.c.l.b16 %v1293
        %v4359 = vunpack.c.h.b16 %v1293
        %v4360 = vunpack.c.l.b16 %v1294
        %v4361 = vunpack.c.h.b16 %v1294
        %v4362 = vunpack.c.l.b16 %v1295
        %v4363 = vunpack.c.h.b16 %v1295
        %v4364 = vunpack.c.l.b16 %v1296
        %v4365 = vunpack.c.h.b16 %v1296
        %v4366 = vunpack.c.l.b16 %v1297
        %v4367 = vunpack.c.h.b16 %v1297
        %v4368 = vunpack.c.l.b16 %v1298
        %v4369 = vunpack.c.h.b16 %v1298
        %v4370 = vunpack.c.l.b16 %v1299
        %v4371 = vunpack.c.h.b16 %v1299
        %v4372 = vpack.c.b16 %v2328, %v2324
        %v4373 = vpack.c.b16 %v2329, %v2325
        %v4374 = vpack.c.b16 %v2330, %v2326
        %v4375 = vpack.c.b16 %v2331, %v2327
        %v4376 = vpack.c.b16 %v2336, %v2332
        %v4377 = vpack.c.b16 %v2337, %v2333
        %v4378 = vpack.c.b16 %v2338, %v2334
        %v4379 = vpack.c.b16 %v2339, %v2335
        %v4380 = vpack.c.b16 %v2344, %v2340
        %v4381 = vpack.c.b16 %v2345, %v2341
        %v4382 = vpack.c.b16 %v2346, %v2342
        %v4383 = vpack.c.b16 %v2347, %v2343
        %v4384 = vpack.c.b16 %v2352, %v2348
        %v4385 = vpack.c.b16 %v2353, %v2349
        %v4386 = vpack.c.b16 %v2354, %v2350
        %v4387 = vpack.c.b16 %v2355, %v2351
        %v4388 = vpack.c.b16 %v2360, %v2356
        %v4389 = vpack.c.b16 %v2361, %v2357
        %v4390 = vpack.c.b16 %v2362, %v2358
        %v4391 = vpack.c.b16 %v2363, %v2359
        %v4392 = vpack.c.b16 %v2368, %v2364
        %v4393 = vpack.c.b16 %v2369, %v2365
        %v4394 = vpack.c.b16 %v2370, %v2366
        %v4395 = vpack.c.b16 %v2371, %v2367
        %v4396 = vpack.c.b16 %v2376, %v2372
        %v4397 = vpack.c.b16 %v2377, %v2373
        %v4398 = vpack.c.b16 %v2378, %v2374
        %v4399 = vpack.c.b16 %v2379, %v2375
        %v4400 = vpack.c.b16 %v2384, %v2380
        %v4401 = vpack.c.b16 %v2385, %v2381
        %v4402 = vpack.c.b16 %v2386, %v2382
        %v4403 = vpack.c.b16 %v2387, %v2383
        %v4404 = vpack.c.b16 %v2392, %v2388
        %v4405 = vpack.c.b16 %v2393, %v2389
        %v4406 = vpack.c.b16 %v2394, %v2390
        %v4407 = vpack.c.b16 %v2395, %v2391
        %v4408 = vpack.c.b16 %v2400, %v2396
        %v4409 = vpack.c.b16 %v2401, %v2397
        %v4410 = vpack.c.b16 %v2402, %v2398
        %v4411 = vpack.c.b16 %v2403, %v2399
        %v4412 = vpack.c.b16 %v2408, %v2404
        %v4413 = vpack.c.b16 %v2409, %v2405
        %v4414 = vpack.c.b16 %v2410, %v2406
        %v4415 = vpack.c.b16 %v2411, %v2407
        %v4416 = vpack.c.b16 %v2416, %v2412
        %v4417 = vpack.c.b16 %v2417, %v2413
        %v4418 = vpack.c.b16 %v2418, %v2414
        %v4419 = vpack.c.b16 %v2419, %v2415
        %v4420 = vpack.c.b16 %v2424, %v2420
        %v4421 = vpack.c.b16 %v2425, %v2421
        %v4422 = vpack.c.b16 %v2426, %v2422
        %v4423 = vpack.c.b16 %v2427, %v2423
        %v4424 = vpack.c.b16 %v2432, %v2428
        %v4425 = vpack.c.b16 %v2433, %v2429
        %v4426 = vpack.c.b16 %v2434, %v2430
        %v4427 = vpack.c.b16 %v2435, %v2431
        %v4428 = vpack.c.b16 %v2440, %v2436
        %v4429 = vpack.c.b16 %v2441, %v2437
        %v4430 = vpack.c.b16 %v2442, %v2438
        %v4431 = vpack.c.b16 %v2443, %v2439
        %v4432 = vpack.c.b16 %v2448, %v2444
        %v4433 = vpack.c.b16 %v2449, %v2445
        %v4434 = vpack.c.b16 %v2450, %v2446
        %v4435 = vpack.c.b16 %v2451, %v2447
        %v4436 = vpack.c.b16 %v2456, %v2452
        %v4437 = vpack.c.b16 %v2457, %v2453
        %v4438 = vpack.c.b16 %v2458, %v2454
        %v4439 = vpack.c.b16 %v2459, %v2455
        %v4440 = vpack.c.b16 %v2464, %v2460
        %v4441 = vpack.c.b16 %v2465, %v2461
        %v4442 = vpack.c.b16 %v2466, %v2462
        %v4443 = vpack.c.b16 %v2467, %v2463
        %v4444 = vpack.c.b16 %v2472, %v2468
        %v4445 = vpack.c.b16 %v2473, %v2469
        %v4446 = vpack.c.b16 %v2474, %v2470
        %v4447 = vpack.c.b16 %v2475, %v2471
        %v4448 = vpack.c.b16 %v2480, %v2476
        %v4449 = vpack.c.b16 %v2481, %v2477
        %v4450 = vpack.c.b16 %v2482, %v2478
        %v4451 = vpack.c.b16 %v2483, %v2479
        %v4452 = vpack.c.b16 %v2488, %v2484
        %v4453 = vpack.c.b16 %v2489, %v2485
        %v4454 = vpack.c.b16 %v2490, %v2486
        %v4455 = vpack.c.b16 %v2491, %v2487
        %v4456 = vpack.c.b16 %v2496, %v2492
        %v4457 = vpack.c.b16 %v2497, %v2493
        %v4458 = vpack.c.b16 %v2498, %v2494
        %v4459 = vpack.c.b16 %v2499, %v2495
        %v4460 = vpack.c.b16 %v2504, %v2500
        %v4461 = vpack.c.b16 %v2505, %v2501
        %v4462 = vpack.c.b16 %v2506, %v2502
        %v4463 = vpack.c.b16 %v2507, %v2503
        %v4464 = vpack.c.b16 %v2512, %v2508
        %v4465 = vpack.c.b16 %v2513, %v2509
        %v4466 = vpack.c.b16 %v2514, %v2510
        %v4467 = vpack.c.b16 %v2515, %v2511
        %v4468 = vpack.c.b16 %v2520, %v2516
        %v4469 = vpack.c.b16 %v2521, %v2517
        %v4470 = vpack.c.b16 %v2522, %v2518
        %v4471 = vpack.c.b16 %v2523, %v2519
        %v4472 = vpack.c.b16 %v2528, %v2524
        %v4473 = vpack.c.b16 %v2529, %v2525
        %v4474 = vpack.c.b16 %v2530, %v2526
        %v4475 = vpack.c.b16 %v2531, %v2527
        %v4476 = vpack.c.b16 %v2536, %v2532
        %v4477 = vpack.c.b16 %v2537, %v2533
        %v4478 = vpack.c.b16 %v2538, %v2534
        %v4479 = vpack.c.b16 %v2539, %v2535
        %v4480 = vpack.c.b16 %v2544, %v2540
        %v4481 = vpack.c.b16 %v2545, %v2541
        %v4482 = vpack.c.b16 %v2546, %v2542
        %v4483 = vpack.c.b16 %v2547, %v2543
        %v4484 = vpack.c.b16 %v2552, %v2548
        %v4485 = vpack.c.b16 %v2553, %v2549
        %v4486 = vpack.c.b16 %v2554, %v2550
        %v4487 = vpack.c.b16 %v2555, %v2551
        %v4488 = vpack.c.b16 %v2560, %v2556
        %v4489 = vpack.c.b16 %v2561, %v2557
        %v4490 = vpack.c.b16 %v2562, %v2558
        %v4491 = vpack.c.b16 %v2563, %v2559
        %v4492 = vpack.c.b16 %v2568, %v2564
        %v4493 = vpack.c.b16 %v2569, %v2565
        %v4494 = vpack.c.b16 %v2570, %v2566
        %v4495 = vpack.c.b16 %v2571, %v2567
        %v4496 = vpack.c.b16 %v2576, %v2572
        %v4497 = vpack.c.b16 %v2577, %v2573
        %v4498 = vpack.c.b16 %v2578, %v2574
        %v4499 = vpack.c.b16 %v2579, %v2575
        %v4500 = vpack.c.b16 %v2584, %v2580
        %v4501 = vpack.c.b16 %v2585, %v2581
        %v4502 = vpack.c.b16 %v2586, %v2582
        %v4503 = vpack.c.b16 %v2587, %v2583
        %v4504 = vpack.c.b16 %v2592, %v2588
        %v4505 = vpack.c.b16 %v2593, %v2589
        %v4506 = vpack.c.b16 %v2594, %v2590
        %v4507 = vpack.c.b16 %v2595, %v2591
        %v4508 = vpack.c.b16 %v2600, %v2596
        %v4509 = vpack.c.b16 %v2601, %v2597
        %v4510 = vpack.c.b16 %v2602, %v2598
        %v4511 = vpack.c.b16 %v2603, %v2599
        %v4512 = vpack.c.b16 %v2608, %v2604
        %v4513 = vpack.c.b16 %v2609, %v2605
        %v4514 = vpack.c.b16 %v2610, %v2606
        %v4515 = vpack.c.b16 %v2611, %v2607
        %v4516 = vpack.c.b16 %v2616, %v2612
        %v4517 = vpack.c.b16 %v2617, %v2613
        %v4518 = vpack.c.b16 %v2618, %v2614
        %v4519 = vpack.c.b16 %v2619, %v2615
        %v4520 = vpack.c.b16 %v2624, %v2620
        %v4521 = vpack.c.b16 %v2625, %v2621
        %v4522 = vpack.c.b16 %v2626, %v2622
        %v4523 = vpack.c.b16 %v2627, %v2623
        %v4524 = vpack.c.b16 %v2632, %v2628
        %v4525 = vpack.c.b16 %v2633, %v2629
        %v4526 = vpack.c.b16 %v2634, %v2630
        %v4527 = vpack.c.b16 %v2635, %v2631
        %v4528 = vpack.c.b16 %v2640, %v2636
        %v4529 = vpack.c.b16 %v2641, %v2637
        %v4530 = vpack.c.b16 %v2642, %v2638
        %v4531 = vpack.c.b16 %v2643, %v2639
        %v4532 = vpack.c.b16 %v2648, %v2644
        %v4533 = vpack.c.b16 %v2649, %v2645
        %v4534 = vpack.c.b16 %v2650, %v2646
        %v4535 = vpack.c.b16 %v2651, %v2647
        %v4536 = vpack.c.b16 %v2656, %v2652
        %v4537 = vpack.c.b16 %v2657, %v2653
        %v4538 = vpack.c.b16 %v2658, %v2654
        %v4539 = vpack.c.b16 %v2659, %v2655
        %v4540 = vpack.c.b16 %v2664, %v2660
        %v4541 = vpack.c.b16 %v2665, %v2661
        %v4542 = vpack.c.b16 %v2666, %v2662
        %v4543 = vpack.c.b16 %v2667, %v2663
        %v4544 = vpack.c.b16 %v2672, %v2668
        %v4545 = vpack.c.b16 %v2673, %v2669
        %v4546 = vpack.c.b16 %v2674, %v2670
        %v4547 = vpack.c.b16 %v2675, %v2671
        %v4548 = vpack.c.b16 %v2680, %v2676
        %v4549 = vpack.c.b16 %v2681, %v2677
        %v4550 = vpack.c.b16 %v2682, %v2678
        %v4551 = vpack.c.b16 %v2683, %v2679
        %v4552 = vpack.c.b16 %v2688, %v2684
        %v4553 = vpack.c.b16 %v2689, %v2685
        %v4554 = vpack.c.b16 %v2690, %v2686
        %v4555 = vpack.c.b16 %v2691, %v2687
        %v4556 = vpack.c.b16 %v2696, %v2692
        %v4557 = vpack.c.b16 %v2697, %v2693
        %v4558 = vpack.c.b16 %v2698, %v2694
        %v4559 = vpack.c.b16 %v2699, %v2695
        %v4560 = vpack.c.b16 %v2704, %v2700
        %v4561 = vpack.c.b16 %v2705, %v2701
        %v4562 = vpack.c.b16 %v2706, %v2702
        %v4563 = vpack.c.b16 %v2707, %v2703
        %v4564 = vpack.c.b16 %v2712, %v2708
        %v4565 = vpack.c.b16 %v2713, %v2709
        %v4566 = vpack.c.b16 %v2714, %v2710
        %v4567 = vpack.c.b16 %v2715, %v2711
        %v4568 = vpack.c.b16 %v2720, %v2716
        %v4569 = vpack.c.b16 %v2721, %v2717
        %v4570 = vpack.c.b16 %v2722, %v2718
        %v4571 = vpack.c.b16 %v2723, %v2719
        %v4572 = vpack.c.b16 %v2728, %v2724
        %v4573 = vpack.c.b16 %v2729, %v2725
        %v4574 = vpack.c.b16 %v2730, %v2726
        %v4575 = vpack.c.b16 %v2731, %v2727
        %v4576 = vpack.c.b16 %v2736, %v2732
        %v4577 = vpack.c.b16 %v2737, %v2733
        %v4578 = vpack.c.b16 %v2738, %v2734
        %v4579 = vpack.c.b16 %v2739, %v2735
        %v4580 = vpack.c.b16 %v2744, %v2740
        %v4581 = vpack.c.b16 %v2745, %v2741
        %v4582 = vpack.c.b16 %v2746, %v2742
        %v4583 = vpack.c.b16 %v2747, %v2743
        %v4584 = vpack.c.b16 %v2752, %v2748
        %v4585 = vpack.c.b16 %v2753, %v2749
        %v4586 = vpack.c.b16 %v2754, %v2750
        %v4587 = vpack.c.b16 %v2755, %v2751
        %v4588 = vpack.c.b16 %v2760, %v2756
        %v4589 = vpack.c.b16 %v2761, %v2757
        %v4590 = vpack.c.b16 %v2762, %v2758
        %v4591 = vpack.c.b16 %v2763, %v2759
        %v4592 = vpack.c.b16 %v2768, %v2764
        %v4593 = vpack.c.b16 %v2769, %v2765
        %v4594 = vpack.c.b16 %v2770, %v2766
        %v4595 = vpack.c.b16 %v2771, %v2767
        %v4596 = vpack.c.b16 %v2776, %v2772
        %v4597 = vpack.c.b16 %v2777, %v2773
        %v4598 = vpack.c.b16 %v2778, %v2774
        %v4599 = vpack.c.b16 %v2779, %v2775
        %v4600 = vpack.c.b16 %v2784, %v2780
        %v4601 = vpack.c.b16 %v2785, %v2781
        %v4602 = vpack.c.b16 %v2786, %v2782
        %v4603 = vpack.c.b16 %v2787, %v2783
        %v4604 = vpack.c.b16 %v2792, %v2788
        %v4605 = vpack.c.b16 %v2793, %v2789
        %v4606 = vpack.c.b16 %v2794, %v2790
        %v4607 = vpack.c.b16 %v2795, %v2791
        %v4608 = vpack.c.b16 %v2800, %v2796
        %v4609 = vpack.c.b16 %v2801, %v2797
        %v4610 = vpack.c.b16 %v2802, %v2798
        %v4611 = vpack.c.b16 %v2803, %v2799
        %v4612 = vpack.c.b16 %v2808, %v2804
        %v4613 = vpack.c.b16 %v2809, %v2805
        %v4614 = vpack.c.b16 %v2810, %v2806
        %v4615 = vpack.c.b16 %v2811, %v2807
        %v4616 = vpack.c.b16 %v2816, %v2812
        %v4617 = vpack.c.b16 %v2817, %v2813
        %v4618 = vpack.c.b16 %v2818, %v2814
        %v4619 = vpack.c.b16 %v2819, %v2815
        %v4620 = vpack.c.b16 %v2824, %v2820
        %v4621 = vpack.c.b16 %v2825, %v2821
        %v4622 = vpack.c.b16 %v2826, %v2822
        %v4623 = vpack.c.b16 %v2827, %v2823
        %v4624 = vpack.c.b16 %v2832, %v2828
        %v4625 = vpack.c.b16 %v2833, %v2829
        %v4626 = vpack.c.b16 %v2834, %v2830
        %v4627 = vpack.c.b16 %v2835, %v2831
        %v4628 = vpack.c.b16 %v2840, %v2836
        %v4629 = vpack.c.b16 %v2841, %v2837
        %v4630 = vpack.c.b16 %v2842, %v2838
        %v4631 = vpack.c.b16 %v2843, %v2839
        %v4632 = vpack.c.b16 %v2848, %v2844
        %v4633 = vpack.c.b16 %v2849, %v2845
        %v4634 = vpack.c.b16 %v2850, %v2846
        %v4635 = vpack.c.b16 %v2851, %v2847
        %v4636 = vpack.c.b16 %v2856, %v2852
        %v4637 = vpack.c.b16 %v2857, %v2853
        %v4638 = vpack.c.b16 %v2858, %v2854
        %v4639 = vpack.c.b16 %v2859, %v2855
        %v4640 = vpack.c.b16 %v2864, %v2860
        %v4641 = vpack.c.b16 %v2865, %v2861
        %v4642 = vpack.c.b16 %v2866, %v2862
        %v4643 = vpack.c.b16 %v2867, %v2863
        %v4644 = vpack.c.b16 %v2872, %v2868
        %v4645 = vpack.c.b16 %v2873, %v2869
        %v4646 = vpack.c.b16 %v2874, %v2870
        %v4647 = vpack.c.b16 %v2875, %v2871
        %v4648 = vpack.c.b16 %v2880, %v2876
        %v4649 = vpack.c.b16 %v2881, %v2877
        %v4650 = vpack.c.b16 %v2882, %v2878
        %v4651 = vpack.c.b16 %v2883, %v2879
        %v4652 = vpack.c.b16 %v2888, %v2884
        %v4653 = vpack.c.b16 %v2889, %v2885
        %v4654 = vpack.c.b16 %v2890, %v2886
        %v4655 = vpack.c.b16 %v2891, %v2887
        %v4656 = vpack.c.b16 %v2896, %v2892
        %v4657 = vpack.c.b16 %v2897, %v2893
        %v4658 = vpack.c.b16 %v2898, %v2894
        %v4659 = vpack.c.b16 %v2899, %v2895
        %v4660 = vpack.c.b16 %v2904, %v2900
        %v4661 = vpack.c.b16 %v2905, %v2901
        %v4662 = vpack.c.b16 %v2906, %v2902
        %v4663 = vpack.c.b16 %v2907, %v2903
        %v4664 = vpack.c.b16 %v2912, %v2908
        %v4665 = vpack.c.b16 %v2913, %v2909
        %v4666 = vpack.c.b16 %v2914, %v2910
        %v4667 = vpack.c.b16 %v2915, %v2911
        %v4668 = vpack.c.b16 %v2920, %v2916
        %v4669 = vpack.c.b16 %v2921, %v2917
        %v4670 = vpack.c.b16 %v2922, %v2918
        %v4671 = vpack.c.b16 %v2923, %v2919
        %v4672 = vpack.c.b16 %v2928, %v2924
        %v4673 = vpack.c.b16 %v2929, %v2925
        %v4674 = vpack.c.b16 %v2930, %v2926
        %v4675 = vpack.c.b16 %v2931, %v2927
        %v4676 = vpack.c.b16 %v2936, %v2932
        %v4677 = vpack.c.b16 %v2937, %v2933
        %v4678 = vpack.c.b16 %v2938, %v2934
        %v4679 = vpack.c.b16 %v2939, %v2935
        %v4680 = vpack.c.b16 %v2944, %v2940
        %v4681 = vpack.c.b16 %v2945, %v2941
        %v4682 = vpack.c.b16 %v2946, %v2942
        %v4683 = vpack.c.b16 %v2947, %v2943
        %v4684 = vpack.c.b16 %v2952, %v2948
        %v4685 = vpack.c.b16 %v2953, %v2949
        %v4686 = vpack.c.b16 %v2954, %v2950
        %v4687 = vpack.c.b16 %v2955, %v2951
        %v4688 = vpack.c.b16 %v2960, %v2956
        %v4689 = vpack.c.b16 %v2961, %v2957
        %v4690 = vpack.c.b16 %v2962, %v2958
        %v4691 = vpack.c.b16 %v2963, %v2959
        %v4692 = vpack.c.b16 %v2968, %v2964
        %v4693 = vpack.c.b16 %v2969, %v2965
        %v4694 = vpack.c.b16 %v2970, %v2966
        %v4695 = vpack.c.b16 %v2971, %v2967
        %v4696 = vpack.c.b16 %v2976, %v2972
        %v4697 = vpack.c.b16 %v2977, %v2973
        %v4698 = vpack.c.b16 %v2978, %v2974
        %v4699 = vpack.c.b16 %v2979, %v2975
        %v4700 = vpack.c.b16 %v2984, %v2980
        %v4701 = vpack.c.b16 %v2985, %v2981
        %v4702 = vpack.c.b16 %v2986, %v2982
        %v4703 = vpack.c.b16 %v2987, %v2983
        %v4704 = vpack.c.b16 %v2992, %v2988
        %v4705 = vpack.c.b16 %v2993, %v2989
        %v4706 = vpack.c.b16 %v2994, %v2990
        %v4707 = vpack.c.b16 %v2995, %v2991
        %v4708 = vpack.c.b16 %v3000, %v2996
        %v4709 = vpack.c.b16 %v3001, %v2997
        %v4710 = vpack.c.b16 %v3002, %v2998
        %v4711 = vpack.c.b16 %v3003, %v2999
        %v4712 = vpack.c.b16 %v3008, %v3004
        %v4713 = vpack.c.b16 %v3009, %v3005
        %v4714 = vpack.c.b16 %v3010, %v3006
        %v4715 = vpack.c.b16 %v3011, %v3007
        %v4716 = vpack.c.b16 %v3016, %v3012
        %v4717 = vpack.c.b16 %v3017, %v3013
        %v4718 = vpack.c.b16 %v3018, %v3014
        %v4719 = vpack.c.b16 %v3019, %v3015
        %v4720 = vpack.c.b16 %v3024, %v3020
        %v4721 = vpack.c.b16 %v3025, %v3021
        %v4722 = vpack.c.b16 %v3026, %v3022
        %v4723 = vpack.c.b16 %v3027, %v3023
        %v4724 = vpack.c.b16 %v3032, %v3028
        %v4725 = vpack.c.b16 %v3033, %v3029
        %v4726 = vpack.c.b16 %v3034, %v3030
        %v4727 = vpack.c.b16 %v3035, %v3031
        %v4728 = vpack.c.b16 %v3040, %v3036
        %v4729 = vpack.c.b16 %v3041, %v3037
        %v4730 = vpack.c.b16 %v3042, %v3038
        %v4731 = vpack.c.b16 %v3043, %v3039
        %v4732 = vpack.c.b16 %v3048, %v3044
        %v4733 = vpack.c.b16 %v3049, %v3045
        %v4734 = vpack.c.b16 %v3050, %v3046
        %v4735 = vpack.c.b16 %v3051, %v3047
        %v4736 = vpack.c.b16 %v3056, %v3052
        %v4737 = vpack.c.b16 %v3057, %v3053
        %v4738 = vpack.c.b16 %v3058, %v3054
        %v4739 = vpack.c.b16 %v3059, %v3055
        %v4740 = vpack.c.b16 %v3064, %v3060
        %v4741 = vpack.c.b16 %v3065, %v3061
        %v4742 = vpack.c.b16 %v3066, %v3062
        %v4743 = vpack.c.b16 %v3067, %v3063
        %v4744 = vpack.c.b16 %v3072, %v3068
        %v4745 = vpack.c.b16 %v3073, %v3069
        %v4746 = vpack.c.b16 %v3074, %v3070
        %v4747 = vpack.c.b16 %v3075, %v3071
        %v4748 = vpack.c.b16 %v3080, %v3076
        %v4749 = vpack.c.b16 %v3081, %v3077
        %v4750 = vpack.c.b16 %v3082, %v3078
        %v4751 = vpack.c.b16 %v3083, %v3079
        %v4752 = vpack.c.b16 %v3088, %v3084
        %v4753 = vpack.c.b16 %v3089, %v3085
        %v4754 = vpack.c.b16 %v3090, %v3086
        %v4755 = vpack.c.b16 %v3091, %v3087
        %v4756 = vpack.c.b16 %v3096, %v3092
        %v4757 = vpack.c.b16 %v3097, %v3093
        %v4758 = vpack.c.b16 %v3098, %v3094
        %v4759 = vpack.c.b16 %v3099, %v3095
        %v4760 = vpack.c.b16 %v3104, %v3100
        %v4761 = vpack.c.b16 %v3105, %v3101
        %v4762 = vpack.c.b16 %v3106, %v3102
        %v4763 = vpack.c.b16 %v3107, %v3103
        %v4764 = vpack.c.b16 %v3112, %v3108
        %v4765 = vpack.c.b16 %v3113, %v3109
        %v4766 = vpack.c.b16 %v3114, %v3110
        %v4767 = vpack.c.b16 %v3115, %v3111
        %v4768 = vpack.c.b16 %v3120, %v3116
        %v4769 = vpack.c.b16 %v3121, %v3117
        %v4770 = vpack.c.b16 %v3122, %v3118
        %v4771 = vpack.c.b16 %v3123, %v3119
        %v4772 = vpack.c.b16 %v3128, %v3124
        %v4773 = vpack.c.b16 %v3129, %v3125
        %v4774 = vpack.c.b16 %v3130, %v3126
        %v4775 = vpack.c.b16 %v3131, %v3127
        %v4776 = vpack.c.b16 %v3136, %v3132
        %v4777 = vpack.c.b16 %v3137, %v3133
        %v4778 = vpack.c.b16 %v3138, %v3134
        %v4779 = vpack.c.b16 %v3139, %v3135
        %v4780 = vpack.c.b16 %v3144, %v3140
        %v4781 = vpack.c.b16 %v3145, %v3141
        %v4782 = vpack.c.b16 %v3146, %v3142
        %v4783 = vpack.c.b16 %v3147, %v3143
        %v4784 = vpack.c.b16 %v3152, %v3148
        %v4785 = vpack.c.b16 %v3153, %v3149
        %v4786 = vpack.c.b16 %v3154, %v3150
        %v4787 = vpack.c.b16 %v3155, %v3151
        %v4788 = vpack.c.b16 %v3160, %v3156
        %v4789 = vpack.c.b16 %v3161, %v3157
        %v4790 = vpack.c.b16 %v3162, %v3158
        %v4791 = vpack.c.b16 %v3163, %v3159
        %v4792 = vpack.c.b16 %v3168, %v3164
        %v4793 = vpack.c.b16 %v3169, %v3165
        %v4794 = vpack.c.b16 %v3170, %v3166
        %v4795 = vpack.c.b16 %v3171, %v3167
        %v4796 = vpack.c.b16 %v3176, %v3172
        %v4797 = vpack.c.b16 %v3177, %v3173
        %v4798 = vpack.c.b16 %v3178, %v3174
        %v4799 = vpack.c.b16 %v3179, %v3175
        %v4800 = vpack.c.b16 %v3184, %v3180
        %v4801 = vpack.c.b16 %v3185, %v3181
        %v4802 = vpack.c.b16 %v3186, %v3182
        %v4803 = vpack.c.b16 %v3187, %v3183
        %v4804 = vpack.c.b16 %v3192, %v3188
        %v4805 = vpack.c.b16 %v3193, %v3189
        %v4806 = vpack.c.b16 %v3194, %v3190
        %v4807 = vpack.c.b16 %v3195, %v3191
        %v4808 = vpack.c.b16 %v3200, %v3196
        %v4809 = vpack.c.b16 %v3201, %v3197
        %v4810 = vpack.c.b16 %v3202, %v3198
        %v4811 = vpack.c.b16 %v3203, %v3199
        %v4812 = vpack.c.b16 %v3208, %v3204
        %v4813 = vpack.c.b16 %v3209, %v3205
        %v4814 = vpack.c.b16 %v3210, %v3206
        %v4815 = vpack.c.b16 %v3211, %v3207
        %v4816 = vpack.c.b16 %v3216, %v3212
        %v4817 = vpack.c.b16 %v3217, %v3213
        %v4818 = vpack.c.b16 %v3218, %v3214
        %v4819 = vpack.c.b16 %v3219, %v3215
        %v4820 = vpack.c.b16 %v3224, %v3220
        %v4821 = vpack.c.b16 %v3225, %v3221
        %v4822 = vpack.c.b16 %v3226, %v3222
        %v4823 = vpack.c.b16 %v3227, %v3223
        %v4824 = vpack.c.b16 %v3232, %v3228
        %v4825 = vpack.c.b16 %v3233, %v3229
        %v4826 = vpack.c.b16 %v3234, %v3230
        %v4827 = vpack.c.b16 %v3235, %v3231
        %v4828 = vpack.c.b16 %v3240, %v3236
        %v4829 = vpack.c.b16 %v3241, %v3237
        %v4830 = vpack.c.b16 %v3242, %v3238
        %v4831 = vpack.c.b16 %v3243, %v3239
        %v4832 = vpack.c.b16 %v3248, %v3244
        %v4833 = vpack.c.b16 %v3249, %v3245
        %v4834 = vpack.c.b16 %v3250, %v3246
        %v4835 = vpack.c.b16 %v3251, %v3247
        %v4836 = vpack.c.b16 %v3256, %v3252
        %v4837 = vpack.c.b16 %v3257, %v3253
        %v4838 = vpack.c.b16 %v3258, %v3254
        %v4839 = vpack.c.b16 %v3259, %v3255
        %v4840 = vpack.c.b16 %v3264, %v3260
        %v4841 = vpack.c.b16 %v3265, %v3261
        %v4842 = vpack.c.b16 %v3266, %v3262
        %v4843 = vpack.c.b16 %v3267, %v3263
        %v4844 = vpack.c.b16 %v3272, %v3268
        %v4845 = vpack.c.b16 %v3273, %v3269
        %v4846 = vpack.c.b16 %v3274, %v3270
        %v4847 = vpack.c.b16 %v3275, %v3271
        %v4848 = vpack.c.b16 %v3280, %v3276
        %v4849 = vpack.c.b16 %v3281, %v3277
        %v4850 = vpack.c.b16 %v3282, %v3278
        %v4851 = vpack.c.b16 %v3283, %v3279
        %v4852 = vpack.c.b16 %v3288, %v3284
        %v4853 = vpack.c.b16 %v3289, %v3285
        %v4854 = vpack.c.b16 %v3290, %v3286
        %v4855 = vpack.c.b16 %v3291, %v3287
        %v4856 = vpack.c.b16 %v3296, %v3292
        %v4857 = vpack.c.b16 %v3297, %v3293
        %v4858 = vpack.c.b16 %v3298, %v3294
        %v4859 = vpack.c.b16 %v3299, %v3295
        %v4860 = vpack.c.b16 %v3304, %v3300
        %v4861 = vpack.c.b16 %v3305, %v3301
        %v4862 = vpack.c.b16 %v3306, %v3302
        %v4863 = vpack.c.b16 %v3307, %v3303
        %v4864 = vpack.c.b16 %v3312, %v3308
        %v4865 = vpack.c.b16 %v3313, %v3309
        %v4866 = vpack.c.b16 %v3314, %v3310
        %v4867 = vpack.c.b16 %v3315, %v3311
        %v4868 = vpack.c.b16 %v3320, %v3316
        %v4869 = vpack.c.b16 %v3321, %v3317
        %v4870 = vpack.c.b16 %v3322, %v3318
        %v4871 = vpack.c.b16 %v3323, %v3319
        %v4872 = vpack.c.b16 %v3328, %v3324
        %v4873 = vpack.c.b16 %v3329, %v3325
        %v4874 = vpack.c.b16 %v3330, %v3326
        %v4875 = vpack.c.b16 %v3331, %v3327
        %v4876 = vpack.c.b16 %v3336, %v3332
        %v4877 = vpack.c.b16 %v3337, %v3333
        %v4878 = vpack.c.b16 %v3338, %v3334
        %v4879 = vpack.c.b16 %v3339, %v3335
        %v4880 = vpack.c.b16 %v3344, %v3340
        %v4881 = vpack.c.b16 %v3345, %v3341
        %v4882 = vpack.c.b16 %v3346, %v3342
        %v4883 = vpack.c.b16 %v3347, %v3343
        %v4884 = vpack.c.b16 %v3352, %v3348
        %v4885 = vpack.c.b16 %v3353, %v3349
        %v4886 = vpack.c.b16 %v3354, %v3350
        %v4887 = vpack.c.b16 %v3355, %v3351
        %v4888 = vpack.c.b16 %v3360, %v3356
        %v4889 = vpack.c.b16 %v3361, %v3357
        %v4890 = vpack.c.b16 %v3362, %v3358
        %v4891 = vpack.c.b16 %v3363, %v3359
        %v4892 = vpack.c.b16 %v3368, %v3364
        %v4893 = vpack.c.b16 %v3369, %v3365
        %v4894 = vpack.c.b16 %v3370, %v3366
        %v4895 = vpack.c.b16 %v3371, %v3367
        %v4896 = vpack.c.b16 %v3376, %v3372
        %v4897 = vpack.c.b16 %v3377, %v3373
        %v4898 = vpack.c.b16 %v3378, %v3374
        %v4899 = vpack.c.b16 %v3379, %v3375
        %v4900 = vpack.c.b16 %v3384, %v3380
        %v4901 = vpack.c.b16 %v3385, %v3381
        %v4902 = vpack.c.b16 %v3386, %v3382
        %v4903 = vpack.c.b16 %v3387, %v3383
        %v4904 = vpack.c.b16 %v3392, %v3388
        %v4905 = vpack.c.b16 %v3393, %v3389
        %v4906 = vpack.c.b16 %v3394, %v3390
        %v4907 = vpack.c.b16 %v3395, %v3391
        %v4908 = vpack.c.b16 %v3400, %v3396
        %v4909 = vpack.c.b16 %v3401, %v3397
        %v4910 = vpack.c.b16 %v3402, %v3398
        %v4911 = vpack.c.b16 %v3403, %v3399
        %v4912 = vpack.c.b16 %v3408, %v3404
        %v4913 = vpack.c.b16 %v3409, %v3405
        %v4914 = vpack.c.b16 %v3410, %v3406
        %v4915 = vpack.c.b16 %v3411, %v3407
        %v4916 = vpack.c.b16 %v3416, %v3412
        %v4917 = vpack.c.b16 %v3417, %v3413
        %v4918 = vpack.c.b16 %v3418, %v3414
        %v4919 = vpack.c.b16 %v3419, %v3415
        %v4920 = vpack.c.b16 %v3424, %v3420
        %v4921 = vpack.c.b16 %v3425, %v3421
        %v4922 = vpack.c.b16 %v3426, %v3422
        %v4923 = vpack.c.b16 %v3427, %v3423
        %v4924 = vpack.c.b16 %v3432, %v3428
        %v4925 = vpack.c.b16 %v3433, %v3429
        %v4926 = vpack.c.b16 %v3434, %v3430
        %v4927 = vpack.c.b16 %v3435, %v3431
        %v4928 = vpack.c.b16 %v3440, %v3436
        %v4929 = vpack.c.b16 %v3441, %v3437
        %v4930 = vpack.c.b16 %v3442, %v3438
        %v4931 = vpack.c.b16 %v3443, %v3439
        %v4932 = vpack.c.b16 %v3448, %v3444
        %v4933 = vpack.c.b16 %v3449, %v3445
        %v4934 = vpack.c.b16 %v3450, %v3446
        %v4935 = vpack.c.b16 %v3451, %v3447
        %v4936 = vpack.c.b16 %v3456, %v3452
        %v4937 = vpack.c.b16 %v3457, %v3453
        %v4938 = vpack.c.b16 %v3458, %v3454
        %v4939 = vpack.c.b16 %v3459, %v3455
        %v4940 = vpack.c.b16 %v3464, %v3460
        %v4941 = vpack.c.b16 %v3465, %v3461
        %v4942 = vpack.c.b16 %v3466, %v3462
        %v4943 = vpack.c.b16 %v3467, %v3463
        %v4944 = vpack.c.b16 %v3472, %v3468
        %v4945 = vpack.c.b16 %v3473, %v3469
        %v4946 = vpack.c.b16 %v3474, %v3470
        %v4947 = vpack.c.b16 %v3475, %v3471
        %v4948 = vpack.c.b16 %v3480, %v3476
        %v4949 = vpack.c.b16 %v3481, %v3477
        %v4950 = vpack.c.b16 %v3482, %v3478
        %v4951 = vpack.c.b16 %v3483, %v3479
        %v4952 = vpack.c.b16 %v3488, %v3484
        %v4953 = vpack.c.b16 %v3489, %v3485
        %v4954 = vpack.c.b16 %v3490, %v3486
        %v4955 = vpack.c.b16 %v3491, %v3487
        %v4956 = vpack.c.b16 %v3496, %v3492
        %v4957 = vpack.c.b16 %v3497, %v3493
        %v4958 = vpack.c.b16 %v3498, %v3494
        %v4959 = vpack.c.b16 %v3499, %v3495
        %v4960 = vpack.c.b16 %v3504, %v3500
        %v4961 = vpack.c.b16 %v3505, %v3501
        %v4962 = vpack.c.b16 %v3506, %v3502
        %v4963 = vpack.c.b16 %v3507, %v3503
        %v4964 = vpack.c.b16 %v3512, %v3508
        %v4965 = vpack.c.b16 %v3513, %v3509
        %v4966 = vpack.c.b16 %v3514, %v3510
        %v4967 = vpack.c.b16 %v3515, %v3511
        %v4968 = vpack.c.b16 %v3520, %v3516
        %v4969 = vpack.c.b16 %v3521, %v3517
        %v4970 = vpack.c.b16 %v3522, %v3518
        %v4971 = vpack.c.b16 %v3523, %v3519
        %v4972 = vpack.c.b16 %v3528, %v3524
        %v4973 = vpack.c.b16 %v3529, %v3525
        %v4974 = vpack.c.b16 %v3530, %v3526
        %v4975 = vpack.c.b16 %v3531, %v3527
        %v4976 = vpack.c.b16 %v3536, %v3532
        %v4977 = vpack.c.b16 %v3537, %v3533
        %v4978 = vpack.c.b16 %v3538, %v3534
        %v4979 = vpack.c.b16 %v3539, %v3535
        %v4980 = vpack.c.b16 %v3544, %v3540
        %v4981 = vpack.c.b16 %v3545, %v3541
        %v4982 = vpack.c.b16 %v3546, %v3542
        %v4983 = vpack.c.b16 %v3547, %v3543
        %v4984 = vpack.c.b16 %v3552, %v3548
        %v4985 = vpack.c.b16 %v3553, %v3549
        %v4986 = vpack.c.b16 %v3554, %v3550
        %v4987 = vpack.c.b16 %v3555, %v3551
        %v4988 = vpack.c.b16 %v3560, %v3556
        %v4989 = vpack.c.b16 %v3561, %v3557
        %v4990 = vpack.c.b16 %v3562, %v3558
        %v4991 = vpack.c.b16 %v3563, %v3559
        %v4992 = vpack.c.b16 %v3568, %v3564
        %v4993 = vpack.c.b16 %v3569, %v3565
        %v4994 = vpack.c.b16 %v3570, %v3566
        %v4995 = vpack.c.b16 %v3571, %v3567
        %v4996 = vpack.c.b16 %v3576, %v3572
        %v4997 = vpack.c.b16 %v3577, %v3573
        %v4998 = vpack.c.b16 %v3578, %v3574
        %v4999 = vpack.c.b16 %v3579, %v3575
        %v5000 = vpack.c.b16 %v3584, %v3580
        %v5001 = vpack.c.b16 %v3585, %v3581
        %v5002 = vpack.c.b16 %v3586, %v3582
        %v5003 = vpack.c.b16 %v3587, %v3583
        %v5004 = vpack.c.b16 %v3592, %v3588
        %v5005 = vpack.c.b16 %v3593, %v3589
        %v5006 = vpack.c.b16 %v3594, %v3590
        %v5007 = vpack.c.b16 %v3595, %v3591
        %v5008 = vpack.c.b16 %v3600, %v3596
        %v5009 = vpack.c.b16 %v3601, %v3597
        %v5010 = vpack.c.b16 %v3602, %v3598
        %v5011 = vpack.c.b16 %v3603, %v3599
        %v5012 = vpack.c.b16 %v3608, %v3604
        %v5013 = vpack.c.b16 %v3609, %v3605
        %v5014 = vpack.c.b16 %v3610, %v3606
        %v5015 = vpack.c.b16 %v3611, %v3607
        %v5016 = vpack.c.b16 %v3616, %v3612
        %v5017 = vpack.c.b16 %v3617, %v3613
        %v5018 = vpack.c.b16 %v3618, %v3614
        %v5019 = vpack.c.b16 %v3619, %v3615
        %v5020 = vpack.c.b16 %v3624, %v3620
        %v5021 = vpack.c.b16 %v3625, %v3621
        %v5022 = vpack.c.b16 %v3626, %v3622
        %v5023 = vpack.c.b16 %v3627, %v3623
        %v5024 = vpack.c.b16 %v3632, %v3628
        %v5025 = vpack.c.b16 %v3633, %v3629
        %v5026 = vpack.c.b16 %v3634, %v3630
        %v5027 = vpack.c.b16 %v3635, %v3631
        %v5028 = vpack.c.b16 %v3640, %v3636
        %v5029 = vpack.c.b16 %v3641, %v3637
        %v5030 = vpack.c.b16 %v3642, %v3638
        %v5031 = vpack.c.b16 %v3643, %v3639
        %v5032 = vpack.c.b16 %v3648, %v3644
        %v5033 = vpack.c.b16 %v3649, %v3645
        %v5034 = vpack.c.b16 %v3650, %v3646
        %v5035 = vpack.c.b16 %v3651, %v3647
        %v5036 = vpack.c.b16 %v3656, %v3652
        %v5037 = vpack.c.b16 %v3657, %v3653
        %v5038 = vpack.c.b16 %v3658, %v3654
        %v5039 = vpack.c.b16 %v3659, %v3655
        %v5040 = vpack.c.b16 %v3664, %v3660
        %v5041 = vpack.c.b16 %v3665, %v3661
        %v5042 = vpack.c.b16 %v3666, %v3662
        %v5043 = vpack.c.b16 %v3667, %v3663
        %v5044 = vpack.c.b16 %v3672, %v3668
        %v5045 = vpack.c.b16 %v3673, %v3669
        %v5046 = vpack.c.b16 %v3674, %v3670
        %v5047 = vpack.c.b16 %v3675, %v3671
        %v5048 = vpack.c.b16 %v3680, %v3676
        %v5049 = vpack.c.b16 %v3681, %v3677
        %v5050 = vpack.c.b16 %v3682, %v3678
        %v5051 = vpack.c.b16 %v3683, %v3679
        %v5052 = vpack.c.b16 %v3688, %v3684
        %v5053 = vpack.c.b16 %v3689, %v3685
        %v5054 = vpack.c.b16 %v3690, %v3686
        %v5055 = vpack.c.b16 %v3691, %v3687
        %v5056 = vpack.c.b16 %v3696, %v3692
        %v5057 = vpack.c.b16 %v3697, %v3693
        %v5058 = vpack.c.b16 %v3698, %v3694
        %v5059 = vpack.c.b16 %v3699, %v3695
        %v5060 = vpack.c.b16 %v3704, %v3700
        %v5061 = vpack.c.b16 %v3705, %v3701
        %v5062 = vpack.c.b16 %v3706, %v3702
        %v5063 = vpack.c.b16 %v3707, %v3703
        %v5064 = vpack.c.b16 %v3712, %v3708
        %v5065 = vpack.c.b16 %v3713, %v3709
        %v5066 = vpack.c.b16 %v3714, %v3710
        %v5067 = vpack.c.b16 %v3715, %v3711
        %v5068 = vpack.c.b16 %v3720, %v3716
        %v5069 = vpack.c.b16 %v3721, %v3717
        %v5070 = vpack.c.b16 %v3722, %v3718
        %v5071 = vpack.c.b16 %v3723, %v3719
        %v5072 = vpack.c.b16 %v3728, %v3724
        %v5073 = vpack.c.b16 %v3729, %v3725
        %v5074 = vpack.c.b16 %v3730, %v3726
        %v5075 = vpack.c.b16 %v3731, %v3727
        %v5076 = vpack.c.b16 %v3736, %v3732
        %v5077 = vpack.c.b16 %v3737, %v3733
        %v5078 = vpack.c.b16 %v3738, %v3734
        %v5079 = vpack.c.b16 %v3739, %v3735
        %v5080 = vpack.c.b16 %v3744, %v3740
        %v5081 = vpack.c.b16 %v3745, %v3741
        %v5082 = vpack.c.b16 %v3746, %v3742
        %v5083 = vpack.c.b16 %v3747, %v3743
        %v5084 = vpack.c.b16 %v3752, %v3748
        %v5085 = vpack.c.b16 %v3753, %v3749
        %v5086 = vpack.c.b16 %v3754, %v3750
        %v5087 = vpack.c.b16 %v3755, %v3751
        %v5088 = vpack.c.b16 %v3760, %v3756
        %v5089 = vpack.c.b16 %v3761, %v3757
        %v5090 = vpack.c.b16 %v3762, %v3758
        %v5091 = vpack.c.b16 %v3763, %v3759
        %v5092 = vpack.c.b16 %v3768, %v3764
        %v5093 = vpack.c.b16 %v3769, %v3765
        %v5094 = vpack.c.b16 %v3770, %v3766
        %v5095 = vpack.c.b16 %v3771, %v3767
        %v5096 = vpack.c.b16 %v3776, %v3772
        %v5097 = vpack.c.b16 %v3777, %v3773
        %v5098 = vpack.c.b16 %v3778, %v3774
        %v5099 = vpack.c.b16 %v3779, %v3775
        %v5100 = vpack.c.b16 %v3784, %v3780
        %v5101 = vpack.c.b16 %v3785, %v3781
        %v5102 = vpack.c.b16 %v3786, %v3782
        %v5103 = vpack.c.b16 %v3787, %v3783
        %v5104 = vpack.c.b16 %v3792, %v3788
        %v5105 = vpack.c.b16 %v3793, %v3789
        %v5106 = vpack.c.b16 %v3794, %v3790
        %v5107 = vpack.c.b16 %v3795, %v3791
        %v5108 = vpack.c.b16 %v3800, %v3796
        %v5109 = vpack.c.b16 %v3801, %v3797
        %v5110 = vpack.c.b16 %v3802, %v3798
        %v5111 = vpack.c.b16 %v3803, %v3799
        %v5112 = vpack.c.b16 %v3808, %v3804
        %v5113 = vpack.c.b16 %v3809, %v3805
        %v5114 = vpack.c.b16 %v3810, %v3806
        %v5115 = vpack.c.b16 %v3811, %v3807
        %v5116 = vpack.c.b16 %v3816, %v3812
        %v5117 = vpack.c.b16 %v3817, %v3813
        %v5118 = vpack.c.b16 %v3818, %v3814
        %v5119 = vpack.c.b16 %v3819, %v3815
        %v5120 = vpack.c.b16 %v3824, %v3820
        %v5121 = vpack.c.b16 %v3825, %v3821
        %v5122 = vpack.c.b16 %v3826, %v3822
        %v5123 = vpack.c.b16 %v3827, %v3823
        %v5124 = vpack.c.b16 %v3832, %v3828
        %v5125 = vpack.c.b16 %v3833, %v3829
        %v5126 = vpack.c.b16 %v3834, %v3830
        %v5127 = vpack.c.b16 %v3835, %v3831
        %v5128 = vpack.c.b16 %v3840, %v3836
        %v5129 = vpack.c.b16 %v3841, %v3837
        %v5130 = vpack.c.b16 %v3842, %v3838
        %v5131 = vpack.c.b16 %v3843, %v3839
        %v5132 = vpack.c.b16 %v3848, %v3844
        %v5133 = vpack.c.b16 %v3849, %v3845
        %v5134 = vpack.c.b16 %v3850, %v3846
        %v5135 = vpack.c.b16 %v3851, %v3847
        %v5136 = vpack.c.b16 %v3856, %v3852
        %v5137 = vpack.c.b16 %v3857, %v3853
        %v5138 = vpack.c.b16 %v3858, %v3854
        %v5139 = vpack.c.b16 %v3859, %v3855
        %v5140 = vpack.c.b16 %v3864, %v3860
        %v5141 = vpack.c.b16 %v3865, %v3861
        %v5142 = vpack.c.b16 %v3866, %v3862
        %v5143 = vpack.c.b16 %v3867, %v3863
        %v5144 = vpack.c.b16 %v3872, %v3868
        %v5145 = vpack.c.b16 %v3873, %v3869
        %v5146 = vpack.c.b16 %v3874, %v3870
        %v5147 = vpack.c.b16 %v3875, %v3871
        %v5148 = vpack.c.b16 %v3880, %v3876
        %v5149 = vpack.c.b16 %v3881, %v3877
        %v5150 = vpack.c.b16 %v3882, %v3878
        %v5151 = vpack.c.b16 %v3883, %v3879
        %v5152 = vpack.c.b16 %v3888, %v3884
        %v5153 = vpack.c.b16 %v3889, %v3885
        %v5154 = vpack.c.b16 %v3890, %v3886
        %v5155 = vpack.c.b16 %v3891, %v3887
        %v5156 = vpack.c.b16 %v3896, %v3892
        %v5157 = vpack.c.b16 %v3897, %v3893
        %v5158 = vpack.c.b16 %v3898, %v3894
        %v5159 = vpack.c.b16 %v3899, %v3895
        %v5160 = vpack.c.b16 %v3904, %v3900
        %v5161 = vpack.c.b16 %v3905, %v3901
        %v5162 = vpack.c.b16 %v3906, %v3902
        %v5163 = vpack.c.b16 %v3907, %v3903
        %v5164 = vpack.c.b16 %v3912, %v3908
        %v5165 = vpack.c.b16 %v3913, %v3909
        %v5166 = vpack.c.b16 %v3914, %v3910
        %v5167 = vpack.c.b16 %v3915, %v3911
        %v5168 = vpack.c.b16 %v3920, %v3916
        %v5169 = vpack.c.b16 %v3921, %v3917
        %v5170 = vpack.c.b16 %v3922, %v3918
        %v5171 = vpack.c.b16 %v3923, %v3919
        %v5172 = vpack.c.b16 %v3928, %v3924
        %v5173 = vpack.c.b16 %v3929, %v3925
        %v5174 = vpack.c.b16 %v3930, %v3926
        %v5175 = vpack.c.b16 %v3931, %v3927
        %v5176 = vpack.c.b16 %v3936, %v3932
        %v5177 = vpack.c.b16 %v3937, %v3933
        %v5178 = vpack.c.b16 %v3938, %v3934
        %v5179 = vpack.c.b16 %v3939, %v3935
        %v5180 = vpack.c.b16 %v3944, %v3940
        %v5181 = vpack.c.b16 %v3945, %v3941
        %v5182 = vpack.c.b16 %v3946, %v3942
        %v5183 = vpack.c.b16 %v3947, %v3943
        %v5184 = vpack.c.b16 %v3952, %v3948
        %v5185 = vpack.c.b16 %v3953, %v3949
        %v5186 = vpack.c.b16 %v3954, %v3950
        %v5187 = vpack.c.b16 %v3955, %v3951
        %v5188 = vpack.c.b16 %v3960, %v3956
        %v5189 = vpack.c.b16 %v3961, %v3957
        %v5190 = vpack.c.b16 %v3962, %v3958
        %v5191 = vpack.c.b16 %v3963, %v3959
        %v5192 = vpack.c.b16 %v3968, %v3964
        %v5193 = vpack.c.b16 %v3969, %v3965
        %v5194 = vpack.c.b16 %v3970, %v3966
        %v5195 = vpack.c.b16 %v3971, %v3967
        %v5196 = vpack.c.b16 %v3976, %v3972
        %v5197 = vpack.c.b16 %v3977, %v3973
        %v5198 = vpack.c.b16 %v3978, %v3974
        %v5199 = vpack.c.b16 %v3979, %v3975
        %v5200 = vpack.c.b16 %v3984, %v3980
        %v5201 = vpack.c.b16 %v3985, %v3981
        %v5202 = vpack.c.b16 %v3986, %v3982
        %v5203 = vpack.c.b16 %v3987, %v3983
        %v5204 = vpack.c.b16 %v3992, %v3988
        %v5205 = vpack.c.b16 %v3993, %v3989
        %v5206 = vpack.c.b16 %v3994, %v3990
        %v5207 = vpack.c.b16 %v3995, %v3991
        %v5208 = vpack.c.b16 %v4000, %v3996
        %v5209 = vpack.c.b16 %v4001, %v3997
        %v5210 = vpack.c.b16 %v4002, %v3998
        %v5211 = vpack.c.b16 %v4003, %v3999
        %v5212 = vpack.c.b16 %v4008, %v4004
        %v5213 = vpack.c.b16 %v4009, %v4005
        %v5214 = vpack.c.b16 %v4010, %v4006
        %v5215 = vpack.c.b16 %v4011, %v4007
        %v5216 = vpack.c.b16 %v4016, %v4012
        %v5217 = vpack.c.b16 %v4017, %v4013
        %v5218 = vpack.c.b16 %v4018, %v4014
        %v5219 = vpack.c.b16 %v4019, %v4015
        %v5220 = vpack.c.b16 %v4024, %v4020
        %v5221 = vpack.c.b16 %v4025, %v4021
        %v5222 = vpack.c.b16 %v4026, %v4022
        %v5223 = vpack.c.b16 %v4027, %v4023
        %v5224 = vpack.c.b16 %v4032, %v4028
        %v5225 = vpack.c.b16 %v4033, %v4029
        %v5226 = vpack.c.b16 %v4034, %v4030
        %v5227 = vpack.c.b16 %v4035, %v4031
        %v5228 = vpack.c.b16 %v4040, %v4036
        %v5229 = vpack.c.b16 %v4041, %v4037
        %v5230 = vpack.c.b16 %v4042, %v4038
        %v5231 = vpack.c.b16 %v4043, %v4039
        %v5232 = vpack.c.b16 %v4048, %v4044
        %v5233 = vpack.c.b16 %v4049, %v4045
        %v5234 = vpack.c.b16 %v4050, %v4046
        %v5235 = vpack.c.b16 %v4051, %v4047
        %v5236 = vpack.c.b16 %v4056, %v4052
        %v5237 = vpack.c.b16 %v4057, %v4053
        %v5238 = vpack.c.b16 %v4058, %v4054
        %v5239 = vpack.c.b16 %v4059, %v4055
        %v5240 = vpack.c.b16 %v4064, %v4060
        %v5241 = vpack.c.b16 %v4065, %v4061
        %v5242 = vpack.c.b16 %v4066, %v4062
        %v5243 = vpack.c.b16 %v4067, %v4063
        %v5244 = vpack.c.b16 %v4072, %v4068
        %v5245 = vpack.c.b16 %v4073, %v4069
        %v5246 = vpack.c.b16 %v4074, %v4070
        %v5247 = vpack.c.b16 %v4075, %v4071
        %v5248 = vpack.c.b16 %v4080, %v4076
        %v5249 = vpack.c.b16 %v4081, %v4077
        %v5250 = vpack.c.b16 %v4082, %v4078
        %v5251 = vpack.c.b16 %v4083, %v4079
        %v5252 = vpack.c.b16 %v4088, %v4084
        %v5253 = vpack.c.b16 %v4089, %v4085
        %v5254 = vpack.c.b16 %v4090, %v4086
        %v5255 = vpack.c.b16 %v4091, %v4087
        %v5256 = vpack.c.b16 %v4096, %v4092
        %v5257 = vpack.c.b16 %v4097, %v4093
        %v5258 = vpack.c.b16 %v4098, %v4094
        %v5259 = vpack.c.b16 %v4099, %v4095
        %v5260 = vpack.c.b16 %v4104, %v4100
        %v5261 = vpack.c.b16 %v4105, %v4101
        %v5262 = vpack.c.b16 %v4106, %v4102
        %v5263 = vpack.c.b16 %v4107, %v4103
        %v5264 = vpack.c.b16 %v4112, %v4108
        %v5265 = vpack.c.b16 %v4113, %v4109
        %v5266 = vpack.c.b16 %v4114, %v4110
        %v5267 = vpack.c.b16 %v4115, %v4111
        %v5268 = vpack.c.b16 %v4120, %v4116
        %v5269 = vpack.c.b16 %v4121, %v4117
        %v5270 = vpack.c.b16 %v4122, %v4118
        %v5271 = vpack.c.b16 %v4123, %v4119
        %v5272 = vpack.c.b16 %v4128, %v4124
        %v5273 = vpack.c.b16 %v4129, %v4125
        %v5274 = vpack.c.b16 %v4130, %v4126
        %v5275 = vpack.c.b16 %v4131, %v4127
        %v5276 = vpack.c.b16 %v4136, %v4132
        %v5277 = vpack.c.b16 %v4137, %v4133
        %v5278 = vpack.c.b16 %v4138, %v4134
        %v5279 = vpack.c.b16 %v4139, %v4135
        %v5280 = vpack.c.b16 %v4144, %v4140
        %v5281 = vpack.c.b16 %v4145, %v4141
        %v5282 = vpack.c.b16 %v4146, %v4142
        %v5283 = vpack.c.b16 %v4147, %v4143
        %v5284 = vpack.c.b16 %v4152, %v4148
        %v5285 = vpack.c.b16 %v4153, %v4149
        %v5286 = vpack.c.b16 %v4154, %v4150
        %v5287 = vpack.c.b16 %v4155, %v4151
        %v5288 = vpack.c.b16 %v4160, %v4156
        %v5289 = vpack.c.b16 %v4161, %v4157
        %v5290 = vpack.c.b16 %v4162, %v4158
        %v5291 = vpack.c.b16 %v4163, %v4159
        %v5292 = vpack.c.b16 %v4168, %v4164
        %v5293 = vpack.c.b16 %v4169, %v4165
        %v5294 = vpack.c.b16 %v4170, %v4166
        %v5295 = vpack.c.b16 %v4171, %v4167
        %v5296 = vpack.c.b16 %v4176, %v4172
        %v5297 = vpack.c.b16 %v4177, %v4173
        %v5298 = vpack.c.b16 %v4178, %v4174
        %v5299 = vpack.c.b16 %v4179, %v4175
        %v5300 = vpack.c.b16 %v4184, %v4180
        %v5301 = vpack.c.b16 %v4185, %v4181
        %v5302 = vpack.c.b16 %v4186, %v4182
        %v5303 = vpack.c.b16 %v4187, %v4183
        %v5304 = vpack.c.b16 %v4192, %v4188
        %v5305 = vpack.c.b16 %v4193, %v4189
        %v5306 = vpack.c.b16 %v4194, %v4190
        %v5307 = vpack.c.b16 %v4195, %v4191
        %v5308 = vpack.c.b16 %v4200, %v4196
        %v5309 = vpack.c.b16 %v4201, %v4197
        %v5310 = vpack.c.b16 %v4202, %v4198
        %v5311 = vpack.c.b16 %v4203, %v4199
        %v5312 = vpack.c.b16 %v4208, %v4204
        %v5313 = vpack.c.b16 %v4209, %v4205
        %v5314 = vpack.c.b16 %v4210, %v4206
        %v5315 = vpack.c.b16 %v4211, %v4207
        %v5316 = vpack.c.b16 %v4216, %v4212
        %v5317 = vpack.c.b16 %v4217, %v4213
        %v5318 = vpack.c.b16 %v4218, %v4214
        %v5319 = vpack.c.b16 %v4219, %v4215
        %v5320 = vpack.c.b16 %v4224, %v4220
        %v5321 = vpack.c.b16 %v4225, %v4221
        %v5322 = vpack.c.b16 %v4226, %v4222
        %v5323 = vpack.c.b16 %v4227, %v4223
        %v5324 = vpack.c.b16 %v4232, %v4228
        %v5325 = vpack.c.b16 %v4233, %v4229
        %v5326 = vpack.c.b16 %v4234, %v4230
        %v5327 = vpack.c.b16 %v4235, %v4231
        %v5328 = vpack.c.b16 %v4240, %v4236
        %v5329 = vpack.c.b16 %v4241, %v4237
        %v5330 = vpack.c.b16 %v4242, %v4238
        %v5331 = vpack.c.b16 %v4243, %v4239
        %v5332 = vpack.c.b16 %v4248, %v4244
        %v5333 = vpack.c.b16 %v4249, %v4245
        %v5334 = vpack.c.b16 %v4250, %v4246
        %v5335 = vpack.c.b16 %v4251, %v4247
        %v5336 = vpack.c.b16 %v4256, %v4252
        %v5337 = vpack.c.b16 %v4257, %v4253
        %v5338 = vpack.c.b16 %v4258, %v4254
        %v5339 = vpack.c.b16 %v4259, %v4255
        %v5340 = vpack.c.b16 %v4264, %v4260
        %v5341 = vpack.c.b16 %v4265, %v4261
        %v5342 = vpack.c.b16 %v4266, %v4262
        %v5343 = vpack.c.b16 %v4267, %v4263
        %v5344 = vpack.c.b16 %v4272, %v4268
        %v5345 = vpack.c.b16 %v4273, %v4269
        %v5346 = vpack.c.b16 %v4274, %v4270
        %v5347 = vpack.c.b16 %v4275, %v4271
        %v5348 = vpack.c.b16 %v4280, %v4276
        %v5349 = vpack.c.b16 %v4281, %v4277
        %v5350 = vpack.c.b16 %v4282, %v4278
        %v5351 = vpack.c.b16 %v4283, %v4279
        %v5352 = vpack.c.b16 %v4288, %v4284
        %v5353 = vpack.c.b16 %v4289, %v4285
        %v5354 = vpack.c.b16 %v4290, %v4286
        %v5355 = vpack.c.b16 %v4291, %v4287
        %v5356 = vpack.c.b16 %v4296, %v4292
        %v5357 = vpack.c.b16 %v4297, %v4293
        %v5358 = vpack.c.b16 %v4298, %v4294
        %v5359 = vpack.c.b16 %v4299, %v4295
        %v5360 = vpack.c.b16 %v4304, %v4300
        %v5361 = vpack.c.b16 %v4305, %v4301
        %v5362 = vpack.c.b16 %v4306, %v4302
        %v5363 = vpack.c.b16 %v4307, %v4303
        %v5364 = vpack.c.b16 %v4312, %v4308
        %v5365 = vpack.c.b16 %v4313, %v4309
        %v5366 = vpack.c.b16 %v4314, %v4310
        %v5367 = vpack.c.b16 %v4315, %v4311
        %v5368 = vpack.c.b16 %v4320, %v4316
        %v5369 = vpack.c.b16 %v4321, %v4317
        %v5370 = vpack.c.b16 %v4322, %v4318
        %v5371 = vpack.c.b16 %v4323, %v4319
        %v5372 = vpack.c.b16 %v4328, %v4324
        %v5373 = vpack.c.b16 %v4329, %v4325
        %v5374 = vpack.c.b16 %v4330, %v4326
        %v5375 = vpack.c.b16 %v4331, %v4327
        %v5376 = vpack.c.b16 %v4336, %v4332
        %v5377 = vpack.c.b16 %v4337, %v4333
        %v5378 = vpack.c.b16 %v4338, %v4334
        %v5379 = vpack.c.b16 %v4339, %v4335
        %v5380 = vpack.c.b16 %v4344, %v4340
        %v5381 = vpack.c.b16 %v4345, %v4341
        %v5382 = vpack.c.b16 %v4346, %v4342
        %v5383 = vpack.c.b16 %v4347, %v4343
        %v5384 = vpack.c.b16 %v4352, %v4348
        %v5385 = vpack.c.b16 %v4353, %v4349
        %v5386 = vpack.c.b16 %v4354, %v4350
        %v5387 = vpack.c.b16 %v4355, %v4351
        %v5388 = vpack.c.b16 %v4360, %v4356
        %v5389 = vpack.c.b16 %v4361, %v4357
        %v5390 = vpack.c.b16 %v4362, %v4358
        %v5391 = vpack.c.b16 %v4363, %v4359
        %v5392 = vpack.c.b16 %v4368, %v4364
        %v5393 = vpack.c.b16 %v4369, %v4365
        %v5394 = vpack.c.b16 %v4370, %v4366
        %v5395 = vpack.c.b16 %v4371, %v4367
        %6420 = vmatprep.subr.bf16.mxu0 %v4373
        %6421 = vmatpush1.bf16.msra.mxu0 %v4372
        %6422 = vmatprep.subr.bf16.mxu0 %v4377
        %6423 = vmatpush1.bf16.msra.mxu0 %v4376
        %6424 = vmatprep.subr.bf16.mxu0 %v4381
        %6425 = vmatpush1.bf16.msra.mxu0 %v4380
        %6426 = vmatprep.subr.bf16.mxu0 %v4385
        %6427 = vmatpush1.bf16.msra.mxu0 %v4384
        %6428 = vmatprep.subr.bf16.mxu0 %v4389
        %6429 = vmatpush1.bf16.msra.mxu0 %v4388
        %6430 = vmatprep.subr.bf16.mxu0 %v4393
        %6431 = vmatpush1.bf16.msra.mxu0 %v4392
        %6432 = vmatprep.subr.bf16.mxu0 %v4397
        %6433 = vmatpush1.bf16.msra.mxu0 %v4396
        %6434 = vmatprep.subr.bf16.mxu0 %v4401
        %6435 = vmatpush1.bf16.msra.mxu0 %v4400
        %6436 = vmatprep.subr.bf16.mxu0 %v4405
        %6437 = vmatpush1.bf16.msra.mxu0 %v4404
        %6438 = vmatprep.subr.bf16.mxu0 %v4409
        %6439 = vmatpush1.bf16.msra.mxu0 %v4408
        %6440 = vmatprep.subr.bf16.mxu0 %v4413
        %6441 = vmatpush1.bf16.msra.mxu0 %v4412
        %6442 = vmatprep.subr.bf16.mxu0 %v4417
        %6443 = vmatpush1.bf16.msra.mxu0 %v4416
        %6444 = vmatprep.subr.bf16.mxu0 %v4421
        %6445 = vmatpush1.bf16.msra.mxu0 %v4420
        %6446 = vmatprep.subr.bf16.mxu0 %v4425
        %6447 = vmatpush1.bf16.msra.mxu0 %v4424
        %6448 = vmatprep.subr.bf16.mxu0 %v4429
        %6449 = vmatpush1.bf16.msra.mxu0 %v4428
        %6450 = vmatprep.subr.bf16.mxu0 %v4433
        %6451 = vmatpush1.bf16.msra.mxu0 %v4432
        %6452 = vmatprep.mubr.bf16.mxu0 %v245
        %6453 = vmatmul.mubr.bf16.gmra.mrb[0].mxu0 %v244
        %v6454 = vpop.f32.mrb[0].mxu0
        %v6455 = vadd.f32 0.0, %v6454
        %v6456 = vpop.f32.mrb[0].mxu0
        %v6457 = vadd.f32 0.0, %v6456
        %v6458 = vpop.f32.mrb[0].mxu0
        %v6459 = vpop.f32.mrb[0].mxu0
        %6460 = vdwg.mxu0
        %6461 = vmatprep.subr.bf16.mxu0 %v4437
        %6462 = vmatpush1.bf16.msra.mxu0 %v4436
        %6463 = vmatprep.subr.bf16.mxu0 %v4441
        %6464 = vmatpush1.bf16.msra.mxu0 %v4440
        %6465 = vmatprep.subr.bf16.mxu0 %v4445
        %6466 = vmatpush1.bf16.msra.mxu0 %v4444
        %6467 = vmatprep.subr.bf16.mxu0 %v4449
        %6468 = vmatpush1.bf16.msra.mxu0 %v4448
        %6469 = vmatprep.subr.bf16.mxu0 %v4453
        %6470 = vmatpush1.bf16.msra.mxu0 %v4452
        %6471 = vmatprep.subr.bf16.mxu0 %v4457
        %6472 = vmatpush1.bf16.msra.mxu0 %v4456
        %6473 = vmatprep.subr.bf16.mxu0 %v4461
        %6474 = vmatpush1.bf16.msra.mxu0 %v4460
        %6475 = vmatprep.subr.bf16.mxu0 %v4465
        %6476 = vmatpush1.bf16.msra.mxu0 %v4464
        %6477 = vmatprep.subr.bf16.mxu0 %v4469
        %6478 = vmatpush1.bf16.msra.mxu0 %v4468
        %6479 = vmatprep.subr.bf16.mxu0 %v4473
        %6480 = vmatpush1.bf16.msra.mxu0 %v4472
        %6481 = vmatprep.subr.bf16.mxu0 %v4477
        %6482 = vmatpush1.bf16.msra.mxu0 %v4476
        %6483 = vmatprep.subr.bf16.mxu0 %v4481
        %6484 = vmatpush1.bf16.msra.mxu0 %v4480
        %6485 = vmatprep.subr.bf16.mxu0 %v4485
        %6486 = vmatpush1.bf16.msra.mxu0 %v4484
        %6487 = vmatprep.subr.bf16.mxu0 %v4489
        %6488 = vmatpush1.bf16.msra.mxu0 %v4488
        %6489 = vmatprep.subr.bf16.mxu0 %v4493
        %6490 = vmatpush1.bf16.msra.mxu0 %v4492
        %6491 = vmatprep.subr.bf16.mxu0 %v4497
        %6492 = vmatpush1.bf16.msra.mxu0 %v4496
        %6493 = vmatprep.mubr.bf16.mxu0 %v247
        %6494 = vmatmul.mubr.bf16.gmra.mrb[0].mxu0 %v246
        %v6495 = vpop.f32.mrb[0].mxu0
        %v6496 = vadd.f32 %v6455, %v6495
        %v6497 = vpop.f32.mrb[0].mxu0
        %v6498 = vadd.f32 %v6457, %v6497
        %v6499 = vpop.f32.mrb[0].mxu0
        %v6500 = vpop.f32.mrb[0].mxu0
        %6501 = vdwg.mxu0
        %6502 = vmatprep.subr.bf16.mxu0 %v4501
        %6503 = vmatpush1.bf16.msra.mxu0 %v4500
        %6504 = vmatprep.subr.bf16.mxu0 %v4505
        %6505 = vmatpush1.bf16.msra.mxu0 %v4504
        %6506 = vmatprep.subr.bf16.mxu0 %v4509
        %6507 = vmatpush1.bf16.msra.mxu0 %v4508
        %6508 = vmatprep.subr.bf16.mxu0 %v4513
        %6509 = vmatpush1.bf16.msra.mxu0 %v4512
        %6510 = vmatprep.subr.bf16.mxu0 %v4517
        %6511 = vmatpush1.bf16.msra.mxu0 %v4516
        %6512 = vmatprep.subr.bf16.mxu0 %v4521
        %6513 = vmatpush1.bf16.msra.mxu0 %v4520
        %6514 = vmatprep.subr.bf16.mxu0 %v4525
        %6515 = vmatpush1.bf16.msra.mxu0 %v4524
        %6516 = vmatprep.subr.bf16.mxu0 %v4529
        %6517 = vmatpush1.bf16.msra.mxu0 %v4528
        %6518 = vmatprep.subr.bf16.mxu0 %v4533
        %6519 = vmatpush1.bf16.msra.mxu0 %v4532
        %6520 = vmatprep.subr.bf16.mxu0 %v4537
        %6521 = vmatpush1.bf16.msra.mxu0 %v4536
        %6522 = vmatprep.subr.bf16.mxu0 %v4541
        %6523 = vmatpush1.bf16.msra.mxu0 %v4540
        %6524 = vmatprep.subr.bf16.mxu0 %v4545
        %6525 = vmatpush1.bf16.msra.mxu0 %v4544
        %6526 = vmatprep.subr.bf16.mxu0 %v4549
        %6527 = vmatpush1.bf16.msra.mxu0 %v4548
        %6528 = vmatprep.subr.bf16.mxu0 %v4553
        %6529 = vmatpush1.bf16.msra.mxu0 %v4552
        %6530 = vmatprep.subr.bf16.mxu0 %v4557
        %6531 = vmatpush1.bf16.msra.mxu0 %v4556
        %6532 = vmatprep.subr.bf16.mxu0 %v4561
        %6533 = vmatpush1.bf16.msra.mxu0 %v4560
        %6534 = vmatprep.mubr.bf16.mxu0 %v249
        %6535 = vmatmul.mubr.bf16.gmra.mrb[0].mxu0 %v248
        %v6536 = vpop.f32.mrb[0].mxu0
        %v6537 = vadd.f32 %v6496, %v6536
        %v6538 = vpop.f32.mrb[0].mxu0
        %v6539 = vadd.f32 %v6498, %v6538
        %v6540 = vpop.f32.mrb[0].mxu0
        %v6541 = vpop.f32.mrb[0].mxu0
        %6542 = vdwg.mxu0
        %6543 = vmatprep.subr.bf16.mxu0 %v4565
        %6544 = vmatpush1.bf16.msra.mxu0 %v4564
        %6545 = vmatprep.subr.bf16.mxu0 %v4569
        %6546 = vmatpush1.bf16.msra.mxu0 %v4568
        %6547 = vmatprep.subr.bf16.mxu0 %v4573
        %6548 = vmatpush1.bf16.msra.mxu0 %v4572
        %6549 = vmatprep.subr.bf16.mxu0 %v4577
        %6550 = vmatpush1.bf16.msra.mxu0 %v4576
        %6551 = vmatprep.subr.bf16.mxu0 %v4581
        %6552 = vmatpush1.bf16.msra.mxu0 %v4580
        %6553 = vmatprep.subr.bf16.mxu0 %v4585
        %6554 = vmatpush1.bf16.msra.mxu0 %v4584
        %6555 = vmatprep.subr.bf16.mxu0 %v4589
        %6556 = vmatpush1.bf16.msra.mxu0 %v4588
        %6557 = vmatprep.subr.bf16.mxu0 %v4593
        %6558 = vmatpush1.bf16.msra.mxu0 %v4592
        %6559 = vmatprep.subr.bf16.mxu0 %v4597
        %6560 = vmatpush1.bf16.msra.mxu0 %v4596
        %6561 = vmatprep.subr.bf16.mxu0 %v4601
        %6562 = vmatpush1.bf16.msra.mxu0 %v4600
        %6563 = vmatprep.subr.bf16.mxu0 %v4605
        %6564 = vmatpush1.bf16.msra.mxu0 %v4604
        %6565 = vmatprep.subr.bf16.mxu0 %v4609
        %6566 = vmatpush1.bf16.msra.mxu0 %v4608
        %6567 = vmatprep.subr.bf16.mxu0 %v4613
        %6568 = vmatpush1.bf16.msra.mxu0 %v4612
        %6569 = vmatprep.subr.bf16.mxu0 %v4617
        %6570 = vmatpush1.bf16.msra.mxu0 %v4616
        %6571 = vmatprep.subr.bf16.mxu0 %v4621
        %6572 = vmatpush1.bf16.msra.mxu0 %v4620
        %6573 = vmatprep.subr.bf16.mxu0 %v4625
        %6574 = vmatpush1.bf16.msra.mxu0 %v4624
        %6575 = vmatprep.mubr.bf16.mxu0 %v251
        %6576 = vmatmul.mubr.bf16.gmra.mrb[0].mxu0 %v250
        %v6577 = vpop.f32.mrb[0].mxu0
        %v6578 = vadd.f32 %v6537, %v6577
        %v6579 = vpop.f32.mrb[0].mxu0
        %v6580 = vadd.f32 %v6539, %v6579
        %v6581 = vpop.f32.mrb[0].mxu0
        %v6582 = vpop.f32.mrb[0].mxu0
        %6583 = vdwg.mxu0
        %6584 = vmatprep.subr.bf16.mxu0 %v4629
        %6585 = vmatpush1.bf16.msra.mxu0 %v4628
        %6586 = vmatprep.subr.bf16.mxu0 %v4633
        %6587 = vmatpush1.bf16.msra.mxu0 %v4632
        %6588 = vmatprep.subr.bf16.mxu0 %v4637
        %6589 = vmatpush1.bf16.msra.mxu0 %v4636
        %6590 = vmatprep.subr.bf16.mxu0 %v4641
        %6591 = vmatpush1.bf16.msra.mxu0 %v4640
        %6592 = vmatprep.subr.bf16.mxu0 %v4645
        %6593 = vmatpush1.bf16.msra.mxu0 %v4644
        %6594 = vmatprep.subr.bf16.mxu0 %v4649
        %6595 = vmatpush1.bf16.msra.mxu0 %v4648
        %6596 = vmatprep.subr.bf16.mxu0 %v4653
        %6597 = vmatpush1.bf16.msra.mxu0 %v4652
        %6598 = vmatprep.subr.bf16.mxu0 %v4657
        %6599 = vmatpush1.bf16.msra.mxu0 %v4656
        %6600 = vmatprep.subr.bf16.mxu0 %v4661
        %6601 = vmatpush1.bf16.msra.mxu0 %v4660
        %6602 = vmatprep.subr.bf16.mxu0 %v4665
        %6603 = vmatpush1.bf16.msra.mxu0 %v4664
        %6604 = vmatprep.subr.bf16.mxu0 %v4669
        %6605 = vmatpush1.bf16.msra.mxu0 %v4668
        %6606 = vmatprep.subr.bf16.mxu0 %v4673
        %6607 = vmatpush1.bf16.msra.mxu0 %v4672
        %6608 = vmatprep.subr.bf16.mxu0 %v4677
        %6609 = vmatpush1.bf16.msra.mxu0 %v4676
        %6610 = vmatprep.subr.bf16.mxu0 %v4681
        %6611 = vmatpush1.bf16.msra.mxu0 %v4680
        %6612 = vmatprep.subr.bf16.mxu0 %v4685
        %6613 = vmatpush1.bf16.msra.mxu0 %v4684
        %6614 = vmatprep.subr.bf16.mxu0 %v4689
        %6615 = vmatpush1.bf16.msra.mxu0 %v4688
        %6616 = vmatprep.mubr.bf16.mxu0 %v253
        %6617 = vmatmul.mubr.bf16.gmra.mrb[0].mxu0 %v252
        %v6618 = vpop.f32.mrb[0].mxu0
        %v6619 = vadd.f32 %v6578, %v6618
        %v6620 = vpop.f32.mrb[0].mxu0
        %v6621 = vadd.f32 %v6580, %v6620
        %v6622 = vpop.f32.mrb[0].mxu0
        %v6623 = vpop.f32.mrb[0].mxu0
        %6624 = vdwg.mxu0
        %6625 = vmatprep.subr.bf16.mxu0 %v4693
        %6626 = vmatpush1.bf16.msra.mxu0 %v4692
        %6627 = vmatprep.subr.bf16.mxu0 %v4697
        %6628 = vmatpush1.bf16.msra.mxu0 %v4696
        %6629 = vmatprep.subr.bf16.mxu0 %v4701
        %6630 = vmatpush1.bf16.msra.mxu0 %v4700
        %6631 = vmatprep.subr.bf16.mxu0 %v4705
        %6632 = vmatpush1.bf16.msra.mxu0 %v4704
        %6633 = vmatprep.subr.bf16.mxu0 %v4709
        %6634 = vmatpush1.bf16.msra.mxu0 %v4708
        %6635 = vmatprep.subr.bf16.mxu0 %v4713
        %6636 = vmatpush1.bf16.msra.mxu0 %v4712
        %6637 = vmatprep.subr.bf16.mxu0 %v4717
        %6638 = vmatpush1.bf16.msra.mxu0 %v4716
        %6639 = vmatprep.subr.bf16.mxu0 %v4721
        %6640 = vmatpush1.bf16.msra.mxu0 %v4720
        %6641 = vmatprep.subr.bf16.mxu0 %v4725
        %6642 = vmatpush1.bf16.msra.mxu0 %v4724
        %6643 = vmatprep.subr.bf16.mxu0 %v4729
        %6644 = vmatpush1.bf16.msra.mxu0 %v4728
        %6645 = vmatprep.subr.bf16.mxu0 %v4733
        %6646 = vmatpush1.bf16.msra.mxu0 %v4732
        %6647 = vmatprep.subr.bf16.mxu0 %v4737
        %6648 = vmatpush1.bf16.msra.mxu0 %v4736
        %6649 = vmatprep.subr.bf16.mxu0 %v4741
        %6650 = vmatpush1.bf16.msra.mxu0 %v4740
        %6651 = vmatprep.subr.bf16.mxu0 %v4745
        %6652 = vmatpush1.bf16.msra.mxu0 %v4744
        %6653 = vmatprep.subr.bf16.mxu0 %v4749
        %6654 = vmatpush1.bf16.msra.mxu0 %v4748
        %6655 = vmatprep.subr.bf16.mxu0 %v4753
        %6656 = vmatpush1.bf16.msra.mxu0 %v4752
        %6657 = vmatprep.mubr.bf16.mxu0 %v255
        %6658 = vmatmul.mubr.bf16.gmra.mrb[0].mxu0 %v254
        %v6659 = vpop.f32.mrb[0].mxu0
        %v6660 = vadd.f32 %v6619, %v6659
        %v6661 = vpop.f32.mrb[0].mxu0
        %v6662 = vadd.f32 %v6621, %v6661
        %v6663 = vpop.f32.mrb[0].mxu0
        %v6664 = vpop.f32.mrb[0].mxu0
        %6665 = vdwg.mxu0
        %6666 = vmatprep.subr.bf16.mxu0 %v4757
        %6667 = vmatpush1.bf16.msra.mxu0 %v4756
        %6668 = vmatprep.subr.bf16.mxu0 %v4761
        %6669 = vmatpush1.bf16.msra.mxu0 %v4760
        %6670 = vmatprep.subr.bf16.mxu0 %v4765
        %6671 = vmatpush1.bf16.msra.mxu0 %v4764
        %6672 = vmatprep.subr.bf16.mxu0 %v4769
        %6673 = vmatpush1.bf16.msra.mxu0 %v4768
        %6674 = vmatprep.subr.bf16.mxu0 %v4773
        %6675 = vmatpush1.bf16.msra.mxu0 %v4772
        %6676 = vmatprep.subr.bf16.mxu0 %v4777
        %6677 = vmatpush1.bf16.msra.mxu0 %v4776
        %6678 = vmatprep.subr.bf16.mxu0 %v4781
        %6679 = vmatpush1.bf16.msra.mxu0 %v4780
        %6680 = vmatprep.subr.bf16.mxu0 %v4785
        %6681 = vmatpush1.bf16.msra.mxu0 %v4784
        %6682 = vmatprep.subr.bf16.mxu0 %v4789
        %6683 = vmatpush1.bf16.msra.mxu0 %v4788
        %6684 = vmatprep.subr.bf16.mxu0 %v4793
        %6685 = vmatpush1.bf16.msra.mxu0 %v4792
        %6686 = vmatprep.subr.bf16.mxu0 %v4797
        %6687 = vmatpush1.bf16.msra.mxu0 %v4796
        %6688 = vmatprep.subr.bf16.mxu0 %v4801
        %6689 = vmatpush1.bf16.msra.mxu0 %v4800
        %6690 = vmatprep.subr.bf16.mxu0 %v4805
        %6691 = vmatpush1.bf16.msra.mxu0 %v4804
        %6692 = vmatprep.subr.bf16.mxu0 %v4809
        %6693 = vmatpush1.bf16.msra.mxu0 %v4808
        %6694 = vmatprep.subr.bf16.mxu0 %v4813
        %6695 = vmatpush1.bf16.msra.mxu0 %v4812
        %6696 = vmatprep.subr.bf16.mxu0 %v4817
        %6697 = vmatpush1.bf16.msra.mxu0 %v4816
        %6698 = vmatprep.mubr.bf16.mxu0 %v257
        %6699 = vmatmul.mubr.bf16.gmra.mrb[0].mxu0 %v256
        %v6700 = vpop.f32.mrb[0].mxu0
        %v6701 = vadd.f32 %v6660, %v6700
        %v6702 = vpop.f32.mrb[0].mxu0
        %v6703 = vadd.f32 %v6662, %v6702
        %v6704 = vpop.f32.mrb[0].mxu0
        %v6705 = vpop.f32.mrb[0].mxu0
        %6706 = vdwg.mxu0
        %6707 = vmatprep.subr.bf16.mxu0 %v4821
        %6708 = vmatpush1.bf16.msra.mxu0 %v4820
        %6709 = vmatprep.subr.bf16.mxu0 %v4825
        %6710 = vmatpush1.bf16.msra.mxu0 %v4824
        %6711 = vmatprep.subr.bf16.mxu0 %v4829
        %6712 = vmatpush1.bf16.msra.mxu0 %v4828
        %6713 = vmatprep.subr.bf16.mxu0 %v4833
        %6714 = vmatpush1.bf16.msra.mxu0 %v4832
        %6715 = vmatprep.subr.bf16.mxu0 %v4837
        %6716 = vmatpush1.bf16.msra.mxu0 %v4836
        %6717 = vmatprep.subr.bf16.mxu0 %v4841
        %6718 = vmatpush1.bf16.msra.mxu0 %v4840
        %6719 = vmatprep.subr.bf16.mxu0 %v4845
        %6720 = vmatpush1.bf16.msra.mxu0 %v4844
        %6721 = vmatprep.subr.bf16.mxu0 %v4849
        %6722 = vmatpush1.bf16.msra.mxu0 %v4848
        %6723 = vmatprep.subr.bf16.mxu0 %v4853
        %6724 = vmatpush1.bf16.msra.mxu0 %v4852
        %6725 = vmatprep.subr.bf16.mxu0 %v4857
        %6726 = vmatpush1.bf16.msra.mxu0 %v4856
        %6727 = vmatprep.subr.bf16.mxu0 %v4861
        %6728 = vmatpush1.bf16.msra.mxu0 %v4860
        %6729 = vmatprep.subr.bf16.mxu0 %v4865
        %6730 = vmatpush1.bf16.msra.mxu0 %v4864
        %6731 = vmatprep.subr.bf16.mxu0 %v4869
        %6732 = vmatpush1.bf16.msra.mxu0 %v4868
        %6733 = vmatprep.subr.bf16.mxu0 %v4873
        %6734 = vmatpush1.bf16.msra.mxu0 %v4872
        %6735 = vmatprep.subr.bf16.mxu0 %v4877
        %6736 = vmatpush1.bf16.msra.mxu0 %v4876
        %6737 = vmatprep.subr.bf16.mxu0 %v4881
        %6738 = vmatpush1.bf16.msra.mxu0 %v4880
        %6739 = vmatprep.mubr.bf16.mxu0 %v259
        %6740 = vmatmul.mubr.bf16.gmra.mrb[0].mxu0 %v258
        %v6741 = vpop.f32.mrb[0].mxu0
        %v6742 = vadd.f32 %v6701, %v6741
        %v6743 = vpop.f32.mrb[0].mxu0
        %v6744 = vadd.f32 %v6703, %v6743
        %v6745 = vpop.f32.mrb[0].mxu0
        %v6746 = vpop.f32.mrb[0].mxu0
        %6747 = vdwg.mxu0
        %6748 = vmatprep.subr.bf16.mxu0 %v4885
        %6749 = vmatpush1.bf16.msra.mxu0 %v4884
        %6750 = vmatprep.subr.bf16.mxu0 %v4889
        %6751 = vmatpush1.bf16.msra.mxu0 %v4888
        %6752 = vmatprep.subr.bf16.mxu0 %v4893
        %6753 = vmatpush1.bf16.msra.mxu0 %v4892
        %6754 = vmatprep.subr.bf16.mxu0 %v4897
        %6755 = vmatpush1.bf16.msra.mxu0 %v4896
        %6756 = vmatprep.subr.bf16.mxu0 %v4901
        %6757 = vmatpush1.bf16.msra.mxu0 %v4900
        %6758 = vmatprep.subr.bf16.mxu0 %v4905
        %6759 = vmatpush1.bf16.msra.mxu0 %v4904
        %6760 = vmatprep.subr.bf16.mxu0 %v4909
        %6761 = vmatpush1.bf16.msra.mxu0 %v4908
        %6762 = vmatprep.subr.bf16.mxu0 %v4913
        %6763 = vmatpush1.bf16.msra.mxu0 %v4912
        %6764 = vmatprep.subr.bf16.mxu0 %v4917
        %6765 = vmatpush1.bf16.msra.mxu0 %v4916
        %6766 = vmatprep.subr.bf16.mxu0 %v4921
        %6767 = vmatpush1.bf16.msra.mxu0 %v4920
        %6768 = vmatprep.subr.bf16.mxu0 %v4925
        %6769 = vmatpush1.bf16.msra.mxu0 %v4924
        %6770 = vmatprep.subr.bf16.mxu0 %v4929
        %6771 = vmatpush1.bf16.msra.mxu0 %v4928
        %6772 = vmatprep.subr.bf16.mxu0 %v4933
        %6773 = vmatpush1.bf16.msra.mxu0 %v4932
        %6774 = vmatprep.subr.bf16.mxu0 %v4937
        %6775 = vmatpush1.bf16.msra.mxu0 %v4936
        %6776 = vmatprep.subr.bf16.mxu0 %v4941
        %6777 = vmatpush1.bf16.msra.mxu0 %v4940
        %6778 = vmatprep.subr.bf16.mxu0 %v4945
        %6779 = vmatpush1.bf16.msra.mxu0 %v4944
        %6780 = vmatprep.mubr.bf16.mxu0 %v261
        %6781 = vmatmul.mubr.bf16.gmra.mrb[0].mxu0 %v260
        %v6782 = vpop.f32.mrb[0].mxu0
        %v6783 = vadd.f32 %v6742, %v6782
        %v6784 = vpop.f32.mrb[0].mxu0
        %v6785 = vadd.f32 %v6744, %v6784
        %v6786 = vpop.f32.mrb[0].mxu0
        %v6787 = vpop.f32.mrb[0].mxu0
        %6788 = vdwg.mxu0
        %6789 = vmatprep.subr.bf16.mxu0 %v4949
        %6790 = vmatpush1.bf16.msra.mxu0 %v4948
        %6791 = vmatprep.subr.bf16.mxu0 %v4953
        %6792 = vmatpush1.bf16.msra.mxu0 %v4952
        %6793 = vmatprep.subr.bf16.mxu0 %v4957
        %6794 = vmatpush1.bf16.msra.mxu0 %v4956
        %6795 = vmatprep.subr.bf16.mxu0 %v4961
        %6796 = vmatpush1.bf16.msra.mxu0 %v4960
        %6797 = vmatprep.subr.bf16.mxu0 %v4965
        %6798 = vmatpush1.bf16.msra.mxu0 %v4964
        %6799 = vmatprep.subr.bf16.mxu0 %v4969
        %6800 = vmatpush1.bf16.msra.mxu0 %v4968
        %6801 = vmatprep.subr.bf16.mxu0 %v4973
        %6802 = vmatpush1.bf16.msra.mxu0 %v4972
        %6803 = vmatprep.subr.bf16.mxu0 %v4977
        %6804 = vmatpush1.bf16.msra.mxu0 %v4976
        %6805 = vmatprep.subr.bf16.mxu0 %v4981
        %6806 = vmatpush1.bf16.msra.mxu0 %v4980
        %6807 = vmatprep.subr.bf16.mxu0 %v4985
        %6808 = vmatpush1.bf16.msra.mxu0 %v4984
        %6809 = vmatprep.subr.bf16.mxu0 %v4989
        %6810 = vmatpush1.bf16.msra.mxu0 %v4988
        %6811 = vmatprep.subr.bf16.mxu0 %v4993
        %6812 = vmatpush1.bf16.msra.mxu0 %v4992
        %6813 = vmatprep.subr.bf16.mxu0 %v4997
        %6814 = vmatpush1.bf16.msra.mxu0 %v4996
        %6815 = vmatprep.subr.bf16.mxu0 %v5001
        %6816 = vmatpush1.bf16.msra.mxu0 %v5000
        %6817 = vmatprep.subr.bf16.mxu0 %v5005
        %6818 = vmatpush1.bf16.msra.mxu0 %v5004
        %6819 = vmatprep.subr.bf16.mxu0 %v5009
        %6820 = vmatpush1.bf16.msra.mxu0 %v5008
        %6821 = vmatprep.mubr.bf16.mxu0 %v263
        %6822 = vmatmul.mubr.bf16.gmra.mrb[0].mxu0 %v262
        %v6823 = vpop.f32.mrb[0].mxu0
        %v6824 = vadd.f32 %v6783, %v6823
        %v6825 = vpop.f32.mrb[0].mxu0
        %v6826 = vadd.f32 %v6785, %v6825
        %v6827 = vpop.f32.mrb[0].mxu0
        %v6828 = vpop.f32.mrb[0].mxu0
        %6829 = vdwg.mxu0
        %6830 = vmatprep.subr.bf16.mxu0 %v5013
        %6831 = vmatpush1.bf16.msra.mxu0 %v5012
        %6832 = vmatprep.subr.bf16.mxu0 %v5017
        %6833 = vmatpush1.bf16.msra.mxu0 %v5016
        %6834 = vmatprep.subr.bf16.mxu0 %v5021
        %6835 = vmatpush1.bf16.msra.mxu0 %v5020
        %6836 = vmatprep.subr.bf16.mxu0 %v5025
        %6837 = vmatpush1.bf16.msra.mxu0 %v5024
        %6838 = vmatprep.subr.bf16.mxu0 %v5029
        %6839 = vmatpush1.bf16.msra.mxu0 %v5028
        %6840 = vmatprep.subr.bf16.mxu0 %v5033
        %6841 = vmatpush1.bf16.msra.mxu0 %v5032
        %6842 = vmatprep.subr.bf16.mxu0 %v5037
        %6843 = vmatpush1.bf16.msra.mxu0 %v5036
        %6844 = vmatprep.subr.bf16.mxu0 %v5041
        %6845 = vmatpush1.bf16.msra.mxu0 %v5040
        %6846 = vmatprep.subr.bf16.mxu0 %v5045
        %6847 = vmatpush1.bf16.msra.mxu0 %v5044
        %6848 = vmatprep.subr.bf16.mxu0 %v5049
        %6849 = vmatpush1.bf16.msra.mxu0 %v5048
        %6850 = vmatprep.subr.bf16.mxu0 %v5053
        %6851 = vmatpush1.bf16.msra.mxu0 %v5052
        %6852 = vmatprep.subr.bf16.mxu0 %v5057
        %6853 = vmatpush1.bf16.msra.mxu0 %v5056
        %6854 = vmatprep.subr.bf16.mxu0 %v5061
        %6855 = vmatpush1.bf16.msra.mxu0 %v5060
        %6856 = vmatprep.subr.bf16.mxu0 %v5065
        %6857 = vmatpush1.bf16.msra.mxu0 %v5064
        %6858 = vmatprep.subr.bf16.mxu0 %v5069
        %6859 = vmatpush1.bf16.msra.mxu0 %v5068
        %6860 = vmatprep.subr.bf16.mxu0 %v5073
        %6861 = vmatpush1.bf16.msra.mxu0 %v5072
        %6862 = vmatprep.mubr.bf16.mxu0 %v265
        %6863 = vmatmul.mubr.bf16.gmra.mrb[0].mxu0 %v264
        %v6864 = vpop.f32.mrb[0].mxu0
        %v6865 = vadd.f32 %v6824, %v6864
        %v6866 = vpop.f32.mrb[0].mxu0
        %v6867 = vadd.f32 %v6826, %v6866
        %v6868 = vpop.f32.mrb[0].mxu0
        %v6869 = vpop.f32.mrb[0].mxu0
        %6870 = vdwg.mxu0
        %6871 = vmatprep.subr.bf16.mxu0 %v5077
        %6872 = vmatpush1.bf16.msra.mxu0 %v5076
        %6873 = vmatprep.subr.bf16.mxu0 %v5081
        %6874 = vmatpush1.bf16.msra.mxu0 %v5080
        %6875 = vmatprep.subr.bf16.mxu0 %v5085
        %6876 = vmatpush1.bf16.msra.mxu0 %v5084
        %6877 = vmatprep.subr.bf16.mxu0 %v5089
        %6878 = vmatpush1.bf16.msra.mxu0 %v5088
        %6879 = vmatprep.subr.bf16.mxu0 %v5093
        %6880 = vmatpush1.bf16.msra.mxu0 %v5092
        %6881 = vmatprep.subr.bf16.mxu0 %v5097
        %6882 = vmatpush1.bf16.msra.mxu0 %v5096
        %6883 = vmatprep.subr.bf16.mxu0 %v5101
        %6884 = vmatpush1.bf16.msra.mxu0 %v5100
        %6885 = vmatprep.subr.bf16.mxu0 %v5105
        %6886 = vmatpush1.bf16.msra.mxu0 %v5104
        %6887 = vmatprep.subr.bf16.mxu0 %v5109
        %6888 = vmatpush1.bf16.msra.mxu0 %v5108
        %6889 = vmatprep.subr.bf16.mxu0 %v5113
        %6890 = vmatpush1.bf16.msra.mxu0 %v5112
        %6891 = vmatprep.subr.bf16.mxu0 %v5117
        %6892 = vmatpush1.bf16.msra.mxu0 %v5116
        %6893 = vmatprep.subr.bf16.mxu0 %v5121
        %6894 = vmatpush1.bf16.msra.mxu0 %v5120
        %6895 = vmatprep.subr.bf16.mxu0 %v5125
        %6896 = vmatpush1.bf16.msra.mxu0 %v5124
        %6897 = vmatprep.subr.bf16.mxu0 %v5129
        %6898 = vmatpush1.bf16.msra.mxu0 %v5128
        %6899 = vmatprep.subr.bf16.mxu0 %v5133
        %6900 = vmatpush1.bf16.msra.mxu0 %v5132
        %6901 = vmatprep.subr.bf16.mxu0 %v5137
        %6902 = vmatpush1.bf16.msra.mxu0 %v5136
        %6903 = vmatprep.mubr.bf16.mxu0 %v267
        %6904 = vmatmul.mubr.bf16.gmra.mrb[0].mxu0 %v266
        %v6905 = vpop.f32.mrb[0].mxu0
        %v6906 = vadd.f32 %v6865, %v6905
        %v6907 = vpop.f32.mrb[0].mxu0
        %v6908 = vadd.f32 %v6867, %v6907
        %v6909 = vpop.f32.mrb[0].mxu0
        %v6910 = vpop.f32.mrb[0].mxu0
        %6911 = vdwg.mxu0
        %6912 = vmatprep.subr.bf16.mxu0 %v5141
        %6913 = vmatpush1.bf16.msra.mxu0 %v5140
        %6914 = vmatprep.subr.bf16.mxu0 %v5145
        %6915 = vmatpush1.bf16.msra.mxu0 %v5144
        %6916 = vmatprep.subr.bf16.mxu0 %v5149
        %6917 = vmatpush1.bf16.msra.mxu0 %v5148
        %6918 = vmatprep.subr.bf16.mxu0 %v5153
        %6919 = vmatpush1.bf16.msra.mxu0 %v5152
        %6920 = vmatprep.subr.bf16.mxu0 %v5157
        %6921 = vmatpush1.bf16.msra.mxu0 %v5156
        %6922 = vmatprep.subr.bf16.mxu0 %v5161
        %6923 = vmatpush1.bf16.msra.mxu0 %v5160
        %6924 = vmatprep.subr.bf16.mxu0 %v5165
        %6925 = vmatpush1.bf16.msra.mxu0 %v5164
        %6926 = vmatprep.subr.bf16.mxu0 %v5169
        %6927 = vmatpush1.bf16.msra.mxu0 %v5168
        %6928 = vmatprep.subr.bf16.mxu0 %v5173
        %6929 = vmatpush1.bf16.msra.mxu0 %v5172
        %6930 = vmatprep.subr.bf16.mxu0 %v5177
        %6931 = vmatpush1.bf16.msra.mxu0 %v5176
        %6932 = vmatprep.subr.bf16.mxu0 %v5181
        %6933 = vmatpush1.bf16.msra.mxu0 %v5180
        %6934 = vmatprep.subr.bf16.mxu0 %v5185
        %6935 = vmatpush1.bf16.msra.mxu0 %v5184
        %6936 = vmatprep.subr.bf16.mxu0 %v5189
        %6937 = vmatpush1.bf16.msra.mxu0 %v5188
        %6938 = vmatprep.subr.bf16.mxu0 %v5193
        %6939 = vmatpush1.bf16.msra.mxu0 %v5192
        %6940 = vmatprep.subr.bf16.mxu0 %v5197
        %6941 = vmatpush1.bf16.msra.mxu0 %v5196
        %6942 = vmatprep.subr.bf16.mxu0 %v5201
        %6943 = vmatpush1.bf16.msra.mxu0 %v5200
        %6944 = vmatprep.mubr.bf16.mxu0 %v269
        %6945 = vmatmul.mubr.bf16.gmra.mrb[0].mxu0 %v268
        %v6946 = vpop.f32.mrb[0].mxu0
        %v6947 = vadd.f32 %v6906, %v6946
        %v6948 = vpop.f32.mrb[0].mxu0
        %v6949 = vadd.f32 %v6908, %v6948
        %v6950 = vpop.f32.mrb[0].mxu0
        %v6951 = vpop.f32.mrb[0].mxu0
        %6952 = vdwg.mxu0
        %6953 = vmatprep.subr.bf16.mxu0 %v5205
        %6954 = vmatpush1.bf16.msra.mxu0 %v5204
        %6955 = vmatprep.subr.bf16.mxu0 %v5209
        %6956 = vmatpush1.bf16.msra.mxu0 %v5208
        %6957 = vmatprep.subr.bf16.mxu0 %v5213
        %6958 = vmatpush1.bf16.msra.mxu0 %v5212
        %6959 = vmatprep.subr.bf16.mxu0 %v5217
        %6960 = vmatpush1.bf16.msra.mxu0 %v5216
        %6961 = vmatprep.subr.bf16.mxu0 %v5221
        %6962 = vmatpush1.bf16.msra.mxu0 %v5220
        %6963 = vmatprep.subr.bf16.mxu0 %v5225
        %6964 = vmatpush1.bf16.msra.mxu0 %v5224
        %6965 = vmatprep.subr.bf16.mxu0 %v5229
        %6966 = vmatpush1.bf16.msra.mxu0 %v5228
        %6967 = vmatprep.subr.bf16.mxu0 %v5233
        %6968 = vmatpush1.bf16.msra.mxu0 %v5232
        %6969 = vmatprep.subr.bf16.mxu0 %v5237
        %6970 = vmatpush1.bf16.msra.mxu0 %v5236
        %6971 = vmatprep.subr.bf16.mxu0 %v5241
        %6972 = vmatpush1.bf16.msra.mxu0 %v5240
        %6973 = vmatprep.subr.bf16.mxu0 %v5245
        %6974 = vmatpush1.bf16.msra.mxu0 %v5244
        %6975 = vmatprep.subr.bf16.mxu0 %v5249
        %6976 = vmatpush1.bf16.msra.mxu0 %v5248
        %6977 = vmatprep.subr.bf16.mxu0 %v5253
        %6978 = vmatpush1.bf16.msra.mxu0 %v5252
        %6979 = vmatprep.subr.bf16.mxu0 %v5257
        %6980 = vmatpush1.bf16.msra.mxu0 %v5256
        %6981 = vmatprep.subr.bf16.mxu0 %v5261
        %6982 = vmatpush1.bf16.msra.mxu0 %v5260
        %6983 = vmatprep.subr.bf16.mxu0 %v5265
        %6984 = vmatpush1.bf16.msra.mxu0 %v5264
        %6985 = vmatprep.mubr.bf16.mxu0 %v271
        %6986 = vmatmul.mubr.bf16.gmra.mrb[0].mxu0 %v270
        %v6987 = vpop.f32.mrb[0].mxu0
        %v6988 = vadd.f32 %v6947, %v6987
        %v6989 = vpop.f32.mrb[0].mxu0
        %v6990 = vadd.f32 %v6949, %v6989
        %v6991 = vpop.f32.mrb[0].mxu0
        %v6992 = vpop.f32.mrb[0].mxu0
        %6993 = vdwg.mxu0
        %6994 = vmatprep.subr.bf16.mxu0 %v5269
        %6995 = vmatpush1.bf16.msra.mxu0 %v5268
        %6996 = vmatprep.subr.bf16.mxu0 %v5273
        %6997 = vmatpush1.bf16.msra.mxu0 %v5272
        %6998 = vmatprep.subr.bf16.mxu0 %v5277
        %6999 = vmatpush1.bf16.msra.mxu0 %v5276
        %7000 = vmatprep.subr.bf16.mxu0 %v5281
        %7001 = vmatpush1.bf16.msra.mxu0 %v5280
        %7002 = vmatprep.subr.bf16.mxu0 %v5285
        %7003 = vmatpush1.bf16.msra.mxu0 %v5284
        %7004 = vmatprep.subr.bf16.mxu0 %v5289
        %7005 = vmatpush1.bf16.msra.mxu0 %v5288
        %7006 = vmatprep.subr.bf16.mxu0 %v5293
        %7007 = vmatpush1.bf16.msra.mxu0 %v5292
        %7008 = vmatprep.subr.bf16.mxu0 %v5297
        %7009 = vmatpush1.bf16.msra.mxu0 %v5296
        %7010 = vmatprep.subr.bf16.mxu0 %v5301
        %7011 = vmatpush1.bf16.msra.mxu0 %v5300
        %7012 = vmatprep.subr.bf16.mxu0 %v5305
        %7013 = vmatpush1.bf16.msra.mxu0 %v5304
        %7014 = vmatprep.subr.bf16.mxu0 %v5309
        %7015 = vmatpush1.bf16.msra.mxu0 %v5308
        %7016 = vmatprep.subr.bf16.mxu0 %v5313
        %7017 = vmatpush1.bf16.msra.mxu0 %v5312
        %7018 = vmatprep.subr.bf16.mxu0 %v5317
        %7019 = vmatpush1.bf16.msra.mxu0 %v5316
        %7020 = vmatprep.subr.bf16.mxu0 %v5321
        %7021 = vmatpush1.bf16.msra.mxu0 %v5320
        %7022 = vmatprep.subr.bf16.mxu0 %v5325
        %7023 = vmatpush1.bf16.msra.mxu0 %v5324
        %7024 = vmatprep.subr.bf16.mxu0 %v5329
        %7025 = vmatpush1.bf16.msra.mxu0 %v5328
        %7026 = vmatprep.mubr.bf16.mxu0 %v273
        %7027 = vmatmul.mubr.bf16.gmra.mrb[0].mxu0 %v272
        %v7028 = vpop.f32.mrb[0].mxu0
        %v7029 = vadd.f32 %v6988, %v7028
        %v7030 = vpop.f32.mrb[0].mxu0
        %v7031 = vadd.f32 %v6990, %v7030
        %v7032 = vpop.f32.mrb[0].mxu0
        %v7033 = vpop.f32.mrb[0].mxu0
        %7034 = vdwg.mxu0
        %7035 = vmatprep.subr.bf16.mxu0 %v5333
        %7036 = vmatpush1.bf16.msra.mxu0 %v5332
        %7037 = vmatprep.subr.bf16.mxu0 %v5337
        %7038 = vmatpush1.bf16.msra.mxu0 %v5336
        %7039 = vmatprep.subr.bf16.mxu0 %v5341
        %7040 = vmatpush1.bf16.msra.mxu0 %v5340
        %7041 = vmatprep.subr.bf16.mxu0 %v5345
        %7042 = vmatpush1.bf16.msra.mxu0 %v5344
        %7043 = vmatprep.subr.bf16.mxu0 %v5349
        %7044 = vmatpush1.bf16.msra.mxu0 %v5348
        %7045 = vmatprep.subr.bf16.mxu0 %v5353
        %7046 = vmatpush1.bf16.msra.mxu0 %v5352
        %7047 = vmatprep.subr.bf16.mxu0 %v5357
        %7048 = vmatpush1.bf16.msra.mxu0 %v5356
        %7049 = vmatprep.subr.bf16.mxu0 %v5361
        %7050 = vmatpush1.bf16.msra.mxu0 %v5360
        %7051 = vmatprep.subr.bf16.mxu0 %v5365
        %7052 = vmatpush1.bf16.msra.mxu0 %v5364
        %7053 = vmatprep.subr.bf16.mxu0 %v5369
        %7054 = vmatpush1.bf16.msra.mxu0 %v5368
        %7055 = vmatprep.subr.bf16.mxu0 %v5373
        %7056 = vmatpush1.bf16.msra.mxu0 %v5372
        %7057 = vmatprep.subr.bf16.mxu0 %v5377
        %7058 = vmatpush1.bf16.msra.mxu0 %v5376
        %7059 = vmatprep.subr.bf16.mxu0 %v5381
        %7060 = vmatpush1.bf16.msra.mxu0 %v5380
        %7061 = vmatprep.subr.bf16.mxu0 %v5385
        %7062 = vmatpush1.bf16.msra.mxu0 %v5384
        %7063 = vmatprep.subr.bf16.mxu0 %v5389
        %7064 = vmatpush1.bf16.msra.mxu0 %v5388
        %7065 = vmatprep.subr.bf16.mxu0 %v5393
        %7066 = vmatpush1.bf16.msra.mxu0 %v5392
        %7067 = vmatprep.mubr.bf16.mxu0 %v275
        %7068 = vmatmul.mubr.bf16.gmra.mrb[0].mxu0 %v274
        %v7069 = vpop.f32.mrb[0].mxu0
        %v7070 = vadd.f32 %v7029, %v7069
        %v7071 = vpop.f32.mrb[0].mxu0
        %v7072 = vadd.f32 %v7031, %v7071
        %v7073 = vpop.f32.mrb[0].mxu0
        %v7074 = vpop.f32.mrb[0].mxu0
        %7075 = vdwg.mxu0
        %7076 = vmatprep.subr.bf16.mxu0 %v4375
        %7077 = vmatpush1.bf16.msra.mxu0 %v4374
        %7078 = vmatprep.subr.bf16.mxu0 %v4379
        %7079 = vmatpush1.bf16.msra.mxu0 %v4378
        %7080 = vmatprep.subr.bf16.mxu0 %v4383
        %7081 = vmatpush1.bf16.msra.mxu0 %v4382
        %7082 = vmatprep.subr.bf16.mxu0 %v4387
        %7083 = vmatpush1.bf16.msra.mxu0 %v4386
        %7084 = vmatprep.subr.bf16.mxu0 %v4391
        %7085 = vmatpush1.bf16.msra.mxu0 %v4390
        %7086 = vmatprep.subr.bf16.mxu0 %v4395
        %7087 = vmatpush1.bf16.msra.mxu0 %v4394
        %7088 = vmatprep.subr.bf16.mxu0 %v4399
        %7089 = vmatpush1.bf16.msra.mxu0 %v4398
        %7090 = vmatprep.subr.bf16.mxu0 %v4403
        %7091 = vmatpush1.bf16.msra.mxu0 %v4402
        %7092 = vmatprep.subr.bf16.mxu0 %v4407
        %7093 = vmatpush1.bf16.msra.mxu0 %v4406
        %7094 = vmatprep.subr.bf16.mxu0 %v4411
        %7095 = vmatpush1.bf16.msra.mxu0 %v4410
        %7096 = vmatprep.subr.bf16.mxu0 %v4415
        %7097 = vmatpush1.bf16.msra.mxu0 %v4414
        %7098 = vmatprep.subr.bf16.mxu0 %v4419
        %7099 = vmatpush1.bf16.msra.mxu0 %v4418
        %7100 = vmatprep.subr.bf16.mxu0 %v4423
        %7101 = vmatpush1.bf16.msra.mxu0 %v4422
        %7102 = vmatprep.subr.bf16.mxu0 %v4427
        %7103 = vmatpush1.bf16.msra.mxu0 %v4426
        %7104 = vmatprep.subr.bf16.mxu0 %v4431
        %7105 = vmatpush1.bf16.msra.mxu0 %v4430
        %7106 = vmatprep.subr.bf16.mxu0 %v4435
        %7107 = vmatpush1.bf16.msra.mxu0 %v4434
        %7108 = vmatprep.mubr.bf16.mxu0 %v245
        %7109 = vmatmul.mubr.bf16.gmra.mrb[0].mxu0 %v244
        %v7110 = vpop.f32.mrb[0].mxu0
        %v7111 = vadd.f32 0.0, %v7110
        %v7112 = vpop.f32.mrb[0].mxu0
        %v7113 = vadd.f32 0.0, %v7112
        %v7114 = vpop.f32.mrb[0].mxu0
        %v7115 = vpop.f32.mrb[0].mxu0
        %7116 = vdwg.mxu0
        %7117 = vmatprep.subr.bf16.mxu0 %v4439
        %7118 = vmatpush1.bf16.msra.mxu0 %v4438
        %7119 = vmatprep.subr.bf16.mxu0 %v4443
        %7120 = vmatpush1.bf16.msra.mxu0 %v4442
        %7121 = vmatprep.subr.bf16.mxu0 %v4447
        %7122 = vmatpush1.bf16.msra.mxu0 %v4446
        %7123 = vmatprep.subr.bf16.mxu0 %v4451
        %7124 = vmatpush1.bf16.msra.mxu0 %v4450
        %7125 = vmatprep.subr.bf16.mxu0 %v4455
        %7126 = vmatpush1.bf16.msra.mxu0 %v4454
        %7127 = vmatprep.subr.bf16.mxu0 %v4459
        %7128 = vmatpush1.bf16.msra.mxu0 %v4458
        %7129 = vmatprep.subr.bf16.mxu0 %v4463
        %7130 = vmatpush1.bf16.msra.mxu0 %v4462
        %7131 = vmatprep.subr.bf16.mxu0 %v4467
        %7132 = vmatpush1.bf16.msra.mxu0 %v4466
        %7133 = vmatprep.subr.bf16.mxu0 %v4471
        %7134 = vmatpush1.bf16.msra.mxu0 %v4470
        %7135 = vmatprep.subr.bf16.mxu0 %v4475
        %7136 = vmatpush1.bf16.msra.mxu0 %v4474
        %7137 = vmatprep.subr.bf16.mxu0 %v4479
        %7138 = vmatpush1.bf16.msra.mxu0 %v4478
        %7139 = vmatprep.subr.bf16.mxu0 %v4483
        %7140 = vmatpush1.bf16.msra.mxu0 %v4482
        %7141 = vmatprep.subr.bf16.mxu0 %v4487
        %7142 = vmatpush1.bf16.msra.mxu0 %v4486
        %7143 = vmatprep.subr.bf16.mxu0 %v4491
        %7144 = vmatpush1.bf16.msra.mxu0 %v4490
        %7145 = vmatprep.subr.bf16.mxu0 %v4495
        %7146 = vmatpush1.bf16.msra.mxu0 %v4494
        %7147 = vmatprep.subr.bf16.mxu0 %v4499
        %7148 = vmatpush1.bf16.msra.mxu0 %v4498
        %7149 = vmatprep.mubr.bf16.mxu0 %v247
        %7150 = vmatmul.mubr.bf16.gmra.mrb[0].mxu0 %v246
        %v7151 = vpop.f32.mrb[0].mxu0
        %v7152 = vadd.f32 %v7111, %v7151
        %v7153 = vpop.f32.mrb[0].mxu0
        %v7154 = vadd.f32 %v7113, %v7153
        %v7155 = vpop.f32.mrb[0].mxu0
        %v7156 = vpop.f32.mrb[0].mxu0
        %7157 = vdwg.mxu0
        %7158 = vmatprep.subr.bf16.mxu0 %v4503
        %7159 = vmatpush1.bf16.msra.mxu0 %v4502
        %7160 = vmatprep.subr.bf16.mxu0 %v4507
        %7161 = vmatpush1.bf16.msra.mxu0 %v4506
        %7162 = vmatprep.subr.bf16.mxu0 %v4511
        %7163 = vmatpush1.bf16.msra.mxu0 %v4510
        %7164 = vmatprep.subr.bf16.mxu0 %v4515
        %7165 = vmatpush1.bf16.msra.mxu0 %v4514
        %7166 = vmatprep.subr.bf16.mxu0 %v4519
        %7167 = vmatpush1.bf16.msra.mxu0 %v4518
        %7168 = vmatprep.subr.bf16.mxu0 %v4523
        %7169 = vmatpush1.bf16.msra.mxu0 %v4522
        %7170 = vmatprep.subr.bf16.mxu0 %v4527
        %7171 = vmatpush1.bf16.msra.mxu0 %v4526
        %7172 = vmatprep.subr.bf16.mxu0 %v4531
        %7173 = vmatpush1.bf16.msra.mxu0 %v4530
        %7174 = vmatprep.subr.bf16.mxu0 %v4535
        %7175 = vmatpush1.bf16.msra.mxu0 %v4534
        %7176 = vmatprep.subr.bf16.mxu0 %v4539
        %7177 = vmatpush1.bf16.msra.mxu0 %v4538
        %7178 = vmatprep.subr.bf16.mxu0 %v4543
        %7179 = vmatpush1.bf16.msra.mxu0 %v4542
        %7180 = vmatprep.subr.bf16.mxu0 %v4547
        %7181 = vmatpush1.bf16.msra.mxu0 %v4546
        %7182 = vmatprep.subr.bf16.mxu0 %v4551
        %7183 = vmatpush1.bf16.msra.mxu0 %v4550
        %7184 = vmatprep.subr.bf16.mxu0 %v4555
        %7185 = vmatpush1.bf16.msra.mxu0 %v4554
        %7186 = vmatprep.subr.bf16.mxu0 %v4559
        %7187 = vmatpush1.bf16.msra.mxu0 %v4558
        %7188 = vmatprep.subr.bf16.mxu0 %v4563
        %7189 = vmatpush1.bf16.msra.mxu0 %v4562
        %7190 = vmatprep.mubr.bf16.mxu0 %v249
        %7191 = vmatmul.mubr.bf16.gmra.mrb[0].mxu0 %v248
        %v7192 = vpop.f32.mrb[0].mxu0
        %v7193 = vadd.f32 %v7152, %v7192
        %v7194 = vpop.f32.mrb[0].mxu0
        %v7195 = vadd.f32 %v7154, %v7194
        %v7196 = vpop.f32.mrb[0].mxu0
        %v7197 = vpop.f32.mrb[0].mxu0
        %7198 = vdwg.mxu0
        %7199 = vmatprep.subr.bf16.mxu0 %v4567
        %7200 = vmatpush1.bf16.msra.mxu0 %v4566
        %7201 = vmatprep.subr.bf16.mxu0 %v4571
        %7202 = vmatpush1.bf16.msra.mxu0 %v4570
        %7203 = vmatprep.subr.bf16.mxu0 %v4575
        %7204 = vmatpush1.bf16.msra.mxu0 %v4574
        %7205 = vmatprep.subr.bf16.mxu0 %v4579
        %7206 = vmatpush1.bf16.msra.mxu0 %v4578
        %7207 = vmatprep.subr.bf16.mxu0 %v4583
        %7208 = vmatpush1.bf16.msra.mxu0 %v4582
        %7209 = vmatprep.subr.bf16.mxu0 %v4587
        %7210 = vmatpush1.bf16.msra.mxu0 %v4586
        %7211 = vmatprep.subr.bf16.mxu0 %v4591
        %7212 = vmatpush1.bf16.msra.mxu0 %v4590
        %7213 = vmatprep.subr.bf16.mxu0 %v4595
        %7214 = vmatpush1.bf16.msra.mxu0 %v4594
        %7215 = vmatprep.subr.bf16.mxu0 %v4599
        %7216 = vmatpush1.bf16.msra.mxu0 %v4598
        %7217 = vmatprep.subr.bf16.mxu0 %v4603
        %7218 = vmatpush1.bf16.msra.mxu0 %v4602
        %7219 = vmatprep.subr.bf16.mxu0 %v4607
        %7220 = vmatpush1.bf16.msra.mxu0 %v4606
        %7221 = vmatprep.subr.bf16.mxu0 %v4611
        %7222 = vmatpush1.bf16.msra.mxu0 %v4610
        %7223 = vmatprep.subr.bf16.mxu0 %v4615
        %7224 = vmatpush1.bf16.msra.mxu0 %v4614
        %7225 = vmatprep.subr.bf16.mxu0 %v4619
        %7226 = vmatpush1.bf16.msra.mxu0 %v4618
        %7227 = vmatprep.subr.bf16.mxu0 %v4623
        %7228 = vmatpush1.bf16.msra.mxu0 %v4622
        %7229 = vmatprep.subr.bf16.mxu0 %v4627
        %7230 = vmatpush1.bf16.msra.mxu0 %v4626
        %7231 = vmatprep.mubr.bf16.mxu0 %v251
        %7232 = vmatmul.mubr.bf16.gmra.mrb[0].mxu0 %v250
        %v7233 = vpop.f32.mrb[0].mxu0
        %v7234 = vadd.f32 %v7193, %v7233
        %v7235 = vpop.f32.mrb[0].mxu0
        %v7236 = vadd.f32 %v7195, %v7235
        %v7237 = vpop.f32.mrb[0].mxu0
        %v7238 = vpop.f32.mrb[0].mxu0
        %7239 = vdwg.mxu0
        %7240 = vmatprep.subr.bf16.mxu0 %v4631
        %7241 = vmatpush1.bf16.msra.mxu0 %v4630
        %7242 = vmatprep.subr.bf16.mxu0 %v4635
        %7243 = vmatpush1.bf16.msra.mxu0 %v4634
        %7244 = vmatprep.subr.bf16.mxu0 %v4639
        %7245 = vmatpush1.bf16.msra.mxu0 %v4638
        %7246 = vmatprep.subr.bf16.mxu0 %v4643
        %7247 = vmatpush1.bf16.msra.mxu0 %v4642
        %7248 = vmatprep.subr.bf16.mxu0 %v4647
        %7249 = vmatpush1.bf16.msra.mxu0 %v4646
        %7250 = vmatprep.subr.bf16.mxu0 %v4651
        %7251 = vmatpush1.bf16.msra.mxu0 %v4650
        %7252 = vmatprep.subr.bf16.mxu0 %v4655
        %7253 = vmatpush1.bf16.msra.mxu0 %v4654
        %7254 = vmatprep.subr.bf16.mxu0 %v4659
        %7255 = vmatpush1.bf16.msra.mxu0 %v4658
        %7256 = vmatprep.subr.bf16.mxu0 %v4663
        %7257 = vmatpush1.bf16.msra.mxu0 %v4662
        %7258 = vmatprep.subr.bf16.mxu0 %v4667
        %7259 = vmatpush1.bf16.msra.mxu0 %v4666
        %7260 = vmatprep.subr.bf16.mxu0 %v4671
        %7261 = vmatpush1.bf16.msra.mxu0 %v4670
        %7262 = vmatprep.subr.bf16.mxu0 %v4675
        %7263 = vmatpush1.bf16.msra.mxu0 %v4674
        %7264 = vmatprep.subr.bf16.mxu0 %v4679
        %7265 = vmatpush1.bf16.msra.mxu0 %v4678
        %7266 = vmatprep.subr.bf16.mxu0 %v4683
        %7267 = vmatpush1.bf16.msra.mxu0 %v4682
        %7268 = vmatprep.subr.bf16.mxu0 %v4687
        %7269 = vmatpush1.bf16.msra.mxu0 %v4686
        %7270 = vmatprep.subr.bf16.mxu0 %v4691
        %7271 = vmatpush1.bf16.msra.mxu0 %v4690
        %7272 = vmatprep.mubr.bf16.mxu0 %v253
        %7273 = vmatmul.mubr.bf16.gmra.mrb[0].mxu0 %v252
        %v7274 = vpop.f32.mrb[0].mxu0
        %v7275 = vadd.f32 %v7234, %v7274
        %v7276 = vpop.f32.mrb[0].mxu0
        %v7277 = vadd.f32 %v7236, %v7276
        %v7278 = vpop.f32.mrb[0].mxu0
        %v7279 = vpop.f32.mrb[0].mxu0
        %7280 = vdwg.mxu0
        %7281 = vmatprep.subr.bf16.mxu0 %v4695
        %7282 = vmatpush1.bf16.msra.mxu0 %v4694
        %7283 = vmatprep.subr.bf16.mxu0 %v4699
        %7284 = vmatpush1.bf16.msra.mxu0 %v4698
        %7285 = vmatprep.subr.bf16.mxu0 %v4703
        %7286 = vmatpush1.bf16.msra.mxu0 %v4702
        %7287 = vmatprep.subr.bf16.mxu0 %v4707
        %7288 = vmatpush1.bf16.msra.mxu0 %v4706
        %7289 = vmatprep.subr.bf16.mxu0 %v4711
        %7290 = vmatpush1.bf16.msra.mxu0 %v4710
        %7291 = vmatprep.subr.bf16.mxu0 %v4715
        %7292 = vmatpush1.bf16.msra.mxu0 %v4714
        %7293 = vmatprep.subr.bf16.mxu0 %v4719
        %7294 = vmatpush1.bf16.msra.mxu0 %v4718
        %7295 = vmatprep.subr.bf16.mxu0 %v4723
        %7296 = vmatpush1.bf16.msra.mxu0 %v4722
        %7297 = vmatprep.subr.bf16.mxu0 %v4727
        %7298 = vmatpush1.bf16.msra.mxu0 %v4726
        %7299 = vmatprep.subr.bf16.mxu0 %v4731
        %7300 = vmatpush1.bf16.msra.mxu0 %v4730
        %7301 = vmatprep.subr.bf16.mxu0 %v4735
        %7302 = vmatpush1.bf16.msra.mxu0 %v4734
        %7303 = vmatprep.subr.bf16.mxu0 %v4739
        %7304 = vmatpush1.bf16.msra.mxu0 %v4738
        %7305 = vmatprep.subr.bf16.mxu0 %v4743
        %7306 = vmatpush1.bf16.msra.mxu0 %v4742
        %7307 = vmatprep.subr.bf16.mxu0 %v4747
        %7308 = vmatpush1.bf16.msra.mxu0 %v4746
        %7309 = vmatprep.subr.bf16.mxu0 %v4751
        %7310 = vmatpush1.bf16.msra.mxu0 %v4750
        %7311 = vmatprep.subr.bf16.mxu0 %v4755
        %7312 = vmatpush1.bf16.msra.mxu0 %v4754
        %7313 = vmatprep.mubr.bf16.mxu0 %v255
        %7314 = vmatmul.mubr.bf16.gmra.mrb[0].mxu0 %v254
        %v7315 = vpop.f32.mrb[0].mxu0
        %v7316 = vadd.f32 %v7275, %v7315
        %v7317 = vpop.f32.mrb[0].mxu0
        %v7318 = vadd.f32 %v7277, %v7317
        %v7319 = vpop.f32.mrb[0].mxu0
        %v7320 = vpop.f32.mrb[0].mxu0
        %7321 = vdwg.mxu0
        %7322 = vmatprep.subr.bf16.mxu0 %v4759
        %7323 = vmatpush1.bf16.msra.mxu0 %v4758
        %7324 = vmatprep.subr.bf16.mxu0 %v4763
        %7325 = vmatpush1.bf16.msra.mxu0 %v4762
        %7326 = vmatprep.subr.bf16.mxu0 %v4767
        %7327 = vmatpush1.bf16.msra.mxu0 %v4766
        %7328 = vmatprep.subr.bf16.mxu0 %v4771
        %7329 = vmatpush1.bf16.msra.mxu0 %v4770
        %7330 = vmatprep.subr.bf16.mxu0 %v4775
        %7331 = vmatpush1.bf16.msra.mxu0 %v4774
        %7332 = vmatprep.subr.bf16.mxu0 %v4779
        %7333 = vmatpush1.bf16.msra.mxu0 %v4778
        %7334 = vmatprep.subr.bf16.mxu0 %v4783
        %7335 = vmatpush1.bf16.msra.mxu0 %v4782
        %7336 = vmatprep.subr.bf16.mxu0 %v4787
        %7337 = vmatpush1.bf16.msra.mxu0 %v4786
        %7338 = vmatprep.subr.bf16.mxu0 %v4791
        %7339 = vmatpush1.bf16.msra.mxu0 %v4790
        %7340 = vmatprep.subr.bf16.mxu0 %v4795
        %7341 = vmatpush1.bf16.msra.mxu0 %v4794
        %7342 = vmatprep.subr.bf16.mxu0 %v4799
        %7343 = vmatpush1.bf16.msra.mxu0 %v4798
        %7344 = vmatprep.subr.bf16.mxu0 %v4803
        %7345 = vmatpush1.bf16.msra.mxu0 %v4802
        %7346 = vmatprep.subr.bf16.mxu0 %v4807
        %7347 = vmatpush1.bf16.msra.mxu0 %v4806
        %7348 = vmatprep.subr.bf16.mxu0 %v4811
        %7349 = vmatpush1.bf16.msra.mxu0 %v4810
        %7350 = vmatprep.subr.bf16.mxu0 %v4815
        %7351 = vmatpush1.bf16.msra.mxu0 %v4814
        %7352 = vmatprep.subr.bf16.mxu0 %v4819
        %7353 = vmatpush1.bf16.msra.mxu0 %v4818
        %7354 = vmatprep.mubr.bf16.mxu0 %v257
        %7355 = vmatmul.mubr.bf16.gmra.mrb[0].mxu0 %v256
        %v7356 = vpop.f32.mrb[0].mxu0
        %v7357 = vadd.f32 %v7316, %v7356
        %v7358 = vpop.f32.mrb[0].mxu0
        %v7359 = vadd.f32 %v7318, %v7358
        %v7360 = vpop.f32.mrb[0].mxu0
        %v7361 = vpop.f32.mrb[0].mxu0
        %7362 = vdwg.mxu0
        %7363 = vmatprep.subr.bf16.mxu0 %v4823
        %7364 = vmatpush1.bf16.msra.mxu0 %v4822
        %7365 = vmatprep.subr.bf16.mxu0 %v4827
        %7366 = vmatpush1.bf16.msra.mxu0 %v4826
        %7367 = vmatprep.subr.bf16.mxu0 %v4831
        %7368 = vmatpush1.bf16.msra.mxu0 %v4830
        %7369 = vmatprep.subr.bf16.mxu0 %v4835
        %7370 = vmatpush1.bf16.msra.mxu0 %v4834
        %7371 = vmatprep.subr.bf16.mxu0 %v4839
        %7372 = vmatpush1.bf16.msra.mxu0 %v4838
        %7373 = vmatprep.subr.bf16.mxu0 %v4843
        %7374 = vmatpush1.bf16.msra.mxu0 %v4842
        %7375 = vmatprep.subr.bf16.mxu0 %v4847
        %7376 = vmatpush1.bf16.msra.mxu0 %v4846
        %7377 = vmatprep.subr.bf16.mxu0 %v4851
        %7378 = vmatpush1.bf16.msra.mxu0 %v4850
        %7379 = vmatprep.subr.bf16.mxu0 %v4855
        %7380 = vmatpush1.bf16.msra.mxu0 %v4854
        %7381 = vmatprep.subr.bf16.mxu0 %v4859
        %7382 = vmatpush1.bf16.msra.mxu0 %v4858
        %7383 = vmatprep.subr.bf16.mxu0 %v4863
        %7384 = vmatpush1.bf16.msra.mxu0 %v4862
        %7385 = vmatprep.subr.bf16.mxu0 %v4867
        %7386 = vmatpush1.bf16.msra.mxu0 %v4866
        %7387 = vmatprep.subr.bf16.mxu0 %v4871
        %7388 = vmatpush1.bf16.msra.mxu0 %v4870
        %7389 = vmatprep.subr.bf16.mxu0 %v4875
        %7390 = vmatpush1.bf16.msra.mxu0 %v4874
        %7391 = vmatprep.subr.bf16.mxu0 %v4879
        %7392 = vmatpush1.bf16.msra.mxu0 %v4878
        %7393 = vmatprep.subr.bf16.mxu0 %v4883
        %7394 = vmatpush1.bf16.msra.mxu0 %v4882
        %7395 = vmatprep.mubr.bf16.mxu0 %v259
        %7396 = vmatmul.mubr.bf16.gmra.mrb[0].mxu0 %v258
        %v7397 = vpop.f32.mrb[0].mxu0
        %v7398 = vadd.f32 %v7357, %v7397
        %v7399 = vpop.f32.mrb[0].mxu0
        %v7400 = vadd.f32 %v7359, %v7399
        %v7401 = vpop.f32.mrb[0].mxu0
        %v7402 = vpop.f32.mrb[0].mxu0
        %7403 = vdwg.mxu0
        %7404 = vmatprep.subr.bf16.mxu0 %v4887
        %7405 = vmatpush1.bf16.msra.mxu0 %v4886
        %7406 = vmatprep.subr.bf16.mxu0 %v4891
        %7407 = vmatpush1.bf16.msra.mxu0 %v4890
        %7408 = vmatprep.subr.bf16.mxu0 %v4895
        %7409 = vmatpush1.bf16.msra.mxu0 %v4894
        %7410 = vmatprep.subr.bf16.mxu0 %v4899
        %7411 = vmatpush1.bf16.msra.mxu0 %v4898
        %7412 = vmatprep.subr.bf16.mxu0 %v4903
        %7413 = vmatpush1.bf16.msra.mxu0 %v4902
        %7414 = vmatprep.subr.bf16.mxu0 %v4907
        %7415 = vmatpush1.bf16.msra.mxu0 %v4906
        %7416 = vmatprep.subr.bf16.mxu0 %v4911
        %7417 = vmatpush1.bf16.msra.mxu0 %v4910
        %7418 = vmatprep.subr.bf16.mxu0 %v4915
        %7419 = vmatpush1.bf16.msra.mxu0 %v4914
        %7420 = vmatprep.subr.bf16.mxu0 %v4919
        %7421 = vmatpush1.bf16.msra.mxu0 %v4918
        %7422 = vmatprep.subr.bf16.mxu0 %v4923
        %7423 = vmatpush1.bf16.msra.mxu0 %v4922
        %7424 = vmatprep.subr.bf16.mxu0 %v4927
        %7425 = vmatpush1.bf16.msra.mxu0 %v4926
        %7426 = vmatprep.subr.bf16.mxu0 %v4931
        %7427 = vmatpush1.bf16.msra.mxu0 %v4930
        %7428 = vmatprep.subr.bf16.mxu0 %v4935
        %7429 = vmatpush1.bf16.msra.mxu0 %v4934
        %7430 = vmatprep.subr.bf16.mxu0 %v4939
        %7431 = vmatpush1.bf16.msra.mxu0 %v4938
        %7432 = vmatprep.subr.bf16.mxu0 %v4943
        %7433 = vmatpush1.bf16.msra.mxu0 %v4942
        %7434 = vmatprep.subr.bf16.mxu0 %v4947
        %7435 = vmatpush1.bf16.msra.mxu0 %v4946
        %7436 = vmatprep.mubr.bf16.mxu0 %v261
        %7437 = vmatmul.mubr.bf16.gmra.mrb[0].mxu0 %v260
        %v7438 = vpop.f32.mrb[0].mxu0
        %v7439 = vadd.f32 %v7398, %v7438
        %v7440 = vpop.f32.mrb[0].mxu0
        %v7441 = vadd.f32 %v7400, %v7440
        %v7442 = vpop.f32.mrb[0].mxu0
        %v7443 = vpop.f32.mrb[0].mxu0
        %7444 = vdwg.mxu0
        %7445 = vmatprep.subr.bf16.mxu0 %v4951
        %7446 = vmatpush1.bf16.msra.mxu0 %v4950
        %7447 = vmatprep.subr.bf16.mxu0 %v4955
        %7448 = vmatpush1.bf16.msra.mxu0 %v4954
        %7449 = vmatprep.subr.bf16.mxu0 %v4959
        %7450 = vmatpush1.bf16.msra.mxu0 %v4958
        %7451 = vmatprep.subr.bf16.mxu0 %v4963
        %7452 = vmatpush1.bf16.msra.mxu0 %v4962
        %7453 = vmatprep.subr.bf16.mxu0 %v4967
        %7454 = vmatpush1.bf16.msra.mxu0 %v4966
        %7455 = vmatprep.subr.bf16.mxu0 %v4971
        %7456 = vmatpush1.bf16.msra.mxu0 %v4970
        %7457 = vmatprep.subr.bf16.mxu0 %v4975
        %7458 = vmatpush1.bf16.msra.mxu0 %v4974
        %7459 = vmatprep.subr.bf16.mxu0 %v4979
        %7460 = vmatpush1.bf16.msra.mxu0 %v4978
        %7461 = vmatprep.subr.bf16.mxu0 %v4983
        %7462 = vmatpush1.bf16.msra.mxu0 %v4982
        %7463 = vmatprep.subr.bf16.mxu0 %v4987
        %7464 = vmatpush1.bf16.msra.mxu0 %v4986
        %7465 = vmatprep.subr.bf16.mxu0 %v4991
        %7466 = vmatpush1.bf16.msra.mxu0 %v4990
        %7467 = vmatprep.subr.bf16.mxu0 %v4995
        %7468 = vmatpush1.bf16.msra.mxu0 %v4994
        %7469 = vmatprep.subr.bf16.mxu0 %v4999
        %7470 = vmatpush1.bf16.msra.mxu0 %v4998
        %7471 = vmatprep.subr.bf16.mxu0 %v5003
        %7472 = vmatpush1.bf16.msra.mxu0 %v5002
        %7473 = vmatprep.subr.bf16.mxu0 %v5007
        %7474 = vmatpush1.bf16.msra.mxu0 %v5006
        %7475 = vmatprep.subr.bf16.mxu0 %v5011
        %7476 = vmatpush1.bf16.msra.mxu0 %v5010
        %7477 = vmatprep.mubr.bf16.mxu0 %v263
        %7478 = vmatmul.mubr.bf16.gmra.mrb[0].mxu0 %v262
        %v7479 = vpop.f32.mrb[0].mxu0
        %v7480 = vadd.f32 %v7439, %v7479
        %v7481 = vpop.f32.mrb[0].mxu0
        %v7482 = vadd.f32 %v7441, %v7481
        %v7483 = vpop.f32.mrb[0].mxu0
        %v7484 = vpop.f32.mrb[0].mxu0
        %7485 = vdwg.mxu0
        %7486 = vmatprep.subr.bf16.mxu0 %v5015
        %7487 = vmatpush1.bf16.msra.mxu0 %v5014
        %7488 = vmatprep.subr.bf16.mxu0 %v5019
        %7489 = vmatpush1.bf16.msra.mxu0 %v5018
        %7490 = vmatprep.subr.bf16.mxu0 %v5023
        %7491 = vmatpush1.bf16.msra.mxu0 %v5022
        %7492 = vmatprep.subr.bf16.mxu0 %v5027
        %7493 = vmatpush1.bf16.msra.mxu0 %v5026
        %7494 = vmatprep.subr.bf16.mxu0 %v5031
        %7495 = vmatpush1.bf16.msra.mxu0 %v5030
        %7496 = vmatprep.subr.bf16.mxu0 %v5035
        %7497 = vmatpush1.bf16.msra.mxu0 %v5034
        %7498 = vmatprep.subr.bf16.mxu0 %v5039
        %7499 = vmatpush1.bf16.msra.mxu0 %v5038
        %7500 = vmatprep.subr.bf16.mxu0 %v5043
        %7501 = vmatpush1.bf16.msra.mxu0 %v5042
        %7502 = vmatprep.subr.bf16.mxu0 %v5047
        %7503 = vmatpush1.bf16.msra.mxu0 %v5046
        %7504 = vmatprep.subr.bf16.mxu0 %v5051
        %7505 = vmatpush1.bf16.msra.mxu0 %v5050
        %7506 = vmatprep.subr.bf16.mxu0 %v5055
        %7507 = vmatpush1.bf16.msra.mxu0 %v5054
        %7508 = vmatprep.subr.bf16.mxu0 %v5059
        %7509 = vmatpush1.bf16.msra.mxu0 %v5058
        %7510 = vmatprep.subr.bf16.mxu0 %v5063
        %7511 = vmatpush1.bf16.msra.mxu0 %v5062
        %7512 = vmatprep.subr.bf16.mxu0 %v5067
        %7513 = vmatpush1.bf16.msra.mxu0 %v5066
        %7514 = vmatprep.subr.bf16.mxu0 %v5071
        %7515 = vmatpush1.bf16.msra.mxu0 %v5070
        %7516 = vmatprep.subr.bf16.mxu0 %v5075
        %7517 = vmatpush1.bf16.msra.mxu0 %v5074
        %7518 = vmatprep.mubr.bf16.mxu0 %v265
        %7519 = vmatmul.mubr.bf16.gmra.mrb[0].mxu0 %v264
        %v7520 = vpop.f32.mrb[0].mxu0
        %v7521 = vadd.f32 %v7480, %v7520
        %v7522 = vpop.f32.mrb[0].mxu0
        %v7523 = vadd.f32 %v7482, %v7522
        %v7524 = vpop.f32.mrb[0].mxu0
        %v7525 = vpop.f32.mrb[0].mxu0
        %7526 = vdwg.mxu0
        %7527 = vmatprep.subr.bf16.mxu0 %v5079
        %7528 = vmatpush1.bf16.msra.mxu0 %v5078
        %7529 = vmatprep.subr.bf16.mxu0 %v5083
        %7530 = vmatpush1.bf16.msra.mxu0 %v5082
        %7531 = vmatprep.subr.bf16.mxu0 %v5087
        %7532 = vmatpush1.bf16.msra.mxu0 %v5086
        %7533 = vmatprep.subr.bf16.mxu0 %v5091
        %7534 = vmatpush1.bf16.msra.mxu0 %v5090
        %7535 = vmatprep.subr.bf16.mxu0 %v5095
        %7536 = vmatpush1.bf16.msra.mxu0 %v5094
        %7537 = vmatprep.subr.bf16.mxu0 %v5099
        %7538 = vmatpush1.bf16.msra.mxu0 %v5098
        %7539 = vmatprep.subr.bf16.mxu0 %v5103
        %7540 = vmatpush1.bf16.msra.mxu0 %v5102
        %7541 = vmatprep.subr.bf16.mxu0 %v5107
        %7542 = vmatpush1.bf16.msra.mxu0 %v5106
        %7543 = vmatprep.subr.bf16.mxu0 %v5111
        %7544 = vmatpush1.bf16.msra.mxu0 %v5110
        %7545 = vmatprep.subr.bf16.mxu0 %v5115
        %7546 = vmatpush1.bf16.msra.mxu0 %v5114
        %7547 = vmatprep.subr.bf16.mxu0 %v5119
        %7548 = vmatpush1.bf16.msra.mxu0 %v5118
        %7549 = vmatprep.subr.bf16.mxu0 %v5123
        %7550 = vmatpush1.bf16.msra.mxu0 %v5122
        %7551 = vmatprep.subr.bf16.mxu0 %v5127
        %7552 = vmatpush1.bf16.msra.mxu0 %v5126
        %7553 = vmatprep.subr.bf16.mxu0 %v5131
        %7554 = vmatpush1.bf16.msra.mxu0 %v5130
        %7555 = vmatprep.subr.bf16.mxu0 %v5135
        %7556 = vmatpush1.bf16.msra.mxu0 %v5134
        %7557 = vmatprep.subr.bf16.mxu0 %v5139
        %7558 = vmatpush1.bf16.msra.mxu0 %v5138
        %7559 = vmatprep.mubr.bf16.mxu0 %v267
        %7560 = vmatmul.mubr.bf16.gmra.mrb[0].mxu0 %v266
        %v7561 = vpop.f32.mrb[0].mxu0
        %v7562 = vadd.f32 %v7521, %v7561
        %v7563 = vpop.f32.mrb[0].mxu0
        %v7564 = vadd.f32 %v7523, %v7563
        %v7565 = vpop.f32.mrb[0].mxu0
        %v7566 = vpop.f32.mrb[0].mxu0
        %7567 = vdwg.mxu0
        %7568 = vmatprep.subr.bf16.mxu0 %v5143
        %7569 = vmatpush1.bf16.msra.mxu0 %v5142
        %7570 = vmatprep.subr.bf16.mxu0 %v5147
        %7571 = vmatpush1.bf16.msra.mxu0 %v5146
        %7572 = vmatprep.subr.bf16.mxu0 %v5151
        %7573 = vmatpush1.bf16.msra.mxu0 %v5150
        %7574 = vmatprep.subr.bf16.mxu0 %v5155
        %7575 = vmatpush1.bf16.msra.mxu0 %v5154
        %7576 = vmatprep.subr.bf16.mxu0 %v5159
        %7577 = vmatpush1.bf16.msra.mxu0 %v5158
        %7578 = vmatprep.subr.bf16.mxu0 %v5163
        %7579 = vmatpush1.bf16.msra.mxu0 %v5162
        %7580 = vmatprep.subr.bf16.mxu0 %v5167
        %7581 = vmatpush1.bf16.msra.mxu0 %v5166
        %7582 = vmatprep.subr.bf16.mxu0 %v5171
        %7583 = vmatpush1.bf16.msra.mxu0 %v5170
        %7584 = vmatprep.subr.bf16.mxu0 %v5175
        %7585 = vmatpush1.bf16.msra.mxu0 %v5174
        %7586 = vmatprep.subr.bf16.mxu0 %v5179
        %7587 = vmatpush1.bf16.msra.mxu0 %v5178
        %7588 = vmatprep.subr.bf16.mxu0 %v5183
        %7589 = vmatpush1.bf16.msra.mxu0 %v5182
        %7590 = vmatprep.subr.bf16.mxu0 %v5187
        %7591 = vmatpush1.bf16.msra.mxu0 %v5186
        %7592 = vmatprep.subr.bf16.mxu0 %v5191
        %7593 = vmatpush1.bf16.msra.mxu0 %v5190
        %7594 = vmatprep.subr.bf16.mxu0 %v5195
        %7595 = vmatpush1.bf16.msra.mxu0 %v5194
        %7596 = vmatprep.subr.bf16.mxu0 %v5199
        %7597 = vmatpush1.bf16.msra.mxu0 %v5198
        %7598 = vmatprep.subr.bf16.mxu0 %v5203
        %7599 = vmatpush1.bf16.msra.mxu0 %v5202
        %7600 = vmatprep.mubr.bf16.mxu0 %v269
        %7601 = vmatmul.mubr.bf16.gmra.mrb[0].mxu0 %v268
        %v7602 = vpop.f32.mrb[0].mxu0
        %v7603 = vadd.f32 %v7562, %v7602
        %v7604 = vpop.f32.mrb[0].mxu0
        %v7605 = vadd.f32 %v7564, %v7604
        %v7606 = vpop.f32.mrb[0].mxu0
        %v7607 = vpop.f32.mrb[0].mxu0
        %7608 = vdwg.mxu0
        %7609 = vmatprep.subr.bf16.mxu0 %v5207
        %7610 = vmatpush1.bf16.msra.mxu0 %v5206
        %7611 = vmatprep.subr.bf16.mxu0 %v5211
        %7612 = vmatpush1.bf16.msra.mxu0 %v5210
        %7613 = vmatprep.subr.bf16.mxu0 %v5215
        %7614 = vmatpush1.bf16.msra.mxu0 %v5214
        %7615 = vmatprep.subr.bf16.mxu0 %v5219
        %7616 = vmatpush1.bf16.msra.mxu0 %v5218
        %7617 = vmatprep.subr.bf16.mxu0 %v5223
        %7618 = vmatpush1.bf16.msra.mxu0 %v5222
        %7619 = vmatprep.subr.bf16.mxu0 %v5227
        %7620 = vmatpush1.bf16.msra.mxu0 %v5226
        %7621 = vmatprep.subr.bf16.mxu0 %v5231
        %7622 = vmatpush1.bf16.msra.mxu0 %v5230
        %7623 = vmatprep.subr.bf16.mxu0 %v5235
        %7624 = vmatpush1.bf16.msra.mxu0 %v5234
        %7625 = vmatprep.subr.bf16.mxu0 %v5239
        %7626 = vmatpush1.bf16.msra.mxu0 %v5238
        %7627 = vmatprep.subr.bf16.mxu0 %v5243
        %7628 = vmatpush1.bf16.msra.mxu0 %v5242
        %7629 = vmatprep.subr.bf16.mxu0 %v5247
        %7630 = vmatpush1.bf16.msra.mxu0 %v5246
        %7631 = vmatprep.subr.bf16.mxu0 %v5251
        %7632 = vmatpush1.bf16.msra.mxu0 %v5250
        %7633 = vmatprep.subr.bf16.mxu0 %v5255
        %7634 = vmatpush1.bf16.msra.mxu0 %v5254
        %7635 = vmatprep.subr.bf16.mxu0 %v5259
        %7636 = vmatpush1.bf16.msra.mxu0 %v5258
        %7637 = vmatprep.subr.bf16.mxu0 %v5263
        %7638 = vmatpush1.bf16.msra.mxu0 %v5262
        %7639 = vmatprep.subr.bf16.mxu0 %v5267
        %7640 = vmatpush1.bf16.msra.mxu0 %v5266
        %7641 = vmatprep.mubr.bf16.mxu0 %v271
        %7642 = vmatmul.mubr.bf16.gmra.mrb[0].mxu0 %v270
        %v7643 = vpop.f32.mrb[0].mxu0
        %v7644 = vadd.f32 %v7603, %v7643
        %v7645 = vpop.f32.mrb[0].mxu0
        %v7646 = vadd.f32 %v7605, %v7645
        %v7647 = vpop.f32.mrb[0].mxu0
        %v7648 = vpop.f32.mrb[0].mxu0
        %7649 = vdwg.mxu0
        %7650 = vmatprep.subr.bf16.mxu0 %v5271
        %7651 = vmatpush1.bf16.msra.mxu0 %v5270
        %7652 = vmatprep.subr.bf16.mxu0 %v5275
        %7653 = vmatpush1.bf16.msra.mxu0 %v5274
        %7654 = vmatprep.subr.bf16.mxu0 %v5279
        %7655 = vmatpush1.bf16.msra.mxu0 %v5278
        %7656 = vmatprep.subr.bf16.mxu0 %v5283
        %7657 = vmatpush1.bf16.msra.mxu0 %v5282
        %7658 = vmatprep.subr.bf16.mxu0 %v5287
        %7659 = vmatpush1.bf16.msra.mxu0 %v5286
        %7660 = vmatprep.subr.bf16.mxu0 %v5291
        %7661 = vmatpush1.bf16.msra.mxu0 %v5290
        %7662 = vmatprep.subr.bf16.mxu0 %v5295
        %7663 = vmatpush1.bf16.msra.mxu0 %v5294
        %7664 = vmatprep.subr.bf16.mxu0 %v5299
        %7665 = vmatpush1.bf16.msra.mxu0 %v5298
        %7666 = vmatprep.subr.bf16.mxu0 %v5303
        %7667 = vmatpush1.bf16.msra.mxu0 %v5302
        %7668 = vmatprep.subr.bf16.mxu0 %v5307
        %7669 = vmatpush1.bf16.msra.mxu0 %v5306
        %7670 = vmatprep.subr.bf16.mxu0 %v5311
        %7671 = vmatpush1.bf16.msra.mxu0 %v5310
        %7672 = vmatprep.subr.bf16.mxu0 %v5315
        %7673 = vmatpush1.bf16.msra.mxu0 %v5314
        %7674 = vmatprep.subr.bf16.mxu0 %v5319
        %7675 = vmatpush1.bf16.msra.mxu0 %v5318
        %7676 = vmatprep.subr.bf16.mxu0 %v5323
        %7677 = vmatpush1.bf16.msra.mxu0 %v5322
        %7678 = vmatprep.subr.bf16.mxu0 %v5327
        %7679 = vmatpush1.bf16.msra.mxu0 %v5326
        %7680 = vmatprep.subr.bf16.mxu0 %v5331
        %7681 = vmatpush1.bf16.msra.mxu0 %v5330
        %7682 = vmatprep.mubr.bf16.mxu0 %v273
        %7683 = vmatmul.mubr.bf16.gmra.mrb[0].mxu0 %v272
        %v7684 = vpop.f32.mrb[0].mxu0
        %v7685 = vadd.f32 %v7644, %v7684
        %v7686 = vpop.f32.mrb[0].mxu0
        %v7687 = vadd.f32 %v7646, %v7686
        %v7688 = vpop.f32.mrb[0].mxu0
        %v7689 = vpop.f32.mrb[0].mxu0
        %7690 = vdwg.mxu0
        %7691 = vmatprep.subr.bf16.mxu0 %v5335
        %7692 = vmatpush1.bf16.msra.mxu0 %v5334
        %7693 = vmatprep.subr.bf16.mxu0 %v5339
        %7694 = vmatpush1.bf16.msra.mxu0 %v5338
        %7695 = vmatprep.subr.bf16.mxu0 %v5343
        %7696 = vmatpush1.bf16.msra.mxu0 %v5342
        %7697 = vmatprep.subr.bf16.mxu0 %v5347
        %7698 = vmatpush1.bf16.msra.mxu0 %v5346
        %7699 = vmatprep.subr.bf16.mxu0 %v5351
        %7700 = vmatpush1.bf16.msra.mxu0 %v5350
        %7701 = vmatprep.subr.bf16.mxu0 %v5355
        %7702 = vmatpush1.bf16.msra.mxu0 %v5354
        %7703 = vmatprep.subr.bf16.mxu0 %v5359
        %7704 = vmatpush1.bf16.msra.mxu0 %v5358
        %7705 = vmatprep.subr.bf16.mxu0 %v5363
        %7706 = vmatpush1.bf16.msra.mxu0 %v5362
        %7707 = vmatprep.subr.bf16.mxu0 %v5367
        %7708 = vmatpush1.bf16.msra.mxu0 %v5366
        %7709 = vmatprep.subr.bf16.mxu0 %v5371
        %7710 = vmatpush1.bf16.msra.mxu0 %v5370
        %7711 = vmatprep.subr.bf16.mxu0 %v5375
        %7712 = vmatpush1.bf16.msra.mxu0 %v5374
        %7713 = vmatprep.subr.bf16.mxu0 %v5379
        %7714 = vmatpush1.bf16.msra.mxu0 %v5378
        %7715 = vmatprep.subr.bf16.mxu0 %v5383
        %7716 = vmatpush1.bf16.msra.mxu0 %v5382
        %7717 = vmatprep.subr.bf16.mxu0 %v5387
        %7718 = vmatpush1.bf16.msra.mxu0 %v5386
        %7719 = vmatprep.subr.bf16.mxu0 %v5391
        %7720 = vmatpush1.bf16.msra.mxu0 %v5390
        %7721 = vmatprep.subr.bf16.mxu0 %v5395
        %7722 = vmatpush1.bf16.msra.mxu0 %v5394
        %7723 = vmatprep.mubr.bf16.mxu0 %v275
        %7724 = vmatmul.mubr.bf16.gmra.mrb[0].mxu0 %v274
        %v7725 = vpop.f32.mrb[0].mxu0
        %v7726 = vadd.f32 %v7685, %v7725
        %v7727 = vpop.f32.mrb[0].mxu0
        %v7728 = vadd.f32 %v7687, %v7727
        %v7729 = vpop.f32.mrb[0].mxu0
        %v7730 = vpop.f32.mrb[0].mxu0
        %7731 = vdwg.mxu0
        %v7732 = vadd.f32 %v208, %v7070
        %v7733 = vadd.f32 %v209, %v7072
        %v7734 = vadd.f32 %v210, %v7726
        %v7735 = vadd.f32 %v211, %v7728
        %7736 = vst [vmem:[%s3] sm:$0xff] %v7732
        %7737 = vst [vmem:[%s3 + $0x8] sm:$0xff] %v7733
        %7738 = vst [vmem:[%s3 + $0x10] sm:$0xff] %v7734
        %7739 = vst [vmem:[%s3 + $0x18] sm:$0xff] %v7735
        %p7740 = scmp.eq.s32.totalorder %s17, 3
        // Predicated region
        $region41: #{model_forward.6} parent=31 // pred_check
          %p7741 = pneg %p7740
        $region42: #{model_forward.6} parent=31 // pred_check_branch
          %7743 = sbr.rel (%p7741) target = $region44
        $region43: #{model_forward.6} parent=31 // pred_region
          %v7744 = vld [vmem:[%s3] sm:$0xff]
          %v7745 = vld [vmem:[%s3 + $0x8] sm:$0xff]
          %v7746 = vld [vmem:[%s3 + $0x10] sm:$0xff]
          %v7747 = vld [vmem:[%s3 + $0x18] sm:$0xff]
          %v7748 = vld [vmem:[%s2] sm:$0xf]
          %v7750 = vlaneseq
          %v7751 = vshrl.u32 %v7750, 7
          %v7752 = vsub.s32 0, %v7751
          %v7753 = vrot.slane %v7748, %v7752
          %v7754 = vlaneseq
          %v7755 = vshrl.u32 %v7754, 7
          %v7756 = vsub.s32 1, %v7755
          %v7757 = vrot.slane %v7748, %v7756
          %v7758 = vlaneseq
          %v7759 = vshrl.u32 %v7758, 7
          %v7760 = vsub.s32 2, %v7759
          %v7761 = vrot.slane %v7748, %v7760
          %v7762 = vlaneseq
          %v7763 = vshrl.u32 %v7762, 7
          %v7764 = vsub.s32 3, %v7763
          %v7765 = vrot.slane %v7748, %v7764
          %v7770 = vadd.f32 %v7744, %v7753
          %v7771 = vadd.f32 %v7745, %v7757
          %v7772 = vadd.f32 %v7746, %v7761
          %v7773 = vadd.f32 %v7747, %v7765
          %vm7774 = vcmp.gt.f32.partialorder %v7770, 0.0
          %vm7775 = vcmp.gt.f32.partialorder %v7771, 0.0
          %vm7776 = vcmp.gt.f32.partialorder %v7772, 0.0
          %vm7777 = vcmp.gt.f32.partialorder %v7773, 0.0
          %v7778 = vmul.f32 %v7770, 0.01
          %v7779 = vmul.f32 %v7771, 0.01
          %v7780 = vmul.f32 %v7772, 0.01
          %v7781 = vmul.f32 %v7773, 0.01
          %v7782 = vsel %vm7774, %v7770, %v7778
          %v7783 = vsel %vm7775, %v7771, %v7779
          %v7784 = vsel %vm7776, %v7772, %v7780
          %v7785 = vsel %vm7777, %v7773, %v7781
          %7786 = vst [vmem:[%s3] sm:$0xff] %v7782
          %7787 = vst [vmem:[%s3 + $0x8] sm:$0xff] %v7783
          %7788 = vst [vmem:[%s3 + $0x10] sm:$0xff] %v7784
          %7789 = vst [vmem:[%s3 + $0x18] sm:$0xff] %v7785
        $region44: #{model_forward.6} parent=31 // pred_fallthru
          _
        // Predicated region
        $region45: #{model_forward.6} parent=31 // pred_check
          %p7790 = pneg %p103
        $region46: #{model_forward.6} parent=31 // pred_check_branch
          %7792 = sbr.rel (%p7790) target = $region48
        $region47: #{model_forward.6} parent=31 // pred_region
          _
        $region48: #{model_forward.6} parent=31 // pred_fallthru
          _
        // Predicated region
        $region49: #{model_forward.6} parent=31 // pred_check
          %p7793 = pneg %p103
        $region50: #{model_forward.6} parent=31 // pred_check_branch
          %7795 = sbr.rel (%p7793) target = $region52
        $region51: #{model_forward.6} parent=31 // pred_region
          _
        $region52: #{model_forward.6} parent=31 // pred_fallthru
          _
      $region32: #{model_forward.6} parent=5 // pred_fallthru
        _
      %p7796 = scmp.le.s32.totalorder 2, %s12
      // Predicated region
      $region53: #{model_forward.6} parent=5 // pred_check
        %p7797 = pneg %p7796
      $region54: #{model_forward.6} parent=5 // pred_check_branch
        %7799 = sbr.rel (%p7797) target = $region56
      $region55: #{model_forward.6} parent=5 // pred_region
        %s7800 = ssub.s32 %s12, 2
      $region56: #{model_forward.6} parent=5 // pred_fallthru
        _
    $region6: #{model_forward.6} parent=1 // loop_footer
      %s16 = sadd.s32 1, %s12
    $region7: #{model_forward.6} parent=1 // loop_footer_branch
      %11 = sbr.rel target = $region3
    $region8: #{model_forward.6} parent=1 // loop_exit
      _
    %7801 = vsyncpa [#allocation3], 1
    %s7802 = scalar_lea.sflag [#allocation3], 1
    %7803 = vsyncpa %s7802, 1

</llo_original>
